<compile_context>
chip_gen: v6e
topology: v6e:2x2x1
jax: 0.10.0
libtpu: 0.0.40
codegen_flags: <defaults>
</compile_context>

<pallas_src>
import functools
import math

import jax
import jax.numpy as jnp
from jax.experimental import pallas as pl
from jax.experimental.pallas import tpu as pltpu

CNN_CHANNELS = 32
LSTM_HIDDEN = 64
NUM_HEADS = 4
HEAD_DIM = LSTM_HIDDEN // NUM_HEADS
KERNEL_SIZE = 5
PAD = 2
NEG_SLOPE = 0.01            # nn.LeakyReLU default
NUM_CLASSES = 3
GATE_PAD = 128              # each LSTM gate block padded to a 128-lane boundary
GP4 = 4 * GATE_PAD
OUT_LANES = 128             # lane-dense logits output, sliced to 3 in the wrapper
BATCH_BLOCK = 8             # sublane-aligned batch tile for the conv/LSTM stage


# ---------------------------------------------------------------------------
# Stage A: Conv1d + LeakyReLU + MaxPool1d(2) + LSTM (time-major output)
# ---------------------------------------------------------------------------
def conv_lstm_kernel(xp_ref, conv_w_ref, conv_b_ref, w_ih_ref, w_hh_ref,
                     lstm_b_ref, out_ref, gx_ref):
    """One batch block.

    xp_ref  : (BB, L + 2*PAD)  zero-padded signal block
    out_ref : (T, BB, H)       time-major LSTM hidden states
    gx_ref  : (T, BB, 4*128)   scratch: hoisted LSTM input projection
    """
    BB, Lp = xp_ref.shape
    L = Lp - 2 * PAD
    T = L // 2
    C = conv_w_ref.shape[1]
    H = LSTM_HIDDEN

    # ----- Conv1d(1, C, k=5, pad=2), computed time-major y[l, b, c] --------
    xpt = xp_ref[...].T                                   # (Lp, BB) 2-D transpose
    conv_w = conv_w_ref[...]                              # (K, C)
    y = jnp.zeros((L, BB, C), jnp.float32)
    for k in range(KERNEL_SIZE):                          # 5 static taps
        y = y + xpt[k:k + L, :, None] * conv_w[k, :][None, None, :]
    y = y + conv_b_ref[...].reshape(1, 1, C)
    y = jnp.where(y > 0, y, NEG_SLOPE * y)                # LeakyReLU
    y = y.reshape(T, 2, BB, C)
    y = jnp.maximum(y[:, 0], y[:, 1])                     # MaxPool1d(2) -> (T, BB, C)

    # ----- LSTM: hoist the input projection out of the recurrence ----------
    # One (T*BB, C) x (C, 512) matmul; only h @ w_hh stays inside the loop.
    gx = jnp.dot(y.reshape(T * BB, C), w_ih_ref[...],
                 preferred_element_type=jnp.float32) + lstm_b_ref[...]
    gx_ref[...] = gx.reshape(T, BB, GP4)

    w_hh = w_hh_ref[...]                                  # (H, 512)

    def step(t, carry):
        h, c = carry
        gates = gx_ref[t] + jnp.dot(h, w_hh,
                                    preferred_element_type=jnp.float32)
        # gate blocks start at 0 / 128 / 256 / 384 -> lane-aligned sub-views
        i_g = jax.nn.sigmoid(gates[:, 0 * GATE_PAD:0 * GATE_PAD + H])
        f_g = jax.nn.sigmoid(gates[:, 1 * GATE_PAD:1 * GATE_PAD + H])
        g_g = jnp.tanh(gates[:, 2 * GATE_PAD:2 * GATE_PAD + H])
        o_g = jax.nn.sigmoid(gates[:, 3 * GATE_PAD:3 * GATE_PAD + H])
        c = f_g * c + i_g * g_g
        h = o_g * jnp.tanh(c)
        out_ref[t] = h                                    # write hidden state
        return h, c

    h0 = jnp.zeros((BB, H), jnp.float32)
    c0 = jnp.zeros((BB, H), jnp.float32)
    jax.lax.fori_loop(0, T, step, (h0, c0), unroll=True if T <= 16 else False)


# ---------------------------------------------------------------------------
# Stage B: MHA over the batch axis (seq-first semantics) + context sum + fc
# ---------------------------------------------------------------------------
def attn_fc_kernel(lstm_ref, in_proj_w_ref, in_proj_b_ref, out_proj_w_ref,
                   out_proj_b_ref, fc_w_ref, fc_b_ref, out_ref, ctx_ref,
                   *, batch):
    """Grid runs over blocks of timesteps; the context vector is accumulated
    in a VMEM scratch across grid steps and the final Linear is applied on
    the last step (lane-dense (Bp, 128) output)."""
    j = pl.program_id(0)

    @pl.when(j == 0)
    def _():
        ctx_ref[...] = jnp.zeros_like(ctx_ref)

    x = lstm_ref[...]                                     # (TB, Bp, E) time-major
    TB, Bp, E = x.shape
    x2 = x.reshape(TB * Bp, E)
    qkv = jnp.dot(x2, in_proj_w_ref[...],
                  preferred_element_type=jnp.float32) + in_proj_b_ref[...]
    scale = 1.0 / math.sqrt(HEAD_DIM)

    head_out = []
    for hh in range(NUM_HEADS):                           # static head unroll
        lo = hh * HEAD_DIM
        q_h = qkv[:, 0 * E + lo:0 * E + lo + HEAD_DIM].reshape(TB, Bp, HEAD_DIM)
        k_h = qkv[:, 1 * E + lo:1 * E + lo + HEAD_DIM].reshape(TB, Bp, HEAD_DIM)
        v_h = qkv[:, 2 * E + lo:2 * E + lo + HEAD_DIM].reshape(TB, Bp, HEAD_DIM)
        # scores over the batch (key) axis, batched over time -> MXU matmuls
        s = jnp.einsum('tqd,tkd->tqk', q_h, k_h,
                       preferred_element_type=jnp.float32) * scale
        if batch < Bp:                                    # mask padded key rows
            kidx = jax.lax.broadcasted_iota(jnp.int32, s.shape, 2)
            s = jnp.where(kidx < batch, s, -1e30)
        s = s - jnp.max(s, axis=-1, keepdims=True)
        p = jnp.exp(s)
        p = p * pl.reciprocal(jnp.sum(p, axis=-1, keepdims=True), approx=True)
        head_out.append(jnp.einsum('tqk,tkd->tqd', p, v_h,
                                   preferred_element_type=jnp.float32))

    attn = jnp.concatenate(head_out, axis=-1)             # (TB, Bp, E)
    attn = jnp.dot(attn.reshape(TB * Bp, E), out_proj_w_ref[...],
                   preferred_element_type=jnp.float32) + out_proj_b_ref[...]
    # partial context sum (over this block of timesteps)
    ctx_ref[...] += jnp.sum(attn.reshape(TB, Bp, E), axis=0)

    @pl.when(j == pl.num_programs(0) - 1)
    def _():
        out_ref[...] = (jnp.dot(ctx_ref[...], fc_w_ref[...],
                                preferred_element_type=jnp.float32)
                        + fc_b_ref[...])


# ---------------------------------------------------------------------------
# Parameters / wrapper
# ---------------------------------------------------------------------------
def init_params(key):
    ks = jax.random.split(key, 12)

    def u(k, shape, bound):
        return jax.random.uniform(k, shape, jnp.float32, -bound, bound)

    C, H, E = CNN_CHANNELS, LSTM_HIDDEN, LSTM_HIDDEN
    return {
        "conv_w": u(ks[0], (C, 1, KERNEL_SIZE), 1.0 / jnp.sqrt(KERNEL_SIZE)),
        "conv_b": u(ks[1], (C,), 1.0 / jnp.sqrt(KERNEL_SIZE)),
        "w_ih":   u(ks[2], (4 * H, C), 1.0 / jnp.sqrt(H)),
        "w_hh":   u(ks[3], (4 * H, H), 1.0 / jnp.sqrt(H)),
        "b_ih":   u(ks[4], (4 * H,), 1.0 / jnp.sqrt(H)),
        "b_hh":   u(ks[5], (4 * H,), 1.0 / jnp.sqrt(H)),
        "in_proj_w":  u(ks[6], (3 * E, E), 1.0 / jnp.sqrt(E)),
        "in_proj_b":  u(ks[7], (3 * E,), 0.1),
        "out_proj_w": u(ks[8], (E, E), 1.0 / jnp.sqrt(E)),
        "out_proj_b": u(ks[9], (E,), 0.1),
        "fc_w":   u(ks[10], (NUM_CLASSES, E), 1.0 / jnp.sqrt(E)),
        "fc_b":   u(ks[11], (NUM_CLASSES,), 1.0 / jnp.sqrt(E)),
    }


def _pad_gate_cols(w):
    """Pad each of the 4 LSTM gate column blocks (width H) out to 128 lanes."""
    H = LSTM_HIDDEN
    pads = [(0, 0)] * (w.ndim - 1) + [(0, GATE_PAD - H)]
    blocks = [jnp.pad(w[..., g * H:(g + 1) * H], pads) for g in range(4)]
    return jnp.concatenate(blocks, axis=-1)


def hybrid_cnn_lstm(x, params):
    """x: (B, L) float32 raw signal -> (B, 3) logits."""
    B, L = x.shape
    assert L % 2 == 0, "MaxPool1d(2) expects an even length here"
    T = L // 2
    C, H, E = CNN_CHANNELS, LSTM_HIDDEN, LSTM_HIDDEN

    # --- glue: pad batch to a sublane multiple, zero-pad signal for conv ---
    BB = BATCH_BLOCK
    Bp = ((B + BB - 1) // BB) * BB
    Lp = L + 2 * PAD
    xp = jnp.pad(x, ((0, Bp - B), (PAD, PAD)))            # (Bp, Lp)

    # --- glue: pre-transpose / pad parameters for the kernels --------------
    conv_w = jnp.transpose(params["conv_w"][:, 0, :])     # (K, C)
    conv_b = params["conv_b"][None, :]                    # (1, C)
    w_ih = _pad_gate_cols(jnp.transpose(params["w_ih"]))  # (C, 512)
    w_hh = _pad_gate_cols(jnp.transpose(params["w_hh"]))  # (H, 512)
    lstm_b = _pad_gate_cols((params["b_ih"] + params["b_hh"])[None, :])  # (1, 512)
    in_proj_w = jnp.transpose(params["in_proj_w"])        # (E, 3E)
    in_proj_b = params["in_proj_b"][None, :]              # (1, 3E)
    out_proj_w = jnp.transpose(params["out_proj_w"])      # (E, E)
    out_proj_b = params["out_proj_b"][None, :]            # (1, E)
    fc_w = jnp.zeros((E, OUT_LANES), jnp.float32).at[:, :NUM_CLASSES].set(
        jnp.transpose(params["fc_w"]))                    # (E, 128) lane-dense
    fc_b = jnp.zeros((1, OUT_LANES), jnp.float32).at[0, :NUM_CLASSES].set(
        params["fc_b"])                                   # (1, 128)

    # --- stage A: conv + pool + LSTM, gridded over batch blocks ------------
    lstm_out = pl.pallas_call(
        conv_lstm_kernel,
        out_shape=jax.ShapeDtypeStruct((T, Bp, H), jnp.float32),
        grid_spec=pltpu.PrefetchScalarGridSpec(
            num_scalar_prefetch=0,
            grid=(Bp // BB,),
            in_specs=[
                pl.BlockSpec((BB, Lp), lambda i: (i, 0)),
                pl.BlockSpec((KERNEL_SIZE, C), lambda i: (0, 0)),
                pl.BlockSpec((1, C), lambda i: (0, 0)),
                pl.BlockSpec((C, GP4), lambda i: (0, 0)),
                pl.BlockSpec((H, GP4), lambda i: (0, 0)),
                pl.BlockSpec((1, GP4), lambda i: (0, 0)),
            ],
            out_specs=pl.BlockSpec((T, BB, H), lambda i: (0, i, 0)),
            scratch_shapes=[pltpu.VMEM((T, BB, GP4), jnp.float32)],
        ),
        compiler_params=pltpu.CompilerParams(
            dimension_semantics=("parallel",),            # batch blocks -> both TCs
            vmem_limit_bytes=32 * 1024 * 1024),
    )(xp, conv_w, conv_b, w_ih, w_hh, lstm_b)

    # --- stage B: attention over batch axis + context sum + fc -------------
    TB = T // 2 if (T % 2 == 0 and T > 1) else T          # time block (divides T)
    grid_b = T // TB

    logits_p = pl.pallas_call(
        functools.partial(attn_fc_kernel, batch=B),
        out_shape=jax.ShapeDtypeStruct((Bp, OUT_LANES), jnp.float32),
        grid_spec=pltpu.PrefetchScalarGridSpec(
            num_scalar_prefetch=0,
            grid=(grid_b,),
            in_specs=[
                pl.BlockSpec((TB, Bp, E), lambda j: (j, 0, 0)),
                pl.BlockSpec((E, 3 * E), lambda j: (0, 0)),
                pl.BlockSpec((1, 3 * E), lambda j: (0, 0)),
                pl.BlockSpec((E, E), lambda j: (0, 0)),
                pl.BlockSpec((1, E), lambda j: (0, 0)),
                pl.BlockSpec((E, OUT_LANES), lambda j: (0, 0)),
                pl.BlockSpec((1, OUT_LANES), lambda j: (0, 0)),
            ],
            out_specs=pl.BlockSpec((Bp, OUT_LANES), lambda j: (0, 0)),
            scratch_shapes=[pltpu.VMEM((Bp, E), jnp.float32)],
        ),
        compiler_params=pltpu.CompilerParams(
            dimension_semantics=("arbitrary",),           # context accumulates over T
            vmem_limit_bytes=32 * 1024 * 1024),
    )(lstm_out, in_proj_w, in_proj_b, out_proj_w, out_proj_b, fc_w, fc_b)

    return logits_p[:B, :NUM_CLASSES]


if __name__ == "__main__":
    key = jax.random.PRNGKey(0)
    kx, kp = jax.random.split(key)
    B, L = 2, 16                                          # x: (batch=2, seq_len=16)
    x = jax.random.normal(kx, (B, L), jnp.float32)
    params = init_params(kp)

    out = jax.jit(hybrid_cnn_lstm)(x, params)
    out = jax.block_until_ready(out)

    assert out.shape == (B, NUM_CLASSES), out.shape
    assert bool(jnp.all(jnp.isfinite(out)))
    print("KERNEL_OK")
</pallas_src>

<mosaic_0001>
module attributes {stable_mosaic.version = 11 : i64} {
  func.func @conv_lstm_kernel(%arg0: i32, %arg1: memref<8x20xf32, #tpu.memory_space<vmem>>, %arg2: memref<5x32xf32, #tpu.memory_space<vmem>>, %arg3: memref<1x32xf32, #tpu.memory_space<vmem>>, %arg4: memref<32x512xf32, #tpu.memory_space<vmem>>, %arg5: memref<64x512xf32, #tpu.memory_space<vmem>>, %arg6: memref<1x512xf32, #tpu.memory_space<vmem>>, %arg7: memref<8x8x64xf32, #tpu.memory_space<vmem>>, %arg8: memref<8x8x512xf32, #tpu.memory_space<vmem>>) attributes {dimension_semantics = [#tpu.dimension_semantics<parallel>], iteration_bounds = array<i64: 1>, scalar_prefetch = 0 : i64, scratch_operands = 1 : i64, tpu.core_type = #tpu.core_type<tc>, window_params = [{transform_indices = @transform_0, window_bounds = array<i64: 8, 20>}, {pipeline_mode = #tpu.pipeline_mode<synchronous>, transform_indices = @transform_1, window_bounds = array<i64: 5, 32>}, {pipeline_mode = #tpu.pipeline_mode<synchronous>, transform_indices = @transform_2, window_bounds = array<i64: 1, 32>}, {pipeline_mode = #tpu.pipeline_mode<synchronous>, transform_indices = @transform_3, window_bounds = array<i64: 32, 512>}, {pipeline_mode = #tpu.pipeline_mode<synchronous>, transform_indices = @transform_4, window_bounds = array<i64: 64, 512>}, {pipeline_mode = #tpu.pipeline_mode<synchronous>, transform_indices = @transform_5, window_bounds = array<i64: 1, 512>}, {transform_indices = @transform_6, window_bounds = array<i64: 8, 8, 64>}]} {
    %c0 = arith.constant 0 : index
    %c0_0 = arith.constant 0 : index
    %0 = vector.load %arg1[%c0, %c0_0] : memref<8x20xf32, #tpu.memory_space<vmem>>, vector<8x20xf32>
    %1 = tpu.transpose %0, [1, 0] : vector<8x20xf32> -> vector<20x8xf32>
    %c0_1 = arith.constant 0 : index
    %c0_2 = arith.constant 0 : index
    %2 = vector.load %arg2[%c0_1, %c0_2] : memref<5x32xf32, #tpu.memory_space<vmem>>, vector<5x32xf32>
    %cst = arith.constant 0.000000e+00 : f32
    %3 = vector.broadcast %cst : f32 to vector<16x8x32xf32>
    %4 = vector.extract_strided_slice %1 {offsets = [0, 0], sizes = [16, 8], strides = [1, 1]} : vector<20x8xf32> to vector<16x8xf32>
    %5 = vector.shape_cast %4 : vector<16x8xf32> to vector<16x8x1xf32>
    %6 = vector.extract_strided_slice %2 {offsets = [0, 0], sizes = [1, 32], strides = [1, 1]} : vector<5x32xf32> to vector<1x32xf32>
    %7 = vector.shape_cast %6 : vector<1x32xf32> to vector<32xf32>
    %8 = vector.shape_cast %7 : vector<32xf32> to vector<1x1x32xf32>
    %9 = vector.broadcast %5 : vector<16x8x1xf32> to vector<16x8x32xf32>
    %10 = vector.broadcast %8 : vector<1x1x32xf32> to vector<16x8x32xf32>
    %11 = arith.mulf %9, %10 : vector<16x8x32xf32>
    %12 = arith.addf %3, %11 : vector<16x8x32xf32>
    %13 = vector.extract_strided_slice %1 {offsets = [1, 0], sizes = [16, 8], strides = [1, 1]} : vector<20x8xf32> to vector<16x8xf32>
    %14 = vector.shape_cast %13 : vector<16x8xf32> to vector<16x8x1xf32>
    %15 = vector.extract_strided_slice %2 {offsets = [1, 0], sizes = [1, 32], strides = [1, 1]} : vector<5x32xf32> to vector<1x32xf32>
    %16 = vector.shape_cast %15 : vector<1x32xf32> to vector<32xf32>
    %17 = vector.shape_cast %16 : vector<32xf32> to vector<1x1x32xf32>
    %18 = vector.broadcast %14 : vector<16x8x1xf32> to vector<16x8x32xf32>
    %19 = vector.broadcast %17 : vector<1x1x32xf32> to vector<16x8x32xf32>
    %20 = arith.mulf %18, %19 : vector<16x8x32xf32>
    %21 = arith.addf %12, %20 : vector<16x8x32xf32>
    %22 = vector.extract_strided_slice %1 {offsets = [2, 0], sizes = [16, 8], strides = [1, 1]} : vector<20x8xf32> to vector<16x8xf32>
    %23 = vector.shape_cast %22 : vector<16x8xf32> to vector<16x8x1xf32>
    %24 = vector.extract_strided_slice %2 {offsets = [2, 0], sizes = [1, 32], strides = [1, 1]} : vector<5x32xf32> to vector<1x32xf32>
    %25 = vector.shape_cast %24 : vector<1x32xf32> to vector<32xf32>
    %26 = vector.shape_cast %25 : vector<32xf32> to vector<1x1x32xf32>
    %27 = vector.broadcast %23 : vector<16x8x1xf32> to vector<16x8x32xf32>
    %28 = vector.broadcast %26 : vector<1x1x32xf32> to vector<16x8x32xf32>
    %29 = arith.mulf %27, %28 : vector<16x8x32xf32>
    %30 = arith.addf %21, %29 : vector<16x8x32xf32>
    %31 = vector.extract_strided_slice %1 {offsets = [3, 0], sizes = [16, 8], strides = [1, 1]} : vector<20x8xf32> to vector<16x8xf32>
    %32 = vector.shape_cast %31 : vector<16x8xf32> to vector<16x8x1xf32>
    %33 = vector.extract_strided_slice %2 {offsets = [3, 0], sizes = [1, 32], strides = [1, 1]} : vector<5x32xf32> to vector<1x32xf32>
    %34 = vector.shape_cast %33 : vector<1x32xf32> to vector<32xf32>
    %35 = vector.shape_cast %34 : vector<32xf32> to vector<1x1x32xf32>
    %36 = vector.broadcast %32 : vector<16x8x1xf32> to vector<16x8x32xf32>
    %37 = vector.broadcast %35 : vector<1x1x32xf32> to vector<16x8x32xf32>
    %38 = arith.mulf %36, %37 : vector<16x8x32xf32>
    %39 = arith.addf %30, %38 : vector<16x8x32xf32>
    %40 = vector.extract_strided_slice %1 {offsets = [4, 0], sizes = [16, 8], strides = [1, 1]} : vector<20x8xf32> to vector<16x8xf32>
    %41 = vector.shape_cast %40 : vector<16x8xf32> to vector<16x8x1xf32>
    %42 = vector.extract_strided_slice %2 {offsets = [4, 0], sizes = [1, 32], strides = [1, 1]} : vector<5x32xf32> to vector<1x32xf32>
    %43 = vector.shape_cast %42 : vector<1x32xf32> to vector<32xf32>
    %44 = vector.shape_cast %43 : vector<32xf32> to vector<1x1x32xf32>
    %45 = vector.broadcast %41 : vector<16x8x1xf32> to vector<16x8x32xf32>
    %46 = vector.broadcast %44 : vector<1x1x32xf32> to vector<16x8x32xf32>
    %47 = arith.mulf %45, %46 : vector<16x8x32xf32>
    %48 = arith.addf %39, %47 : vector<16x8x32xf32>
    %c0_3 = arith.constant 0 : index
    %c0_4 = arith.constant 0 : index
    %49 = vector.load %arg3[%c0_3, %c0_4] : memref<1x32xf32, #tpu.memory_space<vmem>>, vector<1x32xf32>
    %50 = vector.shape_cast %49 : vector<1x32xf32> to vector<1x1x32xf32>
    %51 = vector.broadcast %50 : vector<1x1x32xf32> to vector<16x8x32xf32>
    %52 = arith.addf %48, %51 : vector<16x8x32xf32>
    %cst_5 = arith.constant 0.000000e+00 : f32
    %53 = vector.broadcast %cst_5 : f32 to vector<16x8x32xf32>
    %54 = arith.cmpf ogt, %52, %53 : vector<16x8x32xf32>
    %cst_6 = arith.constant 0.00999999977 : f32
    %55 = vector.broadcast %cst_6 : f32 to vector<16x8x32xf32>
    %56 = arith.mulf %55, %52 : vector<16x8x32xf32>
    %57 = arith.select %54, %52, %56 : vector<16x8x32xi1>, vector<16x8x32xf32>
    %58 = vector.shape_cast %57 : vector<16x8x32xf32> to vector<8x2x8x32xf32>
    %59 = vector.extract_strided_slice %58 {offsets = [0, 0, 0, 0], sizes = [8, 1, 8, 32], strides = [1, 1, 1, 1]} : vector<8x2x8x32xf32> to vector<8x1x8x32xf32>
    %60 = vector.shape_cast %59 : vector<8x1x8x32xf32> to vector<8x8x32xf32>
    %61 = vector.extract_strided_slice %58 {offsets = [0, 1, 0, 0], sizes = [8, 1, 8, 32], strides = [1, 1, 1, 1]} : vector<8x2x8x32xf32> to vector<8x1x8x32xf32>
    %62 = vector.shape_cast %61 : vector<8x1x8x32xf32> to vector<8x8x32xf32>
    %63 = arith.maximumf %60, %62 : vector<8x8x32xf32>
    %64 = vector.shape_cast %63 : vector<8x8x32xf32> to vector<64x32xf32>
    %c0_7 = arith.constant 0 : index
    %c0_8 = arith.constant 0 : index
    %65 = vector.load %arg4[%c0_7, %c0_8] : memref<32x512xf32, #tpu.memory_space<vmem>>, vector<32x512xf32>
    %cst_9 = arith.constant dense<0.000000e+00> : vector<64x512xf32>
    %66 = tpu.matmul %64, %65, %cst_9 {dimension_numbers = #tpu.dot_dimension_numbers<[1], [0], [0], [1], [0, 0, 1, 1], [], []>} : vector<64x32xf32>, vector<32x512xf32>, vector<64x512xf32> -> vector<64x512xf32>
    %c0_10 = arith.constant 0 : index
    %c0_11 = arith.constant 0 : index
    %67 = vector.load %arg6[%c0_10, %c0_11] : memref<1x512xf32, #tpu.memory_space<vmem>>, vector<1x512xf32>
    %68 = vector.broadcast %67 : vector<1x512xf32> to vector<64x512xf32>
    %69 = arith.addf %66, %68 : vector<64x512xf32>
    %70 = vector.shape_cast %69 : vector<64x512xf32> to vector<8x8x512xf32>
    %c0_12 = arith.constant 0 : index
    %c0_13 = arith.constant 0 : index
    %c0_14 = arith.constant 0 : index
    %71 = vector.load %arg8[%c0_12, %c0_13, %c0_14] : memref<8x8x512xf32, #tpu.memory_space<vmem>>, vector<8x8x512xf32>
    tpu.vector_store %arg8[%c0_12, %c0_13, %c0_14], %70 {strides = array<i32>} : memref<8x8x512xf32, #tpu.memory_space<vmem>>, vector<8x8x512xf32>,
    %c0_15 = arith.constant 0 : index
    %c0_16 = arith.constant 0 : index
    %72 = vector.load %arg5[%c0_15, %c0_16] : memref<64x512xf32, #tpu.memory_space<vmem>>, vector<64x512xf32>
    %cst_17 = arith.constant 0.000000e+00 : f32
    %73 = vector.broadcast %cst_17 : f32 to vector<8x64xf32>
    %cst_18 = arith.constant 0.000000e+00 : f32
    %74 = vector.broadcast %cst_18 : f32 to vector<8x64xf32>
    %c0_i32 = arith.constant 0 : i32
    %75 = arith.index_cast %c0_i32 : i32 to index
    %c0_19 = arith.constant 0 : index
    %c0_20 = arith.constant 0 : index
    %76 = vector.load %arg8[%75, %c0_19, %c0_20] : memref<8x8x512xf32, #tpu.memory_space<vmem>>, vector<1x8x512xf32>
    %77 = vector.shape_cast %76 : vector<1x8x512xf32> to vector<8x512xf32>
    %cst_21 = arith.constant dense<0.000000e+00> : vector<8x512xf32>
    %78 = tpu.matmul %73, %72, %cst_21 {dimension_numbers = #tpu.dot_dimension_numbers<[1], [0], [0], [1], [0, 0, 1, 1], [], []>} : vector<8x64xf32>, vector<64x512xf32>, vector<8x512xf32> -> vector<8x512xf32>
    %79 = arith.addf %77, %78 : vector<8x512xf32>
    %80 = vector.extract_strided_slice %79 {offsets = [0, 0], sizes = [8, 64], strides = [1, 1]} : vector<8x512xf32> to vector<8x64xf32>
    %81 = arith.negf %80 : vector<8x64xf32>
    %82 = math.exp %81 : vector<8x64xf32>
    %cst_22 = arith.constant 1.000000e+00 : f32
    %83 = vector.broadcast %cst_22 : f32 to vector<8x64xf32>
    %84 = arith.addf %83, %82 : vector<8x64xf32>
    %85 = arith.divf %83, %84 : vector<8x64xf32>
    %86 = vector.extract_strided_slice %79 {offsets = [0, 128], sizes = [8, 64], strides = [1, 1]} : vector<8x512xf32> to vector<8x64xf32>
    %87 = arith.negf %86 : vector<8x64xf32>
    %88 = math.exp %87 : vector<8x64xf32>
    %cst_23 = arith.constant 1.000000e+00 : f32
    %89 = vector.broadcast %cst_23 : f32 to vector<8x64xf32>
    %90 = arith.addf %89, %88 : vector<8x64xf32>
    %91 = arith.divf %89, %90 : vector<8x64xf32>
    %92 = vector.extract_strided_slice %79 {offsets = [0, 256], sizes = [8, 64], strides = [1, 1]} : vector<8x512xf32> to vector<8x64xf32>
    %93 = math.tanh %92 : vector<8x64xf32>
    %94 = vector.extract_strided_slice %79 {offsets = [0, 384], sizes = [8, 64], strides = [1, 1]} : vector<8x512xf32> to vector<8x64xf32>
    %95 = arith.negf %94 : vector<8x64xf32>
    %96 = math.exp %95 : vector<8x64xf32>
    %cst_24 = arith.constant 1.000000e+00 : f32
    %97 = vector.broadcast %cst_24 : f32 to vector<8x64xf32>
    %98 = arith.addf %97, %96 : vector<8x64xf32>
    %99 = arith.divf %97, %98 : vector<8x64xf32>
    %100 = arith.mulf %91, %74 : vector<8x64xf32>
    %101 = arith.mulf %85, %93 : vector<8x64xf32>
    %102 = arith.addf %100, %101 : vector<8x64xf32>
    %103 = math.tanh %102 : vector<8x64xf32>
    %104 = arith.mulf %99, %103 : vector<8x64xf32>
    %105 = arith.index_cast %c0_i32 : i32 to index
    %c0_25 = arith.constant 0 : index
    %c0_26 = arith.constant 0 : index
    %106 = vector.load %arg7[%105, %c0_25, %c0_26] : memref<8x8x64xf32, #tpu.memory_space<vmem>>, vector<1x8x64xf32>
    %107 = vector.shape_cast %106 : vector<1x8x64xf32> to vector<8x64xf32>
    %108 = vector.shape_cast %104 : vector<8x64xf32> to vector<1x8x64xf32>
    tpu.vector_store %arg7[%105, %c0_25, %c0_26], %108 {strides = array<i32>} : memref<8x8x64xf32, #tpu.memory_space<vmem>>, vector<1x8x64xf32>,
    %c1_i32 = arith.constant 1 : i32
    %109 = arith.index_cast %c1_i32 : i32 to index
    %c0_27 = arith.constant 0 : index
    %c0_28 = arith.constant 0 : index
    %110 = vector.load %arg8[%109, %c0_27, %c0_28] : memref<8x8x512xf32, #tpu.memory_space<vmem>>, vector<1x8x512xf32>
    %111 = vector.shape_cast %110 : vector<1x8x512xf32> to vector<8x512xf32>
    %cst_29 = arith.constant dense<0.000000e+00> : vector<8x512xf32>
    %112 = tpu.matmul %104, %72, %cst_29 {dimension_numbers = #tpu.dot_dimension_numbers<[1], [0], [0], [1], [0, 0, 1, 1], [], []>} : vector<8x64xf32>, vector<64x512xf32>, vector<8x512xf32> -> vector<8x512xf32>
    %113 = arith.addf %111, %112 : vector<8x512xf32>
    %114 = vector.extract_strided_slice %113 {offsets = [0, 0], sizes = [8, 64], strides = [1, 1]} : vector<8x512xf32> to vector<8x64xf32>
    %115 = arith.negf %114 : vector<8x64xf32>
    %116 = math.exp %115 : vector<8x64xf32>
    %cst_30 = arith.constant 1.000000e+00 : f32
    %117 = vector.broadcast %cst_30 : f32 to vector<8x64xf32>
    %118 = arith.addf %117, %116 : vector<8x64xf32>
    %119 = arith.divf %117, %118 : vector<8x64xf32>
    %120 = vector.extract_strided_slice %113 {offsets = [0, 128], sizes = [8, 64], strides = [1, 1]} : vector<8x512xf32> to vector<8x64xf32>
    %121 = arith.negf %120 : vector<8x64xf32>
    %122 = math.exp %121 : vector<8x64xf32>
    %cst_31 = arith.constant 1.000000e+00 : f32
    %123 = vector.broadcast %cst_31 : f32 to vector<8x64xf32>
    %124 = arith.addf %123, %122 : vector<8x64xf32>
    %125 = arith.divf %123, %124 : vector<8x64xf32>
    %126 = vector.extract_strided_slice %113 {offsets = [0, 256], sizes = [8, 64], strides = [1, 1]} : vector<8x512xf32> to vector<8x64xf32>
    %127 = math.tanh %126 : vector<8x64xf32>
    %128 = vector.extract_strided_slice %113 {offsets = [0, 384], sizes = [8, 64], strides = [1, 1]} : vector<8x512xf32> to vector<8x64xf32>
    %129 = arith.negf %128 : vector<8x64xf32>
    %130 = math.exp %129 : vector<8x64xf32>
    %cst_32 = arith.constant 1.000000e+00 : f32
    %131 = vector.broadcast %cst_32 : f32 to vector<8x64xf32>
    %132 = arith.addf %131, %130 : vector<8x64xf32>
    %133 = arith.divf %131, %132 : vector<8x64xf32>
    %134 = arith.mulf %125, %102 : vector<8x64xf32>
    %135 = arith.mulf %119, %127 : vector<8x64xf32>
    %136 = arith.addf %134, %135 : vector<8x64xf32>
    %137 = math.tanh %136 : vector<8x64xf32>
    %138 = arith.mulf %133, %137 : vector<8x64xf32>
    %139 = arith.index_cast %c1_i32 : i32 to index
    %c0_33 = arith.constant 0 : index
    %c0_34 = arith.constant 0 : index
    %140 = vector.load %arg7[%139, %c0_33, %c0_34] : memref<8x8x64xf32, #tpu.memory_space<vmem>>, vector<1x8x64xf32>
    %141 = vector.shape_cast %140 : vector<1x8x64xf32> to vector<8x64xf32>
    %142 = vector.shape_cast %138 : vector<8x64xf32> to vector<1x8x64xf32>
    tpu.vector_store %arg7[%139, %c0_33, %c0_34], %142 {strides = array<i32>} : memref<8x8x64xf32, #tpu.memory_space<vmem>>, vector<1x8x64xf32>,
    %c2_i32 = arith.constant 2 : i32
    %143 = arith.index_cast %c2_i32 : i32 to index
    %c0_35 = arith.constant 0 : index
    %c0_36 = arith.constant 0 : index
    %144 = vector.load %arg8[%143, %c0_35, %c0_36] : memref<8x8x512xf32, #tpu.memory_space<vmem>>, vector<1x8x512xf32>
    %145 = vector.shape_cast %144 : vector<1x8x512xf32> to vector<8x512xf32>
    %cst_37 = arith.constant dense<0.000000e+00> : vector<8x512xf32>
    %146 = tpu.matmul %138, %72, %cst_37 {dimension_numbers = #tpu.dot_dimension_numbers<[1], [0], [0], [1], [0, 0, 1, 1], [], []>} : vector<8x64xf32>, vector<64x512xf32>, vector<8x512xf32> -> vector<8x512xf32>
    %147 = arith.addf %145, %146 : vector<8x512xf32>
    %148 = vector.extract_strided_slice %147 {offsets = [0, 0], sizes = [8, 64], strides = [1, 1]} : vector<8x512xf32> to vector<8x64xf32>
    %149 = arith.negf %148 : vector<8x64xf32>
    %150 = math.exp %149 : vector<8x64xf32>
    %cst_38 = arith.constant 1.000000e+00 : f32
    %151 = vector.broadcast %cst_38 : f32 to vector<8x64xf32>
    %152 = arith.addf %151, %150 : vector<8x64xf32>
    %153 = arith.divf %151, %152 : vector<8x64xf32>
    %154 = vector.extract_strided_slice %147 {offsets = [0, 128], sizes = [8, 64], strides = [1, 1]} : vector<8x512xf32> to vector<8x64xf32>
    %155 = arith.negf %154 : vector<8x64xf32>
    %156 = math.exp %155 : vector<8x64xf32>
    %cst_39 = arith.constant 1.000000e+00 : f32
    %157 = vector.broadcast %cst_39 : f32 to vector<8x64xf32>
    %158 = arith.addf %157, %156 : vector<8x64xf32>
    %159 = arith.divf %157, %158 : vector<8x64xf32>
    %160 = vector.extract_strided_slice %147 {offsets = [0, 256], sizes = [8, 64], strides = [1, 1]} : vector<8x512xf32> to vector<8x64xf32>
    %161 = math.tanh %160 : vector<8x64xf32>
    %162 = vector.extract_strided_slice %147 {offsets = [0, 384], sizes = [8, 64], strides = [1, 1]} : vector<8x512xf32> to vector<8x64xf32>
    %163 = arith.negf %162 : vector<8x64xf32>
    %164 = math.exp %163 : vector<8x64xf32>
    %cst_40 = arith.constant 1.000000e+00 : f32
    %165 = vector.broadcast %cst_40 : f32 to vector<8x64xf32>
    %166 = arith.addf %165, %164 : vector<8x64xf32>
    %167 = arith.divf %165, %166 : vector<8x64xf32>
    %168 = arith.mulf %159, %136 : vector<8x64xf32>
    %169 = arith.mulf %153, %161 : vector<8x64xf32>
    %170 = arith.addf %168, %169 : vector<8x64xf32>
    %171 = math.tanh %170 : vector<8x64xf32>
    %172 = arith.mulf %167, %171 : vector<8x64xf32>
    %173 = arith.index_cast %c2_i32 : i32 to index
    %c0_41 = arith.constant 0 : index
    %c0_42 = arith.constant 0 : index
    %174 = vector.load %arg7[%173, %c0_41, %c0_42] : memref<8x8x64xf32, #tpu.memory_space<vmem>>, vector<1x8x64xf32>
    %175 = vector.shape_cast %174 : vector<1x8x64xf32> to vector<8x64xf32>
    %176 = vector.shape_cast %172 : vector<8x64xf32> to vector<1x8x64xf32>
    tpu.vector_store %arg7[%173, %c0_41, %c0_42], %176 {strides = array<i32>} : memref<8x8x64xf32, #tpu.memory_space<vmem>>, vector<1x8x64xf32>,
    %c3_i32 = arith.constant 3 : i32
    %177 = arith.index_cast %c3_i32 : i32 to index
    %c0_43 = arith.constant 0 : index
    %c0_44 = arith.constant 0 : index
    %178 = vector.load %arg8[%177, %c0_43, %c0_44] : memref<8x8x512xf32, #tpu.memory_space<vmem>>, vector<1x8x512xf32>
    %179 = vector.shape_cast %178 : vector<1x8x512xf32> to vector<8x512xf32>
    %cst_45 = arith.constant dense<0.000000e+00> : vector<8x512xf32>
    %180 = tpu.matmul %172, %72, %cst_45 {dimension_numbers = #tpu.dot_dimension_numbers<[1], [0], [0], [1], [0, 0, 1, 1], [], []>} : vector<8x64xf32>, vector<64x512xf32>, vector<8x512xf32> -> vector<8x512xf32>
    %181 = arith.addf %179, %180 : vector<8x512xf32>
    %182 = vector.extract_strided_slice %181 {offsets = [0, 0], sizes = [8, 64], strides = [1, 1]} : vector<8x512xf32> to vector<8x64xf32>
    %183 = arith.negf %182 : vector<8x64xf32>
    %184 = math.exp %183 : vector<8x64xf32>
    %cst_46 = arith.constant 1.000000e+00 : f32
    %185 = vector.broadcast %cst_46 : f32 to vector<8x64xf32>
    %186 = arith.addf %185, %184 : vector<8x64xf32>
    %187 = arith.divf %185, %186 : vector<8x64xf32>
    %188 = vector.extract_strided_slice %181 {offsets = [0, 128], sizes = [8, 64], strides = [1, 1]} : vector<8x512xf32> to vector<8x64xf32>
    %189 = arith.negf %188 : vector<8x64xf32>
    %190 = math.exp %189 : vector<8x64xf32>
    %cst_47 = arith.constant 1.000000e+00 : f32
    %191 = vector.broadcast %cst_47 : f32 to vector<8x64xf32>
    %192 = arith.addf %191, %190 : vector<8x64xf32>
    %193 = arith.divf %191, %192 : vector<8x64xf32>
    %194 = vector.extract_strided_slice %181 {offsets = [0, 256], sizes = [8, 64], strides = [1, 1]} : vector<8x512xf32> to vector<8x64xf32>
    %195 = math.tanh %194 : vector<8x64xf32>
    %196 = vector.extract_strided_slice %181 {offsets = [0, 384], sizes = [8, 64], strides = [1, 1]} : vector<8x512xf32> to vector<8x64xf32>
    %197 = arith.negf %196 : vector<8x64xf32>
    %198 = math.exp %197 : vector<8x64xf32>
    %cst_48 = arith.constant 1.000000e+00 : f32
    %199 = vector.broadcast %cst_48 : f32 to vector<8x64xf32>
    %200 = arith.addf %199, %198 : vector<8x64xf32>
    %201 = arith.divf %199, %200 : vector<8x64xf32>
    %202 = arith.mulf %193, %170 : vector<8x64xf32>
    %203 = arith.mulf %187, %195 : vector<8x64xf32>
    %204 = arith.addf %202, %203 : vector<8x64xf32>
    %205 = math.tanh %204 : vector<8x64xf32>
    %206 = arith.mulf %201, %205 : vector<8x64xf32>
    %207 = arith.index_cast %c3_i32 : i32 to index
    %c0_49 = arith.constant 0 : index
    %c0_50 = arith.constant 0 : index
    %208 = vector.load %arg7[%207, %c0_49, %c0_50] : memref<8x8x64xf32, #tpu.memory_space<vmem>>, vector<1x8x64xf32>
    %209 = vector.shape_cast %208 : vector<1x8x64xf32> to vector<8x64xf32>
    %210 = vector.shape_cast %206 : vector<8x64xf32> to vector<1x8x64xf32>
    tpu.vector_store %arg7[%207, %c0_49, %c0_50], %210 {strides = array<i32>} : memref<8x8x64xf32, #tpu.memory_space<vmem>>, vector<1x8x64xf32>,
    %c4_i32 = arith.constant 4 : i32
    %211 = arith.index_cast %c4_i32 : i32 to index
    %c0_51 = arith.constant 0 : index
    %c0_52 = arith.constant 0 : index
    %212 = vector.load %arg8[%211, %c0_51, %c0_52] : memref<8x8x512xf32, #tpu.memory_space<vmem>>, vector<1x8x512xf32>
    %213 = vector.shape_cast %212 : vector<1x8x512xf32> to vector<8x512xf32>
    %cst_53 = arith.constant dense<0.000000e+00> : vector<8x512xf32>
    %214 = tpu.matmul %206, %72, %cst_53 {dimension_numbers = #tpu.dot_dimension_numbers<[1], [0], [0], [1], [0, 0, 1, 1], [], []>} : vector<8x64xf32>, vector<64x512xf32>, vector<8x512xf32> -> vector<8x512xf32>
    %215 = arith.addf %213, %214 : vector<8x512xf32>
    %216 = vector.extract_strided_slice %215 {offsets = [0, 0], sizes = [8, 64], strides = [1, 1]} : vector<8x512xf32> to vector<8x64xf32>
    %217 = arith.negf %216 : vector<8x64xf32>
    %218 = math.exp %217 : vector<8x64xf32>
    %cst_54 = arith.constant 1.000000e+00 : f32
    %219 = vector.broadcast %cst_54 : f32 to vector<8x64xf32>
    %220 = arith.addf %219, %218 : vector<8x64xf32>
    %221 = arith.divf %219, %220 : vector<8x64xf32>
    %222 = vector.extract_strided_slice %215 {offsets = [0, 128], sizes = [8, 64], strides = [1, 1]} : vector<8x512xf32> to vector<8x64xf32>
    %223 = arith.negf %222 : vector<8x64xf32>
    %224 = math.exp %223 : vector<8x64xf32>
    %cst_55 = arith.constant 1.000000e+00 : f32
    %225 = vector.broadcast %cst_55 : f32 to vector<8x64xf32>
    %226 = arith.addf %225, %224 : vector<8x64xf32>
    %227 = arith.divf %225, %226 : vector<8x64xf32>
    %228 = vector.extract_strided_slice %215 {offsets = [0, 256], sizes = [8, 64], strides = [1, 1]} : vector<8x512xf32> to vector<8x64xf32>
    %229 = math.tanh %228 : vector<8x64xf32>
    %230 = vector.extract_strided_slice %215 {offsets = [0, 384], sizes = [8, 64], strides = [1, 1]} : vector<8x512xf32> to vector<8x64xf32>
    %231 = arith.negf %230 : vector<8x64xf32>
    %232 = math.exp %231 : vector<8x64xf32>
    %cst_56 = arith.constant 1.000000e+00 : f32
    %233 = vector.broadcast %cst_56 : f32 to vector<8x64xf32>
    %234 = arith.addf %233, %232 : vector<8x64xf32>
    %235 = arith.divf %233, %234 : vector<8x64xf32>
    %236 = arith.mulf %227, %204 : vector<8x64xf32>
    %237 = arith.mulf %221, %229 : vector<8x64xf32>
    %238 = arith.addf %236, %237 : vector<8x64xf32>
    %239 = math.tanh %238 : vector<8x64xf32>
    %240 = arith.mulf %235, %239 : vector<8x64xf32>
    %241 = arith.index_cast %c4_i32 : i32 to index
    %c0_57 = arith.constant 0 : index
    %c0_58 = arith.constant 0 : index
    %242 = vector.load %arg7[%241, %c0_57, %c0_58] : memref<8x8x64xf32, #tpu.memory_space<vmem>>, vector<1x8x64xf32>
    %243 = vector.shape_cast %242 : vector<1x8x64xf32> to vector<8x64xf32>
    %244 = vector.shape_cast %240 : vector<8x64xf32> to vector<1x8x64xf32>
    tpu.vector_store %arg7[%241, %c0_57, %c0_58], %244 {strides = array<i32>} : memref<8x8x64xf32, #tpu.memory_space<vmem>>, vector<1x8x64xf32>,
    %c5_i32 = arith.constant 5 : i32
    %245 = arith.index_cast %c5_i32 : i32 to index
    %c0_59 = arith.constant 0 : index
    %c0_60 = arith.constant 0 : index
    %246 = vector.load %arg8[%245, %c0_59, %c0_60] : memref<8x8x512xf32, #tpu.memory_space<vmem>>, vector<1x8x512xf32>
    %247 = vector.shape_cast %246 : vector<1x8x512xf32> to vector<8x512xf32>
    %cst_61 = arith.constant dense<0.000000e+00> : vector<8x512xf32>
    %248 = tpu.matmul %240, %72, %cst_61 {dimension_numbers = #tpu.dot_dimension_numbers<[1], [0], [0], [1], [0, 0, 1, 1], [], []>} : vector<8x64xf32>, vector<64x512xf32>, vector<8x512xf32> -> vector<8x512xf32>
    %249 = arith.addf %247, %248 : vector<8x512xf32>
    %250 = vector.extract_strided_slice %249 {offsets = [0, 0], sizes = [8, 64], strides = [1, 1]} : vector<8x512xf32> to vector<8x64xf32>
    %251 = arith.negf %250 : vector<8x64xf32>
    %252 = math.exp %251 : vector<8x64xf32>
    %cst_62 = arith.constant 1.000000e+00 : f32
    %253 = vector.broadcast %cst_62 : f32 to vector<8x64xf32>
    %254 = arith.addf %253, %252 : vector<8x64xf32>
    %255 = arith.divf %253, %254 : vector<8x64xf32>
    %256 = vector.extract_strided_slice %249 {offsets = [0, 128], sizes = [8, 64], strides = [1, 1]} : vector<8x512xf32> to vector<8x64xf32>
    %257 = arith.negf %256 : vector<8x64xf32>
    %258 = math.exp %257 : vector<8x64xf32>
    %cst_63 = arith.constant 1.000000e+00 : f32
    %259 = vector.broadcast %cst_63 : f32 to vector<8x64xf32>
    %260 = arith.addf %259, %258 : vector<8x64xf32>
    %261 = arith.divf %259, %260 : vector<8x64xf32>
    %262 = vector.extract_strided_slice %249 {offsets = [0, 256], sizes = [8, 64], strides = [1, 1]} : vector<8x512xf32> to vector<8x64xf32>
    %263 = math.tanh %262 : vector<8x64xf32>
    %264 = vector.extract_strided_slice %249 {offsets = [0, 384], sizes = [8, 64], strides = [1, 1]} : vector<8x512xf32> to vector<8x64xf32>
    %265 = arith.negf %264 : vector<8x64xf32>
    %266 = math.exp %265 : vector<8x64xf32>
    %cst_64 = arith.constant 1.000000e+00 : f32
    %267 = vector.broadcast %cst_64 : f32 to vector<8x64xf32>
    %268 = arith.addf %267, %266 : vector<8x64xf32>
    %269 = arith.divf %267, %268 : vector<8x64xf32>
    %270 = arith.mulf %261, %238 : vector<8x64xf32>
    %271 = arith.mulf %255, %263 : vector<8x64xf32>
    %272 = arith.addf %270, %271 : vector<8x64xf32>
    %273 = math.tanh %272 : vector<8x64xf32>
    %274 = arith.mulf %269, %273 : vector<8x64xf32>
    %275 = arith.index_cast %c5_i32 : i32 to index
    %c0_65 = arith.constant 0 : index
    %c0_66 = arith.constant 0 : index
    %276 = vector.load %arg7[%275, %c0_65, %c0_66] : memref<8x8x64xf32, #tpu.memory_space<vmem>>, vector<1x8x64xf32>
    %277 = vector.shape_cast %276 : vector<1x8x64xf32> to vector<8x64xf32>
    %278 = vector.shape_cast %274 : vector<8x64xf32> to vector<1x8x64xf32>
    tpu.vector_store %arg7[%275, %c0_65, %c0_66], %278 {strides = array<i32>} : memref<8x8x64xf32, #tpu.memory_space<vmem>>, vector<1x8x64xf32>,
    %c6_i32 = arith.constant 6 : i32
    %279 = arith.index_cast %c6_i32 : i32 to index
    %c0_67 = arith.constant 0 : index
    %c0_68 = arith.constant 0 : index
    %280 = vector.load %arg8[%279, %c0_67, %c0_68] : memref<8x8x512xf32, #tpu.memory_space<vmem>>, vector<1x8x512xf32>
    %281 = vector.shape_cast %280 : vector<1x8x512xf32> to vector<8x512xf32>
    %cst_69 = arith.constant dense<0.000000e+00> : vector<8x512xf32>
    %282 = tpu.matmul %274, %72, %cst_69 {dimension_numbers = #tpu.dot_dimension_numbers<[1], [0], [0], [1], [0, 0, 1, 1], [], []>} : vector<8x64xf32>, vector<64x512xf32>, vector<8x512xf32> -> vector<8x512xf32>
    %283 = arith.addf %281, %282 : vector<8x512xf32>
    %284 = vector.extract_strided_slice %283 {offsets = [0, 0], sizes = [8, 64], strides = [1, 1]} : vector<8x512xf32> to vector<8x64xf32>
    %285 = arith.negf %284 : vector<8x64xf32>
    %286 = math.exp %285 : vector<8x64xf32>
    %cst_70 = arith.constant 1.000000e+00 : f32
    %287 = vector.broadcast %cst_70 : f32 to vector<8x64xf32>
    %288 = arith.addf %287, %286 : vector<8x64xf32>
    %289 = arith.divf %287, %288 : vector<8x64xf32>
    %290 = vector.extract_strided_slice %283 {offsets = [0, 128], sizes = [8, 64], strides = [1, 1]} : vector<8x512xf32> to vector<8x64xf32>
    %291 = arith.negf %290 : vector<8x64xf32>
    %292 = math.exp %291 : vector<8x64xf32>
    %cst_71 = arith.constant 1.000000e+00 : f32
    %293 = vector.broadcast %cst_71 : f32 to vector<8x64xf32>
    %294 = arith.addf %293, %292 : vector<8x64xf32>
    %295 = arith.divf %293, %294 : vector<8x64xf32>
    %296 = vector.extract_strided_slice %283 {offsets = [0, 256], sizes = [8, 64], strides = [1, 1]} : vector<8x512xf32> to vector<8x64xf32>
    %297 = math.tanh %296 : vector<8x64xf32>
    %298 = vector.extract_strided_slice %283 {offsets = [0, 384], sizes = [8, 64], strides = [1, 1]} : vector<8x512xf32> to vector<8x64xf32>
    %299 = arith.negf %298 : vector<8x64xf32>
    %300 = math.exp %299 : vector<8x64xf32>
    %cst_72 = arith.constant 1.000000e+00 : f32
    %301 = vector.broadcast %cst_72 : f32 to vector<8x64xf32>
    %302 = arith.addf %301, %300 : vector<8x64xf32>
    %303 = arith.divf %301, %302 : vector<8x64xf32>
    %304 = arith.mulf %295, %272 : vector<8x64xf32>
    %305 = arith.mulf %289, %297 : vector<8x64xf32>
    %306 = arith.addf %304, %305 : vector<8x64xf32>
    %307 = math.tanh %306 : vector<8x64xf32>
    %308 = arith.mulf %303, %307 : vector<8x64xf32>
    %309 = arith.index_cast %c6_i32 : i32 to index
    %c0_73 = arith.constant 0 : index
    %c0_74 = arith.constant 0 : index
    %310 = vector.load %arg7[%309, %c0_73, %c0_74] : memref<8x8x64xf32, #tpu.memory_space<vmem>>, vector<1x8x64xf32>
    %311 = vector.shape_cast %310 : vector<1x8x64xf32> to vector<8x64xf32>
    %312 = vector.shape_cast %308 : vector<8x64xf32> to vector<1x8x64xf32>
    tpu.vector_store %arg7[%309, %c0_73, %c0_74], %312 {strides = array<i32>} : memref<8x8x64xf32, #tpu.memory_space<vmem>>, vector<1x8x64xf32>,
    %c7_i32 = arith.constant 7 : i32
    %313 = arith.index_cast %c7_i32 : i32 to index
    %c0_75 = arith.constant 0 : index
    %c0_76 = arith.constant 0 : index
    %314 = vector.load %arg8[%313, %c0_75, %c0_76] : memref<8x8x512xf32, #tpu.memory_space<vmem>>, vector<1x8x512xf32>
    %315 = vector.shape_cast %314 : vector<1x8x512xf32> to vector<8x512xf32>
    %cst_77 = arith.constant dense<0.000000e+00> : vector<8x512xf32>
    %316 = tpu.matmul %308, %72, %cst_77 {dimension_numbers = #tpu.dot_dimension_numbers<[1], [0], [0], [1], [0, 0, 1, 1], [], []>} : vector<8x64xf32>, vector<64x512xf32>, vector<8x512xf32> -> vector<8x512xf32>
    %317 = arith.addf %315, %316 : vector<8x512xf32>
    %318 = vector.extract_strided_slice %317 {offsets = [0, 0], sizes = [8, 64], strides = [1, 1]} : vector<8x512xf32> to vector<8x64xf32>
    %319 = arith.negf %318 : vector<8x64xf32>
    %320 = math.exp %319 : vector<8x64xf32>
    %cst_78 = arith.constant 1.000000e+00 : f32
    %321 = vector.broadcast %cst_78 : f32 to vector<8x64xf32>
    %322 = arith.addf %321, %320 : vector<8x64xf32>
    %323 = arith.divf %321, %322 : vector<8x64xf32>
    %324 = vector.extract_strided_slice %317 {offsets = [0, 128], sizes = [8, 64], strides = [1, 1]} : vector<8x512xf32> to vector<8x64xf32>
    %325 = arith.negf %324 : vector<8x64xf32>
    %326 = math.exp %325 : vector<8x64xf32>
    %cst_79 = arith.constant 1.000000e+00 : f32
    %327 = vector.broadcast %cst_79 : f32 to vector<8x64xf32>
    %328 = arith.addf %327, %326 : vector<8x64xf32>
    %329 = arith.divf %327, %328 : vector<8x64xf32>
    %330 = vector.extract_strided_slice %317 {offsets = [0, 256], sizes = [8, 64], strides = [1, 1]} : vector<8x512xf32> to vector<8x64xf32>
    %331 = math.tanh %330 : vector<8x64xf32>
    %332 = vector.extract_strided_slice %317 {offsets = [0, 384], sizes = [8, 64], strides = [1, 1]} : vector<8x512xf32> to vector<8x64xf32>
    %333 = arith.negf %332 : vector<8x64xf32>
    %334 = math.exp %333 : vector<8x64xf32>
    %cst_80 = arith.constant 1.000000e+00 : f32
    %335 = vector.broadcast %cst_80 : f32 to vector<8x64xf32>
    %336 = arith.addf %335, %334 : vector<8x64xf32>
    %337 = arith.divf %335, %336 : vector<8x64xf32>
    %338 = arith.mulf %329, %306 : vector<8x64xf32>
    %339 = arith.mulf %323, %331 : vector<8x64xf32>
    %340 = arith.addf %338, %339 : vector<8x64xf32>
    %341 = math.tanh %340 : vector<8x64xf32>
    %342 = arith.mulf %337, %341 : vector<8x64xf32>
    %343 = arith.index_cast %c7_i32 : i32 to index
    %c0_81 = arith.constant 0 : index
    %c0_82 = arith.constant 0 : index
    %344 = vector.load %arg7[%343, %c0_81, %c0_82] : memref<8x8x64xf32, #tpu.memory_space<vmem>>, vector<1x8x64xf32>
    %345 = vector.shape_cast %344 : vector<1x8x64xf32> to vector<8x64xf32>
    %346 = vector.shape_cast %342 : vector<8x64xf32> to vector<1x8x64xf32>
    tpu.vector_store %arg7[%343, %c0_81, %c0_82], %346 {strides = array<i32>} : memref<8x8x64xf32, #tpu.memory_space<vmem>>, vector<1x8x64xf32>,
    %c8_i32 = arith.constant 8 : i32
    return
  }
  func.func @transform_0(%arg0: i32) -> (i32, i32) {
    %c0_i32 = arith.constant 0 : i32
    %c0_i32_0 = arith.constant 0 : i32
    return %arg0, %c0_i32 : i32, i32
  }
  func.func @transform_1(%arg0: i32) -> (i32, i32) {
    %c0_i32 = arith.constant 0 : i32
    %c0_i32_0 = arith.constant 0 : i32
    %c0_i32_1 = arith.constant 0 : i32
    return %c0_i32, %c0_i32_0 : i32, i32
  }
  func.func @transform_2(%arg0: i32) -> (i32, i32) {
    %c0_i32 = arith.constant 0 : i32
    %c0_i32_0 = arith.constant 0 : i32
    %c0_i32_1 = arith.constant 0 : i32
    return %c0_i32, %c0_i32_0 : i32, i32
  }
  func.func @transform_3(%arg0: i32) -> (i32, i32) {
    %c0_i32 = arith.constant 0 : i32
    %c0_i32_0 = arith.constant 0 : i32
    %c0_i32_1 = arith.constant 0 : i32
    return %c0_i32, %c0_i32_0 : i32, i32
  }
  func.func @transform_4(%arg0: i32) -> (i32, i32) {
    %c0_i32 = arith.constant 0 : i32
    %c0_i32_0 = arith.constant 0 : i32
    %c0_i32_1 = arith.constant 0 : i32
    return %c0_i32, %c0_i32_0 : i32, i32
  }
  func.func @transform_5(%arg0: i32) -> (i32, i32) {
    %c0_i32 = arith.constant 0 : i32
    %c0_i32_0 = arith.constant 0 : i32
    %c0_i32_1 = arith.constant 0 : i32
    return %c0_i32, %c0_i32_0 : i32, i32
  }
  func.func @transform_6(%arg0: i32) -> (i32, i32, i32) {
    %c0_i32 = arith.constant 0 : i32
    %c0_i32_0 = arith.constant 0 : i32
    %c0_i32_1 = arith.constant 0 : i32
    return %c0_i32, %arg0, %c0_i32_0 : i32, i32, i32
  }
}

module attributes {stable_mosaic.version = 11 : i64} {
  func.func @attn_fc_kernel(%arg0: i32, %arg1: memref<4x8x64xf32, #tpu.memory_space<vmem>>, %arg2: memref<64x192xf32, #tpu.memory_space<vmem>>, %arg3: memref<1x192xf32, #tpu.memory_space<vmem>>, %arg4: memref<64x64xf32, #tpu.memory_space<vmem>>, %arg5: memref<1x64xf32, #tpu.memory_space<vmem>>, %arg6: memref<64x128xf32, #tpu.memory_space<vmem>>, %arg7: memref<1x128xf32, #tpu.memory_space<vmem>>, %arg8: memref<8x128xf32, #tpu.memory_space<vmem>>, %arg9: memref<8x64xf32, #tpu.memory_space<vmem>>) attributes {dimension_semantics = [#tpu.dimension_semantics<arbitrary>], iteration_bounds = array<i64: 2>, scalar_prefetch = 0 : i64, scratch_operands = 1 : i64, tpu.core_type = #tpu.core_type<tc>, window_params = [{transform_indices = @transform_0, window_bounds = array<i64: 4, 8, 64>}, {pipeline_mode = #tpu.pipeline_mode<synchronous>, transform_indices = @transform_1, window_bounds = array<i64: 64, 192>}, {pipeline_mode = #tpu.pipeline_mode<synchronous>, transform_indices = @transform_2, window_bounds = array<i64: 1, 192>}, {pipeline_mode = #tpu.pipeline_mode<synchronous>, transform_indices = @transform_3, window_bounds = array<i64: 64, 64>}, {pipeline_mode = #tpu.pipeline_mode<synchronous>, transform_indices = @transform_4, window_bounds = array<i64: 1, 64>}, {pipeline_mode = #tpu.pipeline_mode<synchronous>, transform_indices = @transform_5, window_bounds = array<i64: 64, 128>}, {pipeline_mode = #tpu.pipeline_mode<synchronous>, transform_indices = @transform_6, window_bounds = array<i64: 1, 128>}, {pipeline_mode = #tpu.pipeline_mode<synchronous>, transform_indices = @transform_7, window_bounds = array<i64: 8, 128>}]} {
    %c0_i32 = arith.constant 0 : i32
    %0 = arith.cmpi eq, %arg0, %c0_i32 : i32
    %1 = arith.extui %0 : i1 to i32
    %c0_i32_0 = arith.constant 0 : i32
    %2 = arith.cmpi ne, %1, %c0_i32_0 : i32
    scf.if %2 {
      %cst_45 = arith.constant 0.000000e+00 : f32
      %125 = vector.broadcast %cst_45 : f32 to vector<8x64xf32>
      %c0_46 = arith.constant 0 : index
      %c0_47 = arith.constant 0 : index
      %126 = vector.load %arg9[%c0_46, %c0_47] : memref<8x64xf32, #tpu.memory_space<vmem>>, vector<8x64xf32>
      tpu.vector_store %arg9[%c0_46, %c0_47], %125 {strides = array<i32>} : memref<8x64xf32, #tpu.memory_space<vmem>>, vector<8x64xf32>,
    } else {
    }
    %c0 = arith.constant 0 : index
    %c0_1 = arith.constant 0 : index
    %c0_2 = arith.constant 0 : index
    %3 = vector.load %arg1[%c0, %c0_1, %c0_2] : memref<4x8x64xf32, #tpu.memory_space<vmem>>, vector<4x8x64xf32>
    %4 = vector.shape_cast %3 : vector<4x8x64xf32> to vector<32x64xf32>
    %c0_3 = arith.constant 0 : index
    %c0_4 = arith.constant 0 : index
    %5 = vector.load %arg2[%c0_3, %c0_4] : memref<64x192xf32, #tpu.memory_space<vmem>>, vector<64x192xf32>
    %cst = arith.constant dense<0.000000e+00> : vector<32x192xf32>
    %6 = tpu.matmul %4, %5, %cst {dimension_numbers = #tpu.dot_dimension_numbers<[1], [0], [0], [1], [0, 0, 1, 1], [], []>} : vector<32x64xf32>, vector<64x192xf32>, vector<32x192xf32> -> vector<32x192xf32>
    %c0_5 = arith.constant 0 : index
    %c0_6 = arith.constant 0 : index
    %7 = vector.load %arg3[%c0_5, %c0_6] : memref<1x192xf32, #tpu.memory_space<vmem>>, vector<1x192xf32>
    %8 = vector.broadcast %7 : vector<1x192xf32> to vector<32x192xf32>
    %9 = arith.addf %6, %8 : vector<32x192xf32>
    %10 = vector.extract_strided_slice %9 {offsets = [0, 0], sizes = [32, 16], strides = [1, 1]} : vector<32x192xf32> to vector<32x16xf32>
    %11 = vector.shape_cast %10 : vector<32x16xf32> to vector<4x8x16xf32>
    %12 = vector.extract_strided_slice %9 {offsets = [0, 64], sizes = [32, 16], strides = [1, 1]} : vector<32x192xf32> to vector<32x16xf32>
    %13 = vector.shape_cast %12 : vector<32x16xf32> to vector<4x8x16xf32>
    %14 = vector.extract_strided_slice %9 {offsets = [0, 128], sizes = [32, 16], strides = [1, 1]} : vector<32x192xf32> to vector<32x16xf32>
    %15 = vector.shape_cast %14 : vector<32x16xf32> to vector<4x8x16xf32>
    "tpu.trace_start"() <{level = 10 : i32, message = "tqd,tkd->tqk"}> : () -> ()
    %cst_7 = arith.constant dense<0.000000e+00> : vector<4x8x8xf32>
    %16 = tpu.matmul %11, %13, %cst_7 {dimension_numbers = #tpu.dot_dimension_numbers<[2], [2], [1], [1], [0, 0, 0, 1, 1, 1], [0], [0]>} : vector<4x8x16xf32>, vector<4x8x16xf32>, vector<4x8x8xf32> -> vector<4x8x8xf32>
    "tpu.trace_stop"() : () -> ()
    %cst_8 = arith.constant 2.500000e-01 : f32
    %17 = vector.broadcast %cst_8 : f32 to vector<4x8x8xf32>
    %18 = arith.mulf %16, %17 : vector<4x8x8xf32>
    %19 = tpu.iota {dimensions = array<i32: 2>} : vector<4x8x8xi32>
    %c2_i32 = arith.constant 2 : i32
    %20 = vector.broadcast %c2_i32 : i32 to vector<4x8x8xi32>
    %21 = arith.cmpi slt, %19, %20 : vector<4x8x8xi32>
    %cst_9 = arith.constant -1.000000e+30 : f32
    %22 = vector.broadcast %cst_9 : f32 to vector<4x8x8xf32>
    %23 = arith.select %21, %18, %22 : vector<4x8x8xi1>, vector<4x8x8xf32>
    %cst_10 = arith.constant dense<0xFF800000> : vector<4x8xf32>
    %24 = vector.multi_reduction <maximumf>, %23, %cst_10 [2] : vector<4x8x8xf32> to vector<4x8xf32>
    %25 = vector.shape_cast %24 : vector<4x8xf32> to vector<4x8x1xf32>
    %26 = vector.broadcast %25 : vector<4x8x1xf32> to vector<4x8x8xf32>
    %27 = arith.subf %23, %26 : vector<4x8x8xf32>
    %28 = math.exp %27 : vector<4x8x8xf32>
    %cst_11 = arith.constant dense<0.000000e+00> : vector<4x8xf32>
    %29 = vector.multi_reduction <add>, %28, %cst_11 [2] : vector<4x8x8xf32> to vector<4x8xf32>
    %30 = vector.shape_cast %29 : vector<4x8xf32> to vector<4x8x1xf32>
    %31 = tpu.reciprocal %30 {approx = true} : vector<4x8x1xf32> -> vector<4x8x1xf32>
    %32 = vector.broadcast %31 : vector<4x8x1xf32> to vector<4x8x8xf32>
    %33 = arith.mulf %28, %32 : vector<4x8x8xf32>
    "tpu.trace_start"() <{level = 10 : i32, message = "tqk,tkd->tqd"}> : () -> ()
    %cst_12 = arith.constant dense<0.000000e+00> : vector<4x8x16xf32>
    %34 = tpu.matmul %33, %15, %cst_12 {dimension_numbers = #tpu.dot_dimension_numbers<[2], [1], [1], [2], [0, 0, 0, 1, 1, 2], [0], [0]>} : vector<4x8x8xf32>, vector<4x8x16xf32>, vector<4x8x16xf32> -> vector<4x8x16xf32>
    "tpu.trace_stop"() : () -> ()
    %35 = vector.extract_strided_slice %9 {offsets = [0, 16], sizes = [32, 16], strides = [1, 1]} : vector<32x192xf32> to vector<32x16xf32>
    %36 = vector.shape_cast %35 : vector<32x16xf32> to vector<4x8x16xf32>
    %37 = vector.extract_strided_slice %9 {offsets = [0, 80], sizes = [32, 16], strides = [1, 1]} : vector<32x192xf32> to vector<32x16xf32>
    %38 = vector.shape_cast %37 : vector<32x16xf32> to vector<4x8x16xf32>
    %39 = vector.extract_strided_slice %9 {offsets = [0, 144], sizes = [32, 16], strides = [1, 1]} : vector<32x192xf32> to vector<32x16xf32>
    %40 = vector.shape_cast %39 : vector<32x16xf32> to vector<4x8x16xf32>
    "tpu.trace_start"() <{level = 10 : i32, message = "tqd,tkd->tqk"}> : () -> ()
    %cst_13 = arith.constant dense<0.000000e+00> : vector<4x8x8xf32>
    %41 = tpu.matmul %36, %38, %cst_13 {dimension_numbers = #tpu.dot_dimension_numbers<[2], [2], [1], [1], [0, 0, 0, 1, 1, 1], [0], [0]>} : vector<4x8x16xf32>, vector<4x8x16xf32>, vector<4x8x8xf32> -> vector<4x8x8xf32>
    "tpu.trace_stop"() : () -> ()
    %cst_14 = arith.constant 2.500000e-01 : f32
    %42 = vector.broadcast %cst_14 : f32 to vector<4x8x8xf32>
    %43 = arith.mulf %41, %42 : vector<4x8x8xf32>
    %44 = tpu.iota {dimensions = array<i32: 2>} : vector<4x8x8xi32>
    %c2_i32_15 = arith.constant 2 : i32
    %45 = vector.broadcast %c2_i32_15 : i32 to vector<4x8x8xi32>
    %46 = arith.cmpi slt, %44, %45 : vector<4x8x8xi32>
    %cst_16 = arith.constant -1.000000e+30 : f32
    %47 = vector.broadcast %cst_16 : f32 to vector<4x8x8xf32>
    %48 = arith.select %46, %43, %47 : vector<4x8x8xi1>, vector<4x8x8xf32>
    %cst_17 = arith.constant dense<0xFF800000> : vector<4x8xf32>
    %49 = vector.multi_reduction <maximumf>, %48, %cst_17 [2] : vector<4x8x8xf32> to vector<4x8xf32>
    %50 = vector.shape_cast %49 : vector<4x8xf32> to vector<4x8x1xf32>
    %51 = vector.broadcast %50 : vector<4x8x1xf32> to vector<4x8x8xf32>
    %52 = arith.subf %48, %51 : vector<4x8x8xf32>
    %53 = math.exp %52 : vector<4x8x8xf32>
    %cst_18 = arith.constant dense<0.000000e+00> : vector<4x8xf32>
    %54 = vector.multi_reduction <add>, %53, %cst_18 [2] : vector<4x8x8xf32> to vector<4x8xf32>
    %55 = vector.shape_cast %54 : vector<4x8xf32> to vector<4x8x1xf32>
    %56 = tpu.reciprocal %55 {approx = true} : vector<4x8x1xf32> -> vector<4x8x1xf32>
    %57 = vector.broadcast %56 : vector<4x8x1xf32> to vector<4x8x8xf32>
    %58 = arith.mulf %53, %57 : vector<4x8x8xf32>
    "tpu.trace_start"() <{level = 10 : i32, message = "tqk,tkd->tqd"}> : () -> ()
    %cst_19 = arith.constant dense<0.000000e+00> : vector<4x8x16xf32>
    %59 = tpu.matmul %58, %40, %cst_19 {dimension_numbers = #tpu.dot_dimension_numbers<[2], [1], [1], [2], [0, 0, 0, 1, 1, 2], [0], [0]>} : vector<4x8x8xf32>, vector<4x8x16xf32>, vector<4x8x16xf32> -> vector<4x8x16xf32>
    "tpu.trace_stop"() : () -> ()
    %60 = vector.extract_strided_slice %9 {offsets = [0, 32], sizes = [32, 16], strides = [1, 1]} : vector<32x192xf32> to vector<32x16xf32>
    %61 = vector.shape_cast %60 : vector<32x16xf32> to vector<4x8x16xf32>
    %62 = vector.extract_strided_slice %9 {offsets = [0, 96], sizes = [32, 16], strides = [1, 1]} : vector<32x192xf32> to vector<32x16xf32>
    %63 = vector.shape_cast %62 : vector<32x16xf32> to vector<4x8x16xf32>
    %64 = vector.extract_strided_slice %9 {offsets = [0, 160], sizes = [32, 16], strides = [1, 1]} : vector<32x192xf32> to vector<32x16xf32>
    %65 = vector.shape_cast %64 : vector<32x16xf32> to vector<4x8x16xf32>
    "tpu.trace_start"() <{level = 10 : i32, message = "tqd,tkd->tqk"}> : () -> ()
    %cst_20 = arith.constant dense<0.000000e+00> : vector<4x8x8xf32>
    %66 = tpu.matmul %61, %63, %cst_20 {dimension_numbers = #tpu.dot_dimension_numbers<[2], [2], [1], [1], [0, 0, 0, 1, 1, 1], [0], [0]>} : vector<4x8x16xf32>, vector<4x8x16xf32>, vector<4x8x8xf32> -> vector<4x8x8xf32>
    "tpu.trace_stop"() : () -> ()
    %cst_21 = arith.constant 2.500000e-01 : f32
    %67 = vector.broadcast %cst_21 : f32 to vector<4x8x8xf32>
    %68 = arith.mulf %66, %67 : vector<4x8x8xf32>
    %69 = tpu.iota {dimensions = array<i32: 2>} : vector<4x8x8xi32>
    %c2_i32_22 = arith.constant 2 : i32
    %70 = vector.broadcast %c2_i32_22 : i32 to vector<4x8x8xi32>
    %71 = arith.cmpi slt, %69, %70 : vector<4x8x8xi32>
    %cst_23 = arith.constant -1.000000e+30 : f32
    %72 = vector.broadcast %cst_23 : f32 to vector<4x8x8xf32>
    %73 = arith.select %71, %68, %72 : vector<4x8x8xi1>, vector<4x8x8xf32>
    %cst_24 = arith.constant dense<0xFF800000> : vector<4x8xf32>
    %74 = vector.multi_reduction <maximumf>, %73, %cst_24 [2] : vector<4x8x8xf32> to vector<4x8xf32>
    %75 = vector.shape_cast %74 : vector<4x8xf32> to vector<4x8x1xf32>
    %76 = vector.broadcast %75 : vector<4x8x1xf32> to vector<4x8x8xf32>
    %77 = arith.subf %73, %76 : vector<4x8x8xf32>
    %78 = math.exp %77 : vector<4x8x8xf32>
    %cst_25 = arith.constant dense<0.000000e+00> : vector<4x8xf32>
    %79 = vector.multi_reduction <add>, %78, %cst_25 [2] : vector<4x8x8xf32> to vector<4x8xf32>
    %80 = vector.shape_cast %79 : vector<4x8xf32> to vector<4x8x1xf32>
    %81 = tpu.reciprocal %80 {approx = true} : vector<4x8x1xf32> -> vector<4x8x1xf32>
    %82 = vector.broadcast %81 : vector<4x8x1xf32> to vector<4x8x8xf32>
    %83 = arith.mulf %78, %82 : vector<4x8x8xf32>
    "tpu.trace_start"() <{level = 10 : i32, message = "tqk,tkd->tqd"}> : () -> ()
    %cst_26 = arith.constant dense<0.000000e+00> : vector<4x8x16xf32>
    %84 = tpu.matmul %83, %65, %cst_26 {dimension_numbers = #tpu.dot_dimension_numbers<[2], [1], [1], [2], [0, 0, 0, 1, 1, 2], [0], [0]>} : vector<4x8x8xf32>, vector<4x8x16xf32>, vector<4x8x16xf32> -> vector<4x8x16xf32>
    "tpu.trace_stop"() : () -> ()
    %85 = vector.extract_strided_slice %9 {offsets = [0, 48], sizes = [32, 16], strides = [1, 1]} : vector<32x192xf32> to vector<32x16xf32>
    %86 = vector.shape_cast %85 : vector<32x16xf32> to vector<4x8x16xf32>
    %87 = vector.extract_strided_slice %9 {offsets = [0, 112], sizes = [32, 16], strides = [1, 1]} : vector<32x192xf32> to vector<32x16xf32>
    %88 = vector.shape_cast %87 : vector<32x16xf32> to vector<4x8x16xf32>
    %89 = vector.extract_strided_slice %9 {offsets = [0, 176], sizes = [32, 16], strides = [1, 1]} : vector<32x192xf32> to vector<32x16xf32>
    %90 = vector.shape_cast %89 : vector<32x16xf32> to vector<4x8x16xf32>
    "tpu.trace_start"() <{level = 10 : i32, message = "tqd,tkd->tqk"}> : () -> ()
    %cst_27 = arith.constant dense<0.000000e+00> : vector<4x8x8xf32>
    %91 = tpu.matmul %86, %88, %cst_27 {dimension_numbers = #tpu.dot_dimension_numbers<[2], [2], [1], [1], [0, 0, 0, 1, 1, 1], [0], [0]>} : vector<4x8x16xf32>, vector<4x8x16xf32>, vector<4x8x8xf32> -> vector<4x8x8xf32>
    "tpu.trace_stop"() : () -> ()
    %cst_28 = arith.constant 2.500000e-01 : f32
    %92 = vector.broadcast %cst_28 : f32 to vector<4x8x8xf32>
    %93 = arith.mulf %91, %92 : vector<4x8x8xf32>
    %94 = tpu.iota {dimensions = array<i32: 2>} : vector<4x8x8xi32>
    %c2_i32_29 = arith.constant 2 : i32
    %95 = vector.broadcast %c2_i32_29 : i32 to vector<4x8x8xi32>
    %96 = arith.cmpi slt, %94, %95 : vector<4x8x8xi32>
    %cst_30 = arith.constant -1.000000e+30 : f32
    %97 = vector.broadcast %cst_30 : f32 to vector<4x8x8xf32>
    %98 = arith.select %96, %93, %97 : vector<4x8x8xi1>, vector<4x8x8xf32>
    %cst_31 = arith.constant dense<0xFF800000> : vector<4x8xf32>
    %99 = vector.multi_reduction <maximumf>, %98, %cst_31 [2] : vector<4x8x8xf32> to vector<4x8xf32>
    %100 = vector.shape_cast %99 : vector<4x8xf32> to vector<4x8x1xf32>
    %101 = vector.broadcast %100 : vector<4x8x1xf32> to vector<4x8x8xf32>
    %102 = arith.subf %98, %101 : vector<4x8x8xf32>
    %103 = math.exp %102 : vector<4x8x8xf32>
    %cst_32 = arith.constant dense<0.000000e+00> : vector<4x8xf32>
    %104 = vector.multi_reduction <add>, %103, %cst_32 [2] : vector<4x8x8xf32> to vector<4x8xf32>
    %105 = vector.shape_cast %104 : vector<4x8xf32> to vector<4x8x1xf32>
    %106 = tpu.reciprocal %105 {approx = true} : vector<4x8x1xf32> -> vector<4x8x1xf32>
    %107 = vector.broadcast %106 : vector<4x8x1xf32> to vector<4x8x8xf32>
    %108 = arith.mulf %103, %107 : vector<4x8x8xf32>
    "tpu.trace_start"() <{level = 10 : i32, message = "tqk,tkd->tqd"}> : () -> ()
    %cst_33 = arith.constant dense<0.000000e+00> : vector<4x8x16xf32>
    %109 = tpu.matmul %108, %90, %cst_33 {dimension_numbers = #tpu.dot_dimension_numbers<[2], [1], [1], [2], [0, 0, 0, 1, 1, 2], [0], [0]>} : vector<4x8x8xf32>, vector<4x8x16xf32>, vector<4x8x16xf32> -> vector<4x8x16xf32>
    "tpu.trace_stop"() : () -> ()
    %110 = tpu.concatenate %34, %59, %84, %109 in 2 : vector<4x8x16xf32>, vector<4x8x16xf32>, vector<4x8x16xf32>, vector<4x8x16xf32> -> vector<4x8x64xf32>
    %111 = vector.shape_cast %110 : vector<4x8x64xf32> to vector<32x64xf32>
    %c0_34 = arith.constant 0 : index
    %c0_35 = arith.constant 0 : index
    %112 = vector.load %arg4[%c0_34, %c0_35] : memref<64x64xf32, #tpu.memory_space<vmem>>, vector<64x64xf32>
    %cst_36 = arith.constant dense<0.000000e+00> : vector<32x64xf32>
    %113 = tpu.matmul %111, %112, %cst_36 {dimension_numbers = #tpu.dot_dimension_numbers<[1], [0], [0], [1], [0, 0, 1, 1], [], []>} : vector<32x64xf32>, vector<64x64xf32>, vector<32x64xf32> -> vector<32x64xf32>
    %c0_37 = arith.constant 0 : index
    %c0_38 = arith.constant 0 : index
    %114 = vector.load %arg5[%c0_37, %c0_38] : memref<1x64xf32, #tpu.memory_space<vmem>>, vector<1x64xf32>
    %115 = vector.broadcast %114 : vector<1x64xf32> to vector<32x64xf32>
    %116 = arith.addf %113, %115 : vector<32x64xf32>
    %c0_39 = arith.constant 0 : index
    %c0_40 = arith.constant 0 : index
    %117 = vector.load %arg9[%c0_39, %c0_40] : memref<8x64xf32, #tpu.memory_space<vmem>>, vector<8x64xf32>
    %118 = vector.shape_cast %116 : vector<32x64xf32> to vector<4x8x64xf32>
    %cst_41 = arith.constant dense<0.000000e+00> : vector<8x64xf32>
    %119 = vector.multi_reduction <add>, %118, %cst_41 [0] : vector<4x8x64xf32> to vector<8x64xf32>
    %120 = arith.addf %117, %119 : vector<8x64xf32>
    %c0_42 = arith.constant 0 : index
    %c0_43 = arith.constant 0 : index
    %121 = vector.load %arg9[%c0_42, %c0_43] : memref<8x64xf32, #tpu.memory_space<vmem>>, vector<8x64xf32>
    tpu.vector_store %arg9[%c0_42, %c0_43], %120 {strides = array<i32>} : memref<8x64xf32, #tpu.memory_space<vmem>>, vector<8x64xf32>,
    %c1_i32 = arith.constant 1 : i32
    %122 = arith.cmpi eq, %arg0, %c1_i32 : i32
    %123 = arith.extui %122 : i1 to i32
    %c0_i32_44 = arith.constant 0 : i32
    %124 = arith.cmpi ne, %123, %c0_i32_44 : i32
    scf.if %124 {
      %c0_45 = arith.constant 0 : index
      %c0_46 = arith.constant 0 : index
      %125 = vector.load %arg9[%c0_45, %c0_46] : memref<8x64xf32, #tpu.memory_space<vmem>>, vector<8x64xf32>
      %c0_47 = arith.constant 0 : index
      %c0_48 = arith.constant 0 : index
      %126 = vector.load %arg6[%c0_47, %c0_48] : memref<64x128xf32, #tpu.memory_space<vmem>>, vector<64x128xf32>
      %cst_49 = arith.constant dense<0.000000e+00> : vector<8x128xf32>
      %127 = tpu.matmul %125, %126, %cst_49 {dimension_numbers = #tpu.dot_dimension_numbers<[1], [0], [0], [1], [0, 0, 1, 1], [], []>} : vector<8x64xf32>, vector<64x128xf32>, vector<8x128xf32> -> vector<8x128xf32>
      %c0_50 = arith.constant 0 : index
      %c0_51 = arith.constant 0 : index
      %128 = vector.load %arg7[%c0_50, %c0_51] : memref<1x128xf32, #tpu.memory_space<vmem>>, vector<1x128xf32>
      %129 = vector.broadcast %128 : vector<1x128xf32> to vector<8x128xf32>
      %130 = arith.addf %127, %129 : vector<8x128xf32>
      %c0_52 = arith.constant 0 : index
      %c0_53 = arith.constant 0 : index
      %131 = vector.load %arg8[%c0_52, %c0_53] : memref<8x128xf32, #tpu.memory_space<vmem>>, vector<8x128xf32>
      tpu.vector_store %arg8[%c0_52, %c0_53], %130 {strides = array<i32>} : memref<8x128xf32, #tpu.memory_space<vmem>>, vector<8x128xf32>,
    } else {
    }
    return
  }
  func.func @transform_0(%arg0: i32) -> (i32, i32, i32) {
    %c0_i32 = arith.constant 0 : i32
    %c0_i32_0 = arith.constant 0 : i32
    %c0_i32_1 = arith.constant 0 : i32
    return %arg0, %c0_i32, %c0_i32_0 : i32, i32, i32
  }
  func.func @transform_1(%arg0: i32) -> (i32, i32) {
    %c0_i32 = arith.constant 0 : i32
    %c0_i32_0 = arith.constant 0 : i32
    %c0_i32_1 = arith.constant 0 : i32
    return %c0_i32, %c0_i32_0 : i32, i32
  }
  func.func @transform_2(%arg0: i32) -> (i32, i32) {
    %c0_i32 = arith.constant 0 : i32
    %c0_i32_0 = arith.constant 0 : i32
    %c0_i32_1 = arith.constant 0 : i32
    return %c0_i32, %c0_i32_0 : i32, i32
  }
  func.func @transform_3(%arg0: i32) -> (i32, i32) {
    %c0_i32 = arith.constant 0 : i32
    %c0_i32_0 = arith.constant 0 : i32
    %c0_i32_1 = arith.constant 0 : i32
    return %c0_i32, %c0_i32_0 : i32, i32
  }
  func.func @transform_4(%arg0: i32) -> (i32, i32) {
    %c0_i32 = arith.constant 0 : i32
    %c0_i32_0 = arith.constant 0 : i32
    %c0_i32_1 = arith.constant 0 : i32
    return %c0_i32, %c0_i32_0 : i32, i32
  }
  func.func @transform_5(%arg0: i32) -> (i32, i32) {
    %c0_i32 = arith.constant 0 : i32
    %c0_i32_0 = arith.constant 0 : i32
    %c0_i32_1 = arith.constant 0 : i32
    return %c0_i32, %c0_i32_0 : i32, i32
  }
  func.func @transform_6(%arg0: i32) -> (i32, i32) {
    %c0_i32 = arith.constant 0 : i32
    %c0_i32_0 = arith.constant 0 : i32
    %c0_i32_1 = arith.constant 0 : i32
    return %c0_i32, %c0_i32_0 : i32, i32
  }
  func.func @transform_7(%arg0: i32) -> (i32, i32) {
    %c0_i32 = arith.constant 0 : i32
    %c0_i32_0 = arith.constant 0 : i32
    %c0_i32_1 = arith.constant 0 : i32
    return %c0_i32, %c0_i32_0 : i32, i32
  }
}

</mosaic_0001>

<llo_original>
// kernel: hybrid_cnn_lstm.2
$region0: #{hybrid_cnn_lstm.2}
  #allocation0 [shape = 'u32[]', space=smem, size = 0x4, offset = 0x4, fixed_abs, tag = 'smem constant byte address 0x4 - core index']
  #allocation1 [shape = 'u32[144,128]{1,0:T(1,128)}', space=vmem, size = 0x12000, scoped, tag = 'internal scratch']
  #allocation2 [shape = 'f32[8,8,512]{2,1,0:T(8,128)}', space=vmem, size = 0x20000, scoped, tag = 'scratch operand']
  %s0 = inlined_call_operand.vmem [shape: f32[8,20], index: 0, kind: input, shape index: {}]
  %s1 = inlined_call_operand.vmem [shape: f32[5,32], index: 1, kind: input, shape index: {}]
  %s2 = inlined_call_operand.vmem [shape: f32[1,32], index: 2, kind: input, shape index: {}]
  %s3 = inlined_call_operand.vmem [shape: f32[32,512], index: 3, kind: input, shape index: {}]
  %s4 = inlined_call_operand.vmem [shape: f32[64,512], index: 4, kind: input, shape index: {}]
  %s5 = inlined_call_operand.vmem [shape: f32[1,512], index: 5, kind: input, shape index: {}]
  %s6 = inlined_call_operand.vmem [shape: f32[8,8,64], index: 6, kind: output, shape index: {}]
  %s7 = sld [smem:[#allocation0]]
  $region34: #{hybrid_cnn_lstm.2} parent=0
    _
  %s9 = ssub.s32 1, %s7
  %s10 = scalar_select 0, %s9, %s7
  // Predicated region
  $region2: #{hybrid_cnn_lstm.2} parent=0 // pred_check
    _
  $region3: #{hybrid_cnn_lstm.2} parent=0 // pred_check_branch
    %12 = sbr.rel (0) target = $region5
  $region4: #{hybrid_cnn_lstm.2} parent=0 // pred_region
    _
  $region5: #{hybrid_cnn_lstm.2} parent=0 // pred_fallthru
    _
  // Predicated region
  $region6: #{hybrid_cnn_lstm.2} parent=0 // pred_check
    _
  $region7: #{hybrid_cnn_lstm.2} parent=0 // pred_check_branch
    %14 = sbr.rel (0) target = $region9
  $region8: #{hybrid_cnn_lstm.2} parent=0 // pred_region
    _
  $region9: #{hybrid_cnn_lstm.2} parent=0 // pred_fallthru
    _
  // Predicated region
  $region10: #{hybrid_cnn_lstm.2} parent=0 // pred_check
    _
  $region11: #{hybrid_cnn_lstm.2} parent=0 // pred_check_branch
    %16 = sbr.rel (0) target = $region13
  $region12: #{hybrid_cnn_lstm.2} parent=0 // pred_region
    _
  $region13: #{hybrid_cnn_lstm.2} parent=0 // pred_fallthru
    _
  // Predicated region
  $region14: #{hybrid_cnn_lstm.2} parent=0 // pred_check
    _
  $region15: #{hybrid_cnn_lstm.2} parent=0 // pred_check_branch
    %18 = sbr.rel (0) target = $region17
  $region16: #{hybrid_cnn_lstm.2} parent=0 // pred_region
    _
  $region17: #{hybrid_cnn_lstm.2} parent=0 // pred_fallthru
    _
  // Predicated region
  $region18: #{hybrid_cnn_lstm.2} parent=0 // pred_check
    _
  $region19: #{hybrid_cnn_lstm.2} parent=0 // pred_check_branch
    %20 = sbr.rel (0) target = $region21
  $region20: #{hybrid_cnn_lstm.2} parent=0 // pred_region
    _
  $region21: #{hybrid_cnn_lstm.2} parent=0 // pred_fallthru
    _
  // Predicated region
  $region22: #{hybrid_cnn_lstm.2} parent=0 // pred_check
    _
  $region23: #{hybrid_cnn_lstm.2} parent=0 // pred_check_branch
    %22 = sbr.rel (0) target = $region25
  $region24: #{hybrid_cnn_lstm.2} parent=0 // pred_region
    _
  $region25: #{hybrid_cnn_lstm.2} parent=0 // pred_fallthru
    _
  %v23 = vld [vmem:[%s0] sm:$0xff]
  %24 = vxpose.xlu0.b32.start [1/16] %v23, 128
  %25 = vxpose.xlu0.b32.cont [2/16] 0.0, 128
  %26 = vxpose.xlu0.b32.cont [3/16] 0.0, 128
  %27 = vxpose.xlu0.b32.cont [4/16] 0.0, 128
  %28 = vxpose.xlu0.b32.cont [5/16] 0.0, 128
  %29 = vxpose.xlu0.b32.cont [6/16] 0.0, 128
  %30 = vxpose.xlu0.b32.cont [7/16] 0.0, 128
  %31 = vxpose.xlu0.b32.cont [8/16] 0.0, 128
  %32 = vxpose.xlu0.b32.cont [9/16] 0.0, 128
  %33 = vxpose.xlu0.b32.cont [10/16] 0.0, 128
  %34 = vxpose.xlu0.b32.cont [11/16] 0.0, 128
  %35 = vxpose.xlu0.b32.cont [12/16] 0.0, 128
  %36 = vxpose.xlu0.b32.cont [13/16] 0.0, 128
  %37 = vxpose.xlu0.b32.cont [14/16] 0.0, 128
  %38 = vxpose.xlu0.b32.cont [15/16] 0.0, 128
  %39 = vxpose.xlu0.b32.end [16/16] 0.0, 128
  %v40 = vpop.trf.xlu0
  %v41 = vpop.trf.xlu0
  %v42 = vpop.trf.xlu0
  %v43 = vpop.trf.xlu0
  %v44 = vpop.trf.xlu0
  %v45 = vpop.trf.xlu0
  %v46 = vpop.trf.xlu0
  %v47 = vpop.trf.xlu0
  %v48 = vpop.trf.xlu0
  %v49 = vpop.trf.xlu0
  %v50 = vpop.trf.xlu0
  %v51 = vpop.trf.xlu0
  %v52 = vpop.trf.xlu0
  %v53 = vpop.trf.xlu0
  %v54 = vpop.trf.xlu0
  %v55 = vpop.trf.xlu0
  %v56 = vld [vmem:[%s1] sm:$0x1f]
  %v57 = vlaneseq
  %v58 = vshrl.u32 %v57, 7
  %v59 = vsub.s32 0, %v58
  %v60 = vrot.slane %v40, %v59
  %62 = vbcast.lane.b32.xlu0 %v60, 256
  %v63 = vpop.permute.xlu0 %62
  %v64 = vlaneseq
  %v65 = vshrl.u32 %v64, 7
  %v66 = vsub.s32 1, %v65
  %v67 = vrot.slane %v40, %v66
  %69 = vbcast.lane.b32.xlu0 %v67, 256
  %v70 = vpop.permute.xlu0 %69
  %v71 = vlaneseq
  %v72 = vshrl.u32 %v71, 7
  %v73 = vsub.s32 2, %v72
  %v74 = vrot.slane %v40, %v73
  %76 = vbcast.lane.b32.xlu0 %v74, 256
  %v77 = vpop.permute.xlu0 %76
  %v78 = vlaneseq
  %v79 = vshrl.u32 %v78, 7
  %v80 = vsub.s32 3, %v79
  %v81 = vrot.slane %v40, %v80
  %83 = vbcast.lane.b32.xlu0 %v81, 256
  %v84 = vpop.permute.xlu0 %83
  %v85 = vlaneseq
  %v86 = vshrl.u32 %v85, 7
  %v87 = vsub.s32 4, %v86
  %v88 = vrot.slane %v40, %v87
  %90 = vbcast.lane.b32.xlu0 %v88, 256
  %v91 = vpop.permute.xlu0 %90
  %v92 = vlaneseq
  %v93 = vshrl.u32 %v92, 7
  %v94 = vsub.s32 5, %v93
  %v95 = vrot.slane %v40, %v94
  %97 = vbcast.lane.b32.xlu0 %v95, 256
  %v98 = vpop.permute.xlu0 %97
  %v99 = vlaneseq
  %v100 = vshrl.u32 %v99, 7
  %v101 = vsub.s32 6, %v100
  %v102 = vrot.slane %v40, %v101
  %104 = vbcast.lane.b32.xlu0 %v102, 256
  %v105 = vpop.permute.xlu0 %104
  %v106 = vlaneseq
  %v107 = vshrl.u32 %v106, 7
  %v108 = vsub.s32 7, %v107
  %v109 = vrot.slane %v40, %v108
  %111 = vbcast.lane.b32.xlu0 %v109, 256
  %v112 = vpop.permute.xlu0 %111
  %v113 = vlaneseq
  %v114 = vshrl.u32 %v113, 7
  %v115 = vsub.s32 0, %v114
  %v116 = vrot.slane %v41, %v115
  %118 = vbcast.lane.b32.xlu0 %v116, 256
  %v119 = vpop.permute.xlu0 %118
  %v120 = vlaneseq
  %v121 = vshrl.u32 %v120, 7
  %v122 = vsub.s32 1, %v121
  %v123 = vrot.slane %v41, %v122
  %125 = vbcast.lane.b32.xlu0 %v123, 256
  %v126 = vpop.permute.xlu0 %125
  %v127 = vlaneseq
  %v128 = vshrl.u32 %v127, 7
  %v129 = vsub.s32 2, %v128
  %v130 = vrot.slane %v41, %v129
  %132 = vbcast.lane.b32.xlu0 %v130, 256
  %v133 = vpop.permute.xlu0 %132
  %v134 = vlaneseq
  %v135 = vshrl.u32 %v134, 7
  %v136 = vsub.s32 3, %v135
  %v137 = vrot.slane %v41, %v136
  %139 = vbcast.lane.b32.xlu0 %v137, 256
  %v140 = vpop.permute.xlu0 %139
  %v141 = vlaneseq
  %v142 = vshrl.u32 %v141, 7
  %v143 = vsub.s32 4, %v142
  %v144 = vrot.slane %v41, %v143
  %146 = vbcast.lane.b32.xlu0 %v144, 256
  %v147 = vpop.permute.xlu0 %146
  %v148 = vlaneseq
  %v149 = vshrl.u32 %v148, 7
  %v150 = vsub.s32 5, %v149
  %v151 = vrot.slane %v41, %v150
  %153 = vbcast.lane.b32.xlu0 %v151, 256
  %v154 = vpop.permute.xlu0 %153
  %v155 = vlaneseq
  %v156 = vshrl.u32 %v155, 7
  %v157 = vsub.s32 6, %v156
  %v158 = vrot.slane %v41, %v157
  %160 = vbcast.lane.b32.xlu0 %v158, 256
  %v161 = vpop.permute.xlu0 %160
  %v162 = vlaneseq
  %v163 = vshrl.u32 %v162, 7
  %v164 = vsub.s32 7, %v163
  %v165 = vrot.slane %v41, %v164
  %167 = vbcast.lane.b32.xlu0 %v165, 256
  %v168 = vpop.permute.xlu0 %167
  %v169 = vlaneseq
  %v170 = vshrl.u32 %v169, 7
  %v171 = vsub.s32 0, %v170
  %v172 = vrot.slane %v56, %v171
  %v173 = vmul.f32 %v63, %v172
  %v174 = vmul.f32 %v70, %v172
  %v175 = vmul.f32 %v77, %v172
  %v176 = vmul.f32 %v84, %v172
  %v177 = vmul.f32 %v91, %v172
  %v178 = vmul.f32 %v98, %v172
  %v179 = vmul.f32 %v105, %v172
  %v180 = vmul.f32 %v112, %v172
  %v181 = vmul.f32 %v119, %v172
  %v182 = vmul.f32 %v126, %v172
  %v183 = vmul.f32 %v133, %v172
  %v184 = vmul.f32 %v140, %v172
  %v185 = vmul.f32 %v147, %v172
  %v186 = vmul.f32 %v154, %v172
  %v187 = vmul.f32 %v161, %v172
  %v188 = vmul.f32 %v168, %v172
  %v189 = vadd.f32 %v173, 0.0
  %v190 = vadd.f32 %v174, 0.0
  %v191 = vadd.f32 %v175, 0.0
  %v192 = vadd.f32 %v176, 0.0
  %v193 = vadd.f32 %v177, 0.0
  %v194 = vadd.f32 %v178, 0.0
  %v195 = vadd.f32 %v179, 0.0
  %v196 = vadd.f32 %v180, 0.0
  %v197 = vadd.f32 %v181, 0.0
  %v198 = vadd.f32 %v182, 0.0
  %v199 = vadd.f32 %v183, 0.0
  %v200 = vadd.f32 %v184, 0.0
  %v201 = vadd.f32 %v185, 0.0
  %v202 = vadd.f32 %v186, 0.0
  %v203 = vadd.f32 %v187, 0.0
  %v204 = vadd.f32 %v188, 0.0
  %v205 = vlaneseq
  %v206 = vshrl.u32 %v205, 7
  %v207 = vsub.s32 0, %v206
  %v208 = vrot.slane %v42, %v207
  %210 = vbcast.lane.b32.xlu0 %v208, 256
  %v211 = vpop.permute.xlu0 %210
  %v212 = vlaneseq
  %v213 = vshrl.u32 %v212, 7
  %v214 = vsub.s32 1, %v213
  %v215 = vrot.slane %v56, %v214
  %v216 = vmul.f32 %v70, %v215
  %v217 = vmul.f32 %v77, %v215
  %v218 = vmul.f32 %v84, %v215
  %v219 = vmul.f32 %v91, %v215
  %v220 = vmul.f32 %v98, %v215
  %v221 = vmul.f32 %v105, %v215
  %v222 = vmul.f32 %v112, %v215
  %v223 = vmul.f32 %v119, %v215
  %v224 = vmul.f32 %v126, %v215
  %v225 = vmul.f32 %v133, %v215
  %v226 = vmul.f32 %v140, %v215
  %v227 = vmul.f32 %v147, %v215
  %v228 = vmul.f32 %v154, %v215
  %v229 = vmul.f32 %v161, %v215
  %v230 = vmul.f32 %v168, %v215
  %v231 = vmul.f32 %v211, %v215
  %v232 = vadd.f32 %v189, %v216
  %v233 = vadd.f32 %v190, %v217
  %v234 = vadd.f32 %v191, %v218
  %v235 = vadd.f32 %v192, %v219
  %v236 = vadd.f32 %v193, %v220
  %v237 = vadd.f32 %v194, %v221
  %v238 = vadd.f32 %v195, %v222
  %v239 = vadd.f32 %v196, %v223
  %v240 = vadd.f32 %v197, %v224
  %v241 = vadd.f32 %v198, %v225
  %v242 = vadd.f32 %v199, %v226
  %v243 = vadd.f32 %v200, %v227
  %v244 = vadd.f32 %v201, %v228
  %v245 = vadd.f32 %v202, %v229
  %v246 = vadd.f32 %v203, %v230
  %v247 = vadd.f32 %v204, %v231
  %v248 = vlaneseq
  %v249 = vshrl.u32 %v248, 7
  %v250 = vsub.s32 1, %v249
  %v251 = vrot.slane %v42, %v250
  %253 = vbcast.lane.b32.xlu0 %v251, 256
  %v254 = vpop.permute.xlu0 %253
  %v255 = vlaneseq
  %v256 = vshrl.u32 %v255, 7
  %v257 = vsub.s32 2, %v256
  %v258 = vrot.slane %v56, %v257
  %v259 = vmul.f32 %v77, %v258
  %v260 = vmul.f32 %v84, %v258
  %v261 = vmul.f32 %v91, %v258
  %v262 = vmul.f32 %v98, %v258
  %v263 = vmul.f32 %v105, %v258
  %v264 = vmul.f32 %v112, %v258
  %v265 = vmul.f32 %v119, %v258
  %v266 = vmul.f32 %v126, %v258
  %v267 = vmul.f32 %v133, %v258
  %v268 = vmul.f32 %v140, %v258
  %v269 = vmul.f32 %v147, %v258
  %v270 = vmul.f32 %v154, %v258
  %v271 = vmul.f32 %v161, %v258
  %v272 = vmul.f32 %v168, %v258
  %v273 = vmul.f32 %v211, %v258
  %v274 = vmul.f32 %v254, %v258
  %v275 = vadd.f32 %v232, %v259
  %v276 = vadd.f32 %v233, %v260
  %v277 = vadd.f32 %v234, %v261
  %v278 = vadd.f32 %v235, %v262
  %v279 = vadd.f32 %v236, %v263
  %v280 = vadd.f32 %v237, %v264
  %v281 = vadd.f32 %v238, %v265
  %v282 = vadd.f32 %v239, %v266
  %v283 = vadd.f32 %v240, %v267
  %v284 = vadd.f32 %v241, %v268
  %v285 = vadd.f32 %v242, %v269
  %v286 = vadd.f32 %v243, %v270
  %v287 = vadd.f32 %v244, %v271
  %v288 = vadd.f32 %v245, %v272
  %v289 = vadd.f32 %v246, %v273
  %v290 = vadd.f32 %v247, %v274
  %v291 = vlaneseq
  %v292 = vshrl.u32 %v291, 7
  %v293 = vsub.s32 2, %v292
  %v294 = vrot.slane %v42, %v293
  %296 = vbcast.lane.b32.xlu0 %v294, 256
  %v297 = vpop.permute.xlu0 %296
  %v298 = vlaneseq
  %v299 = vshrl.u32 %v298, 7
  %v300 = vsub.s32 3, %v299
  %v301 = vrot.slane %v56, %v300
  %v302 = vmul.f32 %v84, %v301
  %v303 = vmul.f32 %v91, %v301
  %v304 = vmul.f32 %v98, %v301
  %v305 = vmul.f32 %v105, %v301
  %v306 = vmul.f32 %v112, %v301
  %v307 = vmul.f32 %v119, %v301
  %v308 = vmul.f32 %v126, %v301
  %v309 = vmul.f32 %v133, %v301
  %v310 = vmul.f32 %v140, %v301
  %v311 = vmul.f32 %v147, %v301
  %v312 = vmul.f32 %v154, %v301
  %v313 = vmul.f32 %v161, %v301
  %v314 = vmul.f32 %v168, %v301
  %v315 = vmul.f32 %v211, %v301
  %v316 = vmul.f32 %v254, %v301
  %v317 = vmul.f32 %v297, %v301
  %v318 = vadd.f32 %v275, %v302
  %v319 = vadd.f32 %v276, %v303
  %v320 = vadd.f32 %v277, %v304
  %v321 = vadd.f32 %v278, %v305
  %v322 = vadd.f32 %v279, %v306
  %v323 = vadd.f32 %v280, %v307
  %v324 = vadd.f32 %v281, %v308
  %v325 = vadd.f32 %v282, %v309
  %v326 = vadd.f32 %v283, %v310
  %v327 = vadd.f32 %v284, %v311
  %v328 = vadd.f32 %v285, %v312
  %v329 = vadd.f32 %v286, %v313
  %v330 = vadd.f32 %v287, %v314
  %v331 = vadd.f32 %v288, %v315
  %v332 = vadd.f32 %v289, %v316
  %v333 = vadd.f32 %v290, %v317
  %v334 = vlaneseq
  %v335 = vshrl.u32 %v334, 7
  %v336 = vsub.s32 3, %v335
  %v337 = vrot.slane %v42, %v336
  %339 = vbcast.lane.b32.xlu0 %v337, 256
  %v340 = vpop.permute.xlu0 %339
  %v341 = vlaneseq
  %v342 = vshrl.u32 %v341, 7
  %v343 = vsub.s32 4, %v342
  %v344 = vrot.slane %v56, %v343
  %v345 = vmul.f32 %v91, %v344
  %v346 = vmul.f32 %v98, %v344
  %v347 = vmul.f32 %v105, %v344
  %v348 = vmul.f32 %v112, %v344
  %v349 = vmul.f32 %v119, %v344
  %v350 = vmul.f32 %v126, %v344
  %v351 = vmul.f32 %v133, %v344
  %v352 = vmul.f32 %v140, %v344
  %v353 = vmul.f32 %v147, %v344
  %v354 = vmul.f32 %v154, %v344
  %v355 = vmul.f32 %v161, %v344
  %v356 = vmul.f32 %v168, %v344
  %v357 = vmul.f32 %v211, %v344
  %v358 = vmul.f32 %v254, %v344
  %v359 = vmul.f32 %v297, %v344
  %v360 = vmul.f32 %v340, %v344
  %v361 = vadd.f32 %v318, %v345
  %v362 = vadd.f32 %v319, %v346
  %v363 = vadd.f32 %v320, %v347
  %v364 = vadd.f32 %v321, %v348
  %v365 = vadd.f32 %v322, %v349
  %v366 = vadd.f32 %v323, %v350
  %v367 = vadd.f32 %v324, %v351
  %v368 = vadd.f32 %v325, %v352
  %v369 = vadd.f32 %v326, %v353
  %v370 = vadd.f32 %v327, %v354
  %v371 = vadd.f32 %v328, %v355
  %v372 = vadd.f32 %v329, %v356
  %v373 = vadd.f32 %v330, %v357
  %v374 = vadd.f32 %v331, %v358
  %v375 = vadd.f32 %v332, %v359
  %v376 = vadd.f32 %v333, %v360
  %v377 = vld [vmem:[%s2] sm:$0x1]
  %v379 = vlaneseq
  %v380 = vshrl.u32 %v379, 7
  %v381 = vsub.s32 0, %v380
  %v382 = vrot.slane %v377, %v381
  %v384 = vadd.f32 %v361, %v382
  %v385 = vadd.f32 %v362, %v382
  %v386 = vadd.f32 %v363, %v382
  %v387 = vadd.f32 %v364, %v382
  %v388 = vadd.f32 %v365, %v382
  %v389 = vadd.f32 %v366, %v382
  %v390 = vadd.f32 %v367, %v382
  %v391 = vadd.f32 %v368, %v382
  %v392 = vadd.f32 %v369, %v382
  %v393 = vadd.f32 %v370, %v382
  %v394 = vadd.f32 %v371, %v382
  %v395 = vadd.f32 %v372, %v382
  %v396 = vadd.f32 %v373, %v382
  %v397 = vadd.f32 %v374, %v382
  %v398 = vadd.f32 %v375, %v382
  %v399 = vadd.f32 %v376, %v382
  %vm400 = vcmp.gt.f32.partialorder %v384, 0.0
  %vm401 = vcmp.gt.f32.partialorder %v385, 0.0
  %vm402 = vcmp.gt.f32.partialorder %v386, 0.0
  %vm403 = vcmp.gt.f32.partialorder %v387, 0.0
  %vm404 = vcmp.gt.f32.partialorder %v388, 0.0
  %vm405 = vcmp.gt.f32.partialorder %v389, 0.0
  %vm406 = vcmp.gt.f32.partialorder %v390, 0.0
  %vm407 = vcmp.gt.f32.partialorder %v391, 0.0
  %vm408 = vcmp.gt.f32.partialorder %v392, 0.0
  %vm409 = vcmp.gt.f32.partialorder %v393, 0.0
  %vm410 = vcmp.gt.f32.partialorder %v394, 0.0
  %vm411 = vcmp.gt.f32.partialorder %v395, 0.0
  %vm412 = vcmp.gt.f32.partialorder %v396, 0.0
  %vm413 = vcmp.gt.f32.partialorder %v397, 0.0
  %vm414 = vcmp.gt.f32.partialorder %v398, 0.0
  %vm415 = vcmp.gt.f32.partialorder %v399, 0.0
  %v416 = vmul.f32 %v384, 0.01
  %v417 = vmul.f32 %v385, 0.01
  %v418 = vmul.f32 %v386, 0.01
  %v419 = vmul.f32 %v387, 0.01
  %v420 = vmul.f32 %v388, 0.01
  %v421 = vmul.f32 %v389, 0.01
  %v422 = vmul.f32 %v390, 0.01
  %v423 = vmul.f32 %v391, 0.01
  %v424 = vmul.f32 %v392, 0.01
  %v425 = vmul.f32 %v393, 0.01
  %v426 = vmul.f32 %v394, 0.01
  %v427 = vmul.f32 %v395, 0.01
  %v428 = vmul.f32 %v396, 0.01
  %v429 = vmul.f32 %v397, 0.01
  %v430 = vmul.f32 %v398, 0.01
  %v431 = vmul.f32 %v399, 0.01
  %v432 = vsel %vm400, %v384, %v416
  %v433 = vsel %vm401, %v385, %v417
  %v434 = vsel %vm402, %v386, %v418
  %v435 = vsel %vm403, %v387, %v419
  %v436 = vsel %vm404, %v388, %v420
  %v437 = vsel %vm405, %v389, %v421
  %v438 = vsel %vm406, %v390, %v422
  %v439 = vsel %vm407, %v391, %v423
  %v440 = vsel %vm408, %v392, %v424
  %v441 = vsel %vm409, %v393, %v425
  %v442 = vsel %vm410, %v394, %v426
  %v443 = vsel %vm411, %v395, %v427
  %v444 = vsel %vm412, %v396, %v428
  %v445 = vsel %vm413, %v397, %v429
  %v446 = vsel %vm414, %v398, %v430
  %v447 = vsel %vm415, %v399, %v431
  %v448 = vmax.f32 %v432, %v433
  %v449 = vmax.f32 %v434, %v435
  %v450 = vmax.f32 %v436, %v437
  %v451 = vmax.f32 %v438, %v439
  %v452 = vmax.f32 %v440, %v441
  %v453 = vmax.f32 %v442, %v443
  %v454 = vmax.f32 %v444, %v445
  %v455 = vmax.f32 %v446, %v447
  %v456 = vld [vmem:[%s3] sm:$0xff]
  %v457 = vld [vmem:[%s3 + $0x8] sm:$0xff]
  %v458 = vld [vmem:[%s3 + $0x10] sm:$0xff]
  %v459 = vld [vmem:[%s3 + $0x18] sm:$0xff]
  %v460 = vld [vmem:[%s3 + $0x20] sm:$0xff]
  %v461 = vld [vmem:[%s3 + $0x28] sm:$0xff]
  %v462 = vld [vmem:[%s3 + $0x30] sm:$0xff]
  %v463 = vld [vmem:[%s3 + $0x38] sm:$0xff]
  %v464 = vld [vmem:[%s3 + $0x40] sm:$0xff]
  %v465 = vld [vmem:[%s3 + $0x48] sm:$0xff]
  %v466 = vld [vmem:[%s3 + $0x50] sm:$0xff]
  %v467 = vld [vmem:[%s3 + $0x58] sm:$0xff]
  %v468 = vld [vmem:[%s3 + $0x60] sm:$0xff]
  %v469 = vld [vmem:[%s3 + $0x68] sm:$0xff]
  %v470 = vld [vmem:[%s3 + $0x70] sm:$0xff]
  %v471 = vld [vmem:[%s3 + $0x78] sm:$0xff]
  %v472 = vld [vmem:[%s5] sm:$0xf]
  %v474 = vlaneseq
  %v475 = vshrl.u32 %v474, 7
  %v476 = vsub.s32 0, %v475
  %v477 = vrot.slane %v472, %v476
  %v478 = vlaneseq
  %v479 = vshrl.u32 %v478, 7
  %v480 = vsub.s32 1, %v479
  %v481 = vrot.slane %v472, %v480
  %v482 = vlaneseq
  %v483 = vshrl.u32 %v482, 7
  %v484 = vsub.s32 2, %v483
  %v485 = vrot.slane %v472, %v484
  %v486 = vlaneseq
  %v487 = vshrl.u32 %v486, 7
  %v488 = vsub.s32 3, %v487
  %v489 = vrot.slane %v472, %v488
  %vm494 = vcmask 261120
  %v496 = vsel %vm494, %v448, 0
  %v499 = vsel %vm494, %v449, 0
  %v502 = vsel %vm494, %v450, 0
  %v505 = vsel %vm494, %v451, 0
  %v508 = vsel %vm494, %v452, 0
  %v511 = vsel %vm494, %v453, 0
  %v514 = vsel %vm494, %v454, 0
  %v517 = vsel %vm494, %v455, 0
  %519 = vmatprep.subr.mxu0 0.0
  %520 = vmatpush1.msra.mxu0 0.0
  %521 = vmatprep.subr.mxu0 0.0
  %522 = vmatpush1.msra.mxu0 0.0
  %523 = vmatprep.subr.mxu0 0.0
  %524 = vmatpush1.msra.mxu0 0.0
  %525 = vmatprep.subr.mxu0 0.0
  %526 = vmatpush1.msra.mxu0 0.0
  %527 = vmatprep.subr.mxu0 0.0
  %528 = vmatpush1.msra.mxu0 0.0
  %529 = vmatprep.subr.mxu0 0.0
  %530 = vmatpush1.msra.mxu0 0.0
  %531 = vmatprep.subr.mxu0 0.0
  %532 = vmatpush1.msra.mxu0 0.0
  %533 = vmatprep.subr.mxu0 0.0
  %534 = vmatpush1.msra.mxu0 0.0
  %535 = vmatprep.subr.mxu0 0.0
  %536 = vmatpush1.msra.mxu0 0.0
  %537 = vmatprep.subr.mxu0 0.0
  %538 = vmatpush1.msra.mxu0 0.0
  %539 = vmatprep.subr.mxu0 0.0
  %540 = vmatpush1.msra.mxu0 0.0
  %541 = vmatprep.subr.mxu0 0.0
  %542 = vmatpush1.msra.mxu0 0.0
  %543 = vmatprep.subr.mxu0 %v469
  %544 = vmatpush1.msra.mxu0 %v468
  %545 = vmatprep.subr.mxu0 %v465
  %546 = vmatpush1.msra.mxu0 %v464
  %547 = vmatprep.subr.mxu0 %v461
  %548 = vmatpush1.msra.mxu0 %v460
  %549 = vmatprep.subr.mxu0 %v457
  %550 = vmatpush1.msra.mxu0 %v456
  %551 = vmatprep.subr.mxu0 0.0
  %552 = vmatpush2.msra.mxu0 0.0
  %553 = vmatprep.subr.mxu0 0.0
  %554 = vmatpush2.msra.mxu0 0.0
  %555 = vmatprep.subr.mxu0 0.0
  %556 = vmatpush2.msra.mxu0 0.0
  %557 = vmatprep.subr.mxu0 0.0
  %558 = vmatpush2.msra.mxu0 0.0
  %559 = vmatprep.subr.mxu0 0.0
  %560 = vmatpush2.msra.mxu0 0.0
  %561 = vmatprep.subr.mxu0 0.0
  %562 = vmatpush2.msra.mxu0 0.0
  %563 = vmatprep.subr.mxu0 0.0
  %564 = vmatpush2.msra.mxu0 0.0
  %565 = vmatprep.subr.mxu0 0.0
  %566 = vmatpush2.msra.mxu0 0.0
  %567 = vmatprep.subr.mxu0 0.0
  %568 = vmatpush2.msra.mxu0 0.0
  %569 = vmatprep.subr.mxu0 0.0
  %570 = vmatpush2.msra.mxu0 0.0
  %571 = vmatprep.subr.mxu0 0.0
  %572 = vmatpush2.msra.mxu0 0.0
  %573 = vmatprep.subr.mxu0 0.0
  %574 = vmatpush2.msra.mxu0 0.0
  %575 = vmatprep.subr.mxu0 0.0
  %576 = vmatpush2.msra.mxu0 0.0
  %577 = vmatprep.subr.mxu0 0.0
  %578 = vmatpush2.msra.mxu0 0.0
  %579 = vmatprep.subr.mxu0 0.0
  %580 = vmatpush2.msra.mxu0 0.0
  %581 = vmatprep.subr.mxu0 0.0
  %582 = vmatpush2.msra.mxu0 0.0
  %583 = vmatprep.mubr.f32.mxu0 0.0
  %584 = vmatmul.mubr.f32.gmra.mxu0 %v496
  %v585 = vpop.f32.mrf.mxu0
  %v586 = vadd.f32 %v477, %v585
  %v587 = vpop.f32.mrf.mxu0
  %v588 = vadd.f32 %v481, %v587
  %589 = vmatprep.mubr.f32.mxu0 0.0
  %590 = vmatmul.mubr.f32.gmra.mxu0 %v499
  %v591 = vpop.f32.mrf.mxu0
  %v592 = vadd.f32 %v477, %v591
  %v593 = vpop.f32.mrf.mxu0
  %v594 = vadd.f32 %v481, %v593
  %595 = vmatprep.mubr.f32.mxu0 0.0
  %596 = vmatmul.mubr.f32.gmra.mxu0 %v502
  %v597 = vpop.f32.mrf.mxu0
  %v598 = vadd.f32 %v477, %v597
  %v599 = vpop.f32.mrf.mxu0
  %v600 = vadd.f32 %v481, %v599
  %601 = vmatprep.mubr.f32.mxu0 0.0
  %602 = vmatmul.mubr.f32.gmra.mxu0 %v505
  %v603 = vpop.f32.mrf.mxu0
  %v604 = vadd.f32 %v477, %v603
  %v605 = vpop.f32.mrf.mxu0
  %v606 = vadd.f32 %v481, %v605
  %607 = vmatprep.mubr.f32.mxu0 0.0
  %608 = vmatmul.mubr.f32.gmra.mxu0 %v508
  %v609 = vpop.f32.mrf.mxu0
  %v610 = vadd.f32 %v477, %v609
  %v611 = vpop.f32.mrf.mxu0
  %v612 = vadd.f32 %v481, %v611
  %613 = vmatprep.mubr.f32.mxu0 0.0
  %614 = vmatmul.mubr.f32.gmra.mxu0 %v511
  %v615 = vpop.f32.mrf.mxu0
  %v616 = vadd.f32 %v477, %v615
  %v617 = vpop.f32.mrf.mxu0
  %v618 = vadd.f32 %v481, %v617
  %619 = vmatprep.mubr.f32.mxu0 0.0
  %620 = vmatmul.mubr.f32.gmra.mxu0 %v514
  %v621 = vpop.f32.mrf.mxu0
  %v622 = vadd.f32 %v477, %v621
  %v623 = vpop.f32.mrf.mxu0
  %v624 = vadd.f32 %v481, %v623
  %625 = vmatprep.mubr.f32.mxu0 0.0
  %626 = vmatmul.mubr.f32.gmra.mxu0 %v517
  %v627 = vpop.f32.mrf.mxu0
  %v628 = vadd.f32 %v477, %v627
  %v629 = vpop.f32.mrf.mxu0
  %v630 = vadd.f32 %v481, %v629
  %631 = vdwg.mxu0
  %632 = vmatprep.subr.mxu0 0.0
  %633 = vmatpush1.msra.mxu0 0.0
  %634 = vmatprep.subr.mxu0 0.0
  %635 = vmatpush1.msra.mxu0 0.0
  %636 = vmatprep.subr.mxu0 0.0
  %637 = vmatpush1.msra.mxu0 0.0
  %638 = vmatprep.subr.mxu0 0.0
  %639 = vmatpush1.msra.mxu0 0.0
  %640 = vmatprep.subr.mxu0 0.0
  %641 = vmatpush1.msra.mxu0 0.0
  %642 = vmatprep.subr.mxu0 0.0
  %643 = vmatpush1.msra.mxu0 0.0
  %644 = vmatprep.subr.mxu0 0.0
  %645 = vmatpush1.msra.mxu0 0.0
  %646 = vmatprep.subr.mxu0 0.0
  %647 = vmatpush1.msra.mxu0 0.0
  %648 = vmatprep.subr.mxu0 0.0
  %649 = vmatpush1.msra.mxu0 0.0
  %650 = vmatprep.subr.mxu0 0.0
  %651 = vmatpush1.msra.mxu0 0.0
  %652 = vmatprep.subr.mxu0 0.0
  %653 = vmatpush1.msra.mxu0 0.0
  %654 = vmatprep.subr.mxu0 0.0
  %655 = vmatpush1.msra.mxu0 0.0
  %656 = vmatprep.subr.mxu0 %v471
  %657 = vmatpush1.msra.mxu0 %v470
  %658 = vmatprep.subr.mxu0 %v467
  %659 = vmatpush1.msra.mxu0 %v466
  %660 = vmatprep.subr.mxu0 %v463
  %661 = vmatpush1.msra.mxu0 %v462
  %662 = vmatprep.subr.mxu0 %v459
  %663 = vmatpush1.msra.mxu0 %v458
  %664 = vmatprep.subr.mxu0 0.0
  %665 = vmatpush2.msra.mxu0 0.0
  %666 = vmatprep.subr.mxu0 0.0
  %667 = vmatpush2.msra.mxu0 0.0
  %668 = vmatprep.subr.mxu0 0.0
  %669 = vmatpush2.msra.mxu0 0.0
  %670 = vmatprep.subr.mxu0 0.0
  %671 = vmatpush2.msra.mxu0 0.0
  %672 = vmatprep.subr.mxu0 0.0
  %673 = vmatpush2.msra.mxu0 0.0
  %674 = vmatprep.subr.mxu0 0.0
  %675 = vmatpush2.msra.mxu0 0.0
  %676 = vmatprep.subr.mxu0 0.0
  %677 = vmatpush2.msra.mxu0 0.0
  %678 = vmatprep.subr.mxu0 0.0
  %679 = vmatpush2.msra.mxu0 0.0
  %680 = vmatprep.subr.mxu0 0.0
  %681 = vmatpush2.msra.mxu0 0.0
  %682 = vmatprep.subr.mxu0 0.0
  %683 = vmatpush2.msra.mxu0 0.0
  %684 = vmatprep.subr.mxu0 0.0
  %685 = vmatpush2.msra.mxu0 0.0
  %686 = vmatprep.subr.mxu0 0.0
  %687 = vmatpush2.msra.mxu0 0.0
  %688 = vmatprep.subr.mxu0 0.0
  %689 = vmatpush2.msra.mxu0 0.0
  %690 = vmatprep.subr.mxu0 0.0
  %691 = vmatpush2.msra.mxu0 0.0
  %692 = vmatprep.subr.mxu0 0.0
  %693 = vmatpush2.msra.mxu0 0.0
  %694 = vmatprep.subr.mxu0 0.0
  %695 = vmatpush2.msra.mxu0 0.0
  %696 = vmatprep.mubr.f32.mxu0 0.0
  %697 = vmatmul.mubr.f32.gmra.mxu0 %v496
  %v698 = vpop.f32.mrf.mxu0
  %v699 = vadd.f32 %v485, %v698
  %v700 = vpop.f32.mrf.mxu0
  %v701 = vadd.f32 %v489, %v700
  %702 = vmatprep.mubr.f32.mxu0 0.0
  %703 = vmatmul.mubr.f32.gmra.mxu0 %v499
  %v704 = vpop.f32.mrf.mxu0
  %v705 = vadd.f32 %v485, %v704
  %v706 = vpop.f32.mrf.mxu0
  %v707 = vadd.f32 %v489, %v706
  %708 = vmatprep.mubr.f32.mxu0 0.0
  %709 = vmatmul.mubr.f32.gmra.mxu0 %v502
  %v710 = vpop.f32.mrf.mxu0
  %v711 = vadd.f32 %v485, %v710
  %v712 = vpop.f32.mrf.mxu0
  %v713 = vadd.f32 %v489, %v712
  %714 = vmatprep.mubr.f32.mxu0 0.0
  %715 = vmatmul.mubr.f32.gmra.mxu0 %v505
  %v716 = vpop.f32.mrf.mxu0
  %v717 = vadd.f32 %v485, %v716
  %v718 = vpop.f32.mrf.mxu0
  %v719 = vadd.f32 %v489, %v718
  %720 = vmatprep.mubr.f32.mxu0 0.0
  %721 = vmatmul.mubr.f32.gmra.mxu0 %v508
  %v722 = vpop.f32.mrf.mxu0
  %v723 = vadd.f32 %v485, %v722
  %v724 = vpop.f32.mrf.mxu0
  %v725 = vadd.f32 %v489, %v724
  %726 = vmatprep.mubr.f32.mxu0 0.0
  %727 = vmatmul.mubr.f32.gmra.mxu0 %v511
  %v728 = vpop.f32.mrf.mxu0
  %v729 = vadd.f32 %v485, %v728
  %v730 = vpop.f32.mrf.mxu0
  %v731 = vadd.f32 %v489, %v730
  %732 = vmatprep.mubr.f32.mxu0 0.0
  %733 = vmatmul.mubr.f32.gmra.mxu0 %v514
  %v734 = vpop.f32.mrf.mxu0
  %v735 = vadd.f32 %v485, %v734
  %v736 = vpop.f32.mrf.mxu0
  %v737 = vadd.f32 %v489, %v736
  %738 = vmatprep.mubr.f32.mxu0 0.0
  %739 = vmatmul.mubr.f32.gmra.mxu0 %v517
  %v740 = vpop.f32.mrf.mxu0
  %v741 = vadd.f32 %v485, %v740
  %v742 = vpop.f32.mrf.mxu0
  %v743 = vadd.f32 %v489, %v742
  %744 = vdwg.mxu0
  %745 = vst [vmem:[#allocation2] sm:$0xff] %v586
  %746 = vst [vmem:[#allocation2 + $0x8] sm:$0xff] %v588
  %747 = vst [vmem:[#allocation2 + $0x10] sm:$0xff] %v699
  %748 = vst [vmem:[#allocation2 + $0x18] sm:$0xff] %v701
  %749 = vst [vmem:[#allocation2 + $0x20] sm:$0xff] %v592
  %750 = vst [vmem:[#allocation2 + $0x28] sm:$0xff] %v594
  %751 = vst [vmem:[#allocation2 + $0x30] sm:$0xff] %v705
  %752 = vst [vmem:[#allocation2 + $0x38] sm:$0xff] %v707
  %753 = vst [vmem:[#allocation2 + $0x40] sm:$0xff] %v598
  %754 = vst [vmem:[#allocation2 + $0x48] sm:$0xff] %v600
  %755 = vst [vmem:[#allocation2 + $0x50] sm:$0xff] %v711
  %756 = vst [vmem:[#allocation2 + $0x58] sm:$0xff] %v713
  %757 = vst [vmem:[#allocation2 + $0x60] sm:$0xff] %v604
  %758 = vst [vmem:[#allocation2 + $0x68] sm:$0xff] %v606
  %759 = vst [vmem:[#allocation2 + $0x70] sm:$0xff] %v717
  %760 = vst [vmem:[#allocation2 + $0x78] sm:$0xff] %v719
  %761 = vst [vmem:[#allocation2 + $0x80] sm:$0xff] %v610
  %762 = vst [vmem:[#allocation2 + $0x88] sm:$0xff] %v612
  %763 = vst [vmem:[#allocation2 + $0x90] sm:$0xff] %v723
  %764 = vst [vmem:[#allocation2 + $0x98] sm:$0xff] %v725
  %765 = vst [vmem:[#allocation2 + $0xa0] sm:$0xff] %v616
  %766 = vst [vmem:[#allocation2 + $0xa8] sm:$0xff] %v618
  %767 = vst [vmem:[#allocation2 + $0xb0] sm:$0xff] %v729
  %768 = vst [vmem:[#allocation2 + $0xb8] sm:$0xff] %v731
  %769 = vst [vmem:[#allocation2 + $0xc0] sm:$0xff] %v622
  %770 = vst [vmem:[#allocation2 + $0xc8] sm:$0xff] %v624
  %771 = vst [vmem:[#allocation2 + $0xd0] sm:$0xff] %v735
  %772 = vst [vmem:[#allocation2 + $0xd8] sm:$0xff] %v737
  %773 = vst [vmem:[#allocation2 + $0xe0] sm:$0xff] %v628
  %774 = vst [vmem:[#allocation2 + $0xe8] sm:$0xff] %v630
  %775 = vst [vmem:[#allocation2 + $0xf0] sm:$0xff] %v741
  %776 = vst [vmem:[#allocation2 + $0xf8] sm:$0xff] %v743
  %v777 = vld [vmem:[%s4] sm:$0xff]
  %v778 = vld [vmem:[%s4 + $0x8] sm:$0xff]
  %v779 = vld [vmem:[%s4 + $0x10] sm:$0xff]
  %v780 = vld [vmem:[%s4 + $0x18] sm:$0xff]
  %v781 = vld [vmem:[%s4 + $0x20] sm:$0xff]
  %v782 = vld [vmem:[%s4 + $0x28] sm:$0xff]
  %v783 = vld [vmem:[%s4 + $0x30] sm:$0xff]
  %v784 = vld [vmem:[%s4 + $0x38] sm:$0xff]
  %v785 = vld [vmem:[%s4 + $0x40] sm:$0xff]
  %v786 = vld [vmem:[%s4 + $0x48] sm:$0xff]
  %v787 = vld [vmem:[%s4 + $0x50] sm:$0xff]
  %v788 = vld [vmem:[%s4 + $0x58] sm:$0xff]
  %v789 = vld [vmem:[%s4 + $0x60] sm:$0xff]
  %v790 = vld [vmem:[%s4 + $0x68] sm:$0xff]
  %v791 = vld [vmem:[%s4 + $0x70] sm:$0xff]
  %v792 = vld [vmem:[%s4 + $0x78] sm:$0xff]
  %v793 = vld [vmem:[%s4 + $0x80] sm:$0xff]
  %v794 = vld [vmem:[%s4 + $0x88] sm:$0xff]
  %v795 = vld [vmem:[%s4 + $0x90] sm:$0xff]
  %v796 = vld [vmem:[%s4 + $0x98] sm:$0xff]
  %v797 = vld [vmem:[%s4 + $0xa0] sm:$0xff]
  %v798 = vld [vmem:[%s4 + $0xa8] sm:$0xff]
  %v799 = vld [vmem:[%s4 + $0xb0] sm:$0xff]
  %v800 = vld [vmem:[%s4 + $0xb8] sm:$0xff]
  %v801 = vld [vmem:[%s4 + $0xc0] sm:$0xff]
  %v802 = vld [vmem:[%s4 + $0xc8] sm:$0xff]
  %v803 = vld [vmem:[%s4 + $0xd0] sm:$0xff]
  %v804 = vld [vmem:[%s4 + $0xd8] sm:$0xff]
  %v805 = vld [vmem:[%s4 + $0xe0] sm:$0xff]
  %v806 = vld [vmem:[%s4 + $0xe8] sm:$0xff]
  %v807 = vld [vmem:[%s4 + $0xf0] sm:$0xff]
  %v808 = vld [vmem:[%s4 + $0xf8] sm:$0xff]
  %v809 = vld [vmem:[#allocation2] sm:$0xff]
  %v810 = vld [vmem:[#allocation2 + $0x8] sm:$0xff]
  %v811 = vld [vmem:[#allocation2 + $0x10] sm:$0xff]
  %v812 = vld [vmem:[#allocation2 + $0x18] sm:$0xff]
  %vm813 = vcmask 523264
  %v815 = vsel %vm813, 0.0, 0
  %817 = vmatprep.subr.mxu0 0.0
  %818 = vmatpush1.msra.mxu0 0.0
  %819 = vmatprep.subr.mxu0 0.0
  %820 = vmatpush1.msra.mxu0 0.0
  %821 = vmatprep.subr.mxu0 0.0
  %822 = vmatpush1.msra.mxu0 0.0
  %823 = vmatprep.subr.mxu0 0.0
  %824 = vmatpush1.msra.mxu0 0.0
  %825 = vmatprep.subr.mxu0 0.0
  %826 = vmatpush1.msra.mxu0 0.0
  %827 = vmatprep.subr.mxu0 0.0
  %828 = vmatpush1.msra.mxu0 0.0
  %829 = vmatprep.subr.mxu0 0.0
  %830 = vmatpush1.msra.mxu0 0.0
  %831 = vmatprep.subr.mxu0 0.0
  %832 = vmatpush1.msra.mxu0 0.0
  %833 = vmatprep.subr.mxu0 %v806
  %834 = vmatpush1.msra.mxu0 %v805
  %835 = vmatprep.subr.mxu0 %v802
  %836 = vmatpush1.msra.mxu0 %v801
  %837 = vmatprep.subr.mxu0 %v798
  %838 = vmatpush1.msra.mxu0 %v797
  %839 = vmatprep.subr.mxu0 %v794
  %840 = vmatpush1.msra.mxu0 %v793
  %841 = vmatprep.subr.mxu0 %v790
  %842 = vmatpush1.msra.mxu0 %v789
  %843 = vmatprep.subr.mxu0 %v786
  %844 = vmatpush1.msra.mxu0 %v785
  %845 = vmatprep.subr.mxu0 %v782
  %846 = vmatpush1.msra.mxu0 %v781
  %847 = vmatprep.subr.mxu0 %v778
  %848 = vmatpush1.msra.mxu0 %v777
  %849 = vmatprep.subr.mxu0 0.0
  %850 = vmatpush2.msra.mxu0 0.0
  %851 = vmatprep.subr.mxu0 0.0
  %852 = vmatpush2.msra.mxu0 0.0
  %853 = vmatprep.subr.mxu0 0.0
  %854 = vmatpush2.msra.mxu0 0.0
  %855 = vmatprep.subr.mxu0 0.0
  %856 = vmatpush2.msra.mxu0 0.0
  %857 = vmatprep.subr.mxu0 0.0
  %858 = vmatpush2.msra.mxu0 0.0
  %859 = vmatprep.subr.mxu0 0.0
  %860 = vmatpush2.msra.mxu0 0.0
  %861 = vmatprep.subr.mxu0 0.0
  %862 = vmatpush2.msra.mxu0 0.0
  %863 = vmatprep.subr.mxu0 0.0
  %864 = vmatpush2.msra.mxu0 0.0
  %865 = vmatprep.subr.mxu0 0.0
  %866 = vmatpush2.msra.mxu0 0.0
  %867 = vmatprep.subr.mxu0 0.0
  %868 = vmatpush2.msra.mxu0 0.0
  %869 = vmatprep.subr.mxu0 0.0
  %870 = vmatpush2.msra.mxu0 0.0
  %871 = vmatprep.subr.mxu0 0.0
  %872 = vmatpush2.msra.mxu0 0.0
  %873 = vmatprep.subr.mxu0 0.0
  %874 = vmatpush2.msra.mxu0 0.0
  %875 = vmatprep.subr.mxu0 0.0
  %876 = vmatpush2.msra.mxu0 0.0
  %877 = vmatprep.subr.mxu0 0.0
  %878 = vmatpush2.msra.mxu0 0.0
  %879 = vmatprep.subr.mxu0 0.0
  %880 = vmatpush2.msra.mxu0 0.0
  %881 = vmatprep.mubr.f32.mxu0 0.0
  %882 = vmatmul.mubr.f32.gmra.mxu0 %v815
  %v883 = vpop.f32.mrf.mxu0
  %v884 = vadd.f32 0.0, %v883
  %v885 = vpop.f32.mrf.mxu0
  %v886 = vadd.f32 0.0, %v885
  %887 = vdwg.mxu0
  %888 = vmatprep.subr.mxu0 0.0
  %889 = vmatpush1.msra.mxu0 0.0
  %890 = vmatprep.subr.mxu0 0.0
  %891 = vmatpush1.msra.mxu0 0.0
  %892 = vmatprep.subr.mxu0 0.0
  %893 = vmatpush1.msra.mxu0 0.0
  %894 = vmatprep.subr.mxu0 0.0
  %895 = vmatpush1.msra.mxu0 0.0
  %896 = vmatprep.subr.mxu0 0.0
  %897 = vmatpush1.msra.mxu0 0.0
  %898 = vmatprep.subr.mxu0 0.0
  %899 = vmatpush1.msra.mxu0 0.0
  %900 = vmatprep.subr.mxu0 0.0
  %901 = vmatpush1.msra.mxu0 0.0
  %902 = vmatprep.subr.mxu0 0.0
  %903 = vmatpush1.msra.mxu0 0.0
  %904 = vmatprep.subr.mxu0 %v808
  %905 = vmatpush1.msra.mxu0 %v807
  %906 = vmatprep.subr.mxu0 %v804
  %907 = vmatpush1.msra.mxu0 %v803
  %908 = vmatprep.subr.mxu0 %v800
  %909 = vmatpush1.msra.mxu0 %v799
  %910 = vmatprep.subr.mxu0 %v796
  %911 = vmatpush1.msra.mxu0 %v795
  %912 = vmatprep.subr.mxu0 %v792
  %913 = vmatpush1.msra.mxu0 %v791
  %914 = vmatprep.subr.mxu0 %v788
  %915 = vmatpush1.msra.mxu0 %v787
  %916 = vmatprep.subr.mxu0 %v784
  %917 = vmatpush1.msra.mxu0 %v783
  %918 = vmatprep.subr.mxu0 %v780
  %919 = vmatpush1.msra.mxu0 %v779
  %920 = vmatprep.subr.mxu0 0.0
  %921 = vmatpush2.msra.mxu0 0.0
  %922 = vmatprep.subr.mxu0 0.0
  %923 = vmatpush2.msra.mxu0 0.0
  %924 = vmatprep.subr.mxu0 0.0
  %925 = vmatpush2.msra.mxu0 0.0
  %926 = vmatprep.subr.mxu0 0.0
  %927 = vmatpush2.msra.mxu0 0.0
  %928 = vmatprep.subr.mxu0 0.0
  %929 = vmatpush2.msra.mxu0 0.0
  %930 = vmatprep.subr.mxu0 0.0
  %931 = vmatpush2.msra.mxu0 0.0
  %932 = vmatprep.subr.mxu0 0.0
  %933 = vmatpush2.msra.mxu0 0.0
  %934 = vmatprep.subr.mxu0 0.0
  %935 = vmatpush2.msra.mxu0 0.0
  %936 = vmatprep.subr.mxu0 0.0
  %937 = vmatpush2.msra.mxu0 0.0
  %938 = vmatprep.subr.mxu0 0.0
  %939 = vmatpush2.msra.mxu0 0.0
  %940 = vmatprep.subr.mxu0 0.0
  %941 = vmatpush2.msra.mxu0 0.0
  %942 = vmatprep.subr.mxu0 0.0
  %943 = vmatpush2.msra.mxu0 0.0
  %944 = vmatprep.subr.mxu0 0.0
  %945 = vmatpush2.msra.mxu0 0.0
  %946 = vmatprep.subr.mxu0 0.0
  %947 = vmatpush2.msra.mxu0 0.0
  %948 = vmatprep.subr.mxu0 0.0
  %949 = vmatpush2.msra.mxu0 0.0
  %950 = vmatprep.subr.mxu0 0.0
  %951 = vmatpush2.msra.mxu0 0.0
  %952 = vmatprep.mubr.f32.mxu0 0.0
  %953 = vmatmul.mubr.f32.gmra.mxu0 %v815
  %v954 = vpop.f32.mrf.mxu0
  %v955 = vadd.f32 0.0, %v954
  %v956 = vpop.f32.mrf.mxu0
  %v957 = vadd.f32 0.0, %v956
  %958 = vdwg.mxu0
  %v959 = vadd.f32 %v809, %v884
  %v960 = vadd.f32 %v810, %v886
  %v961 = vadd.f32 %v811, %v955
  %v962 = vadd.f32 %v812, %v957
  %v963 = vxor.u32 %v959, 2147483648
  %v964 = vmul.f32 %v963, 1.442695
  %v965 = vpow.pop %v964
  %v966 = vadd.f32 %v965, 1.0
  %v967 = vrcp.pop %v966
  %v968 = vmul.f32 1.0, %v967
  %v969 = vxor.u32 %v960, 2147483648
  %v970 = vmul.f32 %v969, 1.442695
  %v971 = vpow.pop %v970
  %v972 = vadd.f32 %v971, 1.0
  %v973 = vrcp.pop %v972
  %v974 = vmul.f32 1.0, %v973
  %v975 = vtanh.pop %v961
  %v976 = vxor.u32 %v962, 2147483648
  %v977 = vmul.f32 %v976, 1.442695
  %v978 = vpow.pop %v977
  %v979 = vadd.f32 %v978, 1.0
  %v980 = vrcp.pop %v979
  %v981 = vmul.f32 1.0, %v980
  %v982 = vmul.f32 %v974, 0.0
  %v983 = vmul.f32 %v968, %v975
  %v984 = vadd.f32 %v982, %v983
  %v985 = vtanh.pop %v984
  %v986 = vmul.f32 %v981, %v985
  %987 = vst.msk [vmem:[%s6] sm:$0xff] %vm813, %v986
  %s988 = scalar_lea.vmem [#allocation2], 32
  %v989 = vld [vmem:[%s988] sm:$0xff]
  %v990 = vld [vmem:[%s988 + $0x8] sm:$0xff]
  %v991 = vld [vmem:[%s988 + $0x10] sm:$0xff]
  %v992 = vld [vmem:[%s988 + $0x18] sm:$0xff]
  %v994 = vsel %vm813, %v986, 0
  %996 = vmatprep.subr.mxu0 0.0
  %997 = vmatpush1.msra.mxu0 0.0
  %998 = vmatprep.subr.mxu0 0.0
  %999 = vmatpush1.msra.mxu0 0.0
  %1000 = vmatprep.subr.mxu0 0.0
  %1001 = vmatpush1.msra.mxu0 0.0
  %1002 = vmatprep.subr.mxu0 0.0
  %1003 = vmatpush1.msra.mxu0 0.0
  %1004 = vmatprep.subr.mxu0 0.0
  %1005 = vmatpush1.msra.mxu0 0.0
  %1006 = vmatprep.subr.mxu0 0.0
  %1007 = vmatpush1.msra.mxu0 0.0
  %1008 = vmatprep.subr.mxu0 0.0
  %1009 = vmatpush1.msra.mxu0 0.0
  %1010 = vmatprep.subr.mxu0 0.0
  %1011 = vmatpush1.msra.mxu0 0.0
  %1012 = vmatprep.subr.mxu0 %v806
  %1013 = vmatpush1.msra.mxu0 %v805
  %1014 = vmatprep.subr.mxu0 %v802
  %1015 = vmatpush1.msra.mxu0 %v801
  %1016 = vmatprep.subr.mxu0 %v798
  %1017 = vmatpush1.msra.mxu0 %v797
  %1018 = vmatprep.subr.mxu0 %v794
  %1019 = vmatpush1.msra.mxu0 %v793
  %1020 = vmatprep.subr.mxu0 %v790
  %1021 = vmatpush1.msra.mxu0 %v789
  %1022 = vmatprep.subr.mxu0 %v786
  %1023 = vmatpush1.msra.mxu0 %v785
  %1024 = vmatprep.subr.mxu0 %v782
  %1025 = vmatpush1.msra.mxu0 %v781
  %1026 = vmatprep.subr.mxu0 %v778
  %1027 = vmatpush1.msra.mxu0 %v777
  %1028 = vmatprep.subr.mxu0 0.0
  %1029 = vmatpush2.msra.mxu0 0.0
  %1030 = vmatprep.subr.mxu0 0.0
  %1031 = vmatpush2.msra.mxu0 0.0
  %1032 = vmatprep.subr.mxu0 0.0
  %1033 = vmatpush2.msra.mxu0 0.0
  %1034 = vmatprep.subr.mxu0 0.0
  %1035 = vmatpush2.msra.mxu0 0.0
  %1036 = vmatprep.subr.mxu0 0.0
  %1037 = vmatpush2.msra.mxu0 0.0
  %1038 = vmatprep.subr.mxu0 0.0
  %1039 = vmatpush2.msra.mxu0 0.0
  %1040 = vmatprep.subr.mxu0 0.0
  %1041 = vmatpush2.msra.mxu0 0.0
  %1042 = vmatprep.subr.mxu0 0.0
  %1043 = vmatpush2.msra.mxu0 0.0
  %1044 = vmatprep.subr.mxu0 0.0
  %1045 = vmatpush2.msra.mxu0 0.0
  %1046 = vmatprep.subr.mxu0 0.0
  %1047 = vmatpush2.msra.mxu0 0.0
  %1048 = vmatprep.subr.mxu0 0.0
  %1049 = vmatpush2.msra.mxu0 0.0
  %1050 = vmatprep.subr.mxu0 0.0
  %1051 = vmatpush2.msra.mxu0 0.0
  %1052 = vmatprep.subr.mxu0 0.0
  %1053 = vmatpush2.msra.mxu0 0.0
  %1054 = vmatprep.subr.mxu0 0.0
  %1055 = vmatpush2.msra.mxu0 0.0
  %1056 = vmatprep.subr.mxu0 0.0
  %1057 = vmatpush2.msra.mxu0 0.0
  %1058 = vmatprep.subr.mxu0 0.0
  %1059 = vmatpush2.msra.mxu0 0.0
  %1060 = vmatprep.mubr.f32.mxu0 0.0
  %1061 = vmatmul.mubr.f32.gmra.mxu0 %v994
  %v1062 = vpop.f32.mrf.mxu0
  %v1063 = vadd.f32 0.0, %v1062
  %v1064 = vpop.f32.mrf.mxu0
  %v1065 = vadd.f32 0.0, %v1064
  %1066 = vdwg.mxu0
  %1067 = vmatprep.subr.mxu0 0.0
  %1068 = vmatpush1.msra.mxu0 0.0
  %1069 = vmatprep.subr.mxu0 0.0
  %1070 = vmatpush1.msra.mxu0 0.0
  %1071 = vmatprep.subr.mxu0 0.0
  %1072 = vmatpush1.msra.mxu0 0.0
  %1073 = vmatprep.subr.mxu0 0.0
  %1074 = vmatpush1.msra.mxu0 0.0
  %1075 = vmatprep.subr.mxu0 0.0
  %1076 = vmatpush1.msra.mxu0 0.0
  %1077 = vmatprep.subr.mxu0 0.0
  %1078 = vmatpush1.msra.mxu0 0.0
  %1079 = vmatprep.subr.mxu0 0.0
  %1080 = vmatpush1.msra.mxu0 0.0
  %1081 = vmatprep.subr.mxu0 0.0
  %1082 = vmatpush1.msra.mxu0 0.0
  %1083 = vmatprep.subr.mxu0 %v808
  %1084 = vmatpush1.msra.mxu0 %v807
  %1085 = vmatprep.subr.mxu0 %v804
  %1086 = vmatpush1.msra.mxu0 %v803
  %1087 = vmatprep.subr.mxu0 %v800
  %1088 = vmatpush1.msra.mxu0 %v799
  %1089 = vmatprep.subr.mxu0 %v796
  %1090 = vmatpush1.msra.mxu0 %v795
  %1091 = vmatprep.subr.mxu0 %v792
  %1092 = vmatpush1.msra.mxu0 %v791
  %1093 = vmatprep.subr.mxu0 %v788
  %1094 = vmatpush1.msra.mxu0 %v787
  %1095 = vmatprep.subr.mxu0 %v784
  %1096 = vmatpush1.msra.mxu0 %v783
  %1097 = vmatprep.subr.mxu0 %v780
  %1098 = vmatpush1.msra.mxu0 %v779
  %1099 = vmatprep.subr.mxu0 0.0
  %1100 = vmatpush2.msra.mxu0 0.0
  %1101 = vmatprep.subr.mxu0 0.0
  %1102 = vmatpush2.msra.mxu0 0.0
  %1103 = vmatprep.subr.mxu0 0.0
  %1104 = vmatpush2.msra.mxu0 0.0
  %1105 = vmatprep.subr.mxu0 0.0
  %1106 = vmatpush2.msra.mxu0 0.0
  %1107 = vmatprep.subr.mxu0 0.0
  %1108 = vmatpush2.msra.mxu0 0.0
  %1109 = vmatprep.subr.mxu0 0.0
  %1110 = vmatpush2.msra.mxu0 0.0
  %1111 = vmatprep.subr.mxu0 0.0
  %1112 = vmatpush2.msra.mxu0 0.0
  %1113 = vmatprep.subr.mxu0 0.0
  %1114 = vmatpush2.msra.mxu0 0.0
  %1115 = vmatprep.subr.mxu0 0.0
  %1116 = vmatpush2.msra.mxu0 0.0
  %1117 = vmatprep.subr.mxu0 0.0
  %1118 = vmatpush2.msra.mxu0 0.0
  %1119 = vmatprep.subr.mxu0 0.0
  %1120 = vmatpush2.msra.mxu0 0.0
  %1121 = vmatprep.subr.mxu0 0.0
  %1122 = vmatpush2.msra.mxu0 0.0
  %1123 = vmatprep.subr.mxu0 0.0
  %1124 = vmatpush2.msra.mxu0 0.0
  %1125 = vmatprep.subr.mxu0 0.0
  %1126 = vmatpush2.msra.mxu0 0.0
  %1127 = vmatprep.subr.mxu0 0.0
  %1128 = vmatpush2.msra.mxu0 0.0
  %1129 = vmatprep.subr.mxu0 0.0
  %1130 = vmatpush2.msra.mxu0 0.0
  %1131 = vmatprep.mubr.f32.mxu0 0.0
  %1132 = vmatmul.mubr.f32.gmra.mxu0 %v994
  %v1133 = vpop.f32.mrf.mxu0
  %v1134 = vadd.f32 0.0, %v1133
  %v1135 = vpop.f32.mrf.mxu0
  %v1136 = vadd.f32 0.0, %v1135
  %1137 = vdwg.mxu0
  %v1138 = vadd.f32 %v989, %v1063
  %v1139 = vadd.f32 %v990, %v1065
  %v1140 = vadd.f32 %v991, %v1134
  %v1141 = vadd.f32 %v992, %v1136
  %v1142 = vxor.u32 %v1138, 2147483648
  %v1143 = vmul.f32 %v1142, 1.442695
  %v1144 = vpow.pop %v1143
  %v1145 = vadd.f32 %v1144, 1.0
  %v1146 = vrcp.pop %v1145
  %v1147 = vmul.f32 1.0, %v1146
  %v1148 = vxor.u32 %v1139, 2147483648
  %v1149 = vmul.f32 %v1148, 1.442695
  %v1150 = vpow.pop %v1149
  %v1151 = vadd.f32 %v1150, 1.0
  %v1152 = vrcp.pop %v1151
  %v1153 = vmul.f32 1.0, %v1152
  %v1154 = vtanh.pop %v1140
  %v1155 = vxor.u32 %v1141, 2147483648
  %v1156 = vmul.f32 %v1155, 1.442695
  %v1157 = vpow.pop %v1156
  %v1158 = vadd.f32 %v1157, 1.0
  %v1159 = vrcp.pop %v1158
  %v1160 = vmul.f32 1.0, %v1159
  %v1161 = vmul.f32 %v1153, %v984
  %v1162 = vmul.f32 %v1147, %v1154
  %v1163 = vadd.f32 %v1161, %v1162
  %v1164 = vtanh.pop %v1163
  %v1165 = vmul.f32 %v1160, %v1164
  %s1166 = scalar_lea.vmem %s6, 8
  %1167 = vst.msk [vmem:[%s1166] sm:$0xff] %vm813, %v1165
  %s1168 = scalar_lea.vmem [#allocation2], 64
  %v1169 = vld [vmem:[%s1168] sm:$0xff]
  %v1170 = vld [vmem:[%s1168 + $0x8] sm:$0xff]
  %v1171 = vld [vmem:[%s1168 + $0x10] sm:$0xff]
  %v1172 = vld [vmem:[%s1168 + $0x18] sm:$0xff]
  %v1174 = vsel %vm813, %v1165, 0
  %1176 = vmatprep.subr.mxu0 0.0
  %1177 = vmatpush1.msra.mxu0 0.0
  %1178 = vmatprep.subr.mxu0 0.0
  %1179 = vmatpush1.msra.mxu0 0.0
  %1180 = vmatprep.subr.mxu0 0.0
  %1181 = vmatpush1.msra.mxu0 0.0
  %1182 = vmatprep.subr.mxu0 0.0
  %1183 = vmatpush1.msra.mxu0 0.0
  %1184 = vmatprep.subr.mxu0 0.0
  %1185 = vmatpush1.msra.mxu0 0.0
  %1186 = vmatprep.subr.mxu0 0.0
  %1187 = vmatpush1.msra.mxu0 0.0
  %1188 = vmatprep.subr.mxu0 0.0
  %1189 = vmatpush1.msra.mxu0 0.0
  %1190 = vmatprep.subr.mxu0 0.0
  %1191 = vmatpush1.msra.mxu0 0.0
  %1192 = vmatprep.subr.mxu0 %v806
  %1193 = vmatpush1.msra.mxu0 %v805
  %1194 = vmatprep.subr.mxu0 %v802
  %1195 = vmatpush1.msra.mxu0 %v801
  %1196 = vmatprep.subr.mxu0 %v798
  %1197 = vmatpush1.msra.mxu0 %v797
  %1198 = vmatprep.subr.mxu0 %v794
  %1199 = vmatpush1.msra.mxu0 %v793
  %1200 = vmatprep.subr.mxu0 %v790
  %1201 = vmatpush1.msra.mxu0 %v789
  %1202 = vmatprep.subr.mxu0 %v786
  %1203 = vmatpush1.msra.mxu0 %v785
  %1204 = vmatprep.subr.mxu0 %v782
  %1205 = vmatpush1.msra.mxu0 %v781
  %1206 = vmatprep.subr.mxu0 %v778
  %1207 = vmatpush1.msra.mxu0 %v777
  %1208 = vmatprep.subr.mxu0 0.0
  %1209 = vmatpush2.msra.mxu0 0.0
  %1210 = vmatprep.subr.mxu0 0.0
  %1211 = vmatpush2.msra.mxu0 0.0
  %1212 = vmatprep.subr.mxu0 0.0
  %1213 = vmatpush2.msra.mxu0 0.0
  %1214 = vmatprep.subr.mxu0 0.0
  %1215 = vmatpush2.msra.mxu0 0.0
  %1216 = vmatprep.subr.mxu0 0.0
  %1217 = vmatpush2.msra.mxu0 0.0
  %1218 = vmatprep.subr.mxu0 0.0
  %1219 = vmatpush2.msra.mxu0 0.0
  %1220 = vmatprep.subr.mxu0 0.0
  %1221 = vmatpush2.msra.mxu0 0.0
  %1222 = vmatprep.subr.mxu0 0.0
  %1223 = vmatpush2.msra.mxu0 0.0
  %1224 = vmatprep.subr.mxu0 0.0
  %1225 = vmatpush2.msra.mxu0 0.0
  %1226 = vmatprep.subr.mxu0 0.0
  %1227 = vmatpush2.msra.mxu0 0.0
  %1228 = vmatprep.subr.mxu0 0.0
  %1229 = vmatpush2.msra.mxu0 0.0
  %1230 = vmatprep.subr.mxu0 0.0
  %1231 = vmatpush2.msra.mxu0 0.0
  %1232 = vmatprep.subr.mxu0 0.0
  %1233 = vmatpush2.msra.mxu0 0.0
  %1234 = vmatprep.subr.mxu0 0.0
  %1235 = vmatpush2.msra.mxu0 0.0
  %1236 = vmatprep.subr.mxu0 0.0
  %1237 = vmatpush2.msra.mxu0 0.0
  %1238 = vmatprep.subr.mxu0 0.0
  %1239 = vmatpush2.msra.mxu0 0.0
  %1240 = vmatprep.mubr.f32.mxu0 0.0
  %1241 = vmatmul.mubr.f32.gmra.mxu0 %v1174
  %v1242 = vpop.f32.mrf.mxu0
  %v1243 = vadd.f32 0.0, %v1242
  %v1244 = vpop.f32.mrf.mxu0
  %v1245 = vadd.f32 0.0, %v1244
  %1246 = vdwg.mxu0
  %1247 = vmatprep.subr.mxu0 0.0
  %1248 = vmatpush1.msra.mxu0 0.0
  %1249 = vmatprep.subr.mxu0 0.0
  %1250 = vmatpush1.msra.mxu0 0.0
  %1251 = vmatprep.subr.mxu0 0.0
  %1252 = vmatpush1.msra.mxu0 0.0
  %1253 = vmatprep.subr.mxu0 0.0
  %1254 = vmatpush1.msra.mxu0 0.0
  %1255 = vmatprep.subr.mxu0 0.0
  %1256 = vmatpush1.msra.mxu0 0.0
  %1257 = vmatprep.subr.mxu0 0.0
  %1258 = vmatpush1.msra.mxu0 0.0
  %1259 = vmatprep.subr.mxu0 0.0
  %1260 = vmatpush1.msra.mxu0 0.0
  %1261 = vmatprep.subr.mxu0 0.0
  %1262 = vmatpush1.msra.mxu0 0.0
  %1263 = vmatprep.subr.mxu0 %v808
  %1264 = vmatpush1.msra.mxu0 %v807
  %1265 = vmatprep.subr.mxu0 %v804
  %1266 = vmatpush1.msra.mxu0 %v803
  %1267 = vmatprep.subr.mxu0 %v800
  %1268 = vmatpush1.msra.mxu0 %v799
  %1269 = vmatprep.subr.mxu0 %v796
  %1270 = vmatpush1.msra.mxu0 %v795
  %1271 = vmatprep.subr.mxu0 %v792
  %1272 = vmatpush1.msra.mxu0 %v791
  %1273 = vmatprep.subr.mxu0 %v788
  %1274 = vmatpush1.msra.mxu0 %v787
  %1275 = vmatprep.subr.mxu0 %v784
  %1276 = vmatpush1.msra.mxu0 %v783
  %1277 = vmatprep.subr.mxu0 %v780
  %1278 = vmatpush1.msra.mxu0 %v779
  %1279 = vmatprep.subr.mxu0 0.0
  %1280 = vmatpush2.msra.mxu0 0.0
  %1281 = vmatprep.subr.mxu0 0.0
  %1282 = vmatpush2.msra.mxu0 0.0
  %1283 = vmatprep.subr.mxu0 0.0
  %1284 = vmatpush2.msra.mxu0 0.0
  %1285 = vmatprep.subr.mxu0 0.0
  %1286 = vmatpush2.msra.mxu0 0.0
  %1287 = vmatprep.subr.mxu0 0.0
  %1288 = vmatpush2.msra.mxu0 0.0
  %1289 = vmatprep.subr.mxu0 0.0
  %1290 = vmatpush2.msra.mxu0 0.0
  %1291 = vmatprep.subr.mxu0 0.0
  %1292 = vmatpush2.msra.mxu0 0.0
  %1293 = vmatprep.subr.mxu0 0.0
  %1294 = vmatpush2.msra.mxu0 0.0
  %1295 = vmatprep.subr.mxu0 0.0
  %1296 = vmatpush2.msra.mxu0 0.0
  %1297 = vmatprep.subr.mxu0 0.0
  %1298 = vmatpush2.msra.mxu0 0.0
  %1299 = vmatprep.subr.mxu0 0.0
  %1300 = vmatpush2.msra.mxu0 0.0
  %1301 = vmatprep.subr.mxu0 0.0
  %1302 = vmatpush2.msra.mxu0 0.0
  %1303 = vmatprep.subr.mxu0 0.0
  %1304 = vmatpush2.msra.mxu0 0.0
  %1305 = vmatprep.subr.mxu0 0.0
  %1306 = vmatpush2.msra.mxu0 0.0
  %1307 = vmatprep.subr.mxu0 0.0
  %1308 = vmatpush2.msra.mxu0 0.0
  %1309 = vmatprep.subr.mxu0 0.0
  %1310 = vmatpush2.msra.mxu0 0.0
  %1311 = vmatprep.mubr.f32.mxu0 0.0
  %1312 = vmatmul.mubr.f32.gmra.mxu0 %v1174
  %v1313 = vpop.f32.mrf.mxu0
  %v1314 = vadd.f32 0.0, %v1313
  %v1315 = vpop.f32.mrf.mxu0
  %v1316 = vadd.f32 0.0, %v1315
  %1317 = vdwg.mxu0
  %v1318 = vadd.f32 %v1169, %v1243
  %v1319 = vadd.f32 %v1170, %v1245
  %v1320 = vadd.f32 %v1171, %v1314
  %v1321 = vadd.f32 %v1172, %v1316
  %v1322 = vxor.u32 %v1318, 2147483648
  %v1323 = vmul.f32 %v1322, 1.442695
  %v1324 = vpow.pop %v1323
  %v1325 = vadd.f32 %v1324, 1.0
  %v1326 = vrcp.pop %v1325
  %v1327 = vmul.f32 1.0, %v1326
  %v1328 = vxor.u32 %v1319, 2147483648
  %v1329 = vmul.f32 %v1328, 1.442695
  %v1330 = vpow.pop %v1329
  %v1331 = vadd.f32 %v1330, 1.0
  %v1332 = vrcp.pop %v1331
  %v1333 = vmul.f32 1.0, %v1332
  %v1334 = vtanh.pop %v1320
  %v1335 = vxor.u32 %v1321, 2147483648
  %v1336 = vmul.f32 %v1335, 1.442695
  %v1337 = vpow.pop %v1336
  %v1338 = vadd.f32 %v1337, 1.0
  %v1339 = vrcp.pop %v1338
  %v1340 = vmul.f32 1.0, %v1339
  %v1341 = vmul.f32 %v1333, %v1163
  %v1342 = vmul.f32 %v1327, %v1334
  %v1343 = vadd.f32 %v1341, %v1342
  %v1344 = vtanh.pop %v1343
  %v1345 = vmul.f32 %v1340, %v1344
  %s1346 = scalar_lea.vmem %s6, 16
  %1347 = vst.msk [vmem:[%s1346] sm:$0xff] %vm813, %v1345
  %s1348 = scalar_lea.vmem [#allocation2], 96
  %v1349 = vld [vmem:[%s1348] sm:$0xff]
  %v1350 = vld [vmem:[%s1348 + $0x8] sm:$0xff]
  %v1351 = vld [vmem:[%s1348 + $0x10] sm:$0xff]
  %v1352 = vld [vmem:[%s1348 + $0x18] sm:$0xff]
  %v1354 = vsel %vm813, %v1345, 0
  %1356 = vmatprep.subr.mxu0 0.0
  %1357 = vmatpush1.msra.mxu0 0.0
  %1358 = vmatprep.subr.mxu0 0.0
  %1359 = vmatpush1.msra.mxu0 0.0
  %1360 = vmatprep.subr.mxu0 0.0
  %1361 = vmatpush1.msra.mxu0 0.0
  %1362 = vmatprep.subr.mxu0 0.0
  %1363 = vmatpush1.msra.mxu0 0.0
  %1364 = vmatprep.subr.mxu0 0.0
  %1365 = vmatpush1.msra.mxu0 0.0
  %1366 = vmatprep.subr.mxu0 0.0
  %1367 = vmatpush1.msra.mxu0 0.0
  %1368 = vmatprep.subr.mxu0 0.0
  %1369 = vmatpush1.msra.mxu0 0.0
  %1370 = vmatprep.subr.mxu0 0.0
  %1371 = vmatpush1.msra.mxu0 0.0
  %1372 = vmatprep.subr.mxu0 %v806
  %1373 = vmatpush1.msra.mxu0 %v805
  %1374 = vmatprep.subr.mxu0 %v802
  %1375 = vmatpush1.msra.mxu0 %v801
  %1376 = vmatprep.subr.mxu0 %v798
  %1377 = vmatpush1.msra.mxu0 %v797
  %1378 = vmatprep.subr.mxu0 %v794
  %1379 = vmatpush1.msra.mxu0 %v793
  %1380 = vmatprep.subr.mxu0 %v790
  %1381 = vmatpush1.msra.mxu0 %v789
  %1382 = vmatprep.subr.mxu0 %v786
  %1383 = vmatpush1.msra.mxu0 %v785
  %1384 = vmatprep.subr.mxu0 %v782
  %1385 = vmatpush1.msra.mxu0 %v781
  %1386 = vmatprep.subr.mxu0 %v778
  %1387 = vmatpush1.msra.mxu0 %v777
  %1388 = vmatprep.subr.mxu0 0.0
  %1389 = vmatpush2.msra.mxu0 0.0
  %1390 = vmatprep.subr.mxu0 0.0
  %1391 = vmatpush2.msra.mxu0 0.0
  %1392 = vmatprep.subr.mxu0 0.0
  %1393 = vmatpush2.msra.mxu0 0.0
  %1394 = vmatprep.subr.mxu0 0.0
  %1395 = vmatpush2.msra.mxu0 0.0
  %1396 = vmatprep.subr.mxu0 0.0
  %1397 = vmatpush2.msra.mxu0 0.0
  %1398 = vmatprep.subr.mxu0 0.0
  %1399 = vmatpush2.msra.mxu0 0.0
  %1400 = vmatprep.subr.mxu0 0.0
  %1401 = vmatpush2.msra.mxu0 0.0
  %1402 = vmatprep.subr.mxu0 0.0
  %1403 = vmatpush2.msra.mxu0 0.0
  %1404 = vmatprep.subr.mxu0 0.0
  %1405 = vmatpush2.msra.mxu0 0.0
  %1406 = vmatprep.subr.mxu0 0.0
  %1407 = vmatpush2.msra.mxu0 0.0
  %1408 = vmatprep.subr.mxu0 0.0
  %1409 = vmatpush2.msra.mxu0 0.0
  %1410 = vmatprep.subr.mxu0 0.0
  %1411 = vmatpush2.msra.mxu0 0.0
  %1412 = vmatprep.subr.mxu0 0.0
  %1413 = vmatpush2.msra.mxu0 0.0
  %1414 = vmatprep.subr.mxu0 0.0
  %1415 = vmatpush2.msra.mxu0 0.0
  %1416 = vmatprep.subr.mxu0 0.0
  %1417 = vmatpush2.msra.mxu0 0.0
  %1418 = vmatprep.subr.mxu0 0.0
  %1419 = vmatpush2.msra.mxu0 0.0
  %1420 = vmatprep.mubr.f32.mxu0 0.0
  %1421 = vmatmul.mubr.f32.gmra.mxu0 %v1354
  %v1422 = vpop.f32.mrf.mxu0
  %v1423 = vadd.f32 0.0, %v1422
  %v1424 = vpop.f32.mrf.mxu0
  %v1425 = vadd.f32 0.0, %v1424
  %1426 = vdwg.mxu0
  %1427 = vmatprep.subr.mxu0 0.0
  %1428 = vmatpush1.msra.mxu0 0.0
  %1429 = vmatprep.subr.mxu0 0.0
  %1430 = vmatpush1.msra.mxu0 0.0
  %1431 = vmatprep.subr.mxu0 0.0
  %1432 = vmatpush1.msra.mxu0 0.0
  %1433 = vmatprep.subr.mxu0 0.0
  %1434 = vmatpush1.msra.mxu0 0.0
  %1435 = vmatprep.subr.mxu0 0.0
  %1436 = vmatpush1.msra.mxu0 0.0
  %1437 = vmatprep.subr.mxu0 0.0
  %1438 = vmatpush1.msra.mxu0 0.0
  %1439 = vmatprep.subr.mxu0 0.0
  %1440 = vmatpush1.msra.mxu0 0.0
  %1441 = vmatprep.subr.mxu0 0.0
  %1442 = vmatpush1.msra.mxu0 0.0
  %1443 = vmatprep.subr.mxu0 %v808
  %1444 = vmatpush1.msra.mxu0 %v807
  %1445 = vmatprep.subr.mxu0 %v804
  %1446 = vmatpush1.msra.mxu0 %v803
  %1447 = vmatprep.subr.mxu0 %v800
  %1448 = vmatpush1.msra.mxu0 %v799
  %1449 = vmatprep.subr.mxu0 %v796
  %1450 = vmatpush1.msra.mxu0 %v795
  %1451 = vmatprep.subr.mxu0 %v792
  %1452 = vmatpush1.msra.mxu0 %v791
  %1453 = vmatprep.subr.mxu0 %v788
  %1454 = vmatpush1.msra.mxu0 %v787
  %1455 = vmatprep.subr.mxu0 %v784
  %1456 = vmatpush1.msra.mxu0 %v783
  %1457 = vmatprep.subr.mxu0 %v780
  %1458 = vmatpush1.msra.mxu0 %v779
  %1459 = vmatprep.subr.mxu0 0.0
  %1460 = vmatpush2.msra.mxu0 0.0
  %1461 = vmatprep.subr.mxu0 0.0
  %1462 = vmatpush2.msra.mxu0 0.0
  %1463 = vmatprep.subr.mxu0 0.0
  %1464 = vmatpush2.msra.mxu0 0.0
  %1465 = vmatprep.subr.mxu0 0.0
  %1466 = vmatpush2.msra.mxu0 0.0
  %1467 = vmatprep.subr.mxu0 0.0
  %1468 = vmatpush2.msra.mxu0 0.0
  %1469 = vmatprep.subr.mxu0 0.0
  %1470 = vmatpush2.msra.mxu0 0.0
  %1471 = vmatprep.subr.mxu0 0.0
  %1472 = vmatpush2.msra.mxu0 0.0
  %1473 = vmatprep.subr.mxu0 0.0
  %1474 = vmatpush2.msra.mxu0 0.0
  %1475 = vmatprep.subr.mxu0 0.0
  %1476 = vmatpush2.msra.mxu0 0.0
  %1477 = vmatprep.subr.mxu0 0.0
  %1478 = vmatpush2.msra.mxu0 0.0
  %1479 = vmatprep.subr.mxu0 0.0
  %1480 = vmatpush2.msra.mxu0 0.0
  %1481 = vmatprep.subr.mxu0 0.0
  %1482 = vmatpush2.msra.mxu0 0.0
  %1483 = vmatprep.subr.mxu0 0.0
  %1484 = vmatpush2.msra.mxu0 0.0
  %1485 = vmatprep.subr.mxu0 0.0
  %1486 = vmatpush2.msra.mxu0 0.0
  %1487 = vmatprep.subr.mxu0 0.0
  %1488 = vmatpush2.msra.mxu0 0.0
  %1489 = vmatprep.subr.mxu0 0.0
  %1490 = vmatpush2.msra.mxu0 0.0
  %1491 = vmatprep.mubr.f32.mxu0 0.0
  %1492 = vmatmul.mubr.f32.gmra.mxu0 %v1354
  %v1493 = vpop.f32.mrf.mxu0
  %v1494 = vadd.f32 0.0, %v1493
  %v1495 = vpop.f32.mrf.mxu0
  %v1496 = vadd.f32 0.0, %v1495
  %1497 = vdwg.mxu0
  %v1498 = vadd.f32 %v1349, %v1423
  %v1499 = vadd.f32 %v1350, %v1425
  %v1500 = vadd.f32 %v1351, %v1494
  %v1501 = vadd.f32 %v1352, %v1496
  %v1502 = vxor.u32 %v1498, 2147483648
  %v1503 = vmul.f32 %v1502, 1.442695
  %v1504 = vpow.pop %v1503
  %v1505 = vadd.f32 %v1504, 1.0
  %v1506 = vrcp.pop %v1505
  %v1507 = vmul.f32 1.0, %v1506
  %v1508 = vxor.u32 %v1499, 2147483648
  %v1509 = vmul.f32 %v1508, 1.442695
  %v1510 = vpow.pop %v1509
  %v1511 = vadd.f32 %v1510, 1.0
  %v1512 = vrcp.pop %v1511
  %v1513 = vmul.f32 1.0, %v1512
  %v1514 = vtanh.pop %v1500
  %v1515 = vxor.u32 %v1501, 2147483648
  %v1516 = vmul.f32 %v1515, 1.442695
  %v1517 = vpow.pop %v1516
  %v1518 = vadd.f32 %v1517, 1.0
  %v1519 = vrcp.pop %v1518
  %v1520 = vmul.f32 1.0, %v1519
  %v1521 = vmul.f32 %v1513, %v1343
  %v1522 = vmul.f32 %v1507, %v1514
  %v1523 = vadd.f32 %v1521, %v1522
  %v1524 = vtanh.pop %v1523
  %v1525 = vmul.f32 %v1520, %v1524
  %s1526 = scalar_lea.vmem %s6, 24
  %1527 = vst.msk [vmem:[%s1526] sm:$0xff] %vm813, %v1525
  %s1528 = scalar_lea.vmem [#allocation2], 128
  %v1529 = vld [vmem:[%s1528] sm:$0xff]
  %v1530 = vld [vmem:[%s1528 + $0x8] sm:$0xff]
  %v1531 = vld [vmem:[%s1528 + $0x10] sm:$0xff]
  %v1532 = vld [vmem:[%s1528 + $0x18] sm:$0xff]
  %v1534 = vsel %vm813, %v1525, 0
  %1536 = vmatprep.subr.mxu0 0.0
  %1537 = vmatpush1.msra.mxu0 0.0
  %1538 = vmatprep.subr.mxu0 0.0
  %1539 = vmatpush1.msra.mxu0 0.0
  %1540 = vmatprep.subr.mxu0 0.0
  %1541 = vmatpush1.msra.mxu0 0.0
  %1542 = vmatprep.subr.mxu0 0.0
  %1543 = vmatpush1.msra.mxu0 0.0
  %1544 = vmatprep.subr.mxu0 0.0
  %1545 = vmatpush1.msra.mxu0 0.0
  %1546 = vmatprep.subr.mxu0 0.0
  %1547 = vmatpush1.msra.mxu0 0.0
  %1548 = vmatprep.subr.mxu0 0.0
  %1549 = vmatpush1.msra.mxu0 0.0
  %1550 = vmatprep.subr.mxu0 0.0
  %1551 = vmatpush1.msra.mxu0 0.0
  %1552 = vmatprep.subr.mxu0 %v806
  %1553 = vmatpush1.msra.mxu0 %v805
  %1554 = vmatprep.subr.mxu0 %v802
  %1555 = vmatpush1.msra.mxu0 %v801
  %1556 = vmatprep.subr.mxu0 %v798
  %1557 = vmatpush1.msra.mxu0 %v797
  %1558 = vmatprep.subr.mxu0 %v794
  %1559 = vmatpush1.msra.mxu0 %v793
  %1560 = vmatprep.subr.mxu0 %v790
  %1561 = vmatpush1.msra.mxu0 %v789
  %1562 = vmatprep.subr.mxu0 %v786
  %1563 = vmatpush1.msra.mxu0 %v785
  %1564 = vmatprep.subr.mxu0 %v782
  %1565 = vmatpush1.msra.mxu0 %v781
  %1566 = vmatprep.subr.mxu0 %v778
  %1567 = vmatpush1.msra.mxu0 %v777
  %1568 = vmatprep.subr.mxu0 0.0
  %1569 = vmatpush2.msra.mxu0 0.0
  %1570 = vmatprep.subr.mxu0 0.0
  %1571 = vmatpush2.msra.mxu0 0.0
  %1572 = vmatprep.subr.mxu0 0.0
  %1573 = vmatpush2.msra.mxu0 0.0
  %1574 = vmatprep.subr.mxu0 0.0
  %1575 = vmatpush2.msra.mxu0 0.0
  %1576 = vmatprep.subr.mxu0 0.0
  %1577 = vmatpush2.msra.mxu0 0.0
  %1578 = vmatprep.subr.mxu0 0.0
  %1579 = vmatpush2.msra.mxu0 0.0
  %1580 = vmatprep.subr.mxu0 0.0
  %1581 = vmatpush2.msra.mxu0 0.0
  %1582 = vmatprep.subr.mxu0 0.0
  %1583 = vmatpush2.msra.mxu0 0.0
  %1584 = vmatprep.subr.mxu0 0.0
  %1585 = vmatpush2.msra.mxu0 0.0
  %1586 = vmatprep.subr.mxu0 0.0
  %1587 = vmatpush2.msra.mxu0 0.0
  %1588 = vmatprep.subr.mxu0 0.0
  %1589 = vmatpush2.msra.mxu0 0.0
  %1590 = vmatprep.subr.mxu0 0.0
  %1591 = vmatpush2.msra.mxu0 0.0
  %1592 = vmatprep.subr.mxu0 0.0
  %1593 = vmatpush2.msra.mxu0 0.0
  %1594 = vmatprep.subr.mxu0 0.0
  %1595 = vmatpush2.msra.mxu0 0.0
  %1596 = vmatprep.subr.mxu0 0.0
  %1597 = vmatpush2.msra.mxu0 0.0
  %1598 = vmatprep.subr.mxu0 0.0
  %1599 = vmatpush2.msra.mxu0 0.0
  %1600 = vmatprep.mubr.f32.mxu0 0.0
  %1601 = vmatmul.mubr.f32.gmra.mxu0 %v1534
  %v1602 = vpop.f32.mrf.mxu0
  %v1603 = vadd.f32 0.0, %v1602
  %v1604 = vpop.f32.mrf.mxu0
  %v1605 = vadd.f32 0.0, %v1604
  %1606 = vdwg.mxu0
  %1607 = vmatprep.subr.mxu0 0.0
  %1608 = vmatpush1.msra.mxu0 0.0
  %1609 = vmatprep.subr.mxu0 0.0
  %1610 = vmatpush1.msra.mxu0 0.0
  %1611 = vmatprep.subr.mxu0 0.0
  %1612 = vmatpush1.msra.mxu0 0.0
  %1613 = vmatprep.subr.mxu0 0.0
  %1614 = vmatpush1.msra.mxu0 0.0
  %1615 = vmatprep.subr.mxu0 0.0
  %1616 = vmatpush1.msra.mxu0 0.0
  %1617 = vmatprep.subr.mxu0 0.0
  %1618 = vmatpush1.msra.mxu0 0.0
  %1619 = vmatprep.subr.mxu0 0.0
  %1620 = vmatpush1.msra.mxu0 0.0
  %1621 = vmatprep.subr.mxu0 0.0
  %1622 = vmatpush1.msra.mxu0 0.0
  %1623 = vmatprep.subr.mxu0 %v808
  %1624 = vmatpush1.msra.mxu0 %v807
  %1625 = vmatprep.subr.mxu0 %v804
  %1626 = vmatpush1.msra.mxu0 %v803
  %1627 = vmatprep.subr.mxu0 %v800
  %1628 = vmatpush1.msra.mxu0 %v799
  %1629 = vmatprep.subr.mxu0 %v796
  %1630 = vmatpush1.msra.mxu0 %v795
  %1631 = vmatprep.subr.mxu0 %v792
  %1632 = vmatpush1.msra.mxu0 %v791
  %1633 = vmatprep.subr.mxu0 %v788
  %1634 = vmatpush1.msra.mxu0 %v787
  %1635 = vmatprep.subr.mxu0 %v784
  %1636 = vmatpush1.msra.mxu0 %v783
  %1637 = vmatprep.subr.mxu0 %v780
  %1638 = vmatpush1.msra.mxu0 %v779
  %1639 = vmatprep.subr.mxu0 0.0
  %1640 = vmatpush2.msra.mxu0 0.0
  %1641 = vmatprep.subr.mxu0 0.0
  %1642 = vmatpush2.msra.mxu0 0.0
  %1643 = vmatprep.subr.mxu0 0.0
  %1644 = vmatpush2.msra.mxu0 0.0
  %1645 = vmatprep.subr.mxu0 0.0
  %1646 = vmatpush2.msra.mxu0 0.0
  %1647 = vmatprep.subr.mxu0 0.0
  %1648 = vmatpush2.msra.mxu0 0.0
  %1649 = vmatprep.subr.mxu0 0.0
  %1650 = vmatpush2.msra.mxu0 0.0
  %1651 = vmatprep.subr.mxu0 0.0
  %1652 = vmatpush2.msra.mxu0 0.0
  %1653 = vmatprep.subr.mxu0 0.0
  %1654 = vmatpush2.msra.mxu0 0.0
  %1655 = vmatprep.subr.mxu0 0.0
  %1656 = vmatpush2.msra.mxu0 0.0
  %1657 = vmatprep.subr.mxu0 0.0
  %1658 = vmatpush2.msra.mxu0 0.0
  %1659 = vmatprep.subr.mxu0 0.0
  %1660 = vmatpush2.msra.mxu0 0.0
  %1661 = vmatprep.subr.mxu0 0.0
  %1662 = vmatpush2.msra.mxu0 0.0
  %1663 = vmatprep.subr.mxu0 0.0
  %1664 = vmatpush2.msra.mxu0 0.0
  %1665 = vmatprep.subr.mxu0 0.0
  %1666 = vmatpush2.msra.mxu0 0.0
  %1667 = vmatprep.subr.mxu0 0.0
  %1668 = vmatpush2.msra.mxu0 0.0
  %1669 = vmatprep.subr.mxu0 0.0
  %1670 = vmatpush2.msra.mxu0 0.0
  %1671 = vmatprep.mubr.f32.mxu0 0.0
  %1672 = vmatmul.mubr.f32.gmra.mxu0 %v1534
  %v1673 = vpop.f32.mrf.mxu0
  %v1674 = vadd.f32 0.0, %v1673
  %v1675 = vpop.f32.mrf.mxu0
  %v1676 = vadd.f32 0.0, %v1675
  %1677 = vdwg.mxu0
  %v1678 = vadd.f32 %v1529, %v1603
  %v1679 = vadd.f32 %v1530, %v1605
  %v1680 = vadd.f32 %v1531, %v1674
  %v1681 = vadd.f32 %v1532, %v1676
  %v1682 = vxor.u32 %v1678, 2147483648
  %v1683 = vmul.f32 %v1682, 1.442695
  %v1684 = vpow.pop %v1683
  %v1685 = vadd.f32 %v1684, 1.0
  %v1686 = vrcp.pop %v1685
  %v1687 = vmul.f32 1.0, %v1686
  %v1688 = vxor.u32 %v1679, 2147483648
  %v1689 = vmul.f32 %v1688, 1.442695
  %v1690 = vpow.pop %v1689
  %v1691 = vadd.f32 %v1690, 1.0
  %v1692 = vrcp.pop %v1691
  %v1693 = vmul.f32 1.0, %v1692
  %v1694 = vtanh.pop %v1680
  %v1695 = vxor.u32 %v1681, 2147483648
  %v1696 = vmul.f32 %v1695, 1.442695
  %v1697 = vpow.pop %v1696
  %v1698 = vadd.f32 %v1697, 1.0
  %v1699 = vrcp.pop %v1698
  %v1700 = vmul.f32 1.0, %v1699
  %v1701 = vmul.f32 %v1693, %v1523
  %v1702 = vmul.f32 %v1687, %v1694
  %v1703 = vadd.f32 %v1701, %v1702
  %v1704 = vtanh.pop %v1703
  %v1705 = vmul.f32 %v1700, %v1704
  %s1706 = scalar_lea.vmem %s6, 32
  %1707 = vst.msk [vmem:[%s1706] sm:$0xff] %vm813, %v1705
  %s1708 = scalar_lea.vmem [#allocation2], 160
  %v1709 = vld [vmem:[%s1708] sm:$0xff]
  %v1710 = vld [vmem:[%s1708 + $0x8] sm:$0xff]
  %v1711 = vld [vmem:[%s1708 + $0x10] sm:$0xff]
  %v1712 = vld [vmem:[%s1708 + $0x18] sm:$0xff]
  %v1714 = vsel %vm813, %v1705, 0
  %1716 = vmatprep.subr.mxu0 0.0
  %1717 = vmatpush1.msra.mxu0 0.0
  %1718 = vmatprep.subr.mxu0 0.0
  %1719 = vmatpush1.msra.mxu0 0.0
  %1720 = vmatprep.subr.mxu0 0.0
  %1721 = vmatpush1.msra.mxu0 0.0
  %1722 = vmatprep.subr.mxu0 0.0
  %1723 = vmatpush1.msra.mxu0 0.0
  %1724 = vmatprep.subr.mxu0 0.0
  %1725 = vmatpush1.msra.mxu0 0.0
  %1726 = vmatprep.subr.mxu0 0.0
  %1727 = vmatpush1.msra.mxu0 0.0
  %1728 = vmatprep.subr.mxu0 0.0
  %1729 = vmatpush1.msra.mxu0 0.0
  %1730 = vmatprep.subr.mxu0 0.0
  %1731 = vmatpush1.msra.mxu0 0.0
  %1732 = vmatprep.subr.mxu0 %v806
  %1733 = vmatpush1.msra.mxu0 %v805
  %1734 = vmatprep.subr.mxu0 %v802
  %1735 = vmatpush1.msra.mxu0 %v801
  %1736 = vmatprep.subr.mxu0 %v798
  %1737 = vmatpush1.msra.mxu0 %v797
  %1738 = vmatprep.subr.mxu0 %v794
  %1739 = vmatpush1.msra.mxu0 %v793
  %1740 = vmatprep.subr.mxu0 %v790
  %1741 = vmatpush1.msra.mxu0 %v789
  %1742 = vmatprep.subr.mxu0 %v786
  %1743 = vmatpush1.msra.mxu0 %v785
  %1744 = vmatprep.subr.mxu0 %v782
  %1745 = vmatpush1.msra.mxu0 %v781
  %1746 = vmatprep.subr.mxu0 %v778
  %1747 = vmatpush1.msra.mxu0 %v777
  %1748 = vmatprep.subr.mxu0 0.0
  %1749 = vmatpush2.msra.mxu0 0.0
  %1750 = vmatprep.subr.mxu0 0.0
  %1751 = vmatpush2.msra.mxu0 0.0
  %1752 = vmatprep.subr.mxu0 0.0
  %1753 = vmatpush2.msra.mxu0 0.0
  %1754 = vmatprep.subr.mxu0 0.0
  %1755 = vmatpush2.msra.mxu0 0.0
  %1756 = vmatprep.subr.mxu0 0.0
  %1757 = vmatpush2.msra.mxu0 0.0
  %1758 = vmatprep.subr.mxu0 0.0
  %1759 = vmatpush2.msra.mxu0 0.0
  %1760 = vmatprep.subr.mxu0 0.0
  %1761 = vmatpush2.msra.mxu0 0.0
  %1762 = vmatprep.subr.mxu0 0.0
  %1763 = vmatpush2.msra.mxu0 0.0
  %1764 = vmatprep.subr.mxu0 0.0
  %1765 = vmatpush2.msra.mxu0 0.0
  %1766 = vmatprep.subr.mxu0 0.0
  %1767 = vmatpush2.msra.mxu0 0.0
  %1768 = vmatprep.subr.mxu0 0.0
  %1769 = vmatpush2.msra.mxu0 0.0
  %1770 = vmatprep.subr.mxu0 0.0
  %1771 = vmatpush2.msra.mxu0 0.0
  %1772 = vmatprep.subr.mxu0 0.0
  %1773 = vmatpush2.msra.mxu0 0.0
  %1774 = vmatprep.subr.mxu0 0.0
  %1775 = vmatpush2.msra.mxu0 0.0
  %1776 = vmatprep.subr.mxu0 0.0
  %1777 = vmatpush2.msra.mxu0 0.0
  %1778 = vmatprep.subr.mxu0 0.0
  %1779 = vmatpush2.msra.mxu0 0.0
  %1780 = vmatprep.mubr.f32.mxu0 0.0
  %1781 = vmatmul.mubr.f32.gmra.mxu0 %v1714
  %v1782 = vpop.f32.mrf.mxu0
  %v1783 = vadd.f32 0.0, %v1782
  %v1784 = vpop.f32.mrf.mxu0
  %v1785 = vadd.f32 0.0, %v1784
  %1786 = vdwg.mxu0
  %1787 = vmatprep.subr.mxu0 0.0
  %1788 = vmatpush1.msra.mxu0 0.0
  %1789 = vmatprep.subr.mxu0 0.0
  %1790 = vmatpush1.msra.mxu0 0.0
  %1791 = vmatprep.subr.mxu0 0.0
  %1792 = vmatpush1.msra.mxu0 0.0
  %1793 = vmatprep.subr.mxu0 0.0
  %1794 = vmatpush1.msra.mxu0 0.0
  %1795 = vmatprep.subr.mxu0 0.0
  %1796 = vmatpush1.msra.mxu0 0.0
  %1797 = vmatprep.subr.mxu0 0.0
  %1798 = vmatpush1.msra.mxu0 0.0
  %1799 = vmatprep.subr.mxu0 0.0
  %1800 = vmatpush1.msra.mxu0 0.0
  %1801 = vmatprep.subr.mxu0 0.0
  %1802 = vmatpush1.msra.mxu0 0.0
  %1803 = vmatprep.subr.mxu0 %v808
  %1804 = vmatpush1.msra.mxu0 %v807
  %1805 = vmatprep.subr.mxu0 %v804
  %1806 = vmatpush1.msra.mxu0 %v803
  %1807 = vmatprep.subr.mxu0 %v800
  %1808 = vmatpush1.msra.mxu0 %v799
  %1809 = vmatprep.subr.mxu0 %v796
  %1810 = vmatpush1.msra.mxu0 %v795
  %1811 = vmatprep.subr.mxu0 %v792
  %1812 = vmatpush1.msra.mxu0 %v791
  %1813 = vmatprep.subr.mxu0 %v788
  %1814 = vmatpush1.msra.mxu0 %v787
  %1815 = vmatprep.subr.mxu0 %v784
  %1816 = vmatpush1.msra.mxu0 %v783
  %1817 = vmatprep.subr.mxu0 %v780
  %1818 = vmatpush1.msra.mxu0 %v779
  %1819 = vmatprep.subr.mxu0 0.0
  %1820 = vmatpush2.msra.mxu0 0.0
  %1821 = vmatprep.subr.mxu0 0.0
  %1822 = vmatpush2.msra.mxu0 0.0
  %1823 = vmatprep.subr.mxu0 0.0
  %1824 = vmatpush2.msra.mxu0 0.0
  %1825 = vmatprep.subr.mxu0 0.0
  %1826 = vmatpush2.msra.mxu0 0.0
  %1827 = vmatprep.subr.mxu0 0.0
  %1828 = vmatpush2.msra.mxu0 0.0
  %1829 = vmatprep.subr.mxu0 0.0
  %1830 = vmatpush2.msra.mxu0 0.0
  %1831 = vmatprep.subr.mxu0 0.0
  %1832 = vmatpush2.msra.mxu0 0.0
  %1833 = vmatprep.subr.mxu0 0.0
  %1834 = vmatpush2.msra.mxu0 0.0
  %1835 = vmatprep.subr.mxu0 0.0
  %1836 = vmatpush2.msra.mxu0 0.0
  %1837 = vmatprep.subr.mxu0 0.0
  %1838 = vmatpush2.msra.mxu0 0.0
  %1839 = vmatprep.subr.mxu0 0.0
  %1840 = vmatpush2.msra.mxu0 0.0
  %1841 = vmatprep.subr.mxu0 0.0
  %1842 = vmatpush2.msra.mxu0 0.0
  %1843 = vmatprep.subr.mxu0 0.0
  %1844 = vmatpush2.msra.mxu0 0.0
  %1845 = vmatprep.subr.mxu0 0.0
  %1846 = vmatpush2.msra.mxu0 0.0
  %1847 = vmatprep.subr.mxu0 0.0
  %1848 = vmatpush2.msra.mxu0 0.0
  %1849 = vmatprep.subr.mxu0 0.0
  %1850 = vmatpush2.msra.mxu0 0.0
  %1851 = vmatprep.mubr.f32.mxu0 0.0
  %1852 = vmatmul.mubr.f32.gmra.mxu0 %v1714
  %v1853 = vpop.f32.mrf.mxu0
  %v1854 = vadd.f32 0.0, %v1853
  %v1855 = vpop.f32.mrf.mxu0
  %v1856 = vadd.f32 0.0, %v1855
  %1857 = vdwg.mxu0
  %v1858 = vadd.f32 %v1709, %v1783
  %v1859 = vadd.f32 %v1710, %v1785
  %v1860 = vadd.f32 %v1711, %v1854
  %v1861 = vadd.f32 %v1712, %v1856
  %v1862 = vxor.u32 %v1858, 2147483648
  %v1863 = vmul.f32 %v1862, 1.442695
  %v1864 = vpow.pop %v1863
  %v1865 = vadd.f32 %v1864, 1.0
  %v1866 = vrcp.pop %v1865
  %v1867 = vmul.f32 1.0, %v1866
  %v1868 = vxor.u32 %v1859, 2147483648
  %v1869 = vmul.f32 %v1868, 1.442695
  %v1870 = vpow.pop %v1869
  %v1871 = vadd.f32 %v1870, 1.0
  %v1872 = vrcp.pop %v1871
  %v1873 = vmul.f32 1.0, %v1872
  %v1874 = vtanh.pop %v1860
  %v1875 = vxor.u32 %v1861, 2147483648
  %v1876 = vmul.f32 %v1875, 1.442695
  %v1877 = vpow.pop %v1876
  %v1878 = vadd.f32 %v1877, 1.0
  %v1879 = vrcp.pop %v1878
  %v1880 = vmul.f32 1.0, %v1879
  %v1881 = vmul.f32 %v1873, %v1703
  %v1882 = vmul.f32 %v1867, %v1874
  %v1883 = vadd.f32 %v1881, %v1882
  %v1884 = vtanh.pop %v1883
  %v1885 = vmul.f32 %v1880, %v1884
  %s1886 = scalar_lea.vmem %s6, 40
  %1887 = vst.msk [vmem:[%s1886] sm:$0xff] %vm813, %v1885
  %s1888 = scalar_lea.vmem [#allocation2], 192
  %v1889 = vld [vmem:[%s1888] sm:$0xff]
  %v1890 = vld [vmem:[%s1888 + $0x8] sm:$0xff]
  %v1891 = vld [vmem:[%s1888 + $0x10] sm:$0xff]
  %v1892 = vld [vmem:[%s1888 + $0x18] sm:$0xff]
  %v1894 = vsel %vm813, %v1885, 0
  %1896 = vmatprep.subr.mxu0 0.0
  %1897 = vmatpush1.msra.mxu0 0.0
  %1898 = vmatprep.subr.mxu0 0.0
  %1899 = vmatpush1.msra.mxu0 0.0
  %1900 = vmatprep.subr.mxu0 0.0
  %1901 = vmatpush1.msra.mxu0 0.0
  %1902 = vmatprep.subr.mxu0 0.0
  %1903 = vmatpush1.msra.mxu0 0.0
  %1904 = vmatprep.subr.mxu0 0.0
  %1905 = vmatpush1.msra.mxu0 0.0
  %1906 = vmatprep.subr.mxu0 0.0
  %1907 = vmatpush1.msra.mxu0 0.0
  %1908 = vmatprep.subr.mxu0 0.0
  %1909 = vmatpush1.msra.mxu0 0.0
  %1910 = vmatprep.subr.mxu0 0.0
  %1911 = vmatpush1.msra.mxu0 0.0
  %1912 = vmatprep.subr.mxu0 %v806
  %1913 = vmatpush1.msra.mxu0 %v805
  %1914 = vmatprep.subr.mxu0 %v802
  %1915 = vmatpush1.msra.mxu0 %v801
  %1916 = vmatprep.subr.mxu0 %v798
  %1917 = vmatpush1.msra.mxu0 %v797
  %1918 = vmatprep.subr.mxu0 %v794
  %1919 = vmatpush1.msra.mxu0 %v793
  %1920 = vmatprep.subr.mxu0 %v790
  %1921 = vmatpush1.msra.mxu0 %v789
  %1922 = vmatprep.subr.mxu0 %v786
  %1923 = vmatpush1.msra.mxu0 %v785
  %1924 = vmatprep.subr.mxu0 %v782
  %1925 = vmatpush1.msra.mxu0 %v781
  %1926 = vmatprep.subr.mxu0 %v778
  %1927 = vmatpush1.msra.mxu0 %v777
  %1928 = vmatprep.subr.mxu0 0.0
  %1929 = vmatpush2.msra.mxu0 0.0
  %1930 = vmatprep.subr.mxu0 0.0
  %1931 = vmatpush2.msra.mxu0 0.0
  %1932 = vmatprep.subr.mxu0 0.0
  %1933 = vmatpush2.msra.mxu0 0.0
  %1934 = vmatprep.subr.mxu0 0.0
  %1935 = vmatpush2.msra.mxu0 0.0
  %1936 = vmatprep.subr.mxu0 0.0
  %1937 = vmatpush2.msra.mxu0 0.0
  %1938 = vmatprep.subr.mxu0 0.0
  %1939 = vmatpush2.msra.mxu0 0.0
  %1940 = vmatprep.subr.mxu0 0.0
  %1941 = vmatpush2.msra.mxu0 0.0
  %1942 = vmatprep.subr.mxu0 0.0
  %1943 = vmatpush2.msra.mxu0 0.0
  %1944 = vmatprep.subr.mxu0 0.0
  %1945 = vmatpush2.msra.mxu0 0.0
  %1946 = vmatprep.subr.mxu0 0.0
  %1947 = vmatpush2.msra.mxu0 0.0
  %1948 = vmatprep.subr.mxu0 0.0
  %1949 = vmatpush2.msra.mxu0 0.0
  %1950 = vmatprep.subr.mxu0 0.0
  %1951 = vmatpush2.msra.mxu0 0.0
  %1952 = vmatprep.subr.mxu0 0.0
  %1953 = vmatpush2.msra.mxu0 0.0
  %1954 = vmatprep.subr.mxu0 0.0
  %1955 = vmatpush2.msra.mxu0 0.0
  %1956 = vmatprep.subr.mxu0 0.0
  %1957 = vmatpush2.msra.mxu0 0.0
  %1958 = vmatprep.subr.mxu0 0.0
  %1959 = vmatpush2.msra.mxu0 0.0
  %1960 = vmatprep.mubr.f32.mxu0 0.0
  %1961 = vmatmul.mubr.f32.gmra.mxu0 %v1894
  %v1962 = vpop.f32.mrf.mxu0
  %v1963 = vadd.f32 0.0, %v1962
  %v1964 = vpop.f32.mrf.mxu0
  %v1965 = vadd.f32 0.0, %v1964
  %1966 = vdwg.mxu0
  %1967 = vmatprep.subr.mxu0 0.0
  %1968 = vmatpush1.msra.mxu0 0.0
  %1969 = vmatprep.subr.mxu0 0.0
  %1970 = vmatpush1.msra.mxu0 0.0
  %1971 = vmatprep.subr.mxu0 0.0
  %1972 = vmatpush1.msra.mxu0 0.0
  %1973 = vmatprep.subr.mxu0 0.0
  %1974 = vmatpush1.msra.mxu0 0.0
  %1975 = vmatprep.subr.mxu0 0.0
  %1976 = vmatpush1.msra.mxu0 0.0
  %1977 = vmatprep.subr.mxu0 0.0
  %1978 = vmatpush1.msra.mxu0 0.0
  %1979 = vmatprep.subr.mxu0 0.0
  %1980 = vmatpush1.msra.mxu0 0.0
  %1981 = vmatprep.subr.mxu0 0.0
  %1982 = vmatpush1.msra.mxu0 0.0
  %1983 = vmatprep.subr.mxu0 %v808
  %1984 = vmatpush1.msra.mxu0 %v807
  %1985 = vmatprep.subr.mxu0 %v804
  %1986 = vmatpush1.msra.mxu0 %v803
  %1987 = vmatprep.subr.mxu0 %v800
  %1988 = vmatpush1.msra.mxu0 %v799
  %1989 = vmatprep.subr.mxu0 %v796
  %1990 = vmatpush1.msra.mxu0 %v795
  %1991 = vmatprep.subr.mxu0 %v792
  %1992 = vmatpush1.msra.mxu0 %v791
  %1993 = vmatprep.subr.mxu0 %v788
  %1994 = vmatpush1.msra.mxu0 %v787
  %1995 = vmatprep.subr.mxu0 %v784
  %1996 = vmatpush1.msra.mxu0 %v783
  %1997 = vmatprep.subr.mxu0 %v780
  %1998 = vmatpush1.msra.mxu0 %v779
  %1999 = vmatprep.subr.mxu0 0.0
  %2000 = vmatpush2.msra.mxu0 0.0
  %2001 = vmatprep.subr.mxu0 0.0
  %2002 = vmatpush2.msra.mxu0 0.0
  %2003 = vmatprep.subr.mxu0 0.0
  %2004 = vmatpush2.msra.mxu0 0.0
  %2005 = vmatprep.subr.mxu0 0.0
  %2006 = vmatpush2.msra.mxu0 0.0
  %2007 = vmatprep.subr.mxu0 0.0
  %2008 = vmatpush2.msra.mxu0 0.0
  %2009 = vmatprep.subr.mxu0 0.0
  %2010 = vmatpush2.msra.mxu0 0.0
  %2011 = vmatprep.subr.mxu0 0.0
  %2012 = vmatpush2.msra.mxu0 0.0
  %2013 = vmatprep.subr.mxu0 0.0
  %2014 = vmatpush2.msra.mxu0 0.0
  %2015 = vmatprep.subr.mxu0 0.0
  %2016 = vmatpush2.msra.mxu0 0.0
  %2017 = vmatprep.subr.mxu0 0.0
  %2018 = vmatpush2.msra.mxu0 0.0
  %2019 = vmatprep.subr.mxu0 0.0
  %2020 = vmatpush2.msra.mxu0 0.0
  %2021 = vmatprep.subr.mxu0 0.0
  %2022 = vmatpush2.msra.mxu0 0.0
  %2023 = vmatprep.subr.mxu0 0.0
  %2024 = vmatpush2.msra.mxu0 0.0
  %2025 = vmatprep.subr.mxu0 0.0
  %2026 = vmatpush2.msra.mxu0 0.0
  %2027 = vmatprep.subr.mxu0 0.0
  %2028 = vmatpush2.msra.mxu0 0.0
  %2029 = vmatprep.subr.mxu0 0.0
  %2030 = vmatpush2.msra.mxu0 0.0
  %2031 = vmatprep.mubr.f32.mxu0 0.0
  %2032 = vmatmul.mubr.f32.gmra.mxu0 %v1894
  %v2033 = vpop.f32.mrf.mxu0
  %v2034 = vadd.f32 0.0, %v2033
  %v2035 = vpop.f32.mrf.mxu0
  %v2036 = vadd.f32 0.0, %v2035
  %2037 = vdwg.mxu0
  %v2038 = vadd.f32 %v1889, %v1963
  %v2039 = vadd.f32 %v1890, %v1965
  %v2040 = vadd.f32 %v1891, %v2034
  %v2041 = vadd.f32 %v1892, %v2036
  %v2042 = vxor.u32 %v2038, 2147483648
  %v2043 = vmul.f32 %v2042, 1.442695
  %v2044 = vpow.pop %v2043
  %v2045 = vadd.f32 %v2044, 1.0
  %v2046 = vrcp.pop %v2045
  %v2047 = vmul.f32 1.0, %v2046
  %v2048 = vxor.u32 %v2039, 2147483648
  %v2049 = vmul.f32 %v2048, 1.442695
  %v2050 = vpow.pop %v2049
  %v2051 = vadd.f32 %v2050, 1.0
  %v2052 = vrcp.pop %v2051
  %v2053 = vmul.f32 1.0, %v2052
  %v2054 = vtanh.pop %v2040
  %v2055 = vxor.u32 %v2041, 2147483648
  %v2056 = vmul.f32 %v2055, 1.442695
  %v2057 = vpow.pop %v2056
  %v2058 = vadd.f32 %v2057, 1.0
  %v2059 = vrcp.pop %v2058
  %v2060 = vmul.f32 1.0, %v2059
  %v2061 = vmul.f32 %v2053, %v1883
  %v2062 = vmul.f32 %v2047, %v2054
  %v2063 = vadd.f32 %v2061, %v2062
  %v2064 = vtanh.pop %v2063
  %v2065 = vmul.f32 %v2060, %v2064
  %s2066 = scalar_lea.vmem %s6, 48
  %2067 = vst.msk [vmem:[%s2066] sm:$0xff] %vm813, %v2065
  %s2068 = scalar_lea.vmem [#allocation2], 224
  %v2069 = vld [vmem:[%s2068] sm:$0xff]
  %v2070 = vld [vmem:[%s2068 + $0x8] sm:$0xff]
  %v2071 = vld [vmem:[%s2068 + $0x10] sm:$0xff]
  %v2072 = vld [vmem:[%s2068 + $0x18] sm:$0xff]
  %v2074 = vsel %vm813, %v2065, 0
  %2076 = vmatprep.subr.mxu0 0.0
  %2077 = vmatpush1.msra.mxu0 0.0
  %2078 = vmatprep.subr.mxu0 0.0
  %2079 = vmatpush1.msra.mxu0 0.0
  %2080 = vmatprep.subr.mxu0 0.0
  %2081 = vmatpush1.msra.mxu0 0.0
  %2082 = vmatprep.subr.mxu0 0.0
  %2083 = vmatpush1.msra.mxu0 0.0
  %2084 = vmatprep.subr.mxu0 0.0
  %2085 = vmatpush1.msra.mxu0 0.0
  %2086 = vmatprep.subr.mxu0 0.0
  %2087 = vmatpush1.msra.mxu0 0.0
  %2088 = vmatprep.subr.mxu0 0.0
  %2089 = vmatpush1.msra.mxu0 0.0
  %2090 = vmatprep.subr.mxu0 0.0
  %2091 = vmatpush1.msra.mxu0 0.0
  %2092 = vmatprep.subr.mxu0 %v806
  %2093 = vmatpush1.msra.mxu0 %v805
  %2094 = vmatprep.subr.mxu0 %v802
  %2095 = vmatpush1.msra.mxu0 %v801
  %2096 = vmatprep.subr.mxu0 %v798
  %2097 = vmatpush1.msra.mxu0 %v797
  %2098 = vmatprep.subr.mxu0 %v794
  %2099 = vmatpush1.msra.mxu0 %v793
  %2100 = vmatprep.subr.mxu0 %v790
  %2101 = vmatpush1.msra.mxu0 %v789
  %2102 = vmatprep.subr.mxu0 %v786
  %2103 = vmatpush1.msra.mxu0 %v785
  %2104 = vmatprep.subr.mxu0 %v782
  %2105 = vmatpush1.msra.mxu0 %v781
  %2106 = vmatprep.subr.mxu0 %v778
  %2107 = vmatpush1.msra.mxu0 %v777
  %2108 = vmatprep.subr.mxu0 0.0
  %2109 = vmatpush2.msra.mxu0 0.0
  %2110 = vmatprep.subr.mxu0 0.0
  %2111 = vmatpush2.msra.mxu0 0.0
  %2112 = vmatprep.subr.mxu0 0.0
  %2113 = vmatpush2.msra.mxu0 0.0
  %2114 = vmatprep.subr.mxu0 0.0
  %2115 = vmatpush2.msra.mxu0 0.0
  %2116 = vmatprep.subr.mxu0 0.0
  %2117 = vmatpush2.msra.mxu0 0.0
  %2118 = vmatprep.subr.mxu0 0.0
  %2119 = vmatpush2.msra.mxu0 0.0
  %2120 = vmatprep.subr.mxu0 0.0
  %2121 = vmatpush2.msra.mxu0 0.0
  %2122 = vmatprep.subr.mxu0 0.0
  %2123 = vmatpush2.msra.mxu0 0.0
  %2124 = vmatprep.subr.mxu0 0.0
  %2125 = vmatpush2.msra.mxu0 0.0
  %2126 = vmatprep.subr.mxu0 0.0
  %2127 = vmatpush2.msra.mxu0 0.0
  %2128 = vmatprep.subr.mxu0 0.0
  %2129 = vmatpush2.msra.mxu0 0.0
  %2130 = vmatprep.subr.mxu0 0.0
  %2131 = vmatpush2.msra.mxu0 0.0
  %2132 = vmatprep.subr.mxu0 0.0
  %2133 = vmatpush2.msra.mxu0 0.0
  %2134 = vmatprep.subr.mxu0 0.0
  %2135 = vmatpush2.msra.mxu0 0.0
  %2136 = vmatprep.subr.mxu0 0.0
  %2137 = vmatpush2.msra.mxu0 0.0
  %2138 = vmatprep.subr.mxu0 0.0
  %2139 = vmatpush2.msra.mxu0 0.0
  %2140 = vmatprep.mubr.f32.mxu0 0.0
  %2141 = vmatmul.mubr.f32.gmra.mxu0 %v2074
  %v2142 = vpop.f32.mrf.mxu0
  %v2143 = vadd.f32 0.0, %v2142
  %v2144 = vpop.f32.mrf.mxu0
  %v2145 = vadd.f32 0.0, %v2144
  %2146 = vdwg.mxu0
  %2147 = vmatprep.subr.mxu0 0.0
  %2148 = vmatpush1.msra.mxu0 0.0
  %2149 = vmatprep.subr.mxu0 0.0
  %2150 = vmatpush1.msra.mxu0 0.0
  %2151 = vmatprep.subr.mxu0 0.0
  %2152 = vmatpush1.msra.mxu0 0.0
  %2153 = vmatprep.subr.mxu0 0.0
  %2154 = vmatpush1.msra.mxu0 0.0
  %2155 = vmatprep.subr.mxu0 0.0
  %2156 = vmatpush1.msra.mxu0 0.0
  %2157 = vmatprep.subr.mxu0 0.0
  %2158 = vmatpush1.msra.mxu0 0.0
  %2159 = vmatprep.subr.mxu0 0.0
  %2160 = vmatpush1.msra.mxu0 0.0
  %2161 = vmatprep.subr.mxu0 0.0
  %2162 = vmatpush1.msra.mxu0 0.0
  %2163 = vmatprep.subr.mxu0 %v808
  %2164 = vmatpush1.msra.mxu0 %v807
  %2165 = vmatprep.subr.mxu0 %v804
  %2166 = vmatpush1.msra.mxu0 %v803
  %2167 = vmatprep.subr.mxu0 %v800
  %2168 = vmatpush1.msra.mxu0 %v799
  %2169 = vmatprep.subr.mxu0 %v796
  %2170 = vmatpush1.msra.mxu0 %v795
  %2171 = vmatprep.subr.mxu0 %v792
  %2172 = vmatpush1.msra.mxu0 %v791
  %2173 = vmatprep.subr.mxu0 %v788
  %2174 = vmatpush1.msra.mxu0 %v787
  %2175 = vmatprep.subr.mxu0 %v784
  %2176 = vmatpush1.msra.mxu0 %v783
  %2177 = vmatprep.subr.mxu0 %v780
  %2178 = vmatpush1.msra.mxu0 %v779
  %2179 = vmatprep.subr.mxu0 0.0
  %2180 = vmatpush2.msra.mxu0 0.0
  %2181 = vmatprep.subr.mxu0 0.0
  %2182 = vmatpush2.msra.mxu0 0.0
  %2183 = vmatprep.subr.mxu0 0.0
  %2184 = vmatpush2.msra.mxu0 0.0
  %2185 = vmatprep.subr.mxu0 0.0
  %2186 = vmatpush2.msra.mxu0 0.0
  %2187 = vmatprep.subr.mxu0 0.0
  %2188 = vmatpush2.msra.mxu0 0.0
  %2189 = vmatprep.subr.mxu0 0.0
  %2190 = vmatpush2.msra.mxu0 0.0
  %2191 = vmatprep.subr.mxu0 0.0
  %2192 = vmatpush2.msra.mxu0 0.0
  %2193 = vmatprep.subr.mxu0 0.0
  %2194 = vmatpush2.msra.mxu0 0.0
  %2195 = vmatprep.subr.mxu0 0.0
  %2196 = vmatpush2.msra.mxu0 0.0
  %2197 = vmatprep.subr.mxu0 0.0
  %2198 = vmatpush2.msra.mxu0 0.0
  %2199 = vmatprep.subr.mxu0 0.0
  %2200 = vmatpush2.msra.mxu0 0.0
  %2201 = vmatprep.subr.mxu0 0.0
  %2202 = vmatpush2.msra.mxu0 0.0
  %2203 = vmatprep.subr.mxu0 0.0
  %2204 = vmatpush2.msra.mxu0 0.0
  %2205 = vmatprep.subr.mxu0 0.0
  %2206 = vmatpush2.msra.mxu0 0.0
  %2207 = vmatprep.subr.mxu0 0.0
  %2208 = vmatpush2.msra.mxu0 0.0
  %2209 = vmatprep.subr.mxu0 0.0
  %2210 = vmatpush2.msra.mxu0 0.0
  %2211 = vmatprep.mubr.f32.mxu0 0.0
  %2212 = vmatmul.mubr.f32.gmra.mxu0 %v2074
  %v2213 = vpop.f32.mrf.mxu0
  %v2214 = vadd.f32 0.0, %v2213
  %v2215 = vpop.f32.mrf.mxu0
  %v2216 = vadd.f32 0.0, %v2215
  %2217 = vdwg.mxu0
  %v2218 = vadd.f32 %v2069, %v2143
  %v2219 = vadd.f32 %v2070, %v2145
  %v2220 = vadd.f32 %v2071, %v2214
  %v2221 = vadd.f32 %v2072, %v2216
  %v2222 = vxor.u32 %v2218, 2147483648
  %v2223 = vmul.f32 %v2222, 1.442695
  %v2224 = vpow.pop %v2223
  %v2225 = vadd.f32 %v2224, 1.0
  %v2226 = vrcp.pop %v2225
  %v2227 = vmul.f32 1.0, %v2226
  %v2228 = vxor.u32 %v2219, 2147483648
  %v2229 = vmul.f32 %v2228, 1.442695
  %v2230 = vpow.pop %v2229
  %v2231 = vadd.f32 %v2230, 1.0
  %v2232 = vrcp.pop %v2231
  %v2233 = vmul.f32 1.0, %v2232
  %v2234 = vtanh.pop %v2220
  %v2235 = vxor.u32 %v2221, 2147483648
  %v2236 = vmul.f32 %v2235, 1.442695
  %v2237 = vpow.pop %v2236
  %v2238 = vadd.f32 %v2237, 1.0
  %v2239 = vrcp.pop %v2238
  %v2240 = vmul.f32 1.0, %v2239
  %v2241 = vmul.f32 %v2233, %v2063
  %v2242 = vmul.f32 %v2227, %v2234
  %v2243 = vadd.f32 %v2241, %v2242
  %v2244 = vtanh.pop %v2243
  %v2245 = vmul.f32 %v2240, %v2244
  %s2246 = scalar_lea.vmem %s6, 56
  %2247 = vst.msk [vmem:[%s2246] sm:$0xff] %vm813, %v2245
  // Predicated region
  $region26: #{hybrid_cnn_lstm.2} parent=0 // pred_check
    _
  $region27: #{hybrid_cnn_lstm.2} parent=0 // pred_check_branch
    %2249 = sbr.rel (0) target = $region29
  $region28: #{hybrid_cnn_lstm.2} parent=0 // pred_region
    _
  $region29: #{hybrid_cnn_lstm.2} parent=0 // pred_fallthru
    _
  // Predicated region
  $region30: #{hybrid_cnn_lstm.2} parent=0 // pred_check
    _
  $region31: #{hybrid_cnn_lstm.2} parent=0 // pred_check_branch
    %2251 = sbr.rel (0) target = $region33
  $region32: #{hybrid_cnn_lstm.2} parent=0 // pred_region
    _
  $region33: #{hybrid_cnn_lstm.2} parent=0 // pred_fallthru
    _

// kernel: hybrid_cnn_lstm.3
$region0: #{hybrid_cnn_lstm.3}
  #allocation0 [shape = 'u32[]', space=smem, size = 0x4, offset = 0x4, fixed_abs, tag = 'smem constant byte address 0x4 - core index']
  #allocation1 [shape = 'u32[144,128]{1,0:T(1,128)}', space=vmem, size = 0x12000, scoped, tag = 'internal scratch']
  #allocation2 [shape = 'f32[8,64]{1,0:T(8,128)}', space=vmem, size = 0x1000, scoped, tag = 'scratch operand']
  %s0 = inlined_call_operand.vmem [shape: f32[8,8,64], index: 0, kind: input, shape index: {}]
  %s1 = inlined_call_operand.vmem [shape: f32[64,192], index: 1, kind: input, shape index: {}]
  %s2 = inlined_call_operand.vmem [shape: f32[1,192], index: 2, kind: input, shape index: {}]
  %s3 = inlined_call_operand.vmem [shape: f32[64,64], index: 3, kind: input, shape index: {}]
  %s4 = inlined_call_operand.vmem [shape: f32[1,64], index: 4, kind: input, shape index: {}]
  %s5 = inlined_call_operand.vmem [shape: f32[64,128], index: 5, kind: input, shape index: {}]
  %s6 = inlined_call_operand.vmem [shape: f32[1,128], index: 6, kind: input, shape index: {}]
  %s7 = inlined_call_operand.vmem [shape: f32[8,128], index: 7, kind: output, shape index: {}]
  %s8 = sld [smem:[#allocation0]]
  $region69: #{hybrid_cnn_lstm.3} parent=0
    _
  %s10 = ssub.s32 1, %s8
  %s11 = scalar_select 0, %s10, %s8
  loop: start=0, step=1, limit=4
  $region2: #{hybrid_cnn_lstm.3} parent=0 // loop_pre_header
    _
  $region3: #{hybrid_cnn_lstm.3} parent=0 // loop_header
    %s13 = sphi 0, %s17
    %p14 = scmp.ge.s32.totalorder %s13, 4
    %s23 = sphi 0, %s25
    %s26 = sphi 0, %s23
    %s27 = sphi 0, %s26
    %s43 = sphi 0, %s27
    %s47 = sphi 0, %s47
    %s49 = sphi 0, %s47
    %s50 = sphi 0, %s49
    %s64 = sphi 0, %s50
    %s68 = sphi 0, %s68
    %s70 = sphi 0, %s68
    %s71 = sphi 0, %s70
    %s85 = sphi 0, %s71
    %s89 = sphi 0, %s89
    %s91 = sphi 0, %s89
    %s92 = sphi 0, %s91
    %s106 = sphi 0, %s92
    %s110 = sphi 0, %s110
    %s112 = sphi 0, %s110
    %s113 = sphi 0, %s112
    %s127 = sphi 0, %s113
    %s131 = sphi 0, %s131
    %s133 = sphi 0, %s131
    %s134 = sphi 0, %s133
    %s148 = sphi 0, %s134
    %s152 = sphi 0, %s152
    %s154 = sphi 0, %s152
    %s155 = sphi 0, %s154
    %s169 = sphi 0, %s155
    %s173 = sphi 0, %s173
    %s175 = sphi 0, %s173
    %s176 = sphi 0, %s175
    %s190 = sphi 0, %s176
  $region4: #{hybrid_cnn_lstm.3} parent=0 // loop_header_branch
    %16 = sbr.rel (%p14) target = $region8
  $region5: #{hybrid_cnn_lstm.3} parent=0 // loop_body
    %s18 = ssub.s32 %s13, 1
    %s19 = ssub.s32 %s13, 2
    %s20 = sadd.s32 %s13, 1
    %s21 = ssub.s32 %s13, %s20
    %p22 = scmp.eq.s32.totalorder %s21, 0
    %s24 = sadd.s32 %s23, 1
    %s25 = scalar_select %p22, %s23, %s24
    %p28 = pneg %p22
    %p29 = scmp.eq.s32.totalorder %s13, 1
    %p30 = por %p28, %p29
    %p31 = scmp.ne.s32.totalorder %s23, %s26
    %p32 = scmp.eq.s32.totalorder %s13, 0
    %p33 = por %p31, %p32
    %p34 = scmp.ne.s32.totalorder %s23, %s26
    %p35 = scmp.eq.s32.totalorder %s18, 1
    %p36 = por %p34, %p35
    %p37 = scmp.ne.s32.totalorder %s26, %s27
    %p38 = scmp.eq.s32.totalorder %s18, 0
    %p39 = por %p37, %p38
    %p40 = scmp.ne.s32.totalorder %s26, %s27
    %p41 = scmp.eq.s32.totalorder %s19, 1
    %p42 = por %p40, %p41
    %p44 = scmp.ne.s32.totalorder %s27, %s43
    %p45 = scmp.eq.s32.totalorder %s19, 0
    %p46 = por %p44, %p45
    %s48 = sadd.s32 %s47, 1
    %p51 = scmp.eq.s32.totalorder %s13, 1
    %p52 = scmp.ne.s32.totalorder %s47, %s49
    %p53 = scmp.eq.s32.totalorder %s13, 0
    %p54 = por %p52, %p53
    %p55 = scmp.ne.s32.totalorder %s47, %s49
    %p56 = scmp.eq.s32.totalorder %s18, 1
    %p57 = por %p55, %p56
    %p58 = scmp.ne.s32.totalorder %s49, %s50
    %p59 = scmp.eq.s32.totalorder %s18, 0
    %p60 = por %p58, %p59
    %p61 = scmp.ne.s32.totalorder %s49, %s50
    %p62 = scmp.eq.s32.totalorder %s19, 1
    %p63 = por %p61, %p62
    %p65 = scmp.ne.s32.totalorder %s50, %s64
    %p66 = scmp.eq.s32.totalorder %s19, 0
    %p67 = por %p65, %p66
    %s69 = sadd.s32 %s68, 1
    %p72 = scmp.eq.s32.totalorder %s13, 1
    %p73 = scmp.ne.s32.totalorder %s68, %s70
    %p74 = scmp.eq.s32.totalorder %s13, 0
    %p75 = por %p73, %p74
    %p76 = scmp.ne.s32.totalorder %s68, %s70
    %p77 = scmp.eq.s32.totalorder %s18, 1
    %p78 = por %p76, %p77
    %p79 = scmp.ne.s32.totalorder %s70, %s71
    %p80 = scmp.eq.s32.totalorder %s18, 0
    %p81 = por %p79, %p80
    %p82 = scmp.ne.s32.totalorder %s70, %s71
    %p83 = scmp.eq.s32.totalorder %s19, 1
    %p84 = por %p82, %p83
    %p86 = scmp.ne.s32.totalorder %s71, %s85
    %p87 = scmp.eq.s32.totalorder %s19, 0
    %p88 = por %p86, %p87
    %s90 = sadd.s32 %s89, 1
    %p93 = scmp.eq.s32.totalorder %s13, 1
    %p94 = scmp.ne.s32.totalorder %s89, %s91
    %p95 = scmp.eq.s32.totalorder %s13, 0
    %p96 = por %p94, %p95
    %p97 = scmp.ne.s32.totalorder %s89, %s91
    %p98 = scmp.eq.s32.totalorder %s18, 1
    %p99 = por %p97, %p98
    %p100 = scmp.ne.s32.totalorder %s91, %s92
    %p101 = scmp.eq.s32.totalorder %s18, 0
    %p102 = por %p100, %p101
    %p103 = scmp.ne.s32.totalorder %s91, %s92
    %p104 = scmp.eq.s32.totalorder %s19, 1
    %p105 = por %p103, %p104
    %p107 = scmp.ne.s32.totalorder %s92, %s106
    %p108 = scmp.eq.s32.totalorder %s19, 0
    %p109 = por %p107, %p108
    %s111 = sadd.s32 %s110, 1
    %p114 = scmp.eq.s32.totalorder %s13, 1
    %p115 = scmp.ne.s32.totalorder %s110, %s112
    %p116 = scmp.eq.s32.totalorder %s13, 0
    %p117 = por %p115, %p116
    %p118 = scmp.ne.s32.totalorder %s110, %s112
    %p119 = scmp.eq.s32.totalorder %s18, 1
    %p120 = por %p118, %p119
    %p121 = scmp.ne.s32.totalorder %s112, %s113
    %p122 = scmp.eq.s32.totalorder %s18, 0
    %p123 = por %p121, %p122
    %p124 = scmp.ne.s32.totalorder %s112, %s113
    %p125 = scmp.eq.s32.totalorder %s19, 1
    %p126 = por %p124, %p125
    %p128 = scmp.ne.s32.totalorder %s113, %s127
    %p129 = scmp.eq.s32.totalorder %s19, 0
    %p130 = por %p128, %p129
    %s132 = sadd.s32 %s131, 1
    %p135 = scmp.eq.s32.totalorder %s13, 1
    %p136 = scmp.ne.s32.totalorder %s131, %s133
    %p137 = scmp.eq.s32.totalorder %s13, 0
    %p138 = por %p136, %p137
    %p139 = scmp.ne.s32.totalorder %s131, %s133
    %p140 = scmp.eq.s32.totalorder %s18, 1
    %p141 = por %p139, %p140
    %p142 = scmp.ne.s32.totalorder %s133, %s134
    %p143 = scmp.eq.s32.totalorder %s18, 0
    %p144 = por %p142, %p143
    %p145 = scmp.ne.s32.totalorder %s133, %s134
    %p146 = scmp.eq.s32.totalorder %s19, 1
    %p147 = por %p145, %p146
    %p149 = scmp.ne.s32.totalorder %s134, %s148
    %p150 = scmp.eq.s32.totalorder %s19, 0
    %p151 = por %p149, %p150
    %s153 = sadd.s32 %s152, 1
    %p156 = scmp.eq.s32.totalorder %s13, 1
    %p157 = scmp.ne.s32.totalorder %s152, %s154
    %p158 = scmp.eq.s32.totalorder %s13, 0
    %p159 = por %p157, %p158
    %p160 = scmp.ne.s32.totalorder %s152, %s154
    %p161 = scmp.eq.s32.totalorder %s18, 1
    %p162 = por %p160, %p161
    %p163 = scmp.ne.s32.totalorder %s154, %s155
    %p164 = scmp.eq.s32.totalorder %s18, 0
    %p165 = por %p163, %p164
    %p166 = scmp.ne.s32.totalorder %s154, %s155
    %p167 = scmp.eq.s32.totalorder %s19, 1
    %p168 = por %p166, %p167
    %p170 = scmp.ne.s32.totalorder %s155, %s169
    %p171 = scmp.eq.s32.totalorder %s19, 0
    %p172 = por %p170, %p171
    %s174 = sadd.s32 %s173, 1
    %p177 = scmp.eq.s32.totalorder %s13, 1
    %p178 = scmp.ne.s32.totalorder %s173, %s175
    %p179 = scmp.eq.s32.totalorder %s13, 0
    %p180 = por %p178, %p179
    %p181 = scmp.ne.s32.totalorder %s173, %s175
    %p182 = scmp.eq.s32.totalorder %s18, 1
    %p183 = por %p181, %p182
    %p184 = scmp.ne.s32.totalorder %s175, %s176
    %p185 = scmp.eq.s32.totalorder %s18, 0
    %p186 = por %p184, %p185
    %p187 = scmp.ne.s32.totalorder %s175, %s176
    %p188 = scmp.eq.s32.totalorder %s19, 1
    %p189 = por %p187, %p188
    %p191 = scmp.ne.s32.totalorder %s176, %s190
    %p192 = scmp.eq.s32.totalorder %s19, 0
    %p193 = por %p191, %p192
    %p194 = scmp.le.s32.totalorder 1, %s13
    %p195 = scmp.lt.s32.totalorder %s13, 3
    %p196 = pnand %p194, %p195
    %p197 = pneg %p196
    // Predicated region
    $region9: #{hybrid_cnn_lstm.3} parent=5 // pred_check
      _
    $region10: #{hybrid_cnn_lstm.3} parent=5 // pred_check_branch
      %199 = sbr.rel (%p196) target = $region12
    $region11: #{hybrid_cnn_lstm.3} parent=5 // pred_region
      %s200 = ssub.s32 %s13, 1
      // Predicated region
      $region13: #{hybrid_cnn_lstm.3} parent=11 // pred_check
        %p201 = pneg %p60
      $region14: #{hybrid_cnn_lstm.3} parent=11 // pred_check_branch
        %203 = sbr.rel (%p201) target = $region16
      $region15: #{hybrid_cnn_lstm.3} parent=11 // pred_region
        _
      $region16: #{hybrid_cnn_lstm.3} parent=11 // pred_fallthru
        _
      // Predicated region
      $region17: #{hybrid_cnn_lstm.3} parent=11 // pred_check
        %p204 = pneg %p81
      $region18: #{hybrid_cnn_lstm.3} parent=11 // pred_check_branch
        %206 = sbr.rel (%p204) target = $region20
      $region19: #{hybrid_cnn_lstm.3} parent=11 // pred_region
        _
      $region20: #{hybrid_cnn_lstm.3} parent=11 // pred_fallthru
        _
      // Predicated region
      $region21: #{hybrid_cnn_lstm.3} parent=11 // pred_check
        %p207 = pneg %p102
      $region22: #{hybrid_cnn_lstm.3} parent=11 // pred_check_branch
        %209 = sbr.rel (%p207) target = $region24
      $region23: #{hybrid_cnn_lstm.3} parent=11 // pred_region
        _
      $region24: #{hybrid_cnn_lstm.3} parent=11 // pred_fallthru
        _
      // Predicated region
      $region25: #{hybrid_cnn_lstm.3} parent=11 // pred_check
        %p210 = pneg %p123
      $region26: #{hybrid_cnn_lstm.3} parent=11 // pred_check_branch
        %212 = sbr.rel (%p210) target = $region28
      $region27: #{hybrid_cnn_lstm.3} parent=11 // pred_region
        _
      $region28: #{hybrid_cnn_lstm.3} parent=11 // pred_fallthru
        _
      // Predicated region
      $region29: #{hybrid_cnn_lstm.3} parent=11 // pred_check
        %p213 = pneg %p144
      $region30: #{hybrid_cnn_lstm.3} parent=11 // pred_check_branch
        %215 = sbr.rel (%p213) target = $region32
      $region31: #{hybrid_cnn_lstm.3} parent=11 // pred_region
        _
      $region32: #{hybrid_cnn_lstm.3} parent=11 // pred_fallthru
        _
      // Predicated region
      $region33: #{hybrid_cnn_lstm.3} parent=11 // pred_check
        %p216 = pneg %p165
      $region34: #{hybrid_cnn_lstm.3} parent=11 // pred_check_branch
        %218 = sbr.rel (%p216) target = $region36
      $region35: #{hybrid_cnn_lstm.3} parent=11 // pred_region
        _
      $region36: #{hybrid_cnn_lstm.3} parent=11 // pred_fallthru
        _
    $region12: #{hybrid_cnn_lstm.3} parent=5 // pred_fallthru
      _
    %p219 = scmp.lt.s32.totalorder %s13, 2
    // Predicated region
    $region37: #{hybrid_cnn_lstm.3} parent=5 // pred_check
      %p220 = pneg %p219
    $region38: #{hybrid_cnn_lstm.3} parent=5 // pred_check_branch
      %222 = sbr.rel (%p220) target = $region40
    $region39: #{hybrid_cnn_lstm.3} parent=5 // pred_region
      // Predicated region
      $region41: #{hybrid_cnn_lstm.3} parent=39 // pred_check
        %p223 = pneg %p33
      $region42: #{hybrid_cnn_lstm.3} parent=39 // pred_check_branch
        %225 = sbr.rel (%p223) target = $region44
      $region43: #{hybrid_cnn_lstm.3} parent=39 // pred_region
        %s226 = smul.u32 4, %s13
        %p227 = scmp.lt.s32.totalorder %s226, 7
        %s228 = scalar_select %p227, %s226, 7
        %s229 = smul.addr %s228, 8
        %s230 = scalar_lea.vmem %s0, %s229
        %s231 = smul.u32 4, %s13
      $region44: #{hybrid_cnn_lstm.3} parent=39 // pred_fallthru
        _
    $region40: #{hybrid_cnn_lstm.3} parent=5 // pred_fallthru
      _
    %p232 = scmp.le.s32.totalorder 1, %s13
    %p233 = scmp.lt.s32.totalorder %s13, 3
    %p234 = pnand %p232, %p233
    %p235 = pneg %p234
    // Predicated region
    $region45: #{hybrid_cnn_lstm.3} parent=5 // pred_check
      _
    $region46: #{hybrid_cnn_lstm.3} parent=5 // pred_check_branch
      %237 = sbr.rel (%p234) target = $region48
    $region47: #{hybrid_cnn_lstm.3} parent=5 // pred_region
      %s238 = ssub.s32 %s13, 1
      %s239 = smul.u32 4, %s18
      %p240 = scmp.lt.s32.totalorder %s239, 7
      %s241 = scalar_select %p240, %s239, 7
      %s242 = smul.addr %s241, 8
      %s243 = scalar_lea.vmem %s0, %s242
      %p244 = pneg %p39
      %p245 = pneg %p36
      %p246 = pneg %p60
      %p247 = pneg %p57
      %p248 = pneg %p81
      %p249 = pneg %p78
      %p250 = pneg %p102
      %p251 = pneg %p99
      %p252 = pneg %p123
      %p253 = pneg %p120
      %p254 = pneg %p144
      %p255 = pneg %p141
      %p256 = pneg %p165
      %p257 = pneg %p162
      %p258 = pneg %p186
      %p259 = pneg %p183
      %s260 = smul.u32 4, %s18
      %p261 = scmp.lt.s32.totalorder %s260, 7
      %s262 = scalar_select %p261, %s260, 7
      %s263 = smul.addr %s262, 8
      %s264 = scalar_lea.vmem %s0, %s263
      %s265 = smul.u32 4, %s18
      %p266 = scmp.eq.s32.totalorder %s18, 0
      // Predicated region
      $region49: #{hybrid_cnn_lstm.3} parent=47 // pred_check
        %p267 = pneg %p266
      $region50: #{hybrid_cnn_lstm.3} parent=47 // pred_check_branch
        %269 = sbr.rel (%p267) target = $region52
      $region51: #{hybrid_cnn_lstm.3} parent=47 // pred_region
        %vm270 = vcmask 523264
        %271 = vst.msk [vmem:[#allocation2] sm:$0xff] %vm270, 0.0
      $region52: #{hybrid_cnn_lstm.3} parent=47 // pred_fallthru
        _
      %v272 = vld [vmem:[%s264] sm:$0xff]
      %v273 = vld [vmem:[%s264 + $0x8] sm:$0xff]
      %v274 = vld [vmem:[%s264 + $0x10] sm:$0xff]
      %v275 = vld [vmem:[%s264 + $0x18] sm:$0xff]
      %v276 = vld [vmem:[%s1] sm:$0xff]
      %v277 = vld [vmem:[%s1 + $0x8] sm:$0xff]
      %v278 = vld [vmem:[%s1 + $0x10] sm:$0xff]
      %v279 = vld [vmem:[%s1 + $0x18] sm:$0xff]
      %v280 = vld [vmem:[%s1 + $0x20] sm:$0xff]
      %v281 = vld [vmem:[%s1 + $0x28] sm:$0xff]
      %v282 = vld [vmem:[%s1 + $0x30] sm:$0xff]
      %v283 = vld [vmem:[%s1 + $0x38] sm:$0xff]
      %v284 = vld [vmem:[%s1 + $0x40] sm:$0xff]
      %v285 = vld [vmem:[%s1 + $0x48] sm:$0xff]
      %v286 = vld [vmem:[%s1 + $0x50] sm:$0xff]
      %v287 = vld [vmem:[%s1 + $0x58] sm:$0xff]
      %v288 = vld [vmem:[%s1 + $0x60] sm:$0xff]
      %v289 = vld [vmem:[%s1 + $0x68] sm:$0xff]
      %v290 = vld [vmem:[%s1 + $0x70] sm:$0xff]
      %v291 = vld [vmem:[%s1 + $0x78] sm:$0xff]
      %v292 = vld [vmem:[%s2] sm:$0x3]
      %v294 = vlaneseq
      %v295 = vshrl.u32 %v294, 7
      %v296 = vsub.s32 0, %v295
      %v297 = vrot.slane %v292, %v296
      %v298 = vlaneseq
      %v299 = vshrl.u32 %v298, 7
      %v300 = vsub.s32 1, %v299
      %v301 = vrot.slane %v292, %v300
      %vm304 = vcmask 523264
      %v306 = vsel %vm304, %v272, 0
      %v309 = vsel %vm304, %v273, 0
      %v312 = vsel %vm304, %v274, 0
      %v315 = vsel %vm304, %v275, 0
      %317 = vmatprep.subr.mxu0 0.0
      %318 = vmatpush1.msra.mxu0 0.0
      %319 = vmatprep.subr.mxu0 0.0
      %320 = vmatpush1.msra.mxu0 0.0
      %321 = vmatprep.subr.mxu0 0.0
      %322 = vmatpush1.msra.mxu0 0.0
      %323 = vmatprep.subr.mxu0 0.0
      %324 = vmatpush1.msra.mxu0 0.0
      %325 = vmatprep.subr.mxu0 0.0
      %326 = vmatpush1.msra.mxu0 0.0
      %327 = vmatprep.subr.mxu0 0.0
      %328 = vmatpush1.msra.mxu0 0.0
      %329 = vmatprep.subr.mxu0 0.0
      %330 = vmatpush1.msra.mxu0 0.0
      %331 = vmatprep.subr.mxu0 0.0
      %332 = vmatpush1.msra.mxu0 0.0
      %333 = vmatprep.subr.mxu0 %v291
      %334 = vmatpush1.msra.mxu0 %v290
      %335 = vmatprep.subr.mxu0 %v289
      %336 = vmatpush1.msra.mxu0 %v288
      %337 = vmatprep.subr.mxu0 %v287
      %338 = vmatpush1.msra.mxu0 %v286
      %339 = vmatprep.subr.mxu0 %v285
      %340 = vmatpush1.msra.mxu0 %v284
      %341 = vmatprep.subr.mxu0 %v283
      %342 = vmatpush1.msra.mxu0 %v282
      %343 = vmatprep.subr.mxu0 %v281
      %344 = vmatpush1.msra.mxu0 %v280
      %345 = vmatprep.subr.mxu0 %v279
      %346 = vmatpush1.msra.mxu0 %v278
      %347 = vmatprep.subr.mxu0 %v277
      %348 = vmatpush1.msra.mxu0 %v276
      %349 = vmatprep.subr.mxu0 0.0
      %350 = vmatpush2.msra.mxu0 0.0
      %351 = vmatprep.subr.mxu0 0.0
      %352 = vmatpush2.msra.mxu0 0.0
      %353 = vmatprep.subr.mxu0 0.0
      %354 = vmatpush2.msra.mxu0 0.0
      %355 = vmatprep.subr.mxu0 0.0
      %356 = vmatpush2.msra.mxu0 0.0
      %357 = vmatprep.subr.mxu0 0.0
      %358 = vmatpush2.msra.mxu0 0.0
      %359 = vmatprep.subr.mxu0 0.0
      %360 = vmatpush2.msra.mxu0 0.0
      %361 = vmatprep.subr.mxu0 0.0
      %362 = vmatpush2.msra.mxu0 0.0
      %363 = vmatprep.subr.mxu0 0.0
      %364 = vmatpush2.msra.mxu0 0.0
      %365 = vmatprep.subr.mxu0 0.0
      %366 = vmatpush2.msra.mxu0 0.0
      %367 = vmatprep.subr.mxu0 0.0
      %368 = vmatpush2.msra.mxu0 0.0
      %369 = vmatprep.subr.mxu0 0.0
      %370 = vmatpush2.msra.mxu0 0.0
      %371 = vmatprep.subr.mxu0 0.0
      %372 = vmatpush2.msra.mxu0 0.0
      %373 = vmatprep.subr.mxu0 0.0
      %374 = vmatpush2.msra.mxu0 0.0
      %375 = vmatprep.subr.mxu0 0.0
      %376 = vmatpush2.msra.mxu0 0.0
      %377 = vmatprep.subr.mxu0 0.0
      %378 = vmatpush2.msra.mxu0 0.0
      %379 = vmatprep.subr.mxu0 0.0
      %380 = vmatpush2.msra.mxu0 0.0
      %381 = vmatprep.mubr.f32.mxu0 0.0
      %382 = vmatmul.mubr.f32.gmra.mxu0 %v306
      %v383 = vpop.f32.mrf.mxu0
      %v384 = vadd.f32 %v297, %v383
      %v385 = vpop.f32.mrf.mxu0
      %v386 = vadd.f32 %v301, %v385
      %387 = vmatprep.mubr.f32.mxu0 0.0
      %388 = vmatmul.mubr.f32.gmra.mxu0 %v309
      %v389 = vpop.f32.mrf.mxu0
      %v390 = vadd.f32 %v297, %v389
      %v391 = vpop.f32.mrf.mxu0
      %v392 = vadd.f32 %v301, %v391
      %393 = vmatprep.mubr.f32.mxu0 0.0
      %394 = vmatmul.mubr.f32.gmra.mxu0 %v312
      %v395 = vpop.f32.mrf.mxu0
      %v396 = vadd.f32 %v297, %v395
      %v397 = vpop.f32.mrf.mxu0
      %v398 = vadd.f32 %v301, %v397
      %399 = vmatprep.mubr.f32.mxu0 0.0
      %400 = vmatmul.mubr.f32.gmra.mxu0 %v315
      %v401 = vpop.f32.mrf.mxu0
      %v402 = vadd.f32 %v297, %v401
      %v403 = vpop.f32.mrf.mxu0
      %v404 = vadd.f32 %v301, %v403
      %405 = vdwg.mxu0
      %407 = vrot.lane.b32.xlu0 %v384, 64
      %v408 = vpop.permute.xlu0 %407
      %vm409 = vcmask 130048
      %v410 = vsel %vm409, %v384, 0
      %v412 = vsel %vm409, %v408, 0
      %414 = vmatprep.subr.mxu0 0.0
      %415 = vmatpush1.xpose.msra.mxu0 0.0
      %416 = vmatprep.subr.mxu0 0.0
      %417 = vmatpush1.xpose.msra.mxu0 0.0
      %418 = vmatprep.subr.mxu0 0.0
      %419 = vmatpush1.xpose.msra.mxu0 0.0
      %420 = vmatprep.subr.mxu0 0.0
      %421 = vmatpush1.xpose.msra.mxu0 0.0
      %422 = vmatprep.subr.mxu0 0.0
      %423 = vmatpush1.xpose.msra.mxu0 0.0
      %424 = vmatprep.subr.mxu0 0.0
      %425 = vmatpush1.xpose.msra.mxu0 0.0
      %426 = vmatprep.subr.mxu0 0.0
      %427 = vmatpush1.xpose.msra.mxu0 0.0
      %428 = vmatprep.subr.mxu0 0.0
      %429 = vmatpush1.xpose.msra.mxu0 0.0
      %430 = vmatprep.subr.mxu0 0.0
      %431 = vmatpush1.xpose.msra.mxu0 0.0
      %432 = vmatprep.subr.mxu0 0.0
      %433 = vmatpush1.xpose.msra.mxu0 0.0
      %434 = vmatprep.subr.mxu0 0.0
      %435 = vmatpush1.xpose.msra.mxu0 0.0
      %436 = vmatprep.subr.mxu0 0.0
      %437 = vmatpush1.xpose.msra.mxu0 0.0
      %438 = vmatprep.subr.mxu0 0.0
      %439 = vmatpush1.xpose.msra.mxu0 0.0
      %440 = vmatprep.subr.mxu0 0.0
      %441 = vmatpush1.xpose.msra.mxu0 0.0
      %442 = vmatprep.subr.mxu0 0.0
      %443 = vmatpush1.xpose.msra.mxu0 0.0
      %444 = vmatprep.subr.mxu0 0.0
      %445 = vmatpush1.xpose.msra.mxu0 %v412
      %446 = vmatprep.subr.mxu0 0.0
      %447 = vmatpush2.xpose.msra.mxu0 0.0
      %448 = vmatprep.subr.mxu0 0.0
      %449 = vmatpush2.xpose.msra.mxu0 0.0
      %450 = vmatprep.subr.mxu0 0.0
      %451 = vmatpush2.xpose.msra.mxu0 0.0
      %452 = vmatprep.subr.mxu0 0.0
      %453 = vmatpush2.xpose.msra.mxu0 0.0
      %454 = vmatprep.subr.mxu0 0.0
      %455 = vmatpush2.xpose.msra.mxu0 0.0
      %456 = vmatprep.subr.mxu0 0.0
      %457 = vmatpush2.xpose.msra.mxu0 0.0
      %458 = vmatprep.subr.mxu0 0.0
      %459 = vmatpush2.xpose.msra.mxu0 0.0
      %460 = vmatprep.subr.mxu0 0.0
      %461 = vmatpush2.xpose.msra.mxu0 0.0
      %462 = vmatprep.subr.mxu0 0.0
      %463 = vmatpush2.xpose.msra.mxu0 0.0
      %464 = vmatprep.subr.mxu0 0.0
      %465 = vmatpush2.xpose.msra.mxu0 0.0
      %466 = vmatprep.subr.mxu0 0.0
      %467 = vmatpush2.xpose.msra.mxu0 0.0
      %468 = vmatprep.subr.mxu0 0.0
      %469 = vmatpush2.xpose.msra.mxu0 0.0
      %470 = vmatprep.subr.mxu0 0.0
      %471 = vmatpush2.xpose.msra.mxu0 0.0
      %472 = vmatprep.subr.mxu0 0.0
      %473 = vmatpush2.xpose.msra.mxu0 0.0
      %474 = vmatprep.subr.mxu0 0.0
      %475 = vmatpush2.xpose.msra.mxu0 0.0
      %476 = vmatprep.subr.mxu0 0.0
      %477 = vmatpush2.xpose.msra.mxu0 0.0
      %478 = vmatprep.mubr.f32.mxu0 0.0
      %479 = vmatmul.mubr.f32.gmra.mxu0 %v410
      %v480 = vpop.f32.mrf.mxu0
      %v481 = vadd.f32 0.0, %v480
      %v482 = vpop.f32.mrf.mxu0
      %483 = vdwg.mxu0
      %485 = vrot.lane.b32.xlu0 %v390, 64
      %v486 = vpop.permute.xlu0 %485
      %v487 = vsel %vm409, %v390, 0
      %v489 = vsel %vm409, %v486, 0
      %491 = vmatprep.subr.mxu0 0.0
      %492 = vmatpush1.xpose.msra.mxu0 0.0
      %493 = vmatprep.subr.mxu0 0.0
      %494 = vmatpush1.xpose.msra.mxu0 0.0
      %495 = vmatprep.subr.mxu0 0.0
      %496 = vmatpush1.xpose.msra.mxu0 0.0
      %497 = vmatprep.subr.mxu0 0.0
      %498 = vmatpush1.xpose.msra.mxu0 0.0
      %499 = vmatprep.subr.mxu0 0.0
      %500 = vmatpush1.xpose.msra.mxu0 0.0
      %501 = vmatprep.subr.mxu0 0.0
      %502 = vmatpush1.xpose.msra.mxu0 0.0
      %503 = vmatprep.subr.mxu0 0.0
      %504 = vmatpush1.xpose.msra.mxu0 0.0
      %505 = vmatprep.subr.mxu0 0.0
      %506 = vmatpush1.xpose.msra.mxu0 0.0
      %507 = vmatprep.subr.mxu0 0.0
      %508 = vmatpush1.xpose.msra.mxu0 0.0
      %509 = vmatprep.subr.mxu0 0.0
      %510 = vmatpush1.xpose.msra.mxu0 0.0
      %511 = vmatprep.subr.mxu0 0.0
      %512 = vmatpush1.xpose.msra.mxu0 0.0
      %513 = vmatprep.subr.mxu0 0.0
      %514 = vmatpush1.xpose.msra.mxu0 0.0
      %515 = vmatprep.subr.mxu0 0.0
      %516 = vmatpush1.xpose.msra.mxu0 0.0
      %517 = vmatprep.subr.mxu0 0.0
      %518 = vmatpush1.xpose.msra.mxu0 0.0
      %519 = vmatprep.subr.mxu0 0.0
      %520 = vmatpush1.xpose.msra.mxu0 0.0
      %521 = vmatprep.subr.mxu0 0.0
      %522 = vmatpush1.xpose.msra.mxu0 %v489
      %523 = vmatprep.subr.mxu0 0.0
      %524 = vmatpush2.xpose.msra.mxu0 0.0
      %525 = vmatprep.subr.mxu0 0.0
      %526 = vmatpush2.xpose.msra.mxu0 0.0
      %527 = vmatprep.subr.mxu0 0.0
      %528 = vmatpush2.xpose.msra.mxu0 0.0
      %529 = vmatprep.subr.mxu0 0.0
      %530 = vmatpush2.xpose.msra.mxu0 0.0
      %531 = vmatprep.subr.mxu0 0.0
      %532 = vmatpush2.xpose.msra.mxu0 0.0
      %533 = vmatprep.subr.mxu0 0.0
      %534 = vmatpush2.xpose.msra.mxu0 0.0
      %535 = vmatprep.subr.mxu0 0.0
      %536 = vmatpush2.xpose.msra.mxu0 0.0
      %537 = vmatprep.subr.mxu0 0.0
      %538 = vmatpush2.xpose.msra.mxu0 0.0
      %539 = vmatprep.subr.mxu0 0.0
      %540 = vmatpush2.xpose.msra.mxu0 0.0
      %541 = vmatprep.subr.mxu0 0.0
      %542 = vmatpush2.xpose.msra.mxu0 0.0
      %543 = vmatprep.subr.mxu0 0.0
      %544 = vmatpush2.xpose.msra.mxu0 0.0
      %545 = vmatprep.subr.mxu0 0.0
      %546 = vmatpush2.xpose.msra.mxu0 0.0
      %547 = vmatprep.subr.mxu0 0.0
      %548 = vmatpush2.xpose.msra.mxu0 0.0
      %549 = vmatprep.subr.mxu0 0.0
      %550 = vmatpush2.xpose.msra.mxu0 0.0
      %551 = vmatprep.subr.mxu0 0.0
      %552 = vmatpush2.xpose.msra.mxu0 0.0
      %553 = vmatprep.subr.mxu0 0.0
      %554 = vmatpush2.xpose.msra.mxu0 0.0
      %555 = vmatprep.mubr.f32.mxu0 0.0
      %556 = vmatmul.mubr.f32.gmra.mxu0 %v487
      %v557 = vpop.f32.mrf.mxu0
      %v558 = vadd.f32 0.0, %v557
      %v559 = vpop.f32.mrf.mxu0
      %560 = vdwg.mxu0
      %562 = vrot.lane.b32.xlu0 %v396, 64
      %v563 = vpop.permute.xlu0 %562
      %v564 = vsel %vm409, %v396, 0
      %v566 = vsel %vm409, %v563, 0
      %568 = vmatprep.subr.mxu0 0.0
      %569 = vmatpush1.xpose.msra.mxu0 0.0
      %570 = vmatprep.subr.mxu0 0.0
      %571 = vmatpush1.xpose.msra.mxu0 0.0
      %572 = vmatprep.subr.mxu0 0.0
      %573 = vmatpush1.xpose.msra.mxu0 0.0
      %574 = vmatprep.subr.mxu0 0.0
      %575 = vmatpush1.xpose.msra.mxu0 0.0
      %576 = vmatprep.subr.mxu0 0.0
      %577 = vmatpush1.xpose.msra.mxu0 0.0
      %578 = vmatprep.subr.mxu0 0.0
      %579 = vmatpush1.xpose.msra.mxu0 0.0
      %580 = vmatprep.subr.mxu0 0.0
      %581 = vmatpush1.xpose.msra.mxu0 0.0
      %582 = vmatprep.subr.mxu0 0.0
      %583 = vmatpush1.xpose.msra.mxu0 0.0
      %584 = vmatprep.subr.mxu0 0.0
      %585 = vmatpush1.xpose.msra.mxu0 0.0
      %586 = vmatprep.subr.mxu0 0.0
      %587 = vmatpush1.xpose.msra.mxu0 0.0
      %588 = vmatprep.subr.mxu0 0.0
      %589 = vmatpush1.xpose.msra.mxu0 0.0
      %590 = vmatprep.subr.mxu0 0.0
      %591 = vmatpush1.xpose.msra.mxu0 0.0
      %592 = vmatprep.subr.mxu0 0.0
      %593 = vmatpush1.xpose.msra.mxu0 0.0
      %594 = vmatprep.subr.mxu0 0.0
      %595 = vmatpush1.xpose.msra.mxu0 0.0
      %596 = vmatprep.subr.mxu0 0.0
      %597 = vmatpush1.xpose.msra.mxu0 0.0
      %598 = vmatprep.subr.mxu0 0.0
      %599 = vmatpush1.xpose.msra.mxu0 %v566
      %600 = vmatprep.subr.mxu0 0.0
      %601 = vmatpush2.xpose.msra.mxu0 0.0
      %602 = vmatprep.subr.mxu0 0.0
      %603 = vmatpush2.xpose.msra.mxu0 0.0
      %604 = vmatprep.subr.mxu0 0.0
      %605 = vmatpush2.xpose.msra.mxu0 0.0
      %606 = vmatprep.subr.mxu0 0.0
      %607 = vmatpush2.xpose.msra.mxu0 0.0
      %608 = vmatprep.subr.mxu0 0.0
      %609 = vmatpush2.xpose.msra.mxu0 0.0
      %610 = vmatprep.subr.mxu0 0.0
      %611 = vmatpush2.xpose.msra.mxu0 0.0
      %612 = vmatprep.subr.mxu0 0.0
      %613 = vmatpush2.xpose.msra.mxu0 0.0
      %614 = vmatprep.subr.mxu0 0.0
      %615 = vmatpush2.xpose.msra.mxu0 0.0
      %616 = vmatprep.subr.mxu0 0.0
      %617 = vmatpush2.xpose.msra.mxu0 0.0
      %618 = vmatprep.subr.mxu0 0.0
      %619 = vmatpush2.xpose.msra.mxu0 0.0
      %620 = vmatprep.subr.mxu0 0.0
      %621 = vmatpush2.xpose.msra.mxu0 0.0
      %622 = vmatprep.subr.mxu0 0.0
      %623 = vmatpush2.xpose.msra.mxu0 0.0
      %624 = vmatprep.subr.mxu0 0.0
      %625 = vmatpush2.xpose.msra.mxu0 0.0
      %626 = vmatprep.subr.mxu0 0.0
      %627 = vmatpush2.xpose.msra.mxu0 0.0
      %628 = vmatprep.subr.mxu0 0.0
      %629 = vmatpush2.xpose.msra.mxu0 0.0
      %630 = vmatprep.subr.mxu0 0.0
      %631 = vmatpush2.xpose.msra.mxu0 0.0
      %632 = vmatprep.mubr.f32.mxu0 0.0
      %633 = vmatmul.mubr.f32.gmra.mxu0 %v564
      %v634 = vpop.f32.mrf.mxu0
      %v635 = vadd.f32 0.0, %v634
      %v636 = vpop.f32.mrf.mxu0
      %637 = vdwg.mxu0
      %639 = vrot.lane.b32.xlu0 %v402, 64
      %v640 = vpop.permute.xlu0 %639
      %v641 = vsel %vm409, %v402, 0
      %v643 = vsel %vm409, %v640, 0
      %645 = vmatprep.subr.mxu0 0.0
      %646 = vmatpush1.xpose.msra.mxu0 0.0
      %647 = vmatprep.subr.mxu0 0.0
      %648 = vmatpush1.xpose.msra.mxu0 0.0
      %649 = vmatprep.subr.mxu0 0.0
      %650 = vmatpush1.xpose.msra.mxu0 0.0
      %651 = vmatprep.subr.mxu0 0.0
      %652 = vmatpush1.xpose.msra.mxu0 0.0
      %653 = vmatprep.subr.mxu0 0.0
      %654 = vmatpush1.xpose.msra.mxu0 0.0
      %655 = vmatprep.subr.mxu0 0.0
      %656 = vmatpush1.xpose.msra.mxu0 0.0
      %657 = vmatprep.subr.mxu0 0.0
      %658 = vmatpush1.xpose.msra.mxu0 0.0
      %659 = vmatprep.subr.mxu0 0.0
      %660 = vmatpush1.xpose.msra.mxu0 0.0
      %661 = vmatprep.subr.mxu0 0.0
      %662 = vmatpush1.xpose.msra.mxu0 0.0
      %663 = vmatprep.subr.mxu0 0.0
      %664 = vmatpush1.xpose.msra.mxu0 0.0
      %665 = vmatprep.subr.mxu0 0.0
      %666 = vmatpush1.xpose.msra.mxu0 0.0
      %667 = vmatprep.subr.mxu0 0.0
      %668 = vmatpush1.xpose.msra.mxu0 0.0
      %669 = vmatprep.subr.mxu0 0.0
      %670 = vmatpush1.xpose.msra.mxu0 0.0
      %671 = vmatprep.subr.mxu0 0.0
      %672 = vmatpush1.xpose.msra.mxu0 0.0
      %673 = vmatprep.subr.mxu0 0.0
      %674 = vmatpush1.xpose.msra.mxu0 0.0
      %675 = vmatprep.subr.mxu0 0.0
      %676 = vmatpush1.xpose.msra.mxu0 %v643
      %677 = vmatprep.subr.mxu0 0.0
      %678 = vmatpush2.xpose.msra.mxu0 0.0
      %679 = vmatprep.subr.mxu0 0.0
      %680 = vmatpush2.xpose.msra.mxu0 0.0
      %681 = vmatprep.subr.mxu0 0.0
      %682 = vmatpush2.xpose.msra.mxu0 0.0
      %683 = vmatprep.subr.mxu0 0.0
      %684 = vmatpush2.xpose.msra.mxu0 0.0
      %685 = vmatprep.subr.mxu0 0.0
      %686 = vmatpush2.xpose.msra.mxu0 0.0
      %687 = vmatprep.subr.mxu0 0.0
      %688 = vmatpush2.xpose.msra.mxu0 0.0
      %689 = vmatprep.subr.mxu0 0.0
      %690 = vmatpush2.xpose.msra.mxu0 0.0
      %691 = vmatprep.subr.mxu0 0.0
      %692 = vmatpush2.xpose.msra.mxu0 0.0
      %693 = vmatprep.subr.mxu0 0.0
      %694 = vmatpush2.xpose.msra.mxu0 0.0
      %695 = vmatprep.subr.mxu0 0.0
      %696 = vmatpush2.xpose.msra.mxu0 0.0
      %697 = vmatprep.subr.mxu0 0.0
      %698 = vmatpush2.xpose.msra.mxu0 0.0
      %699 = vmatprep.subr.mxu0 0.0
      %700 = vmatpush2.xpose.msra.mxu0 0.0
      %701 = vmatprep.subr.mxu0 0.0
      %702 = vmatpush2.xpose.msra.mxu0 0.0
      %703 = vmatprep.subr.mxu0 0.0
      %704 = vmatpush2.xpose.msra.mxu0 0.0
      %705 = vmatprep.subr.mxu0 0.0
      %706 = vmatpush2.xpose.msra.mxu0 0.0
      %707 = vmatprep.subr.mxu0 0.0
      %708 = vmatpush2.xpose.msra.mxu0 0.0
      %709 = vmatprep.mubr.f32.mxu0 0.0
      %710 = vmatmul.mubr.f32.gmra.mxu0 %v641
      %v711 = vpop.f32.mrf.mxu0
      %v712 = vadd.f32 0.0, %v711
      %v713 = vpop.f32.mrf.mxu0
      %714 = vdwg.mxu0
      %v715 = vmul.f32 %v481, 0.25
      %v716 = vmul.f32 %v558, 0.25
      %v717 = vmul.f32 %v635, 0.25
      %v718 = vmul.f32 %v712, 0.25
      %v719 = vlaneseq
      %v720 = vand.u32 %v719, 127
      %vm721 = vcmp.lt.s32.totalorder %v720, 2
      %v722 = vsel %vm721, %v715, -1e+30
      %v723 = vsel %vm721, %v716, -1e+30
      %v724 = vsel %vm721, %v717, -1e+30
      %v725 = vsel %vm721, %v718, -1e+30
      %vm726 = vcmask 64512
      %v727 = vsel %vm726, %v722, -inf
      %728 = vmax.xlane.f32.xlu0 %v727
      %v729 = vpop.xlane.xlu0 %728
      %v730 = vsel %vm726, %v723, -inf
      %731 = vmax.xlane.f32.xlu0 %v730
      %v732 = vpop.xlane.xlu0 %731
      %v733 = vsel %vm726, %v724, -inf
      %734 = vmax.xlane.f32.xlu0 %v733
      %v735 = vpop.xlane.xlu0 %734
      %v736 = vsel %vm726, %v725, -inf
      %737 = vmax.xlane.f32.xlu0 %v736
      %v738 = vpop.xlane.xlu0 %737
      %v739 = vsub.f32 %v722, %v729
      %v740 = vsub.f32 %v723, %v732
      %v741 = vsub.f32 %v724, %v735
      %v742 = vsub.f32 %v725, %v738
      %v743 = vmul.f32 %v739, 1.442695
      %v744 = vpow.pop %v743
      %v745 = vmul.f32 %v740, 1.442695
      %v746 = vpow.pop %v745
      %v747 = vmul.f32 %v741, 1.442695
      %v748 = vpow.pop %v747
      %v749 = vmul.f32 %v742, 1.442695
      %v750 = vpow.pop %v749
      %v751 = vsel %vm726, %v744, 0.0
      %752 = vadd.xlane.f32.xlu0 %v751
      %v753 = vpop.xlane.xlu0 %752
      %v754 = vsel %vm726, %v746, 0.0
      %755 = vadd.xlane.f32.xlu0 %v754
      %v756 = vpop.xlane.xlu0 %755
      %v757 = vsel %vm726, %v748, 0.0
      %758 = vadd.xlane.f32.xlu0 %v757
      %v759 = vpop.xlane.xlu0 %758
      %v760 = vsel %vm726, %v750, 0.0
      %761 = vadd.xlane.f32.xlu0 %v760
      %v762 = vpop.xlane.xlu0 %761
      %v763 = vrcp.pop %v753
      %v764 = vrcp.pop %v756
      %v765 = vrcp.pop %v759
      %v766 = vrcp.pop %v762
      %v767 = vmul.f32 %v744, %v763
      %v768 = vmul.f32 %v746, %v764
      %v769 = vmul.f32 %v748, %v765
      %v770 = vmul.f32 %v750, %v766
      %v772 = vsel %vm726, %v767, 0
      %774 = vmatprep.subr.mxu0 0.0
      %775 = vmatpush1.msra.mxu0 0.0
      %776 = vmatprep.subr.mxu0 0.0
      %777 = vmatpush1.msra.mxu0 0.0
      %778 = vmatprep.subr.mxu0 0.0
      %779 = vmatpush1.msra.mxu0 0.0
      %780 = vmatprep.subr.mxu0 0.0
      %781 = vmatpush1.msra.mxu0 0.0
      %782 = vmatprep.subr.mxu0 0.0
      %783 = vmatpush1.msra.mxu0 0.0
      %784 = vmatprep.subr.mxu0 0.0
      %785 = vmatpush1.msra.mxu0 0.0
      %786 = vmatprep.subr.mxu0 0.0
      %787 = vmatpush1.msra.mxu0 0.0
      %788 = vmatprep.subr.mxu0 0.0
      %789 = vmatpush1.msra.mxu0 0.0
      %790 = vmatprep.subr.mxu0 0.0
      %791 = vmatpush1.msra.mxu0 0.0
      %792 = vmatprep.subr.mxu0 0.0
      %793 = vmatpush1.msra.mxu0 0.0
      %794 = vmatprep.subr.mxu0 0.0
      %795 = vmatpush1.msra.mxu0 0.0
      %796 = vmatprep.subr.mxu0 0.0
      %797 = vmatpush1.msra.mxu0 0.0
      %798 = vmatprep.subr.mxu0 0.0
      %799 = vmatpush1.msra.mxu0 0.0
      %800 = vmatprep.subr.mxu0 0.0
      %801 = vmatpush1.msra.mxu0 0.0
      %802 = vmatprep.subr.mxu0 0.0
      %803 = vmatpush1.msra.mxu0 0.0
      %804 = vmatprep.subr.mxu0 0.0
      %805 = vmatpush1.msra.mxu0 %v386
      %806 = vmatprep.subr.mxu0 0.0
      %807 = vmatpush2.msra.mxu0 0.0
      %808 = vmatprep.subr.mxu0 0.0
      %809 = vmatpush2.msra.mxu0 0.0
      %810 = vmatprep.subr.mxu0 0.0
      %811 = vmatpush2.msra.mxu0 0.0
      %812 = vmatprep.subr.mxu0 0.0
      %813 = vmatpush2.msra.mxu0 0.0
      %814 = vmatprep.subr.mxu0 0.0
      %815 = vmatpush2.msra.mxu0 0.0
      %816 = vmatprep.subr.mxu0 0.0
      %817 = vmatpush2.msra.mxu0 0.0
      %818 = vmatprep.subr.mxu0 0.0
      %819 = vmatpush2.msra.mxu0 0.0
      %820 = vmatprep.subr.mxu0 0.0
      %821 = vmatpush2.msra.mxu0 0.0
      %822 = vmatprep.subr.mxu0 0.0
      %823 = vmatpush2.msra.mxu0 0.0
      %824 = vmatprep.subr.mxu0 0.0
      %825 = vmatpush2.msra.mxu0 0.0
      %826 = vmatprep.subr.mxu0 0.0
      %827 = vmatpush2.msra.mxu0 0.0
      %828 = vmatprep.subr.mxu0 0.0
      %829 = vmatpush2.msra.mxu0 0.0
      %830 = vmatprep.subr.mxu0 0.0
      %831 = vmatpush2.msra.mxu0 0.0
      %832 = vmatprep.subr.mxu0 0.0
      %833 = vmatpush2.msra.mxu0 0.0
      %834 = vmatprep.subr.mxu0 0.0
      %835 = vmatpush2.msra.mxu0 0.0
      %836 = vmatprep.subr.mxu0 0.0
      %837 = vmatpush2.msra.mxu0 0.0
      %838 = vmatprep.mubr.f32.mxu0 0.0
      %839 = vmatmul.mubr.f32.gmra.mxu0 %v772
      %v840 = vpop.f32.mrf.mxu0
      %v841 = vadd.f32 0.0, %v840
      %v842 = vpop.f32.mrf.mxu0
      %843 = vdwg.mxu0
      %v845 = vsel %vm726, %v768, 0
      %847 = vmatprep.subr.mxu0 0.0
      %848 = vmatpush1.msra.mxu0 0.0
      %849 = vmatprep.subr.mxu0 0.0
      %850 = vmatpush1.msra.mxu0 0.0
      %851 = vmatprep.subr.mxu0 0.0
      %852 = vmatpush1.msra.mxu0 0.0
      %853 = vmatprep.subr.mxu0 0.0
      %854 = vmatpush1.msra.mxu0 0.0
      %855 = vmatprep.subr.mxu0 0.0
      %856 = vmatpush1.msra.mxu0 0.0
      %857 = vmatprep.subr.mxu0 0.0
      %858 = vmatpush1.msra.mxu0 0.0
      %859 = vmatprep.subr.mxu0 0.0
      %860 = vmatpush1.msra.mxu0 0.0
      %861 = vmatprep.subr.mxu0 0.0
      %862 = vmatpush1.msra.mxu0 0.0
      %863 = vmatprep.subr.mxu0 0.0
      %864 = vmatpush1.msra.mxu0 0.0
      %865 = vmatprep.subr.mxu0 0.0
      %866 = vmatpush1.msra.mxu0 0.0
      %867 = vmatprep.subr.mxu0 0.0
      %868 = vmatpush1.msra.mxu0 0.0
      %869 = vmatprep.subr.mxu0 0.0
      %870 = vmatpush1.msra.mxu0 0.0
      %871 = vmatprep.subr.mxu0 0.0
      %872 = vmatpush1.msra.mxu0 0.0
      %873 = vmatprep.subr.mxu0 0.0
      %874 = vmatpush1.msra.mxu0 0.0
      %875 = vmatprep.subr.mxu0 0.0
      %876 = vmatpush1.msra.mxu0 0.0
      %877 = vmatprep.subr.mxu0 0.0
      %878 = vmatpush1.msra.mxu0 %v392
      %879 = vmatprep.subr.mxu0 0.0
      %880 = vmatpush2.msra.mxu0 0.0
      %881 = vmatprep.subr.mxu0 0.0
      %882 = vmatpush2.msra.mxu0 0.0
      %883 = vmatprep.subr.mxu0 0.0
      %884 = vmatpush2.msra.mxu0 0.0
      %885 = vmatprep.subr.mxu0 0.0
      %886 = vmatpush2.msra.mxu0 0.0
      %887 = vmatprep.subr.mxu0 0.0
      %888 = vmatpush2.msra.mxu0 0.0
      %889 = vmatprep.subr.mxu0 0.0
      %890 = vmatpush2.msra.mxu0 0.0
      %891 = vmatprep.subr.mxu0 0.0
      %892 = vmatpush2.msra.mxu0 0.0
      %893 = vmatprep.subr.mxu0 0.0
      %894 = vmatpush2.msra.mxu0 0.0
      %895 = vmatprep.subr.mxu0 0.0
      %896 = vmatpush2.msra.mxu0 0.0
      %897 = vmatprep.subr.mxu0 0.0
      %898 = vmatpush2.msra.mxu0 0.0
      %899 = vmatprep.subr.mxu0 0.0
      %900 = vmatpush2.msra.mxu0 0.0
      %901 = vmatprep.subr.mxu0 0.0
      %902 = vmatpush2.msra.mxu0 0.0
      %903 = vmatprep.subr.mxu0 0.0
      %904 = vmatpush2.msra.mxu0 0.0
      %905 = vmatprep.subr.mxu0 0.0
      %906 = vmatpush2.msra.mxu0 0.0
      %907 = vmatprep.subr.mxu0 0.0
      %908 = vmatpush2.msra.mxu0 0.0
      %909 = vmatprep.subr.mxu0 0.0
      %910 = vmatpush2.msra.mxu0 0.0
      %911 = vmatprep.mubr.f32.mxu0 0.0
      %912 = vmatmul.mubr.f32.gmra.mxu0 %v845
      %v913 = vpop.f32.mrf.mxu0
      %v914 = vadd.f32 0.0, %v913
      %v915 = vpop.f32.mrf.mxu0
      %916 = vdwg.mxu0
      %v918 = vsel %vm726, %v769, 0
      %920 = vmatprep.subr.mxu0 0.0
      %921 = vmatpush1.msra.mxu0 0.0
      %922 = vmatprep.subr.mxu0 0.0
      %923 = vmatpush1.msra.mxu0 0.0
      %924 = vmatprep.subr.mxu0 0.0
      %925 = vmatpush1.msra.mxu0 0.0
      %926 = vmatprep.subr.mxu0 0.0
      %927 = vmatpush1.msra.mxu0 0.0
      %928 = vmatprep.subr.mxu0 0.0
      %929 = vmatpush1.msra.mxu0 0.0
      %930 = vmatprep.subr.mxu0 0.0
      %931 = vmatpush1.msra.mxu0 0.0
      %932 = vmatprep.subr.mxu0 0.0
      %933 = vmatpush1.msra.mxu0 0.0
      %934 = vmatprep.subr.mxu0 0.0
      %935 = vmatpush1.msra.mxu0 0.0
      %936 = vmatprep.subr.mxu0 0.0
      %937 = vmatpush1.msra.mxu0 0.0
      %938 = vmatprep.subr.mxu0 0.0
      %939 = vmatpush1.msra.mxu0 0.0
      %940 = vmatprep.subr.mxu0 0.0
      %941 = vmatpush1.msra.mxu0 0.0
      %942 = vmatprep.subr.mxu0 0.0
      %943 = vmatpush1.msra.mxu0 0.0
      %944 = vmatprep.subr.mxu0 0.0
      %945 = vmatpush1.msra.mxu0 0.0
      %946 = vmatprep.subr.mxu0 0.0
      %947 = vmatpush1.msra.mxu0 0.0
      %948 = vmatprep.subr.mxu0 0.0
      %949 = vmatpush1.msra.mxu0 0.0
      %950 = vmatprep.subr.mxu0 0.0
      %951 = vmatpush1.msra.mxu0 %v398
      %952 = vmatprep.subr.mxu0 0.0
      %953 = vmatpush2.msra.mxu0 0.0
      %954 = vmatprep.subr.mxu0 0.0
      %955 = vmatpush2.msra.mxu0 0.0
      %956 = vmatprep.subr.mxu0 0.0
      %957 = vmatpush2.msra.mxu0 0.0
      %958 = vmatprep.subr.mxu0 0.0
      %959 = vmatpush2.msra.mxu0 0.0
      %960 = vmatprep.subr.mxu0 0.0
      %961 = vmatpush2.msra.mxu0 0.0
      %962 = vmatprep.subr.mxu0 0.0
      %963 = vmatpush2.msra.mxu0 0.0
      %964 = vmatprep.subr.mxu0 0.0
      %965 = vmatpush2.msra.mxu0 0.0
      %966 = vmatprep.subr.mxu0 0.0
      %967 = vmatpush2.msra.mxu0 0.0
      %968 = vmatprep.subr.mxu0 0.0
      %969 = vmatpush2.msra.mxu0 0.0
      %970 = vmatprep.subr.mxu0 0.0
      %971 = vmatpush2.msra.mxu0 0.0
      %972 = vmatprep.subr.mxu0 0.0
      %973 = vmatpush2.msra.mxu0 0.0
      %974 = vmatprep.subr.mxu0 0.0
      %975 = vmatpush2.msra.mxu0 0.0
      %976 = vmatprep.subr.mxu0 0.0
      %977 = vmatpush2.msra.mxu0 0.0
      %978 = vmatprep.subr.mxu0 0.0
      %979 = vmatpush2.msra.mxu0 0.0
      %980 = vmatprep.subr.mxu0 0.0
      %981 = vmatpush2.msra.mxu0 0.0
      %982 = vmatprep.subr.mxu0 0.0
      %983 = vmatpush2.msra.mxu0 0.0
      %984 = vmatprep.mubr.f32.mxu0 0.0
      %985 = vmatmul.mubr.f32.gmra.mxu0 %v918
      %v986 = vpop.f32.mrf.mxu0
      %v987 = vadd.f32 0.0, %v986
      %v988 = vpop.f32.mrf.mxu0
      %989 = vdwg.mxu0
      %v991 = vsel %vm726, %v770, 0
      %993 = vmatprep.subr.mxu0 0.0
      %994 = vmatpush1.msra.mxu0 0.0
      %995 = vmatprep.subr.mxu0 0.0
      %996 = vmatpush1.msra.mxu0 0.0
      %997 = vmatprep.subr.mxu0 0.0
      %998 = vmatpush1.msra.mxu0 0.0
      %999 = vmatprep.subr.mxu0 0.0
      %1000 = vmatpush1.msra.mxu0 0.0
      %1001 = vmatprep.subr.mxu0 0.0
      %1002 = vmatpush1.msra.mxu0 0.0
      %1003 = vmatprep.subr.mxu0 0.0
      %1004 = vmatpush1.msra.mxu0 0.0
      %1005 = vmatprep.subr.mxu0 0.0
      %1006 = vmatpush1.msra.mxu0 0.0
      %1007 = vmatprep.subr.mxu0 0.0
      %1008 = vmatpush1.msra.mxu0 0.0
      %1009 = vmatprep.subr.mxu0 0.0
      %1010 = vmatpush1.msra.mxu0 0.0
      %1011 = vmatprep.subr.mxu0 0.0
      %1012 = vmatpush1.msra.mxu0 0.0
      %1013 = vmatprep.subr.mxu0 0.0
      %1014 = vmatpush1.msra.mxu0 0.0
      %1015 = vmatprep.subr.mxu0 0.0
      %1016 = vmatpush1.msra.mxu0 0.0
      %1017 = vmatprep.subr.mxu0 0.0
      %1018 = vmatpush1.msra.mxu0 0.0
      %1019 = vmatprep.subr.mxu0 0.0
      %1020 = vmatpush1.msra.mxu0 0.0
      %1021 = vmatprep.subr.mxu0 0.0
      %1022 = vmatpush1.msra.mxu0 0.0
      %1023 = vmatprep.subr.mxu0 0.0
      %1024 = vmatpush1.msra.mxu0 %v404
      %1025 = vmatprep.subr.mxu0 0.0
      %1026 = vmatpush2.msra.mxu0 0.0
      %1027 = vmatprep.subr.mxu0 0.0
      %1028 = vmatpush2.msra.mxu0 0.0
      %1029 = vmatprep.subr.mxu0 0.0
      %1030 = vmatpush2.msra.mxu0 0.0
      %1031 = vmatprep.subr.mxu0 0.0
      %1032 = vmatpush2.msra.mxu0 0.0
      %1033 = vmatprep.subr.mxu0 0.0
      %1034 = vmatpush2.msra.mxu0 0.0
      %1035 = vmatprep.subr.mxu0 0.0
      %1036 = vmatpush2.msra.mxu0 0.0
      %1037 = vmatprep.subr.mxu0 0.0
      %1038 = vmatpush2.msra.mxu0 0.0
      %1039 = vmatprep.subr.mxu0 0.0
      %1040 = vmatpush2.msra.mxu0 0.0
      %1041 = vmatprep.subr.mxu0 0.0
      %1042 = vmatpush2.msra.mxu0 0.0
      %1043 = vmatprep.subr.mxu0 0.0
      %1044 = vmatpush2.msra.mxu0 0.0
      %1045 = vmatprep.subr.mxu0 0.0
      %1046 = vmatpush2.msra.mxu0 0.0
      %1047 = vmatprep.subr.mxu0 0.0
      %1048 = vmatpush2.msra.mxu0 0.0
      %1049 = vmatprep.subr.mxu0 0.0
      %1050 = vmatpush2.msra.mxu0 0.0
      %1051 = vmatprep.subr.mxu0 0.0
      %1052 = vmatpush2.msra.mxu0 0.0
      %1053 = vmatprep.subr.mxu0 0.0
      %1054 = vmatpush2.msra.mxu0 0.0
      %1055 = vmatprep.subr.mxu0 0.0
      %1056 = vmatpush2.msra.mxu0 0.0
      %1057 = vmatprep.mubr.f32.mxu0 0.0
      %1058 = vmatmul.mubr.f32.gmra.mxu0 %v991
      %v1059 = vpop.f32.mrf.mxu0
      %v1060 = vadd.f32 0.0, %v1059
      %v1061 = vpop.f32.mrf.mxu0
      %1062 = vdwg.mxu0
      %1063 = vrot.lane.b32.xlu0 %v384, 112
      %v1064 = vpop.permute.xlu0 %1063
      %1065 = vrot.lane.b32.xlu0 %v384, 48
      %v1066 = vpop.permute.xlu0 %1065
      %v1067 = vsel %vm409, %v1064, 0
      %v1069 = vsel %vm409, %v1066, 0
      %1071 = vmatprep.subr.mxu0 0.0
      %1072 = vmatpush1.xpose.msra.mxu0 0.0
      %1073 = vmatprep.subr.mxu0 0.0
      %1074 = vmatpush1.xpose.msra.mxu0 0.0
      %1075 = vmatprep.subr.mxu0 0.0
      %1076 = vmatpush1.xpose.msra.mxu0 0.0
      %1077 = vmatprep.subr.mxu0 0.0
      %1078 = vmatpush1.xpose.msra.mxu0 0.0
      %1079 = vmatprep.subr.mxu0 0.0
      %1080 = vmatpush1.xpose.msra.mxu0 0.0
      %1081 = vmatprep.subr.mxu0 0.0
      %1082 = vmatpush1.xpose.msra.mxu0 0.0
      %1083 = vmatprep.subr.mxu0 0.0
      %1084 = vmatpush1.xpose.msra.mxu0 0.0
      %1085 = vmatprep.subr.mxu0 0.0
      %1086 = vmatpush1.xpose.msra.mxu0 0.0
      %1087 = vmatprep.subr.mxu0 0.0
      %1088 = vmatpush1.xpose.msra.mxu0 0.0
      %1089 = vmatprep.subr.mxu0 0.0
      %1090 = vmatpush1.xpose.msra.mxu0 0.0
      %1091 = vmatprep.subr.mxu0 0.0
      %1092 = vmatpush1.xpose.msra.mxu0 0.0
      %1093 = vmatprep.subr.mxu0 0.0
      %1094 = vmatpush1.xpose.msra.mxu0 0.0
      %1095 = vmatprep.subr.mxu0 0.0
      %1096 = vmatpush1.xpose.msra.mxu0 0.0
      %1097 = vmatprep.subr.mxu0 0.0
      %1098 = vmatpush1.xpose.msra.mxu0 0.0
      %1099 = vmatprep.subr.mxu0 0.0
      %1100 = vmatpush1.xpose.msra.mxu0 0.0
      %1101 = vmatprep.subr.mxu0 0.0
      %1102 = vmatpush1.xpose.msra.mxu0 %v1069
      %1103 = vmatprep.subr.mxu0 0.0
      %1104 = vmatpush2.xpose.msra.mxu0 0.0
      %1105 = vmatprep.subr.mxu0 0.0
      %1106 = vmatpush2.xpose.msra.mxu0 0.0
      %1107 = vmatprep.subr.mxu0 0.0
      %1108 = vmatpush2.xpose.msra.mxu0 0.0
      %1109 = vmatprep.subr.mxu0 0.0
      %1110 = vmatpush2.xpose.msra.mxu0 0.0
      %1111 = vmatprep.subr.mxu0 0.0
      %1112 = vmatpush2.xpose.msra.mxu0 0.0
      %1113 = vmatprep.subr.mxu0 0.0
      %1114 = vmatpush2.xpose.msra.mxu0 0.0
      %1115 = vmatprep.subr.mxu0 0.0
      %1116 = vmatpush2.xpose.msra.mxu0 0.0
      %1117 = vmatprep.subr.mxu0 0.0
      %1118 = vmatpush2.xpose.msra.mxu0 0.0
      %1119 = vmatprep.subr.mxu0 0.0
      %1120 = vmatpush2.xpose.msra.mxu0 0.0
      %1121 = vmatprep.subr.mxu0 0.0
      %1122 = vmatpush2.xpose.msra.mxu0 0.0
      %1123 = vmatprep.subr.mxu0 0.0
      %1124 = vmatpush2.xpose.msra.mxu0 0.0
      %1125 = vmatprep.subr.mxu0 0.0
      %1126 = vmatpush2.xpose.msra.mxu0 0.0
      %1127 = vmatprep.subr.mxu0 0.0
      %1128 = vmatpush2.xpose.msra.mxu0 0.0
      %1129 = vmatprep.subr.mxu0 0.0
      %1130 = vmatpush2.xpose.msra.mxu0 0.0
      %1131 = vmatprep.subr.mxu0 0.0
      %1132 = vmatpush2.xpose.msra.mxu0 0.0
      %1133 = vmatprep.subr.mxu0 0.0
      %1134 = vmatpush2.xpose.msra.mxu0 0.0
      %1135 = vmatprep.mubr.f32.mxu0 0.0
      %1136 = vmatmul.mubr.f32.gmra.mxu0 %v1067
      %v1137 = vpop.f32.mrf.mxu0
      %v1138 = vadd.f32 0.0, %v1137
      %v1139 = vpop.f32.mrf.mxu0
      %1140 = vdwg.mxu0
      %1141 = vrot.lane.b32.xlu0 %v390, 112
      %v1142 = vpop.permute.xlu0 %1141
      %1143 = vrot.lane.b32.xlu0 %v390, 48
      %v1144 = vpop.permute.xlu0 %1143
      %v1145 = vsel %vm409, %v1142, 0
      %v1147 = vsel %vm409, %v1144, 0
      %1149 = vmatprep.subr.mxu0 0.0
      %1150 = vmatpush1.xpose.msra.mxu0 0.0
      %1151 = vmatprep.subr.mxu0 0.0
      %1152 = vmatpush1.xpose.msra.mxu0 0.0
      %1153 = vmatprep.subr.mxu0 0.0
      %1154 = vmatpush1.xpose.msra.mxu0 0.0
      %1155 = vmatprep.subr.mxu0 0.0
      %1156 = vmatpush1.xpose.msra.mxu0 0.0
      %1157 = vmatprep.subr.mxu0 0.0
      %1158 = vmatpush1.xpose.msra.mxu0 0.0
      %1159 = vmatprep.subr.mxu0 0.0
      %1160 = vmatpush1.xpose.msra.mxu0 0.0
      %1161 = vmatprep.subr.mxu0 0.0
      %1162 = vmatpush1.xpose.msra.mxu0 0.0
      %1163 = vmatprep.subr.mxu0 0.0
      %1164 = vmatpush1.xpose.msra.mxu0 0.0
      %1165 = vmatprep.subr.mxu0 0.0
      %1166 = vmatpush1.xpose.msra.mxu0 0.0
      %1167 = vmatprep.subr.mxu0 0.0
      %1168 = vmatpush1.xpose.msra.mxu0 0.0
      %1169 = vmatprep.subr.mxu0 0.0
      %1170 = vmatpush1.xpose.msra.mxu0 0.0
      %1171 = vmatprep.subr.mxu0 0.0
      %1172 = vmatpush1.xpose.msra.mxu0 0.0
      %1173 = vmatprep.subr.mxu0 0.0
      %1174 = vmatpush1.xpose.msra.mxu0 0.0
      %1175 = vmatprep.subr.mxu0 0.0
      %1176 = vmatpush1.xpose.msra.mxu0 0.0
      %1177 = vmatprep.subr.mxu0 0.0
      %1178 = vmatpush1.xpose.msra.mxu0 0.0
      %1179 = vmatprep.subr.mxu0 0.0
      %1180 = vmatpush1.xpose.msra.mxu0 %v1147
      %1181 = vmatprep.subr.mxu0 0.0
      %1182 = vmatpush2.xpose.msra.mxu0 0.0
      %1183 = vmatprep.subr.mxu0 0.0
      %1184 = vmatpush2.xpose.msra.mxu0 0.0
      %1185 = vmatprep.subr.mxu0 0.0
      %1186 = vmatpush2.xpose.msra.mxu0 0.0
      %1187 = vmatprep.subr.mxu0 0.0
      %1188 = vmatpush2.xpose.msra.mxu0 0.0
      %1189 = vmatprep.subr.mxu0 0.0
      %1190 = vmatpush2.xpose.msra.mxu0 0.0
      %1191 = vmatprep.subr.mxu0 0.0
      %1192 = vmatpush2.xpose.msra.mxu0 0.0
      %1193 = vmatprep.subr.mxu0 0.0
      %1194 = vmatpush2.xpose.msra.mxu0 0.0
      %1195 = vmatprep.subr.mxu0 0.0
      %1196 = vmatpush2.xpose.msra.mxu0 0.0
      %1197 = vmatprep.subr.mxu0 0.0
      %1198 = vmatpush2.xpose.msra.mxu0 0.0
      %1199 = vmatprep.subr.mxu0 0.0
      %1200 = vmatpush2.xpose.msra.mxu0 0.0
      %1201 = vmatprep.subr.mxu0 0.0
      %1202 = vmatpush2.xpose.msra.mxu0 0.0
      %1203 = vmatprep.subr.mxu0 0.0
      %1204 = vmatpush2.xpose.msra.mxu0 0.0
      %1205 = vmatprep.subr.mxu0 0.0
      %1206 = vmatpush2.xpose.msra.mxu0 0.0
      %1207 = vmatprep.subr.mxu0 0.0
      %1208 = vmatpush2.xpose.msra.mxu0 0.0
      %1209 = vmatprep.subr.mxu0 0.0
      %1210 = vmatpush2.xpose.msra.mxu0 0.0
      %1211 = vmatprep.subr.mxu0 0.0
      %1212 = vmatpush2.xpose.msra.mxu0 0.0
      %1213 = vmatprep.mubr.f32.mxu0 0.0
      %1214 = vmatmul.mubr.f32.gmra.mxu0 %v1145
      %v1215 = vpop.f32.mrf.mxu0
      %v1216 = vadd.f32 0.0, %v1215
      %v1217 = vpop.f32.mrf.mxu0
      %1218 = vdwg.mxu0
      %1219 = vrot.lane.b32.xlu0 %v396, 112
      %v1220 = vpop.permute.xlu0 %1219
      %1221 = vrot.lane.b32.xlu0 %v396, 48
      %v1222 = vpop.permute.xlu0 %1221
      %v1223 = vsel %vm409, %v1220, 0
      %v1225 = vsel %vm409, %v1222, 0
      %1227 = vmatprep.subr.mxu0 0.0
      %1228 = vmatpush1.xpose.msra.mxu0 0.0
      %1229 = vmatprep.subr.mxu0 0.0
      %1230 = vmatpush1.xpose.msra.mxu0 0.0
      %1231 = vmatprep.subr.mxu0 0.0
      %1232 = vmatpush1.xpose.msra.mxu0 0.0
      %1233 = vmatprep.subr.mxu0 0.0
      %1234 = vmatpush1.xpose.msra.mxu0 0.0
      %1235 = vmatprep.subr.mxu0 0.0
      %1236 = vmatpush1.xpose.msra.mxu0 0.0
      %1237 = vmatprep.subr.mxu0 0.0
      %1238 = vmatpush1.xpose.msra.mxu0 0.0
      %1239 = vmatprep.subr.mxu0 0.0
      %1240 = vmatpush1.xpose.msra.mxu0 0.0
      %1241 = vmatprep.subr.mxu0 0.0
      %1242 = vmatpush1.xpose.msra.mxu0 0.0
      %1243 = vmatprep.subr.mxu0 0.0
      %1244 = vmatpush1.xpose.msra.mxu0 0.0
      %1245 = vmatprep.subr.mxu0 0.0
      %1246 = vmatpush1.xpose.msra.mxu0 0.0
      %1247 = vmatprep.subr.mxu0 0.0
      %1248 = vmatpush1.xpose.msra.mxu0 0.0
      %1249 = vmatprep.subr.mxu0 0.0
      %1250 = vmatpush1.xpose.msra.mxu0 0.0
      %1251 = vmatprep.subr.mxu0 0.0
      %1252 = vmatpush1.xpose.msra.mxu0 0.0
      %1253 = vmatprep.subr.mxu0 0.0
      %1254 = vmatpush1.xpose.msra.mxu0 0.0
      %1255 = vmatprep.subr.mxu0 0.0
      %1256 = vmatpush1.xpose.msra.mxu0 0.0
      %1257 = vmatprep.subr.mxu0 0.0
      %1258 = vmatpush1.xpose.msra.mxu0 %v1225
      %1259 = vmatprep.subr.mxu0 0.0
      %1260 = vmatpush2.xpose.msra.mxu0 0.0
      %1261 = vmatprep.subr.mxu0 0.0
      %1262 = vmatpush2.xpose.msra.mxu0 0.0
      %1263 = vmatprep.subr.mxu0 0.0
      %1264 = vmatpush2.xpose.msra.mxu0 0.0
      %1265 = vmatprep.subr.mxu0 0.0
      %1266 = vmatpush2.xpose.msra.mxu0 0.0
      %1267 = vmatprep.subr.mxu0 0.0
      %1268 = vmatpush2.xpose.msra.mxu0 0.0
      %1269 = vmatprep.subr.mxu0 0.0
      %1270 = vmatpush2.xpose.msra.mxu0 0.0
      %1271 = vmatprep.subr.mxu0 0.0
      %1272 = vmatpush2.xpose.msra.mxu0 0.0
      %1273 = vmatprep.subr.mxu0 0.0
      %1274 = vmatpush2.xpose.msra.mxu0 0.0
      %1275 = vmatprep.subr.mxu0 0.0
      %1276 = vmatpush2.xpose.msra.mxu0 0.0
      %1277 = vmatprep.subr.mxu0 0.0
      %1278 = vmatpush2.xpose.msra.mxu0 0.0
      %1279 = vmatprep.subr.mxu0 0.0
      %1280 = vmatpush2.xpose.msra.mxu0 0.0
      %1281 = vmatprep.subr.mxu0 0.0
      %1282 = vmatpush2.xpose.msra.mxu0 0.0
      %1283 = vmatprep.subr.mxu0 0.0
      %1284 = vmatpush2.xpose.msra.mxu0 0.0
      %1285 = vmatprep.subr.mxu0 0.0
      %1286 = vmatpush2.xpose.msra.mxu0 0.0
      %1287 = vmatprep.subr.mxu0 0.0
      %1288 = vmatpush2.xpose.msra.mxu0 0.0
      %1289 = vmatprep.subr.mxu0 0.0
      %1290 = vmatpush2.xpose.msra.mxu0 0.0
      %1291 = vmatprep.mubr.f32.mxu0 0.0
      %1292 = vmatmul.mubr.f32.gmra.mxu0 %v1223
      %v1293 = vpop.f32.mrf.mxu0
      %v1294 = vadd.f32 0.0, %v1293
      %v1295 = vpop.f32.mrf.mxu0
      %1296 = vdwg.mxu0
      %1297 = vrot.lane.b32.xlu0 %v402, 112
      %v1298 = vpop.permute.xlu0 %1297
      %1299 = vrot.lane.b32.xlu0 %v402, 48
      %v1300 = vpop.permute.xlu0 %1299
      %v1301 = vsel %vm409, %v1298, 0
      %v1303 = vsel %vm409, %v1300, 0
      %1305 = vmatprep.subr.mxu0 0.0
      %1306 = vmatpush1.xpose.msra.mxu0 0.0
      %1307 = vmatprep.subr.mxu0 0.0
      %1308 = vmatpush1.xpose.msra.mxu0 0.0
      %1309 = vmatprep.subr.mxu0 0.0
      %1310 = vmatpush1.xpose.msra.mxu0 0.0
      %1311 = vmatprep.subr.mxu0 0.0
      %1312 = vmatpush1.xpose.msra.mxu0 0.0
      %1313 = vmatprep.subr.mxu0 0.0
      %1314 = vmatpush1.xpose.msra.mxu0 0.0
      %1315 = vmatprep.subr.mxu0 0.0
      %1316 = vmatpush1.xpose.msra.mxu0 0.0
      %1317 = vmatprep.subr.mxu0 0.0
      %1318 = vmatpush1.xpose.msra.mxu0 0.0
      %1319 = vmatprep.subr.mxu0 0.0
      %1320 = vmatpush1.xpose.msra.mxu0 0.0
      %1321 = vmatprep.subr.mxu0 0.0
      %1322 = vmatpush1.xpose.msra.mxu0 0.0
      %1323 = vmatprep.subr.mxu0 0.0
      %1324 = vmatpush1.xpose.msra.mxu0 0.0
      %1325 = vmatprep.subr.mxu0 0.0
      %1326 = vmatpush1.xpose.msra.mxu0 0.0
      %1327 = vmatprep.subr.mxu0 0.0
      %1328 = vmatpush1.xpose.msra.mxu0 0.0
      %1329 = vmatprep.subr.mxu0 0.0
      %1330 = vmatpush1.xpose.msra.mxu0 0.0
      %1331 = vmatprep.subr.mxu0 0.0
      %1332 = vmatpush1.xpose.msra.mxu0 0.0
      %1333 = vmatprep.subr.mxu0 0.0
      %1334 = vmatpush1.xpose.msra.mxu0 0.0
      %1335 = vmatprep.subr.mxu0 0.0
      %1336 = vmatpush1.xpose.msra.mxu0 %v1303
      %1337 = vmatprep.subr.mxu0 0.0
      %1338 = vmatpush2.xpose.msra.mxu0 0.0
      %1339 = vmatprep.subr.mxu0 0.0
      %1340 = vmatpush2.xpose.msra.mxu0 0.0
      %1341 = vmatprep.subr.mxu0 0.0
      %1342 = vmatpush2.xpose.msra.mxu0 0.0
      %1343 = vmatprep.subr.mxu0 0.0
      %1344 = vmatpush2.xpose.msra.mxu0 0.0
      %1345 = vmatprep.subr.mxu0 0.0
      %1346 = vmatpush2.xpose.msra.mxu0 0.0
      %1347 = vmatprep.subr.mxu0 0.0
      %1348 = vmatpush2.xpose.msra.mxu0 0.0
      %1349 = vmatprep.subr.mxu0 0.0
      %1350 = vmatpush2.xpose.msra.mxu0 0.0
      %1351 = vmatprep.subr.mxu0 0.0
      %1352 = vmatpush2.xpose.msra.mxu0 0.0
      %1353 = vmatprep.subr.mxu0 0.0
      %1354 = vmatpush2.xpose.msra.mxu0 0.0
      %1355 = vmatprep.subr.mxu0 0.0
      %1356 = vmatpush2.xpose.msra.mxu0 0.0
      %1357 = vmatprep.subr.mxu0 0.0
      %1358 = vmatpush2.xpose.msra.mxu0 0.0
      %1359 = vmatprep.subr.mxu0 0.0
      %1360 = vmatpush2.xpose.msra.mxu0 0.0
      %1361 = vmatprep.subr.mxu0 0.0
      %1362 = vmatpush2.xpose.msra.mxu0 0.0
      %1363 = vmatprep.subr.mxu0 0.0
      %1364 = vmatpush2.xpose.msra.mxu0 0.0
      %1365 = vmatprep.subr.mxu0 0.0
      %1366 = vmatpush2.xpose.msra.mxu0 0.0
      %1367 = vmatprep.subr.mxu0 0.0
      %1368 = vmatpush2.xpose.msra.mxu0 0.0
      %1369 = vmatprep.mubr.f32.mxu0 0.0
      %1370 = vmatmul.mubr.f32.gmra.mxu0 %v1301
      %v1371 = vpop.f32.mrf.mxu0
      %v1372 = vadd.f32 0.0, %v1371
      %v1373 = vpop.f32.mrf.mxu0
      %1374 = vdwg.mxu0
      %v1375 = vmul.f32 %v1138, 0.25
      %v1376 = vmul.f32 %v1216, 0.25
      %v1377 = vmul.f32 %v1294, 0.25
      %v1378 = vmul.f32 %v1372, 0.25
      %v1379 = vsel %vm721, %v1375, -1e+30
      %v1380 = vsel %vm721, %v1376, -1e+30
      %v1381 = vsel %vm721, %v1377, -1e+30
      %v1382 = vsel %vm721, %v1378, -1e+30
      %v1383 = vsel %vm726, %v1379, -inf
      %1384 = vmax.xlane.f32.xlu0 %v1383
      %v1385 = vpop.xlane.xlu0 %1384
      %v1386 = vsel %vm726, %v1380, -inf
      %1387 = vmax.xlane.f32.xlu0 %v1386
      %v1388 = vpop.xlane.xlu0 %1387
      %v1389 = vsel %vm726, %v1381, -inf
      %1390 = vmax.xlane.f32.xlu0 %v1389
      %v1391 = vpop.xlane.xlu0 %1390
      %v1392 = vsel %vm726, %v1382, -inf
      %1393 = vmax.xlane.f32.xlu0 %v1392
      %v1394 = vpop.xlane.xlu0 %1393
      %v1395 = vsub.f32 %v1379, %v1385
      %v1396 = vsub.f32 %v1380, %v1388
      %v1397 = vsub.f32 %v1381, %v1391
      %v1398 = vsub.f32 %v1382, %v1394
      %v1399 = vmul.f32 %v1395, 1.442695
      %v1400 = vpow.pop %v1399
      %v1401 = vmul.f32 %v1396, 1.442695
      %v1402 = vpow.pop %v1401
      %v1403 = vmul.f32 %v1397, 1.442695
      %v1404 = vpow.pop %v1403
      %v1405 = vmul.f32 %v1398, 1.442695
      %v1406 = vpow.pop %v1405
      %v1407 = vsel %vm726, %v1400, 0.0
      %1408 = vadd.xlane.f32.xlu0 %v1407
      %v1409 = vpop.xlane.xlu0 %1408
      %v1410 = vsel %vm726, %v1402, 0.0
      %1411 = vadd.xlane.f32.xlu0 %v1410
      %v1412 = vpop.xlane.xlu0 %1411
      %v1413 = vsel %vm726, %v1404, 0.0
      %1414 = vadd.xlane.f32.xlu0 %v1413
      %v1415 = vpop.xlane.xlu0 %1414
      %v1416 = vsel %vm726, %v1406, 0.0
      %1417 = vadd.xlane.f32.xlu0 %v1416
      %v1418 = vpop.xlane.xlu0 %1417
      %v1419 = vrcp.pop %v1409
      %v1420 = vrcp.pop %v1412
      %v1421 = vrcp.pop %v1415
      %v1422 = vrcp.pop %v1418
      %v1423 = vmul.f32 %v1400, %v1419
      %v1424 = vmul.f32 %v1402, %v1420
      %v1425 = vmul.f32 %v1404, %v1421
      %v1426 = vmul.f32 %v1406, %v1422
      %1428 = vrot.lane.b32.xlu0 %v386, 112
      %v1429 = vpop.permute.xlu0 %1428
      %v1432 = vsel %vm726, %v1423, 0
      %1434 = vmatprep.subr.mxu0 0.0
      %1435 = vmatpush1.msra.mxu0 0.0
      %1436 = vmatprep.subr.mxu0 0.0
      %1437 = vmatpush1.msra.mxu0 0.0
      %1438 = vmatprep.subr.mxu0 0.0
      %1439 = vmatpush1.msra.mxu0 0.0
      %1440 = vmatprep.subr.mxu0 0.0
      %1441 = vmatpush1.msra.mxu0 0.0
      %1442 = vmatprep.subr.mxu0 0.0
      %1443 = vmatpush1.msra.mxu0 0.0
      %1444 = vmatprep.subr.mxu0 0.0
      %1445 = vmatpush1.msra.mxu0 0.0
      %1446 = vmatprep.subr.mxu0 0.0
      %1447 = vmatpush1.msra.mxu0 0.0
      %1448 = vmatprep.subr.mxu0 0.0
      %1449 = vmatpush1.msra.mxu0 0.0
      %1450 = vmatprep.subr.mxu0 0.0
      %1451 = vmatpush1.msra.mxu0 0.0
      %1452 = vmatprep.subr.mxu0 0.0
      %1453 = vmatpush1.msra.mxu0 0.0
      %1454 = vmatprep.subr.mxu0 0.0
      %1455 = vmatpush1.msra.mxu0 0.0
      %1456 = vmatprep.subr.mxu0 0.0
      %1457 = vmatpush1.msra.mxu0 0.0
      %1458 = vmatprep.subr.mxu0 0.0
      %1459 = vmatpush1.msra.mxu0 0.0
      %1460 = vmatprep.subr.mxu0 0.0
      %1461 = vmatpush1.msra.mxu0 0.0
      %1462 = vmatprep.subr.mxu0 0.0
      %1463 = vmatpush1.msra.mxu0 0.0
      %1464 = vmatprep.subr.mxu0 0.0
      %1465 = vmatpush1.msra.mxu0 %v1429
      %1466 = vmatprep.subr.mxu0 0.0
      %1467 = vmatpush2.msra.mxu0 0.0
      %1468 = vmatprep.subr.mxu0 0.0
      %1469 = vmatpush2.msra.mxu0 0.0
      %1470 = vmatprep.subr.mxu0 0.0
      %1471 = vmatpush2.msra.mxu0 0.0
      %1472 = vmatprep.subr.mxu0 0.0
      %1473 = vmatpush2.msra.mxu0 0.0
      %1474 = vmatprep.subr.mxu0 0.0
      %1475 = vmatpush2.msra.mxu0 0.0
      %1476 = vmatprep.subr.mxu0 0.0
      %1477 = vmatpush2.msra.mxu0 0.0
      %1478 = vmatprep.subr.mxu0 0.0
      %1479 = vmatpush2.msra.mxu0 0.0
      %1480 = vmatprep.subr.mxu0 0.0
      %1481 = vmatpush2.msra.mxu0 0.0
      %1482 = vmatprep.subr.mxu0 0.0
      %1483 = vmatpush2.msra.mxu0 0.0
      %1484 = vmatprep.subr.mxu0 0.0
      %1485 = vmatpush2.msra.mxu0 0.0
      %1486 = vmatprep.subr.mxu0 0.0
      %1487 = vmatpush2.msra.mxu0 0.0
      %1488 = vmatprep.subr.mxu0 0.0
      %1489 = vmatpush2.msra.mxu0 0.0
      %1490 = vmatprep.subr.mxu0 0.0
      %1491 = vmatpush2.msra.mxu0 0.0
      %1492 = vmatprep.subr.mxu0 0.0
      %1493 = vmatpush2.msra.mxu0 0.0
      %1494 = vmatprep.subr.mxu0 0.0
      %1495 = vmatpush2.msra.mxu0 0.0
      %1496 = vmatprep.subr.mxu0 0.0
      %1497 = vmatpush2.msra.mxu0 0.0
      %1498 = vmatprep.mubr.f32.mxu0 0.0
      %1499 = vmatmul.mubr.f32.gmra.mxu0 %v1432
      %v1500 = vpop.f32.mrf.mxu0
      %v1501 = vadd.f32 0.0, %v1500
      %v1502 = vpop.f32.mrf.mxu0
      %1503 = vdwg.mxu0
      %1505 = vrot.lane.b32.xlu0 %v392, 112
      %v1506 = vpop.permute.xlu0 %1505
      %v1509 = vsel %vm726, %v1424, 0
      %1511 = vmatprep.subr.mxu0 0.0
      %1512 = vmatpush1.msra.mxu0 0.0
      %1513 = vmatprep.subr.mxu0 0.0
      %1514 = vmatpush1.msra.mxu0 0.0
      %1515 = vmatprep.subr.mxu0 0.0
      %1516 = vmatpush1.msra.mxu0 0.0
      %1517 = vmatprep.subr.mxu0 0.0
      %1518 = vmatpush1.msra.mxu0 0.0
      %1519 = vmatprep.subr.mxu0 0.0
      %1520 = vmatpush1.msra.mxu0 0.0
      %1521 = vmatprep.subr.mxu0 0.0
      %1522 = vmatpush1.msra.mxu0 0.0
      %1523 = vmatprep.subr.mxu0 0.0
      %1524 = vmatpush1.msra.mxu0 0.0
      %1525 = vmatprep.subr.mxu0 0.0
      %1526 = vmatpush1.msra.mxu0 0.0
      %1527 = vmatprep.subr.mxu0 0.0
      %1528 = vmatpush1.msra.mxu0 0.0
      %1529 = vmatprep.subr.mxu0 0.0
      %1530 = vmatpush1.msra.mxu0 0.0
      %1531 = vmatprep.subr.mxu0 0.0
      %1532 = vmatpush1.msra.mxu0 0.0
      %1533 = vmatprep.subr.mxu0 0.0
      %1534 = vmatpush1.msra.mxu0 0.0
      %1535 = vmatprep.subr.mxu0 0.0
      %1536 = vmatpush1.msra.mxu0 0.0
      %1537 = vmatprep.subr.mxu0 0.0
      %1538 = vmatpush1.msra.mxu0 0.0
      %1539 = vmatprep.subr.mxu0 0.0
      %1540 = vmatpush1.msra.mxu0 0.0
      %1541 = vmatprep.subr.mxu0 0.0
      %1542 = vmatpush1.msra.mxu0 %v1506
      %1543 = vmatprep.subr.mxu0 0.0
      %1544 = vmatpush2.msra.mxu0 0.0
      %1545 = vmatprep.subr.mxu0 0.0
      %1546 = vmatpush2.msra.mxu0 0.0
      %1547 = vmatprep.subr.mxu0 0.0
      %1548 = vmatpush2.msra.mxu0 0.0
      %1549 = vmatprep.subr.mxu0 0.0
      %1550 = vmatpush2.msra.mxu0 0.0
      %1551 = vmatprep.subr.mxu0 0.0
      %1552 = vmatpush2.msra.mxu0 0.0
      %1553 = vmatprep.subr.mxu0 0.0
      %1554 = vmatpush2.msra.mxu0 0.0
      %1555 = vmatprep.subr.mxu0 0.0
      %1556 = vmatpush2.msra.mxu0 0.0
      %1557 = vmatprep.subr.mxu0 0.0
      %1558 = vmatpush2.msra.mxu0 0.0
      %1559 = vmatprep.subr.mxu0 0.0
      %1560 = vmatpush2.msra.mxu0 0.0
      %1561 = vmatprep.subr.mxu0 0.0
      %1562 = vmatpush2.msra.mxu0 0.0
      %1563 = vmatprep.subr.mxu0 0.0
      %1564 = vmatpush2.msra.mxu0 0.0
      %1565 = vmatprep.subr.mxu0 0.0
      %1566 = vmatpush2.msra.mxu0 0.0
      %1567 = vmatprep.subr.mxu0 0.0
      %1568 = vmatpush2.msra.mxu0 0.0
      %1569 = vmatprep.subr.mxu0 0.0
      %1570 = vmatpush2.msra.mxu0 0.0
      %1571 = vmatprep.subr.mxu0 0.0
      %1572 = vmatpush2.msra.mxu0 0.0
      %1573 = vmatprep.subr.mxu0 0.0
      %1574 = vmatpush2.msra.mxu0 0.0
      %1575 = vmatprep.mubr.f32.mxu0 0.0
      %1576 = vmatmul.mubr.f32.gmra.mxu0 %v1509
      %v1577 = vpop.f32.mrf.mxu0
      %v1578 = vadd.f32 0.0, %v1577
      %v1579 = vpop.f32.mrf.mxu0
      %1580 = vdwg.mxu0
      %1582 = vrot.lane.b32.xlu0 %v398, 112
      %v1583 = vpop.permute.xlu0 %1582
      %v1586 = vsel %vm726, %v1425, 0
      %1588 = vmatprep.subr.mxu0 0.0
      %1589 = vmatpush1.msra.mxu0 0.0
      %1590 = vmatprep.subr.mxu0 0.0
      %1591 = vmatpush1.msra.mxu0 0.0
      %1592 = vmatprep.subr.mxu0 0.0
      %1593 = vmatpush1.msra.mxu0 0.0
      %1594 = vmatprep.subr.mxu0 0.0
      %1595 = vmatpush1.msra.mxu0 0.0
      %1596 = vmatprep.subr.mxu0 0.0
      %1597 = vmatpush1.msra.mxu0 0.0
      %1598 = vmatprep.subr.mxu0 0.0
      %1599 = vmatpush1.msra.mxu0 0.0
      %1600 = vmatprep.subr.mxu0 0.0
      %1601 = vmatpush1.msra.mxu0 0.0
      %1602 = vmatprep.subr.mxu0 0.0
      %1603 = vmatpush1.msra.mxu0 0.0
      %1604 = vmatprep.subr.mxu0 0.0
      %1605 = vmatpush1.msra.mxu0 0.0
      %1606 = vmatprep.subr.mxu0 0.0
      %1607 = vmatpush1.msra.mxu0 0.0
      %1608 = vmatprep.subr.mxu0 0.0
      %1609 = vmatpush1.msra.mxu0 0.0
      %1610 = vmatprep.subr.mxu0 0.0
      %1611 = vmatpush1.msra.mxu0 0.0
      %1612 = vmatprep.subr.mxu0 0.0
      %1613 = vmatpush1.msra.mxu0 0.0
      %1614 = vmatprep.subr.mxu0 0.0
      %1615 = vmatpush1.msra.mxu0 0.0
      %1616 = vmatprep.subr.mxu0 0.0
      %1617 = vmatpush1.msra.mxu0 0.0
      %1618 = vmatprep.subr.mxu0 0.0
      %1619 = vmatpush1.msra.mxu0 %v1583
      %1620 = vmatprep.subr.mxu0 0.0
      %1621 = vmatpush2.msra.mxu0 0.0
      %1622 = vmatprep.subr.mxu0 0.0
      %1623 = vmatpush2.msra.mxu0 0.0
      %1624 = vmatprep.subr.mxu0 0.0
      %1625 = vmatpush2.msra.mxu0 0.0
      %1626 = vmatprep.subr.mxu0 0.0
      %1627 = vmatpush2.msra.mxu0 0.0
      %1628 = vmatprep.subr.mxu0 0.0
      %1629 = vmatpush2.msra.mxu0 0.0
      %1630 = vmatprep.subr.mxu0 0.0
      %1631 = vmatpush2.msra.mxu0 0.0
      %1632 = vmatprep.subr.mxu0 0.0
      %1633 = vmatpush2.msra.mxu0 0.0
      %1634 = vmatprep.subr.mxu0 0.0
      %1635 = vmatpush2.msra.mxu0 0.0
      %1636 = vmatprep.subr.mxu0 0.0
      %1637 = vmatpush2.msra.mxu0 0.0
      %1638 = vmatprep.subr.mxu0 0.0
      %1639 = vmatpush2.msra.mxu0 0.0
      %1640 = vmatprep.subr.mxu0 0.0
      %1641 = vmatpush2.msra.mxu0 0.0
      %1642 = vmatprep.subr.mxu0 0.0
      %1643 = vmatpush2.msra.mxu0 0.0
      %1644 = vmatprep.subr.mxu0 0.0
      %1645 = vmatpush2.msra.mxu0 0.0
      %1646 = vmatprep.subr.mxu0 0.0
      %1647 = vmatpush2.msra.mxu0 0.0
      %1648 = vmatprep.subr.mxu0 0.0
      %1649 = vmatpush2.msra.mxu0 0.0
      %1650 = vmatprep.subr.mxu0 0.0
      %1651 = vmatpush2.msra.mxu0 0.0
      %1652 = vmatprep.mubr.f32.mxu0 0.0
      %1653 = vmatmul.mubr.f32.gmra.mxu0 %v1586
      %v1654 = vpop.f32.mrf.mxu0
      %v1655 = vadd.f32 0.0, %v1654
      %v1656 = vpop.f32.mrf.mxu0
      %1657 = vdwg.mxu0
      %1659 = vrot.lane.b32.xlu0 %v404, 112
      %v1660 = vpop.permute.xlu0 %1659
      %v1663 = vsel %vm726, %v1426, 0
      %1665 = vmatprep.subr.mxu0 0.0
      %1666 = vmatpush1.msra.mxu0 0.0
      %1667 = vmatprep.subr.mxu0 0.0
      %1668 = vmatpush1.msra.mxu0 0.0
      %1669 = vmatprep.subr.mxu0 0.0
      %1670 = vmatpush1.msra.mxu0 0.0
      %1671 = vmatprep.subr.mxu0 0.0
      %1672 = vmatpush1.msra.mxu0 0.0
      %1673 = vmatprep.subr.mxu0 0.0
      %1674 = vmatpush1.msra.mxu0 0.0
      %1675 = vmatprep.subr.mxu0 0.0
      %1676 = vmatpush1.msra.mxu0 0.0
      %1677 = vmatprep.subr.mxu0 0.0
      %1678 = vmatpush1.msra.mxu0 0.0
      %1679 = vmatprep.subr.mxu0 0.0
      %1680 = vmatpush1.msra.mxu0 0.0
      %1681 = vmatprep.subr.mxu0 0.0
      %1682 = vmatpush1.msra.mxu0 0.0
      %1683 = vmatprep.subr.mxu0 0.0
      %1684 = vmatpush1.msra.mxu0 0.0
      %1685 = vmatprep.subr.mxu0 0.0
      %1686 = vmatpush1.msra.mxu0 0.0
      %1687 = vmatprep.subr.mxu0 0.0
      %1688 = vmatpush1.msra.mxu0 0.0
      %1689 = vmatprep.subr.mxu0 0.0
      %1690 = vmatpush1.msra.mxu0 0.0
      %1691 = vmatprep.subr.mxu0 0.0
      %1692 = vmatpush1.msra.mxu0 0.0
      %1693 = vmatprep.subr.mxu0 0.0
      %1694 = vmatpush1.msra.mxu0 0.0
      %1695 = vmatprep.subr.mxu0 0.0
      %1696 = vmatpush1.msra.mxu0 %v1660
      %1697 = vmatprep.subr.mxu0 0.0
      %1698 = vmatpush2.msra.mxu0 0.0
      %1699 = vmatprep.subr.mxu0 0.0
      %1700 = vmatpush2.msra.mxu0 0.0
      %1701 = vmatprep.subr.mxu0 0.0
      %1702 = vmatpush2.msra.mxu0 0.0
      %1703 = vmatprep.subr.mxu0 0.0
      %1704 = vmatpush2.msra.mxu0 0.0
      %1705 = vmatprep.subr.mxu0 0.0
      %1706 = vmatpush2.msra.mxu0 0.0
      %1707 = vmatprep.subr.mxu0 0.0
      %1708 = vmatpush2.msra.mxu0 0.0
      %1709 = vmatprep.subr.mxu0 0.0
      %1710 = vmatpush2.msra.mxu0 0.0
      %1711 = vmatprep.subr.mxu0 0.0
      %1712 = vmatpush2.msra.mxu0 0.0
      %1713 = vmatprep.subr.mxu0 0.0
      %1714 = vmatpush2.msra.mxu0 0.0
      %1715 = vmatprep.subr.mxu0 0.0
      %1716 = vmatpush2.msra.mxu0 0.0
      %1717 = vmatprep.subr.mxu0 0.0
      %1718 = vmatpush2.msra.mxu0 0.0
      %1719 = vmatprep.subr.mxu0 0.0
      %1720 = vmatpush2.msra.mxu0 0.0
      %1721 = vmatprep.subr.mxu0 0.0
      %1722 = vmatpush2.msra.mxu0 0.0
      %1723 = vmatprep.subr.mxu0 0.0
      %1724 = vmatpush2.msra.mxu0 0.0
      %1725 = vmatprep.subr.mxu0 0.0
      %1726 = vmatpush2.msra.mxu0 0.0
      %1727 = vmatprep.subr.mxu0 0.0
      %1728 = vmatpush2.msra.mxu0 0.0
      %1729 = vmatprep.mubr.f32.mxu0 0.0
      %1730 = vmatmul.mubr.f32.gmra.mxu0 %v1663
      %v1731 = vpop.f32.mrf.mxu0
      %v1732 = vadd.f32 0.0, %v1731
      %v1733 = vpop.f32.mrf.mxu0
      %1734 = vdwg.mxu0
      %1735 = vrot.lane.b32.xlu0 %v384, 96
      %v1736 = vpop.permute.xlu0 %1735
      %1737 = vrot.lane.b32.xlu0 %v384, 32
      %v1738 = vpop.permute.xlu0 %1737
      %v1739 = vsel %vm409, %v1736, 0
      %v1741 = vsel %vm409, %v1738, 0
      %1743 = vmatprep.subr.mxu0 0.0
      %1744 = vmatpush1.xpose.msra.mxu0 0.0
      %1745 = vmatprep.subr.mxu0 0.0
      %1746 = vmatpush1.xpose.msra.mxu0 0.0
      %1747 = vmatprep.subr.mxu0 0.0
      %1748 = vmatpush1.xpose.msra.mxu0 0.0
      %1749 = vmatprep.subr.mxu0 0.0
      %1750 = vmatpush1.xpose.msra.mxu0 0.0
      %1751 = vmatprep.subr.mxu0 0.0
      %1752 = vmatpush1.xpose.msra.mxu0 0.0
      %1753 = vmatprep.subr.mxu0 0.0
      %1754 = vmatpush1.xpose.msra.mxu0 0.0
      %1755 = vmatprep.subr.mxu0 0.0
      %1756 = vmatpush1.xpose.msra.mxu0 0.0
      %1757 = vmatprep.subr.mxu0 0.0
      %1758 = vmatpush1.xpose.msra.mxu0 0.0
      %1759 = vmatprep.subr.mxu0 0.0
      %1760 = vmatpush1.xpose.msra.mxu0 0.0
      %1761 = vmatprep.subr.mxu0 0.0
      %1762 = vmatpush1.xpose.msra.mxu0 0.0
      %1763 = vmatprep.subr.mxu0 0.0
      %1764 = vmatpush1.xpose.msra.mxu0 0.0
      %1765 = vmatprep.subr.mxu0 0.0
      %1766 = vmatpush1.xpose.msra.mxu0 0.0
      %1767 = vmatprep.subr.mxu0 0.0
      %1768 = vmatpush1.xpose.msra.mxu0 0.0
      %1769 = vmatprep.subr.mxu0 0.0
      %1770 = vmatpush1.xpose.msra.mxu0 0.0
      %1771 = vmatprep.subr.mxu0 0.0
      %1772 = vmatpush1.xpose.msra.mxu0 0.0
      %1773 = vmatprep.subr.mxu0 0.0
      %1774 = vmatpush1.xpose.msra.mxu0 %v1741
      %1775 = vmatprep.subr.mxu0 0.0
      %1776 = vmatpush2.xpose.msra.mxu0 0.0
      %1777 = vmatprep.subr.mxu0 0.0
      %1778 = vmatpush2.xpose.msra.mxu0 0.0
      %1779 = vmatprep.subr.mxu0 0.0
      %1780 = vmatpush2.xpose.msra.mxu0 0.0
      %1781 = vmatprep.subr.mxu0 0.0
      %1782 = vmatpush2.xpose.msra.mxu0 0.0
      %1783 = vmatprep.subr.mxu0 0.0
      %1784 = vmatpush2.xpose.msra.mxu0 0.0
      %1785 = vmatprep.subr.mxu0 0.0
      %1786 = vmatpush2.xpose.msra.mxu0 0.0
      %1787 = vmatprep.subr.mxu0 0.0
      %1788 = vmatpush2.xpose.msra.mxu0 0.0
      %1789 = vmatprep.subr.mxu0 0.0
      %1790 = vmatpush2.xpose.msra.mxu0 0.0
      %1791 = vmatprep.subr.mxu0 0.0
      %1792 = vmatpush2.xpose.msra.mxu0 0.0
      %1793 = vmatprep.subr.mxu0 0.0
      %1794 = vmatpush2.xpose.msra.mxu0 0.0
      %1795 = vmatprep.subr.mxu0 0.0
      %1796 = vmatpush2.xpose.msra.mxu0 0.0
      %1797 = vmatprep.subr.mxu0 0.0
      %1798 = vmatpush2.xpose.msra.mxu0 0.0
      %1799 = vmatprep.subr.mxu0 0.0
      %1800 = vmatpush2.xpose.msra.mxu0 0.0
      %1801 = vmatprep.subr.mxu0 0.0
      %1802 = vmatpush2.xpose.msra.mxu0 0.0
      %1803 = vmatprep.subr.mxu0 0.0
      %1804 = vmatpush2.xpose.msra.mxu0 0.0
      %1805 = vmatprep.subr.mxu0 0.0
      %1806 = vmatpush2.xpose.msra.mxu0 0.0
      %1807 = vmatprep.mubr.f32.mxu0 0.0
      %1808 = vmatmul.mubr.f32.gmra.mxu0 %v1739
      %v1809 = vpop.f32.mrf.mxu0
      %v1810 = vadd.f32 0.0, %v1809
      %v1811 = vpop.f32.mrf.mxu0
      %1812 = vdwg.mxu0
      %1813 = vrot.lane.b32.xlu0 %v390, 96
      %v1814 = vpop.permute.xlu0 %1813
      %1815 = vrot.lane.b32.xlu0 %v390, 32
      %v1816 = vpop.permute.xlu0 %1815
      %v1817 = vsel %vm409, %v1814, 0
      %v1819 = vsel %vm409, %v1816, 0
      %1821 = vmatprep.subr.mxu0 0.0
      %1822 = vmatpush1.xpose.msra.mxu0 0.0
      %1823 = vmatprep.subr.mxu0 0.0
      %1824 = vmatpush1.xpose.msra.mxu0 0.0
      %1825 = vmatprep.subr.mxu0 0.0
      %1826 = vmatpush1.xpose.msra.mxu0 0.0
      %1827 = vmatprep.subr.mxu0 0.0
      %1828 = vmatpush1.xpose.msra.mxu0 0.0
      %1829 = vmatprep.subr.mxu0 0.0
      %1830 = vmatpush1.xpose.msra.mxu0 0.0
      %1831 = vmatprep.subr.mxu0 0.0
      %1832 = vmatpush1.xpose.msra.mxu0 0.0
      %1833 = vmatprep.subr.mxu0 0.0
      %1834 = vmatpush1.xpose.msra.mxu0 0.0
      %1835 = vmatprep.subr.mxu0 0.0
      %1836 = vmatpush1.xpose.msra.mxu0 0.0
      %1837 = vmatprep.subr.mxu0 0.0
      %1838 = vmatpush1.xpose.msra.mxu0 0.0
      %1839 = vmatprep.subr.mxu0 0.0
      %1840 = vmatpush1.xpose.msra.mxu0 0.0
      %1841 = vmatprep.subr.mxu0 0.0
      %1842 = vmatpush1.xpose.msra.mxu0 0.0
      %1843 = vmatprep.subr.mxu0 0.0
      %1844 = vmatpush1.xpose.msra.mxu0 0.0
      %1845 = vmatprep.subr.mxu0 0.0
      %1846 = vmatpush1.xpose.msra.mxu0 0.0
      %1847 = vmatprep.subr.mxu0 0.0
      %1848 = vmatpush1.xpose.msra.mxu0 0.0
      %1849 = vmatprep.subr.mxu0 0.0
      %1850 = vmatpush1.xpose.msra.mxu0 0.0
      %1851 = vmatprep.subr.mxu0 0.0
      %1852 = vmatpush1.xpose.msra.mxu0 %v1819
      %1853 = vmatprep.subr.mxu0 0.0
      %1854 = vmatpush2.xpose.msra.mxu0 0.0
      %1855 = vmatprep.subr.mxu0 0.0
      %1856 = vmatpush2.xpose.msra.mxu0 0.0
      %1857 = vmatprep.subr.mxu0 0.0
      %1858 = vmatpush2.xpose.msra.mxu0 0.0
      %1859 = vmatprep.subr.mxu0 0.0
      %1860 = vmatpush2.xpose.msra.mxu0 0.0
      %1861 = vmatprep.subr.mxu0 0.0
      %1862 = vmatpush2.xpose.msra.mxu0 0.0
      %1863 = vmatprep.subr.mxu0 0.0
      %1864 = vmatpush2.xpose.msra.mxu0 0.0
      %1865 = vmatprep.subr.mxu0 0.0
      %1866 = vmatpush2.xpose.msra.mxu0 0.0
      %1867 = vmatprep.subr.mxu0 0.0
      %1868 = vmatpush2.xpose.msra.mxu0 0.0
      %1869 = vmatprep.subr.mxu0 0.0
      %1870 = vmatpush2.xpose.msra.mxu0 0.0
      %1871 = vmatprep.subr.mxu0 0.0
      %1872 = vmatpush2.xpose.msra.mxu0 0.0
      %1873 = vmatprep.subr.mxu0 0.0
      %1874 = vmatpush2.xpose.msra.mxu0 0.0
      %1875 = vmatprep.subr.mxu0 0.0
      %1876 = vmatpush2.xpose.msra.mxu0 0.0
      %1877 = vmatprep.subr.mxu0 0.0
      %1878 = vmatpush2.xpose.msra.mxu0 0.0
      %1879 = vmatprep.subr.mxu0 0.0
      %1880 = vmatpush2.xpose.msra.mxu0 0.0
      %1881 = vmatprep.subr.mxu0 0.0
      %1882 = vmatpush2.xpose.msra.mxu0 0.0
      %1883 = vmatprep.subr.mxu0 0.0
      %1884 = vmatpush2.xpose.msra.mxu0 0.0
      %1885 = vmatprep.mubr.f32.mxu0 0.0
      %1886 = vmatmul.mubr.f32.gmra.mxu0 %v1817
      %v1887 = vpop.f32.mrf.mxu0
      %v1888 = vadd.f32 0.0, %v1887
      %v1889 = vpop.f32.mrf.mxu0
      %1890 = vdwg.mxu0
      %1891 = vrot.lane.b32.xlu0 %v396, 96
      %v1892 = vpop.permute.xlu0 %1891
      %1893 = vrot.lane.b32.xlu0 %v396, 32
      %v1894 = vpop.permute.xlu0 %1893
      %v1895 = vsel %vm409, %v1892, 0
      %v1897 = vsel %vm409, %v1894, 0
      %1899 = vmatprep.subr.mxu0 0.0
      %1900 = vmatpush1.xpose.msra.mxu0 0.0
      %1901 = vmatprep.subr.mxu0 0.0
      %1902 = vmatpush1.xpose.msra.mxu0 0.0
      %1903 = vmatprep.subr.mxu0 0.0
      %1904 = vmatpush1.xpose.msra.mxu0 0.0
      %1905 = vmatprep.subr.mxu0 0.0
      %1906 = vmatpush1.xpose.msra.mxu0 0.0
      %1907 = vmatprep.subr.mxu0 0.0
      %1908 = vmatpush1.xpose.msra.mxu0 0.0
      %1909 = vmatprep.subr.mxu0 0.0
      %1910 = vmatpush1.xpose.msra.mxu0 0.0
      %1911 = vmatprep.subr.mxu0 0.0
      %1912 = vmatpush1.xpose.msra.mxu0 0.0
      %1913 = vmatprep.subr.mxu0 0.0
      %1914 = vmatpush1.xpose.msra.mxu0 0.0
      %1915 = vmatprep.subr.mxu0 0.0
      %1916 = vmatpush1.xpose.msra.mxu0 0.0
      %1917 = vmatprep.subr.mxu0 0.0
      %1918 = vmatpush1.xpose.msra.mxu0 0.0
      %1919 = vmatprep.subr.mxu0 0.0
      %1920 = vmatpush1.xpose.msra.mxu0 0.0
      %1921 = vmatprep.subr.mxu0 0.0
      %1922 = vmatpush1.xpose.msra.mxu0 0.0
      %1923 = vmatprep.subr.mxu0 0.0
      %1924 = vmatpush1.xpose.msra.mxu0 0.0
      %1925 = vmatprep.subr.mxu0 0.0
      %1926 = vmatpush1.xpose.msra.mxu0 0.0
      %1927 = vmatprep.subr.mxu0 0.0
      %1928 = vmatpush1.xpose.msra.mxu0 0.0
      %1929 = vmatprep.subr.mxu0 0.0
      %1930 = vmatpush1.xpose.msra.mxu0 %v1897
      %1931 = vmatprep.subr.mxu0 0.0
      %1932 = vmatpush2.xpose.msra.mxu0 0.0
      %1933 = vmatprep.subr.mxu0 0.0
      %1934 = vmatpush2.xpose.msra.mxu0 0.0
      %1935 = vmatprep.subr.mxu0 0.0
      %1936 = vmatpush2.xpose.msra.mxu0 0.0
      %1937 = vmatprep.subr.mxu0 0.0
      %1938 = vmatpush2.xpose.msra.mxu0 0.0
      %1939 = vmatprep.subr.mxu0 0.0
      %1940 = vmatpush2.xpose.msra.mxu0 0.0
      %1941 = vmatprep.subr.mxu0 0.0
      %1942 = vmatpush2.xpose.msra.mxu0 0.0
      %1943 = vmatprep.subr.mxu0 0.0
      %1944 = vmatpush2.xpose.msra.mxu0 0.0
      %1945 = vmatprep.subr.mxu0 0.0
      %1946 = vmatpush2.xpose.msra.mxu0 0.0
      %1947 = vmatprep.subr.mxu0 0.0
      %1948 = vmatpush2.xpose.msra.mxu0 0.0
      %1949 = vmatprep.subr.mxu0 0.0
      %1950 = vmatpush2.xpose.msra.mxu0 0.0
      %1951 = vmatprep.subr.mxu0 0.0
      %1952 = vmatpush2.xpose.msra.mxu0 0.0
      %1953 = vmatprep.subr.mxu0 0.0
      %1954 = vmatpush2.xpose.msra.mxu0 0.0
      %1955 = vmatprep.subr.mxu0 0.0
      %1956 = vmatpush2.xpose.msra.mxu0 0.0
      %1957 = vmatprep.subr.mxu0 0.0
      %1958 = vmatpush2.xpose.msra.mxu0 0.0
      %1959 = vmatprep.subr.mxu0 0.0
      %1960 = vmatpush2.xpose.msra.mxu0 0.0
      %1961 = vmatprep.subr.mxu0 0.0
      %1962 = vmatpush2.xpose.msra.mxu0 0.0
      %1963 = vmatprep.mubr.f32.mxu0 0.0
      %1964 = vmatmul.mubr.f32.gmra.mxu0 %v1895
      %v1965 = vpop.f32.mrf.mxu0
      %v1966 = vadd.f32 0.0, %v1965
      %v1967 = vpop.f32.mrf.mxu0
      %1968 = vdwg.mxu0
      %1969 = vrot.lane.b32.xlu0 %v402, 96
      %v1970 = vpop.permute.xlu0 %1969
      %1971 = vrot.lane.b32.xlu0 %v402, 32
      %v1972 = vpop.permute.xlu0 %1971
      %v1973 = vsel %vm409, %v1970, 0
      %v1975 = vsel %vm409, %v1972, 0
      %1977 = vmatprep.subr.mxu0 0.0
      %1978 = vmatpush1.xpose.msra.mxu0 0.0
      %1979 = vmatprep.subr.mxu0 0.0
      %1980 = vmatpush1.xpose.msra.mxu0 0.0
      %1981 = vmatprep.subr.mxu0 0.0
      %1982 = vmatpush1.xpose.msra.mxu0 0.0
      %1983 = vmatprep.subr.mxu0 0.0
      %1984 = vmatpush1.xpose.msra.mxu0 0.0
      %1985 = vmatprep.subr.mxu0 0.0
      %1986 = vmatpush1.xpose.msra.mxu0 0.0
      %1987 = vmatprep.subr.mxu0 0.0
      %1988 = vmatpush1.xpose.msra.mxu0 0.0
      %1989 = vmatprep.subr.mxu0 0.0
      %1990 = vmatpush1.xpose.msra.mxu0 0.0
      %1991 = vmatprep.subr.mxu0 0.0
      %1992 = vmatpush1.xpose.msra.mxu0 0.0
      %1993 = vmatprep.subr.mxu0 0.0
      %1994 = vmatpush1.xpose.msra.mxu0 0.0
      %1995 = vmatprep.subr.mxu0 0.0
      %1996 = vmatpush1.xpose.msra.mxu0 0.0
      %1997 = vmatprep.subr.mxu0 0.0
      %1998 = vmatpush1.xpose.msra.mxu0 0.0
      %1999 = vmatprep.subr.mxu0 0.0
      %2000 = vmatpush1.xpose.msra.mxu0 0.0
      %2001 = vmatprep.subr.mxu0 0.0
      %2002 = vmatpush1.xpose.msra.mxu0 0.0
      %2003 = vmatprep.subr.mxu0 0.0
      %2004 = vmatpush1.xpose.msra.mxu0 0.0
      %2005 = vmatprep.subr.mxu0 0.0
      %2006 = vmatpush1.xpose.msra.mxu0 0.0
      %2007 = vmatprep.subr.mxu0 0.0
      %2008 = vmatpush1.xpose.msra.mxu0 %v1975
      %2009 = vmatprep.subr.mxu0 0.0
      %2010 = vmatpush2.xpose.msra.mxu0 0.0
      %2011 = vmatprep.subr.mxu0 0.0
      %2012 = vmatpush2.xpose.msra.mxu0 0.0
      %2013 = vmatprep.subr.mxu0 0.0
      %2014 = vmatpush2.xpose.msra.mxu0 0.0
      %2015 = vmatprep.subr.mxu0 0.0
      %2016 = vmatpush2.xpose.msra.mxu0 0.0
      %2017 = vmatprep.subr.mxu0 0.0
      %2018 = vmatpush2.xpose.msra.mxu0 0.0
      %2019 = vmatprep.subr.mxu0 0.0
      %2020 = vmatpush2.xpose.msra.mxu0 0.0
      %2021 = vmatprep.subr.mxu0 0.0
      %2022 = vmatpush2.xpose.msra.mxu0 0.0
      %2023 = vmatprep.subr.mxu0 0.0
      %2024 = vmatpush2.xpose.msra.mxu0 0.0
      %2025 = vmatprep.subr.mxu0 0.0
      %2026 = vmatpush2.xpose.msra.mxu0 0.0
      %2027 = vmatprep.subr.mxu0 0.0
      %2028 = vmatpush2.xpose.msra.mxu0 0.0
      %2029 = vmatprep.subr.mxu0 0.0
      %2030 = vmatpush2.xpose.msra.mxu0 0.0
      %2031 = vmatprep.subr.mxu0 0.0
      %2032 = vmatpush2.xpose.msra.mxu0 0.0
      %2033 = vmatprep.subr.mxu0 0.0
      %2034 = vmatpush2.xpose.msra.mxu0 0.0
      %2035 = vmatprep.subr.mxu0 0.0
      %2036 = vmatpush2.xpose.msra.mxu0 0.0
      %2037 = vmatprep.subr.mxu0 0.0
      %2038 = vmatpush2.xpose.msra.mxu0 0.0
      %2039 = vmatprep.subr.mxu0 0.0
      %2040 = vmatpush2.xpose.msra.mxu0 0.0
      %2041 = vmatprep.mubr.f32.mxu0 0.0
      %2042 = vmatmul.mubr.f32.gmra.mxu0 %v1973
      %v2043 = vpop.f32.mrf.mxu0
      %v2044 = vadd.f32 0.0, %v2043
      %v2045 = vpop.f32.mrf.mxu0
      %2046 = vdwg.mxu0
      %v2047 = vmul.f32 %v1810, 0.25
      %v2048 = vmul.f32 %v1888, 0.25
      %v2049 = vmul.f32 %v1966, 0.25
      %v2050 = vmul.f32 %v2044, 0.25
      %v2051 = vsel %vm721, %v2047, -1e+30
      %v2052 = vsel %vm721, %v2048, -1e+30
      %v2053 = vsel %vm721, %v2049, -1e+30
      %v2054 = vsel %vm721, %v2050, -1e+30
      %v2055 = vsel %vm726, %v2051, -inf
      %2056 = vmax.xlane.f32.xlu0 %v2055
      %v2057 = vpop.xlane.xlu0 %2056
      %v2058 = vsel %vm726, %v2052, -inf
      %2059 = vmax.xlane.f32.xlu0 %v2058
      %v2060 = vpop.xlane.xlu0 %2059
      %v2061 = vsel %vm726, %v2053, -inf
      %2062 = vmax.xlane.f32.xlu0 %v2061
      %v2063 = vpop.xlane.xlu0 %2062
      %v2064 = vsel %vm726, %v2054, -inf
      %2065 = vmax.xlane.f32.xlu0 %v2064
      %v2066 = vpop.xlane.xlu0 %2065
      %v2067 = vsub.f32 %v2051, %v2057
      %v2068 = vsub.f32 %v2052, %v2060
      %v2069 = vsub.f32 %v2053, %v2063
      %v2070 = vsub.f32 %v2054, %v2066
      %v2071 = vmul.f32 %v2067, 1.442695
      %v2072 = vpow.pop %v2071
      %v2073 = vmul.f32 %v2068, 1.442695
      %v2074 = vpow.pop %v2073
      %v2075 = vmul.f32 %v2069, 1.442695
      %v2076 = vpow.pop %v2075
      %v2077 = vmul.f32 %v2070, 1.442695
      %v2078 = vpow.pop %v2077
      %v2079 = vsel %vm726, %v2072, 0.0
      %2080 = vadd.xlane.f32.xlu0 %v2079
      %v2081 = vpop.xlane.xlu0 %2080
      %v2082 = vsel %vm726, %v2074, 0.0
      %2083 = vadd.xlane.f32.xlu0 %v2082
      %v2084 = vpop.xlane.xlu0 %2083
      %v2085 = vsel %vm726, %v2076, 0.0
      %2086 = vadd.xlane.f32.xlu0 %v2085
      %v2087 = vpop.xlane.xlu0 %2086
      %v2088 = vsel %vm726, %v2078, 0.0
      %2089 = vadd.xlane.f32.xlu0 %v2088
      %v2090 = vpop.xlane.xlu0 %2089
      %v2091 = vrcp.pop %v2081
      %v2092 = vrcp.pop %v2084
      %v2093 = vrcp.pop %v2087
      %v2094 = vrcp.pop %v2090
      %v2095 = vmul.f32 %v2072, %v2091
      %v2096 = vmul.f32 %v2074, %v2092
      %v2097 = vmul.f32 %v2076, %v2093
      %v2098 = vmul.f32 %v2078, %v2094
      %2099 = vrot.lane.b32.xlu0 %v386, 96
      %v2100 = vpop.permute.xlu0 %2099
      %v2103 = vsel %vm726, %v2095, 0
      %2105 = vmatprep.subr.mxu0 0.0
      %2106 = vmatpush1.msra.mxu0 0.0
      %2107 = vmatprep.subr.mxu0 0.0
      %2108 = vmatpush1.msra.mxu0 0.0
      %2109 = vmatprep.subr.mxu0 0.0
      %2110 = vmatpush1.msra.mxu0 0.0
      %2111 = vmatprep.subr.mxu0 0.0
      %2112 = vmatpush1.msra.mxu0 0.0
      %2113 = vmatprep.subr.mxu0 0.0
      %2114 = vmatpush1.msra.mxu0 0.0
      %2115 = vmatprep.subr.mxu0 0.0
      %2116 = vmatpush1.msra.mxu0 0.0
      %2117 = vmatprep.subr.mxu0 0.0
      %2118 = vmatpush1.msra.mxu0 0.0
      %2119 = vmatprep.subr.mxu0 0.0
      %2120 = vmatpush1.msra.mxu0 0.0
      %2121 = vmatprep.subr.mxu0 0.0
      %2122 = vmatpush1.msra.mxu0 0.0
      %2123 = vmatprep.subr.mxu0 0.0
      %2124 = vmatpush1.msra.mxu0 0.0
      %2125 = vmatprep.subr.mxu0 0.0
      %2126 = vmatpush1.msra.mxu0 0.0
      %2127 = vmatprep.subr.mxu0 0.0
      %2128 = vmatpush1.msra.mxu0 0.0
      %2129 = vmatprep.subr.mxu0 0.0
      %2130 = vmatpush1.msra.mxu0 0.0
      %2131 = vmatprep.subr.mxu0 0.0
      %2132 = vmatpush1.msra.mxu0 0.0
      %2133 = vmatprep.subr.mxu0 0.0
      %2134 = vmatpush1.msra.mxu0 0.0
      %2135 = vmatprep.subr.mxu0 0.0
      %2136 = vmatpush1.msra.mxu0 %v2100
      %2137 = vmatprep.subr.mxu0 0.0
      %2138 = vmatpush2.msra.mxu0 0.0
      %2139 = vmatprep.subr.mxu0 0.0
      %2140 = vmatpush2.msra.mxu0 0.0
      %2141 = vmatprep.subr.mxu0 0.0
      %2142 = vmatpush2.msra.mxu0 0.0
      %2143 = vmatprep.subr.mxu0 0.0
      %2144 = vmatpush2.msra.mxu0 0.0
      %2145 = vmatprep.subr.mxu0 0.0
      %2146 = vmatpush2.msra.mxu0 0.0
      %2147 = vmatprep.subr.mxu0 0.0
      %2148 = vmatpush2.msra.mxu0 0.0
      %2149 = vmatprep.subr.mxu0 0.0
      %2150 = vmatpush2.msra.mxu0 0.0
      %2151 = vmatprep.subr.mxu0 0.0
      %2152 = vmatpush2.msra.mxu0 0.0
      %2153 = vmatprep.subr.mxu0 0.0
      %2154 = vmatpush2.msra.mxu0 0.0
      %2155 = vmatprep.subr.mxu0 0.0
      %2156 = vmatpush2.msra.mxu0 0.0
      %2157 = vmatprep.subr.mxu0 0.0
      %2158 = vmatpush2.msra.mxu0 0.0
      %2159 = vmatprep.subr.mxu0 0.0
      %2160 = vmatpush2.msra.mxu0 0.0
      %2161 = vmatprep.subr.mxu0 0.0
      %2162 = vmatpush2.msra.mxu0 0.0
      %2163 = vmatprep.subr.mxu0 0.0
      %2164 = vmatpush2.msra.mxu0 0.0
      %2165 = vmatprep.subr.mxu0 0.0
      %2166 = vmatpush2.msra.mxu0 0.0
      %2167 = vmatprep.subr.mxu0 0.0
      %2168 = vmatpush2.msra.mxu0 0.0
      %2169 = vmatprep.mubr.f32.mxu0 0.0
      %2170 = vmatmul.mubr.f32.gmra.mxu0 %v2103
      %v2171 = vpop.f32.mrf.mxu0
      %v2172 = vadd.f32 0.0, %v2171
      %v2173 = vpop.f32.mrf.mxu0
      %2174 = vdwg.mxu0
      %2175 = vrot.lane.b32.xlu0 %v392, 96
      %v2176 = vpop.permute.xlu0 %2175
      %v2179 = vsel %vm726, %v2096, 0
      %2181 = vmatprep.subr.mxu0 0.0
      %2182 = vmatpush1.msra.mxu0 0.0
      %2183 = vmatprep.subr.mxu0 0.0
      %2184 = vmatpush1.msra.mxu0 0.0
      %2185 = vmatprep.subr.mxu0 0.0
      %2186 = vmatpush1.msra.mxu0 0.0
      %2187 = vmatprep.subr.mxu0 0.0
      %2188 = vmatpush1.msra.mxu0 0.0
      %2189 = vmatprep.subr.mxu0 0.0
      %2190 = vmatpush1.msra.mxu0 0.0
      %2191 = vmatprep.subr.mxu0 0.0
      %2192 = vmatpush1.msra.mxu0 0.0
      %2193 = vmatprep.subr.mxu0 0.0
      %2194 = vmatpush1.msra.mxu0 0.0
      %2195 = vmatprep.subr.mxu0 0.0
      %2196 = vmatpush1.msra.mxu0 0.0
      %2197 = vmatprep.subr.mxu0 0.0
      %2198 = vmatpush1.msra.mxu0 0.0
      %2199 = vmatprep.subr.mxu0 0.0
      %2200 = vmatpush1.msra.mxu0 0.0
      %2201 = vmatprep.subr.mxu0 0.0
      %2202 = vmatpush1.msra.mxu0 0.0
      %2203 = vmatprep.subr.mxu0 0.0
      %2204 = vmatpush1.msra.mxu0 0.0
      %2205 = vmatprep.subr.mxu0 0.0
      %2206 = vmatpush1.msra.mxu0 0.0
      %2207 = vmatprep.subr.mxu0 0.0
      %2208 = vmatpush1.msra.mxu0 0.0
      %2209 = vmatprep.subr.mxu0 0.0
      %2210 = vmatpush1.msra.mxu0 0.0
      %2211 = vmatprep.subr.mxu0 0.0
      %2212 = vmatpush1.msra.mxu0 %v2176
      %2213 = vmatprep.subr.mxu0 0.0
      %2214 = vmatpush2.msra.mxu0 0.0
      %2215 = vmatprep.subr.mxu0 0.0
      %2216 = vmatpush2.msra.mxu0 0.0
      %2217 = vmatprep.subr.mxu0 0.0
      %2218 = vmatpush2.msra.mxu0 0.0
      %2219 = vmatprep.subr.mxu0 0.0
      %2220 = vmatpush2.msra.mxu0 0.0
      %2221 = vmatprep.subr.mxu0 0.0
      %2222 = vmatpush2.msra.mxu0 0.0
      %2223 = vmatprep.subr.mxu0 0.0
      %2224 = vmatpush2.msra.mxu0 0.0
      %2225 = vmatprep.subr.mxu0 0.0
      %2226 = vmatpush2.msra.mxu0 0.0
      %2227 = vmatprep.subr.mxu0 0.0
      %2228 = vmatpush2.msra.mxu0 0.0
      %2229 = vmatprep.subr.mxu0 0.0
      %2230 = vmatpush2.msra.mxu0 0.0
      %2231 = vmatprep.subr.mxu0 0.0
      %2232 = vmatpush2.msra.mxu0 0.0
      %2233 = vmatprep.subr.mxu0 0.0
      %2234 = vmatpush2.msra.mxu0 0.0
      %2235 = vmatprep.subr.mxu0 0.0
      %2236 = vmatpush2.msra.mxu0 0.0
      %2237 = vmatprep.subr.mxu0 0.0
      %2238 = vmatpush2.msra.mxu0 0.0
      %2239 = vmatprep.subr.mxu0 0.0
      %2240 = vmatpush2.msra.mxu0 0.0
      %2241 = vmatprep.subr.mxu0 0.0
      %2242 = vmatpush2.msra.mxu0 0.0
      %2243 = vmatprep.subr.mxu0 0.0
      %2244 = vmatpush2.msra.mxu0 0.0
      %2245 = vmatprep.mubr.f32.mxu0 0.0
      %2246 = vmatmul.mubr.f32.gmra.mxu0 %v2179
      %v2247 = vpop.f32.mrf.mxu0
      %v2248 = vadd.f32 0.0, %v2247
      %v2249 = vpop.f32.mrf.mxu0
      %2250 = vdwg.mxu0
      %2251 = vrot.lane.b32.xlu0 %v398, 96
      %v2252 = vpop.permute.xlu0 %2251
      %v2255 = vsel %vm726, %v2097, 0
      %2257 = vmatprep.subr.mxu0 0.0
      %2258 = vmatpush1.msra.mxu0 0.0
      %2259 = vmatprep.subr.mxu0 0.0
      %2260 = vmatpush1.msra.mxu0 0.0
      %2261 = vmatprep.subr.mxu0 0.0
      %2262 = vmatpush1.msra.mxu0 0.0
      %2263 = vmatprep.subr.mxu0 0.0
      %2264 = vmatpush1.msra.mxu0 0.0
      %2265 = vmatprep.subr.mxu0 0.0
      %2266 = vmatpush1.msra.mxu0 0.0
      %2267 = vmatprep.subr.mxu0 0.0
      %2268 = vmatpush1.msra.mxu0 0.0
      %2269 = vmatprep.subr.mxu0 0.0
      %2270 = vmatpush1.msra.mxu0 0.0
      %2271 = vmatprep.subr.mxu0 0.0
      %2272 = vmatpush1.msra.mxu0 0.0
      %2273 = vmatprep.subr.mxu0 0.0
      %2274 = vmatpush1.msra.mxu0 0.0
      %2275 = vmatprep.subr.mxu0 0.0
      %2276 = vmatpush1.msra.mxu0 0.0
      %2277 = vmatprep.subr.mxu0 0.0
      %2278 = vmatpush1.msra.mxu0 0.0
      %2279 = vmatprep.subr.mxu0 0.0
      %2280 = vmatpush1.msra.mxu0 0.0
      %2281 = vmatprep.subr.mxu0 0.0
      %2282 = vmatpush1.msra.mxu0 0.0
      %2283 = vmatprep.subr.mxu0 0.0
      %2284 = vmatpush1.msra.mxu0 0.0
      %2285 = vmatprep.subr.mxu0 0.0
      %2286 = vmatpush1.msra.mxu0 0.0
      %2287 = vmatprep.subr.mxu0 0.0
      %2288 = vmatpush1.msra.mxu0 %v2252
      %2289 = vmatprep.subr.mxu0 0.0
      %2290 = vmatpush2.msra.mxu0 0.0
      %2291 = vmatprep.subr.mxu0 0.0
      %2292 = vmatpush2.msra.mxu0 0.0
      %2293 = vmatprep.subr.mxu0 0.0
      %2294 = vmatpush2.msra.mxu0 0.0
      %2295 = vmatprep.subr.mxu0 0.0
      %2296 = vmatpush2.msra.mxu0 0.0
      %2297 = vmatprep.subr.mxu0 0.0
      %2298 = vmatpush2.msra.mxu0 0.0
      %2299 = vmatprep.subr.mxu0 0.0
      %2300 = vmatpush2.msra.mxu0 0.0
      %2301 = vmatprep.subr.mxu0 0.0
      %2302 = vmatpush2.msra.mxu0 0.0
      %2303 = vmatprep.subr.mxu0 0.0
      %2304 = vmatpush2.msra.mxu0 0.0
      %2305 = vmatprep.subr.mxu0 0.0
      %2306 = vmatpush2.msra.mxu0 0.0
      %2307 = vmatprep.subr.mxu0 0.0
      %2308 = vmatpush2.msra.mxu0 0.0
      %2309 = vmatprep.subr.mxu0 0.0
      %2310 = vmatpush2.msra.mxu0 0.0
      %2311 = vmatprep.subr.mxu0 0.0
      %2312 = vmatpush2.msra.mxu0 0.0
      %2313 = vmatprep.subr.mxu0 0.0
      %2314 = vmatpush2.msra.mxu0 0.0
      %2315 = vmatprep.subr.mxu0 0.0
      %2316 = vmatpush2.msra.mxu0 0.0
      %2317 = vmatprep.subr.mxu0 0.0
      %2318 = vmatpush2.msra.mxu0 0.0
      %2319 = vmatprep.subr.mxu0 0.0
      %2320 = vmatpush2.msra.mxu0 0.0
      %2321 = vmatprep.mubr.f32.mxu0 0.0
      %2322 = vmatmul.mubr.f32.gmra.mxu0 %v2255
      %v2323 = vpop.f32.mrf.mxu0
      %v2324 = vadd.f32 0.0, %v2323
      %v2325 = vpop.f32.mrf.mxu0
      %2326 = vdwg.mxu0
      %2327 = vrot.lane.b32.xlu0 %v404, 96
      %v2328 = vpop.permute.xlu0 %2327
      %v2331 = vsel %vm726, %v2098, 0
      %2333 = vmatprep.subr.mxu0 0.0
      %2334 = vmatpush1.msra.mxu0 0.0
      %2335 = vmatprep.subr.mxu0 0.0
      %2336 = vmatpush1.msra.mxu0 0.0
      %2337 = vmatprep.subr.mxu0 0.0
      %2338 = vmatpush1.msra.mxu0 0.0
      %2339 = vmatprep.subr.mxu0 0.0
      %2340 = vmatpush1.msra.mxu0 0.0
      %2341 = vmatprep.subr.mxu0 0.0
      %2342 = vmatpush1.msra.mxu0 0.0
      %2343 = vmatprep.subr.mxu0 0.0
      %2344 = vmatpush1.msra.mxu0 0.0
      %2345 = vmatprep.subr.mxu0 0.0
      %2346 = vmatpush1.msra.mxu0 0.0
      %2347 = vmatprep.subr.mxu0 0.0
      %2348 = vmatpush1.msra.mxu0 0.0
      %2349 = vmatprep.subr.mxu0 0.0
      %2350 = vmatpush1.msra.mxu0 0.0
      %2351 = vmatprep.subr.mxu0 0.0
      %2352 = vmatpush1.msra.mxu0 0.0
      %2353 = vmatprep.subr.mxu0 0.0
      %2354 = vmatpush1.msra.mxu0 0.0
      %2355 = vmatprep.subr.mxu0 0.0
      %2356 = vmatpush1.msra.mxu0 0.0
      %2357 = vmatprep.subr.mxu0 0.0
      %2358 = vmatpush1.msra.mxu0 0.0
      %2359 = vmatprep.subr.mxu0 0.0
      %2360 = vmatpush1.msra.mxu0 0.0
      %2361 = vmatprep.subr.mxu0 0.0
      %2362 = vmatpush1.msra.mxu0 0.0
      %2363 = vmatprep.subr.mxu0 0.0
      %2364 = vmatpush1.msra.mxu0 %v2328
      %2365 = vmatprep.subr.mxu0 0.0
      %2366 = vmatpush2.msra.mxu0 0.0
      %2367 = vmatprep.subr.mxu0 0.0
      %2368 = vmatpush2.msra.mxu0 0.0
      %2369 = vmatprep.subr.mxu0 0.0
      %2370 = vmatpush2.msra.mxu0 0.0
      %2371 = vmatprep.subr.mxu0 0.0
      %2372 = vmatpush2.msra.mxu0 0.0
      %2373 = vmatprep.subr.mxu0 0.0
      %2374 = vmatpush2.msra.mxu0 0.0
      %2375 = vmatprep.subr.mxu0 0.0
      %2376 = vmatpush2.msra.mxu0 0.0
      %2377 = vmatprep.subr.mxu0 0.0
      %2378 = vmatpush2.msra.mxu0 0.0
      %2379 = vmatprep.subr.mxu0 0.0
      %2380 = vmatpush2.msra.mxu0 0.0
      %2381 = vmatprep.subr.mxu0 0.0
      %2382 = vmatpush2.msra.mxu0 0.0
      %2383 = vmatprep.subr.mxu0 0.0
      %2384 = vmatpush2.msra.mxu0 0.0
      %2385 = vmatprep.subr.mxu0 0.0
      %2386 = vmatpush2.msra.mxu0 0.0
      %2387 = vmatprep.subr.mxu0 0.0
      %2388 = vmatpush2.msra.mxu0 0.0
      %2389 = vmatprep.subr.mxu0 0.0
      %2390 = vmatpush2.msra.mxu0 0.0
      %2391 = vmatprep.subr.mxu0 0.0
      %2392 = vmatpush2.msra.mxu0 0.0
      %2393 = vmatprep.subr.mxu0 0.0
      %2394 = vmatpush2.msra.mxu0 0.0
      %2395 = vmatprep.subr.mxu0 0.0
      %2396 = vmatpush2.msra.mxu0 0.0
      %2397 = vmatprep.mubr.f32.mxu0 0.0
      %2398 = vmatmul.mubr.f32.gmra.mxu0 %v2331
      %v2399 = vpop.f32.mrf.mxu0
      %v2400 = vadd.f32 0.0, %v2399
      %v2401 = vpop.f32.mrf.mxu0
      %2402 = vdwg.mxu0
      %2403 = vrot.lane.b32.xlu0 %v384, 80
      %v2404 = vpop.permute.xlu0 %2403
      %2405 = vrot.lane.b32.xlu0 %v384, 16
      %v2406 = vpop.permute.xlu0 %2405
      %v2407 = vsel %vm409, %v2404, 0
      %v2409 = vsel %vm409, %v2406, 0
      %2411 = vmatprep.subr.mxu0 0.0
      %2412 = vmatpush1.xpose.msra.mxu0 0.0
      %2413 = vmatprep.subr.mxu0 0.0
      %2414 = vmatpush1.xpose.msra.mxu0 0.0
      %2415 = vmatprep.subr.mxu0 0.0
      %2416 = vmatpush1.xpose.msra.mxu0 0.0
      %2417 = vmatprep.subr.mxu0 0.0
      %2418 = vmatpush1.xpose.msra.mxu0 0.0
      %2419 = vmatprep.subr.mxu0 0.0
      %2420 = vmatpush1.xpose.msra.mxu0 0.0
      %2421 = vmatprep.subr.mxu0 0.0
      %2422 = vmatpush1.xpose.msra.mxu0 0.0
      %2423 = vmatprep.subr.mxu0 0.0
      %2424 = vmatpush1.xpose.msra.mxu0 0.0
      %2425 = vmatprep.subr.mxu0 0.0
      %2426 = vmatpush1.xpose.msra.mxu0 0.0
      %2427 = vmatprep.subr.mxu0 0.0
      %2428 = vmatpush1.xpose.msra.mxu0 0.0
      %2429 = vmatprep.subr.mxu0 0.0
      %2430 = vmatpush1.xpose.msra.mxu0 0.0
      %2431 = vmatprep.subr.mxu0 0.0
      %2432 = vmatpush1.xpose.msra.mxu0 0.0
      %2433 = vmatprep.subr.mxu0 0.0
      %2434 = vmatpush1.xpose.msra.mxu0 0.0
      %2435 = vmatprep.subr.mxu0 0.0
      %2436 = vmatpush1.xpose.msra.mxu0 0.0
      %2437 = vmatprep.subr.mxu0 0.0
      %2438 = vmatpush1.xpose.msra.mxu0 0.0
      %2439 = vmatprep.subr.mxu0 0.0
      %2440 = vmatpush1.xpose.msra.mxu0 0.0
      %2441 = vmatprep.subr.mxu0 0.0
      %2442 = vmatpush1.xpose.msra.mxu0 %v2409
      %2443 = vmatprep.subr.mxu0 0.0
      %2444 = vmatpush2.xpose.msra.mxu0 0.0
      %2445 = vmatprep.subr.mxu0 0.0
      %2446 = vmatpush2.xpose.msra.mxu0 0.0
      %2447 = vmatprep.subr.mxu0 0.0
      %2448 = vmatpush2.xpose.msra.mxu0 0.0
      %2449 = vmatprep.subr.mxu0 0.0
      %2450 = vmatpush2.xpose.msra.mxu0 0.0
      %2451 = vmatprep.subr.mxu0 0.0
      %2452 = vmatpush2.xpose.msra.mxu0 0.0
      %2453 = vmatprep.subr.mxu0 0.0
      %2454 = vmatpush2.xpose.msra.mxu0 0.0
      %2455 = vmatprep.subr.mxu0 0.0
      %2456 = vmatpush2.xpose.msra.mxu0 0.0
      %2457 = vmatprep.subr.mxu0 0.0
      %2458 = vmatpush2.xpose.msra.mxu0 0.0
      %2459 = vmatprep.subr.mxu0 0.0
      %2460 = vmatpush2.xpose.msra.mxu0 0.0
      %2461 = vmatprep.subr.mxu0 0.0
      %2462 = vmatpush2.xpose.msra.mxu0 0.0
      %2463 = vmatprep.subr.mxu0 0.0
      %2464 = vmatpush2.xpose.msra.mxu0 0.0
      %2465 = vmatprep.subr.mxu0 0.0
      %2466 = vmatpush2.xpose.msra.mxu0 0.0
      %2467 = vmatprep.subr.mxu0 0.0
      %2468 = vmatpush2.xpose.msra.mxu0 0.0
      %2469 = vmatprep.subr.mxu0 0.0
      %2470 = vmatpush2.xpose.msra.mxu0 0.0
      %2471 = vmatprep.subr.mxu0 0.0
      %2472 = vmatpush2.xpose.msra.mxu0 0.0
      %2473 = vmatprep.subr.mxu0 0.0
      %2474 = vmatpush2.xpose.msra.mxu0 0.0
      %2475 = vmatprep.mubr.f32.mxu0 0.0
      %2476 = vmatmul.mubr.f32.gmra.mxu0 %v2407
      %v2477 = vpop.f32.mrf.mxu0
      %v2478 = vadd.f32 0.0, %v2477
      %v2479 = vpop.f32.mrf.mxu0
      %2480 = vdwg.mxu0
      %2481 = vrot.lane.b32.xlu0 %v390, 80
      %v2482 = vpop.permute.xlu0 %2481
      %2483 = vrot.lane.b32.xlu0 %v390, 16
      %v2484 = vpop.permute.xlu0 %2483
      %v2485 = vsel %vm409, %v2482, 0
      %v2487 = vsel %vm409, %v2484, 0
      %2489 = vmatprep.subr.mxu0 0.0
      %2490 = vmatpush1.xpose.msra.mxu0 0.0
      %2491 = vmatprep.subr.mxu0 0.0
      %2492 = vmatpush1.xpose.msra.mxu0 0.0
      %2493 = vmatprep.subr.mxu0 0.0
      %2494 = vmatpush1.xpose.msra.mxu0 0.0
      %2495 = vmatprep.subr.mxu0 0.0
      %2496 = vmatpush1.xpose.msra.mxu0 0.0
      %2497 = vmatprep.subr.mxu0 0.0
      %2498 = vmatpush1.xpose.msra.mxu0 0.0
      %2499 = vmatprep.subr.mxu0 0.0
      %2500 = vmatpush1.xpose.msra.mxu0 0.0
      %2501 = vmatprep.subr.mxu0 0.0
      %2502 = vmatpush1.xpose.msra.mxu0 0.0
      %2503 = vmatprep.subr.mxu0 0.0
      %2504 = vmatpush1.xpose.msra.mxu0 0.0
      %2505 = vmatprep.subr.mxu0 0.0
      %2506 = vmatpush1.xpose.msra.mxu0 0.0
      %2507 = vmatprep.subr.mxu0 0.0
      %2508 = vmatpush1.xpose.msra.mxu0 0.0
      %2509 = vmatprep.subr.mxu0 0.0
      %2510 = vmatpush1.xpose.msra.mxu0 0.0
      %2511 = vmatprep.subr.mxu0 0.0
      %2512 = vmatpush1.xpose.msra.mxu0 0.0
      %2513 = vmatprep.subr.mxu0 0.0
      %2514 = vmatpush1.xpose.msra.mxu0 0.0
      %2515 = vmatprep.subr.mxu0 0.0
      %2516 = vmatpush1.xpose.msra.mxu0 0.0
      %2517 = vmatprep.subr.mxu0 0.0
      %2518 = vmatpush1.xpose.msra.mxu0 0.0
      %2519 = vmatprep.subr.mxu0 0.0
      %2520 = vmatpush1.xpose.msra.mxu0 %v2487
      %2521 = vmatprep.subr.mxu0 0.0
      %2522 = vmatpush2.xpose.msra.mxu0 0.0
      %2523 = vmatprep.subr.mxu0 0.0
      %2524 = vmatpush2.xpose.msra.mxu0 0.0
      %2525 = vmatprep.subr.mxu0 0.0
      %2526 = vmatpush2.xpose.msra.mxu0 0.0
      %2527 = vmatprep.subr.mxu0 0.0
      %2528 = vmatpush2.xpose.msra.mxu0 0.0
      %2529 = vmatprep.subr.mxu0 0.0
      %2530 = vmatpush2.xpose.msra.mxu0 0.0
      %2531 = vmatprep.subr.mxu0 0.0
      %2532 = vmatpush2.xpose.msra.mxu0 0.0
      %2533 = vmatprep.subr.mxu0 0.0
      %2534 = vmatpush2.xpose.msra.mxu0 0.0
      %2535 = vmatprep.subr.mxu0 0.0
      %2536 = vmatpush2.xpose.msra.mxu0 0.0
      %2537 = vmatprep.subr.mxu0 0.0
      %2538 = vmatpush2.xpose.msra.mxu0 0.0
      %2539 = vmatprep.subr.mxu0 0.0
      %2540 = vmatpush2.xpose.msra.mxu0 0.0
      %2541 = vmatprep.subr.mxu0 0.0
      %2542 = vmatpush2.xpose.msra.mxu0 0.0
      %2543 = vmatprep.subr.mxu0 0.0
      %2544 = vmatpush2.xpose.msra.mxu0 0.0
      %2545 = vmatprep.subr.mxu0 0.0
      %2546 = vmatpush2.xpose.msra.mxu0 0.0
      %2547 = vmatprep.subr.mxu0 0.0
      %2548 = vmatpush2.xpose.msra.mxu0 0.0
      %2549 = vmatprep.subr.mxu0 0.0
      %2550 = vmatpush2.xpose.msra.mxu0 0.0
      %2551 = vmatprep.subr.mxu0 0.0
      %2552 = vmatpush2.xpose.msra.mxu0 0.0
      %2553 = vmatprep.mubr.f32.mxu0 0.0
      %2554 = vmatmul.mubr.f32.gmra.mxu0 %v2485
      %v2555 = vpop.f32.mrf.mxu0
      %v2556 = vadd.f32 0.0, %v2555
      %v2557 = vpop.f32.mrf.mxu0
      %2558 = vdwg.mxu0
      %2559 = vrot.lane.b32.xlu0 %v396, 80
      %v2560 = vpop.permute.xlu0 %2559
      %2561 = vrot.lane.b32.xlu0 %v396, 16
      %v2562 = vpop.permute.xlu0 %2561
      %v2563 = vsel %vm409, %v2560, 0
      %v2565 = vsel %vm409, %v2562, 0
      %2567 = vmatprep.subr.mxu0 0.0
      %2568 = vmatpush1.xpose.msra.mxu0 0.0
      %2569 = vmatprep.subr.mxu0 0.0
      %2570 = vmatpush1.xpose.msra.mxu0 0.0
      %2571 = vmatprep.subr.mxu0 0.0
      %2572 = vmatpush1.xpose.msra.mxu0 0.0
      %2573 = vmatprep.subr.mxu0 0.0
      %2574 = vmatpush1.xpose.msra.mxu0 0.0
      %2575 = vmatprep.subr.mxu0 0.0
      %2576 = vmatpush1.xpose.msra.mxu0 0.0
      %2577 = vmatprep.subr.mxu0 0.0
      %2578 = vmatpush1.xpose.msra.mxu0 0.0
      %2579 = vmatprep.subr.mxu0 0.0
      %2580 = vmatpush1.xpose.msra.mxu0 0.0
      %2581 = vmatprep.subr.mxu0 0.0
      %2582 = vmatpush1.xpose.msra.mxu0 0.0
      %2583 = vmatprep.subr.mxu0 0.0
      %2584 = vmatpush1.xpose.msra.mxu0 0.0
      %2585 = vmatprep.subr.mxu0 0.0
      %2586 = vmatpush1.xpose.msra.mxu0 0.0
      %2587 = vmatprep.subr.mxu0 0.0
      %2588 = vmatpush1.xpose.msra.mxu0 0.0
      %2589 = vmatprep.subr.mxu0 0.0
      %2590 = vmatpush1.xpose.msra.mxu0 0.0
      %2591 = vmatprep.subr.mxu0 0.0
      %2592 = vmatpush1.xpose.msra.mxu0 0.0
      %2593 = vmatprep.subr.mxu0 0.0
      %2594 = vmatpush1.xpose.msra.mxu0 0.0
      %2595 = vmatprep.subr.mxu0 0.0
      %2596 = vmatpush1.xpose.msra.mxu0 0.0
      %2597 = vmatprep.subr.mxu0 0.0
      %2598 = vmatpush1.xpose.msra.mxu0 %v2565
      %2599 = vmatprep.subr.mxu0 0.0
      %2600 = vmatpush2.xpose.msra.mxu0 0.0
      %2601 = vmatprep.subr.mxu0 0.0
      %2602 = vmatpush2.xpose.msra.mxu0 0.0
      %2603 = vmatprep.subr.mxu0 0.0
      %2604 = vmatpush2.xpose.msra.mxu0 0.0
      %2605 = vmatprep.subr.mxu0 0.0
      %2606 = vmatpush2.xpose.msra.mxu0 0.0
      %2607 = vmatprep.subr.mxu0 0.0
      %2608 = vmatpush2.xpose.msra.mxu0 0.0
      %2609 = vmatprep.subr.mxu0 0.0
      %2610 = vmatpush2.xpose.msra.mxu0 0.0
      %2611 = vmatprep.subr.mxu0 0.0
      %2612 = vmatpush2.xpose.msra.mxu0 0.0
      %2613 = vmatprep.subr.mxu0 0.0
      %2614 = vmatpush2.xpose.msra.mxu0 0.0
      %2615 = vmatprep.subr.mxu0 0.0
      %2616 = vmatpush2.xpose.msra.mxu0 0.0
      %2617 = vmatprep.subr.mxu0 0.0
      %2618 = vmatpush2.xpose.msra.mxu0 0.0
      %2619 = vmatprep.subr.mxu0 0.0
      %2620 = vmatpush2.xpose.msra.mxu0 0.0
      %2621 = vmatprep.subr.mxu0 0.0
      %2622 = vmatpush2.xpose.msra.mxu0 0.0
      %2623 = vmatprep.subr.mxu0 0.0
      %2624 = vmatpush2.xpose.msra.mxu0 0.0
      %2625 = vmatprep.subr.mxu0 0.0
      %2626 = vmatpush2.xpose.msra.mxu0 0.0
      %2627 = vmatprep.subr.mxu0 0.0
      %2628 = vmatpush2.xpose.msra.mxu0 0.0
      %2629 = vmatprep.subr.mxu0 0.0
      %2630 = vmatpush2.xpose.msra.mxu0 0.0
      %2631 = vmatprep.mubr.f32.mxu0 0.0
      %2632 = vmatmul.mubr.f32.gmra.mxu0 %v2563
      %v2633 = vpop.f32.mrf.mxu0
      %v2634 = vadd.f32 0.0, %v2633
      %v2635 = vpop.f32.mrf.mxu0
      %2636 = vdwg.mxu0
      %2637 = vrot.lane.b32.xlu0 %v402, 80
      %v2638 = vpop.permute.xlu0 %2637
      %2639 = vrot.lane.b32.xlu0 %v402, 16
      %v2640 = vpop.permute.xlu0 %2639
      %v2641 = vsel %vm409, %v2638, 0
      %v2643 = vsel %vm409, %v2640, 0
      %2645 = vmatprep.subr.mxu0 0.0
      %2646 = vmatpush1.xpose.msra.mxu0 0.0
      %2647 = vmatprep.subr.mxu0 0.0
      %2648 = vmatpush1.xpose.msra.mxu0 0.0
      %2649 = vmatprep.subr.mxu0 0.0
      %2650 = vmatpush1.xpose.msra.mxu0 0.0
      %2651 = vmatprep.subr.mxu0 0.0
      %2652 = vmatpush1.xpose.msra.mxu0 0.0
      %2653 = vmatprep.subr.mxu0 0.0
      %2654 = vmatpush1.xpose.msra.mxu0 0.0
      %2655 = vmatprep.subr.mxu0 0.0
      %2656 = vmatpush1.xpose.msra.mxu0 0.0
      %2657 = vmatprep.subr.mxu0 0.0
      %2658 = vmatpush1.xpose.msra.mxu0 0.0
      %2659 = vmatprep.subr.mxu0 0.0
      %2660 = vmatpush1.xpose.msra.mxu0 0.0
      %2661 = vmatprep.subr.mxu0 0.0
      %2662 = vmatpush1.xpose.msra.mxu0 0.0
      %2663 = vmatprep.subr.mxu0 0.0
      %2664 = vmatpush1.xpose.msra.mxu0 0.0
      %2665 = vmatprep.subr.mxu0 0.0
      %2666 = vmatpush1.xpose.msra.mxu0 0.0
      %2667 = vmatprep.subr.mxu0 0.0
      %2668 = vmatpush1.xpose.msra.mxu0 0.0
      %2669 = vmatprep.subr.mxu0 0.0
      %2670 = vmatpush1.xpose.msra.mxu0 0.0
      %2671 = vmatprep.subr.mxu0 0.0
      %2672 = vmatpush1.xpose.msra.mxu0 0.0
      %2673 = vmatprep.subr.mxu0 0.0
      %2674 = vmatpush1.xpose.msra.mxu0 0.0
      %2675 = vmatprep.subr.mxu0 0.0
      %2676 = vmatpush1.xpose.msra.mxu0 %v2643
      %2677 = vmatprep.subr.mxu0 0.0
      %2678 = vmatpush2.xpose.msra.mxu0 0.0
      %2679 = vmatprep.subr.mxu0 0.0
      %2680 = vmatpush2.xpose.msra.mxu0 0.0
      %2681 = vmatprep.subr.mxu0 0.0
      %2682 = vmatpush2.xpose.msra.mxu0 0.0
      %2683 = vmatprep.subr.mxu0 0.0
      %2684 = vmatpush2.xpose.msra.mxu0 0.0
      %2685 = vmatprep.subr.mxu0 0.0
      %2686 = vmatpush2.xpose.msra.mxu0 0.0
      %2687 = vmatprep.subr.mxu0 0.0
      %2688 = vmatpush2.xpose.msra.mxu0 0.0
      %2689 = vmatprep.subr.mxu0 0.0
      %2690 = vmatpush2.xpose.msra.mxu0 0.0
      %2691 = vmatprep.subr.mxu0 0.0
      %2692 = vmatpush2.xpose.msra.mxu0 0.0
      %2693 = vmatprep.subr.mxu0 0.0
      %2694 = vmatpush2.xpose.msra.mxu0 0.0
      %2695 = vmatprep.subr.mxu0 0.0
      %2696 = vmatpush2.xpose.msra.mxu0 0.0
      %2697 = vmatprep.subr.mxu0 0.0
      %2698 = vmatpush2.xpose.msra.mxu0 0.0
      %2699 = vmatprep.subr.mxu0 0.0
      %2700 = vmatpush2.xpose.msra.mxu0 0.0
      %2701 = vmatprep.subr.mxu0 0.0
      %2702 = vmatpush2.xpose.msra.mxu0 0.0
      %2703 = vmatprep.subr.mxu0 0.0
      %2704 = vmatpush2.xpose.msra.mxu0 0.0
      %2705 = vmatprep.subr.mxu0 0.0
      %2706 = vmatpush2.xpose.msra.mxu0 0.0
      %2707 = vmatprep.subr.mxu0 0.0
      %2708 = vmatpush2.xpose.msra.mxu0 0.0
      %2709 = vmatprep.mubr.f32.mxu0 0.0
      %2710 = vmatmul.mubr.f32.gmra.mxu0 %v2641
      %v2711 = vpop.f32.mrf.mxu0
      %v2712 = vadd.f32 0.0, %v2711
      %v2713 = vpop.f32.mrf.mxu0
      %2714 = vdwg.mxu0
      %v2715 = vmul.f32 %v2478, 0.25
      %v2716 = vmul.f32 %v2556, 0.25
      %v2717 = vmul.f32 %v2634, 0.25
      %v2718 = vmul.f32 %v2712, 0.25
      %v2719 = vsel %vm721, %v2715, -1e+30
      %v2720 = vsel %vm721, %v2716, -1e+30
      %v2721 = vsel %vm721, %v2717, -1e+30
      %v2722 = vsel %vm721, %v2718, -1e+30
      %v2723 = vsel %vm726, %v2719, -inf
      %2724 = vmax.xlane.f32.xlu0 %v2723
      %v2725 = vpop.xlane.xlu0 %2724
      %v2726 = vsel %vm726, %v2720, -inf
      %2727 = vmax.xlane.f32.xlu0 %v2726
      %v2728 = vpop.xlane.xlu0 %2727
      %v2729 = vsel %vm726, %v2721, -inf
      %2730 = vmax.xlane.f32.xlu0 %v2729
      %v2731 = vpop.xlane.xlu0 %2730
      %v2732 = vsel %vm726, %v2722, -inf
      %2733 = vmax.xlane.f32.xlu0 %v2732
      %v2734 = vpop.xlane.xlu0 %2733
      %v2735 = vsub.f32 %v2719, %v2725
      %v2736 = vsub.f32 %v2720, %v2728
      %v2737 = vsub.f32 %v2721, %v2731
      %v2738 = vsub.f32 %v2722, %v2734
      %v2739 = vmul.f32 %v2735, 1.442695
      %v2740 = vpow.pop %v2739
      %v2741 = vmul.f32 %v2736, 1.442695
      %v2742 = vpow.pop %v2741
      %v2743 = vmul.f32 %v2737, 1.442695
      %v2744 = vpow.pop %v2743
      %v2745 = vmul.f32 %v2738, 1.442695
      %v2746 = vpow.pop %v2745
      %v2747 = vsel %vm726, %v2740, 0.0
      %2748 = vadd.xlane.f32.xlu0 %v2747
      %v2749 = vpop.xlane.xlu0 %2748
      %v2750 = vsel %vm726, %v2742, 0.0
      %2751 = vadd.xlane.f32.xlu0 %v2750
      %v2752 = vpop.xlane.xlu0 %2751
      %v2753 = vsel %vm726, %v2744, 0.0
      %2754 = vadd.xlane.f32.xlu0 %v2753
      %v2755 = vpop.xlane.xlu0 %2754
      %v2756 = vsel %vm726, %v2746, 0.0
      %2757 = vadd.xlane.f32.xlu0 %v2756
      %v2758 = vpop.xlane.xlu0 %2757
      %v2759 = vrcp.pop %v2749
      %v2760 = vrcp.pop %v2752
      %v2761 = vrcp.pop %v2755
      %v2762 = vrcp.pop %v2758
      %v2763 = vmul.f32 %v2740, %v2759
      %v2764 = vmul.f32 %v2742, %v2760
      %v2765 = vmul.f32 %v2744, %v2761
      %v2766 = vmul.f32 %v2746, %v2762
      %2767 = vrot.lane.b32.xlu0 %v386, 80
      %v2768 = vpop.permute.xlu0 %2767
      %v2771 = vsel %vm726, %v2763, 0
      %2773 = vmatprep.subr.mxu0 0.0
      %2774 = vmatpush1.msra.mxu0 0.0
      %2775 = vmatprep.subr.mxu0 0.0
      %2776 = vmatpush1.msra.mxu0 0.0
      %2777 = vmatprep.subr.mxu0 0.0
      %2778 = vmatpush1.msra.mxu0 0.0
      %2779 = vmatprep.subr.mxu0 0.0
      %2780 = vmatpush1.msra.mxu0 0.0
      %2781 = vmatprep.subr.mxu0 0.0
      %2782 = vmatpush1.msra.mxu0 0.0
      %2783 = vmatprep.subr.mxu0 0.0
      %2784 = vmatpush1.msra.mxu0 0.0
      %2785 = vmatprep.subr.mxu0 0.0
      %2786 = vmatpush1.msra.mxu0 0.0
      %2787 = vmatprep.subr.mxu0 0.0
      %2788 = vmatpush1.msra.mxu0 0.0
      %2789 = vmatprep.subr.mxu0 0.0
      %2790 = vmatpush1.msra.mxu0 0.0
      %2791 = vmatprep.subr.mxu0 0.0
      %2792 = vmatpush1.msra.mxu0 0.0
      %2793 = vmatprep.subr.mxu0 0.0
      %2794 = vmatpush1.msra.mxu0 0.0
      %2795 = vmatprep.subr.mxu0 0.0
      %2796 = vmatpush1.msra.mxu0 0.0
      %2797 = vmatprep.subr.mxu0 0.0
      %2798 = vmatpush1.msra.mxu0 0.0
      %2799 = vmatprep.subr.mxu0 0.0
      %2800 = vmatpush1.msra.mxu0 0.0
      %2801 = vmatprep.subr.mxu0 0.0
      %2802 = vmatpush1.msra.mxu0 0.0
      %2803 = vmatprep.subr.mxu0 0.0
      %2804 = vmatpush1.msra.mxu0 %v2768
      %2805 = vmatprep.subr.mxu0 0.0
      %2806 = vmatpush2.msra.mxu0 0.0
      %2807 = vmatprep.subr.mxu0 0.0
      %2808 = vmatpush2.msra.mxu0 0.0
      %2809 = vmatprep.subr.mxu0 0.0
      %2810 = vmatpush2.msra.mxu0 0.0
      %2811 = vmatprep.subr.mxu0 0.0
      %2812 = vmatpush2.msra.mxu0 0.0
      %2813 = vmatprep.subr.mxu0 0.0
      %2814 = vmatpush2.msra.mxu0 0.0
      %2815 = vmatprep.subr.mxu0 0.0
      %2816 = vmatpush2.msra.mxu0 0.0
      %2817 = vmatprep.subr.mxu0 0.0
      %2818 = vmatpush2.msra.mxu0 0.0
      %2819 = vmatprep.subr.mxu0 0.0
      %2820 = vmatpush2.msra.mxu0 0.0
      %2821 = vmatprep.subr.mxu0 0.0
      %2822 = vmatpush2.msra.mxu0 0.0
      %2823 = vmatprep.subr.mxu0 0.0
      %2824 = vmatpush2.msra.mxu0 0.0
      %2825 = vmatprep.subr.mxu0 0.0
      %2826 = vmatpush2.msra.mxu0 0.0
      %2827 = vmatprep.subr.mxu0 0.0
      %2828 = vmatpush2.msra.mxu0 0.0
      %2829 = vmatprep.subr.mxu0 0.0
      %2830 = vmatpush2.msra.mxu0 0.0
      %2831 = vmatprep.subr.mxu0 0.0
      %2832 = vmatpush2.msra.mxu0 0.0
      %2833 = vmatprep.subr.mxu0 0.0
      %2834 = vmatpush2.msra.mxu0 0.0
      %2835 = vmatprep.subr.mxu0 0.0
      %2836 = vmatpush2.msra.mxu0 0.0
      %2837 = vmatprep.mubr.f32.mxu0 0.0
      %2838 = vmatmul.mubr.f32.gmra.mxu0 %v2771
      %v2839 = vpop.f32.mrf.mxu0
      %v2840 = vadd.f32 0.0, %v2839
      %v2841 = vpop.f32.mrf.mxu0
      %2842 = vdwg.mxu0
      %2843 = vrot.lane.b32.xlu0 %v392, 80
      %v2844 = vpop.permute.xlu0 %2843
      %v2847 = vsel %vm726, %v2764, 0
      %2849 = vmatprep.subr.mxu0 0.0
      %2850 = vmatpush1.msra.mxu0 0.0
      %2851 = vmatprep.subr.mxu0 0.0
      %2852 = vmatpush1.msra.mxu0 0.0
      %2853 = vmatprep.subr.mxu0 0.0
      %2854 = vmatpush1.msra.mxu0 0.0
      %2855 = vmatprep.subr.mxu0 0.0
      %2856 = vmatpush1.msra.mxu0 0.0
      %2857 = vmatprep.subr.mxu0 0.0
      %2858 = vmatpush1.msra.mxu0 0.0
      %2859 = vmatprep.subr.mxu0 0.0
      %2860 = vmatpush1.msra.mxu0 0.0
      %2861 = vmatprep.subr.mxu0 0.0
      %2862 = vmatpush1.msra.mxu0 0.0
      %2863 = vmatprep.subr.mxu0 0.0
      %2864 = vmatpush1.msra.mxu0 0.0
      %2865 = vmatprep.subr.mxu0 0.0
      %2866 = vmatpush1.msra.mxu0 0.0
      %2867 = vmatprep.subr.mxu0 0.0
      %2868 = vmatpush1.msra.mxu0 0.0
      %2869 = vmatprep.subr.mxu0 0.0
      %2870 = vmatpush1.msra.mxu0 0.0
      %2871 = vmatprep.subr.mxu0 0.0
      %2872 = vmatpush1.msra.mxu0 0.0
      %2873 = vmatprep.subr.mxu0 0.0
      %2874 = vmatpush1.msra.mxu0 0.0
      %2875 = vmatprep.subr.mxu0 0.0
      %2876 = vmatpush1.msra.mxu0 0.0
      %2877 = vmatprep.subr.mxu0 0.0
      %2878 = vmatpush1.msra.mxu0 0.0
      %2879 = vmatprep.subr.mxu0 0.0
      %2880 = vmatpush1.msra.mxu0 %v2844
      %2881 = vmatprep.subr.mxu0 0.0
      %2882 = vmatpush2.msra.mxu0 0.0
      %2883 = vmatprep.subr.mxu0 0.0
      %2884 = vmatpush2.msra.mxu0 0.0
      %2885 = vmatprep.subr.mxu0 0.0
      %2886 = vmatpush2.msra.mxu0 0.0
      %2887 = vmatprep.subr.mxu0 0.0
      %2888 = vmatpush2.msra.mxu0 0.0
      %2889 = vmatprep.subr.mxu0 0.0
      %2890 = vmatpush2.msra.mxu0 0.0
      %2891 = vmatprep.subr.mxu0 0.0
      %2892 = vmatpush2.msra.mxu0 0.0
      %2893 = vmatprep.subr.mxu0 0.0
      %2894 = vmatpush2.msra.mxu0 0.0
      %2895 = vmatprep.subr.mxu0 0.0
      %2896 = vmatpush2.msra.mxu0 0.0
      %2897 = vmatprep.subr.mxu0 0.0
      %2898 = vmatpush2.msra.mxu0 0.0
      %2899 = vmatprep.subr.mxu0 0.0
      %2900 = vmatpush2.msra.mxu0 0.0
      %2901 = vmatprep.subr.mxu0 0.0
      %2902 = vmatpush2.msra.mxu0 0.0
      %2903 = vmatprep.subr.mxu0 0.0
      %2904 = vmatpush2.msra.mxu0 0.0
      %2905 = vmatprep.subr.mxu0 0.0
      %2906 = vmatpush2.msra.mxu0 0.0
      %2907 = vmatprep.subr.mxu0 0.0
      %2908 = vmatpush2.msra.mxu0 0.0
      %2909 = vmatprep.subr.mxu0 0.0
      %2910 = vmatpush2.msra.mxu0 0.0
      %2911 = vmatprep.subr.mxu0 0.0
      %2912 = vmatpush2.msra.mxu0 0.0
      %2913 = vmatprep.mubr.f32.mxu0 0.0
      %2914 = vmatmul.mubr.f32.gmra.mxu0 %v2847
      %v2915 = vpop.f32.mrf.mxu0
      %v2916 = vadd.f32 0.0, %v2915
      %v2917 = vpop.f32.mrf.mxu0
      %2918 = vdwg.mxu0
      %2919 = vrot.lane.b32.xlu0 %v398, 80
      %v2920 = vpop.permute.xlu0 %2919
      %v2923 = vsel %vm726, %v2765, 0
      %2925 = vmatprep.subr.mxu0 0.0
      %2926 = vmatpush1.msra.mxu0 0.0
      %2927 = vmatprep.subr.mxu0 0.0
      %2928 = vmatpush1.msra.mxu0 0.0
      %2929 = vmatprep.subr.mxu0 0.0
      %2930 = vmatpush1.msra.mxu0 0.0
      %2931 = vmatprep.subr.mxu0 0.0
      %2932 = vmatpush1.msra.mxu0 0.0
      %2933 = vmatprep.subr.mxu0 0.0
      %2934 = vmatpush1.msra.mxu0 0.0
      %2935 = vmatprep.subr.mxu0 0.0
      %2936 = vmatpush1.msra.mxu0 0.0
      %2937 = vmatprep.subr.mxu0 0.0
      %2938 = vmatpush1.msra.mxu0 0.0
      %2939 = vmatprep.subr.mxu0 0.0
      %2940 = vmatpush1.msra.mxu0 0.0
      %2941 = vmatprep.subr.mxu0 0.0
      %2942 = vmatpush1.msra.mxu0 0.0
      %2943 = vmatprep.subr.mxu0 0.0
      %2944 = vmatpush1.msra.mxu0 0.0
      %2945 = vmatprep.subr.mxu0 0.0
      %2946 = vmatpush1.msra.mxu0 0.0
      %2947 = vmatprep.subr.mxu0 0.0
      %2948 = vmatpush1.msra.mxu0 0.0
      %2949 = vmatprep.subr.mxu0 0.0
      %2950 = vmatpush1.msra.mxu0 0.0
      %2951 = vmatprep.subr.mxu0 0.0
      %2952 = vmatpush1.msra.mxu0 0.0
      %2953 = vmatprep.subr.mxu0 0.0
      %2954 = vmatpush1.msra.mxu0 0.0
      %2955 = vmatprep.subr.mxu0 0.0
      %2956 = vmatpush1.msra.mxu0 %v2920
      %2957 = vmatprep.subr.mxu0 0.0
      %2958 = vmatpush2.msra.mxu0 0.0
      %2959 = vmatprep.subr.mxu0 0.0
      %2960 = vmatpush2.msra.mxu0 0.0
      %2961 = vmatprep.subr.mxu0 0.0
      %2962 = vmatpush2.msra.mxu0 0.0
      %2963 = vmatprep.subr.mxu0 0.0
      %2964 = vmatpush2.msra.mxu0 0.0
      %2965 = vmatprep.subr.mxu0 0.0
      %2966 = vmatpush2.msra.mxu0 0.0
      %2967 = vmatprep.subr.mxu0 0.0
      %2968 = vmatpush2.msra.mxu0 0.0
      %2969 = vmatprep.subr.mxu0 0.0
      %2970 = vmatpush2.msra.mxu0 0.0
      %2971 = vmatprep.subr.mxu0 0.0
      %2972 = vmatpush2.msra.mxu0 0.0
      %2973 = vmatprep.subr.mxu0 0.0
      %2974 = vmatpush2.msra.mxu0 0.0
      %2975 = vmatprep.subr.mxu0 0.0
      %2976 = vmatpush2.msra.mxu0 0.0
      %2977 = vmatprep.subr.mxu0 0.0
      %2978 = vmatpush2.msra.mxu0 0.0
      %2979 = vmatprep.subr.mxu0 0.0
      %2980 = vmatpush2.msra.mxu0 0.0
      %2981 = vmatprep.subr.mxu0 0.0
      %2982 = vmatpush2.msra.mxu0 0.0
      %2983 = vmatprep.subr.mxu0 0.0
      %2984 = vmatpush2.msra.mxu0 0.0
      %2985 = vmatprep.subr.mxu0 0.0
      %2986 = vmatpush2.msra.mxu0 0.0
      %2987 = vmatprep.subr.mxu0 0.0
      %2988 = vmatpush2.msra.mxu0 0.0
      %2989 = vmatprep.mubr.f32.mxu0 0.0
      %2990 = vmatmul.mubr.f32.gmra.mxu0 %v2923
      %v2991 = vpop.f32.mrf.mxu0
      %v2992 = vadd.f32 0.0, %v2991
      %v2993 = vpop.f32.mrf.mxu0
      %2994 = vdwg.mxu0
      %2995 = vrot.lane.b32.xlu0 %v404, 80
      %v2996 = vpop.permute.xlu0 %2995
      %v2999 = vsel %vm726, %v2766, 0
      %3001 = vmatprep.subr.mxu0 0.0
      %3002 = vmatpush1.msra.mxu0 0.0
      %3003 = vmatprep.subr.mxu0 0.0
      %3004 = vmatpush1.msra.mxu0 0.0
      %3005 = vmatprep.subr.mxu0 0.0
      %3006 = vmatpush1.msra.mxu0 0.0
      %3007 = vmatprep.subr.mxu0 0.0
      %3008 = vmatpush1.msra.mxu0 0.0
      %3009 = vmatprep.subr.mxu0 0.0
      %3010 = vmatpush1.msra.mxu0 0.0
      %3011 = vmatprep.subr.mxu0 0.0
      %3012 = vmatpush1.msra.mxu0 0.0
      %3013 = vmatprep.subr.mxu0 0.0
      %3014 = vmatpush1.msra.mxu0 0.0
      %3015 = vmatprep.subr.mxu0 0.0
      %3016 = vmatpush1.msra.mxu0 0.0
      %3017 = vmatprep.subr.mxu0 0.0
      %3018 = vmatpush1.msra.mxu0 0.0
      %3019 = vmatprep.subr.mxu0 0.0
      %3020 = vmatpush1.msra.mxu0 0.0
      %3021 = vmatprep.subr.mxu0 0.0
      %3022 = vmatpush1.msra.mxu0 0.0
      %3023 = vmatprep.subr.mxu0 0.0
      %3024 = vmatpush1.msra.mxu0 0.0
      %3025 = vmatprep.subr.mxu0 0.0
      %3026 = vmatpush1.msra.mxu0 0.0
      %3027 = vmatprep.subr.mxu0 0.0
      %3028 = vmatpush1.msra.mxu0 0.0
      %3029 = vmatprep.subr.mxu0 0.0
      %3030 = vmatpush1.msra.mxu0 0.0
      %3031 = vmatprep.subr.mxu0 0.0
      %3032 = vmatpush1.msra.mxu0 %v2996
      %3033 = vmatprep.subr.mxu0 0.0
      %3034 = vmatpush2.msra.mxu0 0.0
      %3035 = vmatprep.subr.mxu0 0.0
      %3036 = vmatpush2.msra.mxu0 0.0
      %3037 = vmatprep.subr.mxu0 0.0
      %3038 = vmatpush2.msra.mxu0 0.0
      %3039 = vmatprep.subr.mxu0 0.0
      %3040 = vmatpush2.msra.mxu0 0.0
      %3041 = vmatprep.subr.mxu0 0.0
      %3042 = vmatpush2.msra.mxu0 0.0
      %3043 = vmatprep.subr.mxu0 0.0
      %3044 = vmatpush2.msra.mxu0 0.0
      %3045 = vmatprep.subr.mxu0 0.0
      %3046 = vmatpush2.msra.mxu0 0.0
      %3047 = vmatprep.subr.mxu0 0.0
      %3048 = vmatpush2.msra.mxu0 0.0
      %3049 = vmatprep.subr.mxu0 0.0
      %3050 = vmatpush2.msra.mxu0 0.0
      %3051 = vmatprep.subr.mxu0 0.0
      %3052 = vmatpush2.msra.mxu0 0.0
      %3053 = vmatprep.subr.mxu0 0.0
      %3054 = vmatpush2.msra.mxu0 0.0
      %3055 = vmatprep.subr.mxu0 0.0
      %3056 = vmatpush2.msra.mxu0 0.0
      %3057 = vmatprep.subr.mxu0 0.0
      %3058 = vmatpush2.msra.mxu0 0.0
      %3059 = vmatprep.subr.mxu0 0.0
      %3060 = vmatpush2.msra.mxu0 0.0
      %3061 = vmatprep.subr.mxu0 0.0
      %3062 = vmatpush2.msra.mxu0 0.0
      %3063 = vmatprep.subr.mxu0 0.0
      %3064 = vmatpush2.msra.mxu0 0.0
      %3065 = vmatprep.mubr.f32.mxu0 0.0
      %3066 = vmatmul.mubr.f32.gmra.mxu0 %v2999
      %v3067 = vpop.f32.mrf.mxu0
      %v3068 = vadd.f32 0.0, %v3067
      %v3069 = vpop.f32.mrf.mxu0
      %3070 = vdwg.mxu0
      %3075 = vrot.lane.b32.xlu0 %v1501, 16
      %v3076 = vpop.permute.xlu0 %3075
      %3077 = vrot.lane.b32.xlu0 %v1578, 16
      %v3078 = vpop.permute.xlu0 %3077
      %3079 = vrot.lane.b32.xlu0 %v1655, 16
      %v3080 = vpop.permute.xlu0 %3079
      %3081 = vrot.lane.b32.xlu0 %v1732, 16
      %v3082 = vpop.permute.xlu0 %3081
      %3091 = vrot.lane.b32.xlu0 %v2172, 32
      %v3092 = vpop.permute.xlu0 %3091
      %3093 = vrot.lane.b32.xlu0 %v2248, 32
      %v3094 = vpop.permute.xlu0 %3093
      %3095 = vrot.lane.b32.xlu0 %v2324, 32
      %v3096 = vpop.permute.xlu0 %3095
      %3097 = vrot.lane.b32.xlu0 %v2400, 32
      %v3098 = vpop.permute.xlu0 %3097
      %3107 = vrot.lane.b32.xlu0 %v2840, 48
      %v3108 = vpop.permute.xlu0 %3107
      %3109 = vrot.lane.b32.xlu0 %v2916, 48
      %v3110 = vpop.permute.xlu0 %3109
      %3111 = vrot.lane.b32.xlu0 %v2992, 48
      %v3112 = vpop.permute.xlu0 %3111
      %3113 = vrot.lane.b32.xlu0 %v3068, 48
      %v3114 = vpop.permute.xlu0 %3113
      %v3119 = vsel %vm409, %v841, %v3076
      %v3120 = vsel %vm409, %v914, %v3078
      %v3121 = vsel %vm409, %v987, %v3080
      %v3122 = vsel %vm409, %v1060, %v3082
      %vm3123 = vcmask 261120
      %v3124 = vsel %vm3123, %v3119, %v3092
      %v3125 = vsel %vm3123, %v3120, %v3094
      %v3126 = vsel %vm3123, %v3121, %v3096
      %v3127 = vsel %vm3123, %v3122, %v3098
      %vm3128 = vcmask 392192
      %v3129 = vsel %vm3128, %v3124, %v3108
      %v3130 = vsel %vm3128, %v3125, %v3110
      %v3131 = vsel %vm3128, %v3126, %v3112
      %v3132 = vsel %vm3128, %v3127, %v3114
      %v3133 = vld [vmem:[%s3] sm:$0xff]
      %v3134 = vld [vmem:[%s3 + $0x8] sm:$0xff]
      %v3135 = vld [vmem:[%s3 + $0x10] sm:$0xff]
      %v3136 = vld [vmem:[%s3 + $0x18] sm:$0xff]
      %v3137 = vld [vmem:[%s3 + $0x20] sm:$0xff]
      %v3138 = vld [vmem:[%s3 + $0x28] sm:$0xff]
      %v3139 = vld [vmem:[%s3 + $0x30] sm:$0xff]
      %v3140 = vld [vmem:[%s3 + $0x38] sm:$0xff]
      %v3141 = vld [vmem:[%s4] sm:$0x1]
      %v3143 = vlaneseq
      %v3144 = vshrl.u32 %v3143, 7
      %v3145 = vsub.s32 0, %v3144
      %v3146 = vrot.slane %v3141, %v3145
      %v3149 = vsel %vm304, %v3129, 0
      %v3152 = vsel %vm304, %v3130, 0
      %v3155 = vsel %vm304, %v3131, 0
      %v3158 = vsel %vm304, %v3132, 0
      %3160 = vmatprep.subr.mxu0 0.0
      %3161 = vmatpush1.msra.mxu0 0.0
      %3162 = vmatprep.subr.mxu0 0.0
      %3163 = vmatpush1.msra.mxu0 0.0
      %3164 = vmatprep.subr.mxu0 0.0
      %3165 = vmatpush1.msra.mxu0 0.0
      %3166 = vmatprep.subr.mxu0 0.0
      %3167 = vmatpush1.msra.mxu0 0.0
      %3168 = vmatprep.subr.mxu0 0.0
      %3169 = vmatpush1.msra.mxu0 0.0
      %3170 = vmatprep.subr.mxu0 0.0
      %3171 = vmatpush1.msra.mxu0 0.0
      %3172 = vmatprep.subr.mxu0 0.0
      %3173 = vmatpush1.msra.mxu0 0.0
      %3174 = vmatprep.subr.mxu0 0.0
      %3175 = vmatpush1.msra.mxu0 0.0
      %3176 = vmatprep.subr.mxu0 0.0
      %3177 = vmatpush1.msra.mxu0 %v3140
      %3178 = vmatprep.subr.mxu0 0.0
      %3179 = vmatpush1.msra.mxu0 %v3139
      %3180 = vmatprep.subr.mxu0 0.0
      %3181 = vmatpush1.msra.mxu0 %v3138
      %3182 = vmatprep.subr.mxu0 0.0
      %3183 = vmatpush1.msra.mxu0 %v3137
      %3184 = vmatprep.subr.mxu0 0.0
      %3185 = vmatpush1.msra.mxu0 %v3136
      %3186 = vmatprep.subr.mxu0 0.0
      %3187 = vmatpush1.msra.mxu0 %v3135
      %3188 = vmatprep.subr.mxu0 0.0
      %3189 = vmatpush1.msra.mxu0 %v3134
      %3190 = vmatprep.subr.mxu0 0.0
      %3191 = vmatpush1.msra.mxu0 %v3133
      %3192 = vmatprep.subr.mxu0 0.0
      %3193 = vmatpush2.msra.mxu0 0.0
      %3194 = vmatprep.subr.mxu0 0.0
      %3195 = vmatpush2.msra.mxu0 0.0
      %3196 = vmatprep.subr.mxu0 0.0
      %3197 = vmatpush2.msra.mxu0 0.0
      %3198 = vmatprep.subr.mxu0 0.0
      %3199 = vmatpush2.msra.mxu0 0.0
      %3200 = vmatprep.subr.mxu0 0.0
      %3201 = vmatpush2.msra.mxu0 0.0
      %3202 = vmatprep.subr.mxu0 0.0
      %3203 = vmatpush2.msra.mxu0 0.0
      %3204 = vmatprep.subr.mxu0 0.0
      %3205 = vmatpush2.msra.mxu0 0.0
      %3206 = vmatprep.subr.mxu0 0.0
      %3207 = vmatpush2.msra.mxu0 0.0
      %3208 = vmatprep.subr.mxu0 0.0
      %3209 = vmatpush2.msra.mxu0 0.0
      %3210 = vmatprep.subr.mxu0 0.0
      %3211 = vmatpush2.msra.mxu0 0.0
      %3212 = vmatprep.subr.mxu0 0.0
      %3213 = vmatpush2.msra.mxu0 0.0
      %3214 = vmatprep.subr.mxu0 0.0
      %3215 = vmatpush2.msra.mxu0 0.0
      %3216 = vmatprep.subr.mxu0 0.0
      %3217 = vmatpush2.msra.mxu0 0.0
      %3218 = vmatprep.subr.mxu0 0.0
      %3219 = vmatpush2.msra.mxu0 0.0
      %3220 = vmatprep.subr.mxu0 0.0
      %3221 = vmatpush2.msra.mxu0 0.0
      %3222 = vmatprep.subr.mxu0 0.0
      %3223 = vmatpush2.msra.mxu0 0.0
      %3224 = vmatprep.mubr.f32.mxu0 0.0
      %3225 = vmatmul.mubr.f32.gmra.mxu0 %v3149
      %v3226 = vpop.f32.mrf.mxu0
      %v3227 = vadd.f32 %v3146, %v3226
      %v3228 = vpop.f32.mrf.mxu0
      %3229 = vmatprep.mubr.f32.mxu0 0.0
      %3230 = vmatmul.mubr.f32.gmra.mxu0 %v3152
      %v3231 = vpop.f32.mrf.mxu0
      %v3232 = vadd.f32 %v3146, %v3231
      %v3233 = vpop.f32.mrf.mxu0
      %3234 = vmatprep.mubr.f32.mxu0 0.0
      %3235 = vmatmul.mubr.f32.gmra.mxu0 %v3155
      %v3236 = vpop.f32.mrf.mxu0
      %v3237 = vadd.f32 %v3146, %v3236
      %v3238 = vpop.f32.mrf.mxu0
      %3239 = vmatprep.mubr.f32.mxu0 0.0
      %3240 = vmatmul.mubr.f32.gmra.mxu0 %v3158
      %v3241 = vpop.f32.mrf.mxu0
      %v3242 = vadd.f32 %v3146, %v3241
      %v3243 = vpop.f32.mrf.mxu0
      %3244 = vdwg.mxu0
      %v3245 = vld [vmem:[#allocation2] sm:$0xff]
      %v3246 = vsel %vm304, %v3227, 0.0
      %v3247 = vsel %vm304, %v3232, 0.0
      %v3248 = vadd.f32 %v3246, %v3247
      %v3249 = vsel %vm304, %v3237, 0.0
      %v3250 = vadd.f32 %v3248, %v3249
      %v3251 = vsel %vm304, %v3242, 0.0
      %v3252 = vadd.f32 %v3250, %v3251
      %v3253 = vadd.f32 %v3245, %v3252
      %3254 = vst.msk [vmem:[#allocation2] sm:$0xff] %vm304, %v3253
      %p3255 = scmp.eq.s32.totalorder %s18, 1
      // Predicated region
      $region53: #{hybrid_cnn_lstm.3} parent=47 // pred_check
        %p3256 = pneg %p3255
      $region54: #{hybrid_cnn_lstm.3} parent=47 // pred_check_branch
        %3258 = sbr.rel (%p3256) target = $region56
      $region55: #{hybrid_cnn_lstm.3} parent=47 // pred_region
        %v3259 = vld [vmem:[#allocation2] sm:$0xff]
        %v3260 = vld [vmem:[%s5] sm:$0xff]
        %v3261 = vld [vmem:[%s5 + $0x8] sm:$0xff]
        %v3262 = vld [vmem:[%s5 + $0x10] sm:$0xff]
        %v3263 = vld [vmem:[%s5 + $0x18] sm:$0xff]
        %v3264 = vld [vmem:[%s5 + $0x20] sm:$0xff]
        %v3265 = vld [vmem:[%s5 + $0x28] sm:$0xff]
        %v3266 = vld [vmem:[%s5 + $0x30] sm:$0xff]
        %v3267 = vld [vmem:[%s5 + $0x38] sm:$0xff]
        %v3268 = vld [vmem:[%s6] sm:$0x1]
        %v3270 = vlaneseq
        %v3271 = vshrl.u32 %v3270, 7
        %v3272 = vsub.s32 0, %v3271
        %v3273 = vrot.slane %v3268, %v3272
        %v3276 = vsel %vm304, %v3259, 0
        %3278 = vmatprep.subr.mxu0 0.0
        %3279 = vmatpush1.msra.mxu0 0.0
        %3280 = vmatprep.subr.mxu0 0.0
        %3281 = vmatpush1.msra.mxu0 0.0
        %3282 = vmatprep.subr.mxu0 0.0
        %3283 = vmatpush1.msra.mxu0 0.0
        %3284 = vmatprep.subr.mxu0 0.0
        %3285 = vmatpush1.msra.mxu0 0.0
        %3286 = vmatprep.subr.mxu0 0.0
        %3287 = vmatpush1.msra.mxu0 0.0
        %3288 = vmatprep.subr.mxu0 0.0
        %3289 = vmatpush1.msra.mxu0 0.0
        %3290 = vmatprep.subr.mxu0 0.0
        %3291 = vmatpush1.msra.mxu0 0.0
        %3292 = vmatprep.subr.mxu0 0.0
        %3293 = vmatpush1.msra.mxu0 0.0
        %3294 = vmatprep.subr.mxu0 0.0
        %3295 = vmatpush1.msra.mxu0 %v3267
        %3296 = vmatprep.subr.mxu0 0.0
        %3297 = vmatpush1.msra.mxu0 %v3266
        %3298 = vmatprep.subr.mxu0 0.0
        %3299 = vmatpush1.msra.mxu0 %v3265
        %3300 = vmatprep.subr.mxu0 0.0
        %3301 = vmatpush1.msra.mxu0 %v3264
        %3302 = vmatprep.subr.mxu0 0.0
        %3303 = vmatpush1.msra.mxu0 %v3263
        %3304 = vmatprep.subr.mxu0 0.0
        %3305 = vmatpush1.msra.mxu0 %v3262
        %3306 = vmatprep.subr.mxu0 0.0
        %3307 = vmatpush1.msra.mxu0 %v3261
        %3308 = vmatprep.subr.mxu0 0.0
        %3309 = vmatpush1.msra.mxu0 %v3260
        %3310 = vmatprep.subr.mxu0 0.0
        %3311 = vmatpush2.msra.mxu0 0.0
        %3312 = vmatprep.subr.mxu0 0.0
        %3313 = vmatpush2.msra.mxu0 0.0
        %3314 = vmatprep.subr.mxu0 0.0
        %3315 = vmatpush2.msra.mxu0 0.0
        %3316 = vmatprep.subr.mxu0 0.0
        %3317 = vmatpush2.msra.mxu0 0.0
        %3318 = vmatprep.subr.mxu0 0.0
        %3319 = vmatpush2.msra.mxu0 0.0
        %3320 = vmatprep.subr.mxu0 0.0
        %3321 = vmatpush2.msra.mxu0 0.0
        %3322 = vmatprep.subr.mxu0 0.0
        %3323 = vmatpush2.msra.mxu0 0.0
        %3324 = vmatprep.subr.mxu0 0.0
        %3325 = vmatpush2.msra.mxu0 0.0
        %3326 = vmatprep.subr.mxu0 0.0
        %3327 = vmatpush2.msra.mxu0 0.0
        %3328 = vmatprep.subr.mxu0 0.0
        %3329 = vmatpush2.msra.mxu0 0.0
        %3330 = vmatprep.subr.mxu0 0.0
        %3331 = vmatpush2.msra.mxu0 0.0
        %3332 = vmatprep.subr.mxu0 0.0
        %3333 = vmatpush2.msra.mxu0 0.0
        %3334 = vmatprep.subr.mxu0 0.0
        %3335 = vmatpush2.msra.mxu0 0.0
        %3336 = vmatprep.subr.mxu0 0.0
        %3337 = vmatpush2.msra.mxu0 0.0
        %3338 = vmatprep.subr.mxu0 0.0
        %3339 = vmatpush2.msra.mxu0 0.0
        %3340 = vmatprep.subr.mxu0 0.0
        %3341 = vmatpush2.msra.mxu0 0.0
        %3342 = vmatprep.mubr.f32.mxu0 0.0
        %3343 = vmatmul.mubr.f32.gmra.mxu0 %v3276
        %v3344 = vpop.f32.mrf.mxu0
        %v3345 = vadd.f32 %v3273, %v3344
        %v3346 = vpop.f32.mrf.mxu0
        %3347 = vdwg.mxu0
        %3348 = vst [vmem:[%s7] sm:$0xff] %v3345
      $region56: #{hybrid_cnn_lstm.3} parent=47 // pred_fallthru
        _
      // Predicated region
      $region57: #{hybrid_cnn_lstm.3} parent=47 // pred_check
        %p3349 = pneg %p183
      $region58: #{hybrid_cnn_lstm.3} parent=47 // pred_check_branch
        %3351 = sbr.rel (%p3349) target = $region60
      $region59: #{hybrid_cnn_lstm.3} parent=47 // pred_region
        _
      $region60: #{hybrid_cnn_lstm.3} parent=47 // pred_fallthru
        _
      // Predicated region
      $region61: #{hybrid_cnn_lstm.3} parent=47 // pred_check
        %p3352 = pneg %p183
      $region62: #{hybrid_cnn_lstm.3} parent=47 // pred_check_branch
        %3354 = sbr.rel (%p3352) target = $region64
      $region63: #{hybrid_cnn_lstm.3} parent=47 // pred_region
        _
      $region64: #{hybrid_cnn_lstm.3} parent=47 // pred_fallthru
        _
    $region48: #{hybrid_cnn_lstm.3} parent=5 // pred_fallthru
      _
    %p3355 = scmp.le.s32.totalorder 2, %s13
    // Predicated region
    $region65: #{hybrid_cnn_lstm.3} parent=5 // pred_check
      %p3356 = pneg %p3355
    $region66: #{hybrid_cnn_lstm.3} parent=5 // pred_check_branch
      %3358 = sbr.rel (%p3356) target = $region68
    $region67: #{hybrid_cnn_lstm.3} parent=5 // pred_region
      %s3359 = ssub.s32 %s13, 2
    $region68: #{hybrid_cnn_lstm.3} parent=5 // pred_fallthru
      _
  $region6: #{hybrid_cnn_lstm.3} parent=0 // loop_footer
    %s17 = sadd.s32 1, %s13
  $region7: #{hybrid_cnn_lstm.3} parent=0 // loop_footer_branch
    %12 = sbr.rel target = $region3
  $region8: #{hybrid_cnn_lstm.3} parent=0 // loop_exit
    _

</llo_original>
